<compile_context>
chip_gen: v7x
topology: tpu7x:2x2x1
jax: 0.10.0
libtpu: 0.0.40
codegen_flags: <defaults>
</compile_context>

<pallas_src>
import jax
import jax.numpy as jnp
from jax import lax
from jax.experimental import pallas as pl
from jax.experimental.pallas import tpu as pltpu

KH = KW = 5
NTAPS = KH * KW
LANE = 128


# --------------------------------------------------------------------------------------
# Wrapper-side (plain XLA) data preparation: im2col patches and 0/1 gather matrices.
# --------------------------------------------------------------------------------------
def _im2col(x, kh, kw):
    """x: [N, C, H, W] -> patches [N, C*kh*kw, Ho*Wo]; row order (c, dh, dw)."""
    n, c, h, w = x.shape
    ho, wo = h - kh + 1, w - kw + 1
    taps = []
    for dh in range(kh):
        for dw in range(kw):
            taps.append(x[:, :, dh:dh + ho, dw:dw + wo].reshape(n, c, ho * wo))
    p = jnp.stack(taps, axis=2)                        # [N, C, kh*kw, Ho*Wo]
    return p.reshape(n, c * kh * kw, ho * wo).astype(jnp.float32)


def _pool_select_mats(h_in, w_in):
    """Four 0/1 gather matrices [4, h_in*w_in, (h_in//2)*(w_in//2)] for 2x2/2 max-pool."""
    h_out, w_out = h_in // 2, w_in // 2
    ii, jj = jnp.meshgrid(jnp.arange(h_out), jnp.arange(w_out), indexing="ij")
    rows = jnp.arange(h_in * w_in)[:, None]
    mats = []
    for di in (0, 1):
        for dj in (0, 1):
            src = ((2 * ii + di) * w_in + (2 * jj + dj)).reshape(-1)
            mats.append((rows == src[None, :]).astype(jnp.float32))
    return jnp.stack(mats, axis=0)                     # [4, h_in*w_in, h_out*w_out]


def _conv_gather_mats(h_in, w_in, kh, kw):
    """kh*kw 0/1 gather matrices [kh*kw, h_in*w_in, Ho*Wo]; tap t=dh*kw+dw shifts (dh,dw)."""
    h_out, w_out = h_in - kh + 1, w_in - kw + 1
    ii, jj = jnp.meshgrid(jnp.arange(h_out), jnp.arange(w_out), indexing="ij")
    rows = jnp.arange(h_in * w_in)[:, None]
    mats = []
    for dh in range(kh):
        for dw in range(kw):
            src = ((ii + dh) * w_in + (jj + dw)).reshape(-1)
            mats.append((rows == src[None, :]).astype(jnp.float32))
    return jnp.stack(mats, axis=0)                     # [kh*kw, h_in*w_in, h_out*w_out]


# --------------------------------------------------------------------------------------
# Fused kernel: one grid step == TB samples, everything lane-dense on the MXU (bf16
# operands, f32 accumulation).  Activation rows are (channel-major, sample-minor).
# --------------------------------------------------------------------------------------
def _make_lenet_kernel(TB, C1, C2):
    CB1 = C1 * TB

    def kernel(p1_ref, w1_ref, b1_ref, pool1_ref, g2_ref, w2_ref, b2_ref, pool2_ref,
               fcw_ref, fcb_ref, fc1w_ref, fc1b_ref, fc2w_ref, fc2b_ref,
               o_ref, k2_ref):
        f32, bf16 = jnp.float32, jnp.bfloat16

        # ---- layer 1: conv 5x5 (block-diag over batch), BN-shift, ReLU ----------------
        a1 = jnp.dot(w1_ref[...], p1_ref[...], preferred_element_type=f32)  # [C1*TB, 784]
        a1 = jnp.maximum(a1 + b1_ref[...], 0.0).astype(bf16)

        # ---- max-pool 2x2/2: four shared 0/1 gather matmuls + elementwise max ---------
        pooled1 = None
        for d in range(4):
            g = jnp.dot(a1, pool1_ref[d], preferred_element_type=f32)       # [C1*TB, 196]
            pooled1 = g if pooled1 is None else jnp.maximum(pooled1, g)
        pooled1 = pooled1.astype(bf16)

        # ---- layer 2: one lane-dense tap gather, restack taps on K, one fused matmul --
        win = jnp.dot(pooled1, g2_ref[...], preferred_element_type=f32)     # [C1*TB, 25*128]
        win = win.astype(bf16)
        for t in range(NTAPS):
            k2_ref[t * CB1:(t + 1) * CB1, :] = win[:, t * LANE:(t + 1) * LANE]
        a2 = jnp.dot(w2_ref[...], k2_ref[...], preferred_element_type=f32)  # [C2*TB, 128]
        a2 = jnp.maximum(a2 + b2_ref[...], 0.0).astype(bf16)

        # ---- max-pool 2x2/2 ------------------------------------------------------------
        pooled2 = None
        for d in range(4):
            g = jnp.dot(a2, pool2_ref[d], preferred_element_type=f32)       # [C2*TB, 25]
            pooled2 = g if pooled2 is None else jnp.maximum(pooled2, g)
        pooled2 = pooled2.astype(bf16)

        # ---- fc (C2*25 -> 120): lane-expanded matmul + diag-block reduction over C2 ----
        y = jnp.dot(pooled2, fcw_ref[...], preferred_element_type=f32)      # [C2*TB, C2*128]
        h = y[0:TB, 0:LANE]
        for c in range(1, C2):
            h = h + y[c * TB:(c + 1) * TB, c * LANE:(c + 1) * LANE]
        h = jnp.maximum(h + fcb_ref[...], 0.0).astype(bf16)                 # [TB, 128]

        # ---- fc1 -> relu -> fc2[:, task_id] (batched, lane-padded output) --------------
        h1 = jnp.dot(h, fc1w_ref[...], preferred_element_type=f32) + fc1b_ref[...]
        h1 = jnp.maximum(h1, 0.0).astype(bf16)                              # [TB, 84]
        out = jnp.dot(h1, fc2w_ref[...], preferred_element_type=f32) + fc2b_ref[...]
        o_ref[...] = out.astype(o_ref.dtype)                                # [TB, 128]

    return kernel


def lenet5_forward(params, x, task_id, tb=8):
    eps = 1e-5
    f32, bf16 = jnp.float32, jnp.bfloat16
    N, C_in, H, W = x.shape
    C1 = params["conv1_w"].shape[0]
    C2 = params["conv2_w"].shape[0]
    H1c, W1c = H - KH + 1, W - KW + 1
    H1p, W1p = H1c // 2, W1c // 2
    H2c, W2c = H1p - KH + 1, W1p - KW + 1
    H2p, W2p = H2c // 2, W2c // 2
    PC1, PP1 = H1c * W1c, H1p * W1p
    PC2, PP2 = H2c * W2c, H2p * W2p
    fc_in = C2 * PP2
    assert params["fc_w"].shape[0] == fc_in
    assert N % tb == 0 and tb % 8 == 0, "batch must be a multiple of TB (multiple of 8)"

    def bn_fold(conv_b, gamma, beta, mean, var):
        # bn(conv(x) + b) with per-task (gamma, beta) == scale*conv(x) + shift
        scale = gamma[task_id] / jnp.sqrt(var + eps)
        shift = beta[task_id] - mean * scale + scale * conv_b
        return scale, shift

    sc1, sh1 = bn_fold(params["conv1_b"], params["bn1_gamma"], params["bn1_beta"],
                       params["bn1_mean"], params["bn1_var"])
    sc2, sh2 = bn_fold(params["conv2_b"], params["bn2_gamma"], params["bn2_beta"],
                       params["bn2_mean"], params["bn2_var"])

    eye_tb = jnp.eye(tb, dtype=f32)

    # conv1: BN scale folded in; block-diagonal over the TB samples (rows = (c, tb)).
    w1f = sc1[:, None] * params["conv1_w"].reshape(C1, C_in * NTAPS)
    w1bd = jnp.einsum("ck,ru->cruk", w1f, eye_tb) \
              .reshape(C1 * tb, tb * C_in * NTAPS).astype(bf16)            # [C1*TB, TB*75]
    b1t = jnp.repeat(sh1, tb)[:, None].astype(f32)                         # [C1*TB, 1]

    # conv2: taps fused on K; block-diagonal over the TB samples (rows = (o, tb)).
    w2s = sc2[:, None, None] * params["conv2_w"].reshape(C2, C1, NTAPS)
    w2f = jnp.einsum("oct,ru->ortcu", w2s, eye_tb) \
              .reshape(C2 * tb, NTAPS * C1 * tb).astype(bf16)              # [C2*TB, 25*C1*TB]
    b2t = jnp.repeat(sh2, tb)[:, None].astype(f32)                         # [C2*TB, 1]

    # Pooling / tap-gather 0/1 matrices (exact in bf16).
    pool1sel = _pool_select_mats(H1c, W1c).astype(bf16)                    # [4, 784, 196]
    g2 = _conv_gather_mats(H1p, W1p, KH, KW)                               # [25, 196, 100]
    g2 = jnp.pad(g2, ((0, 0), (0, 0), (0, LANE - PC2)))
    g2cat = jnp.transpose(g2, (1, 0, 2)).reshape(PP1, NTAPS * LANE).astype(bf16)
    pool2sel = _pool_select_mats(H2c, W2c)                                 # [4, 100, 25]
    pool2sel = jnp.pad(pool2sel, ((0, 0), (0, LANE - PC2), (0, 0))).astype(bf16)

    # fc: lane-expanded weight so the flatten never materializes in the kernel.
    FCH = params["fc_w"].shape[1]                                          # 120
    fcw3 = params["fc_w"].reshape(C2, PP2, FCH)
    fcwexp = jnp.pad(fcw3, ((0, 0), (0, 0), (0, LANE - FCH)))
    fcwexp = jnp.transpose(fcwexp, (1, 0, 2)).reshape(PP2, C2 * LANE).astype(bf16)
    fcb = jnp.pad(params["fc_b"], (0, LANE - FCH))[None, :].astype(f32)    # [1, 128]

    H84 = params["fc1_w"].shape[1]
    fc1w = jnp.pad(params["fc1_w"], ((0, LANE - FCH), (0, 0))).astype(bf16)  # [128, 84]
    fc1b = params["fc1_b"][None, :].astype(f32)                            # [1, 84]

    # Only the task_id column of fc2 is needed; keep the output lane-dense (128 cols).
    fc2w = jnp.zeros((H84, LANE), f32).at[:, 0].set(params["fc2_w"][:, task_id]).astype(bf16)
    fc2b = jnp.zeros((1, LANE), f32).at[0, 0].set(params["fc2_b"][task_id])

    # Per-sample im2col patches, stacked on sublanes per grid step, bf16 HBM stream.
    p1 = _im2col(x, KH, KW).astype(bf16).reshape(N * C_in * NTAPS, PC1)    # [N*75, 784]

    args = (p1, w1bd, b1t, pool1sel, g2cat, w2f, b2t, pool2sel,
            fcwexp, fcb, fc1w, fc1b, fc2w, fc2b)

    def const_spec(a):
        return pl.BlockSpec(a.shape, lambda n, _nd=a.ndim: (0,) * _nd)

    in_specs = ([pl.BlockSpec((tb * C_in * NTAPS, PC1), lambda n: (n, 0))]
                + [const_spec(a) for a in args[1:]])

    kernel = _make_lenet_kernel(tb, C1, C2)

    out = pl.pallas_call(
        kernel,
        out_shape=jax.ShapeDtypeStruct((N, LANE), jnp.float32),
        grid=(N // tb,),
        in_specs=in_specs,
        out_specs=pl.BlockSpec((tb, LANE), lambda n: (n, 0)),
        scratch_shapes=[pltpu.VMEM((NTAPS * C1 * tb, LANE), jnp.bfloat16)],
        compiler_params=pltpu.CompilerParams(
            dimension_semantics=("parallel",),
            vmem_limit_bytes=32 * 1024 * 1024,
        ),
    )(*args)
    return out[:, 0]


# --------------------------------------------------------------------------------------
# Pure-JAX reference (same semantics) for a correctness check.
# --------------------------------------------------------------------------------------
def _reference_forward(params, x, task_id):
    eps = 1e-5

    def layer(y, w, b, gamma, beta, mean, var):
        y = lax.conv_general_dilated(y, w, (1, 1), "VALID",
                                     dimension_numbers=("NCHW", "OIHW", "NCHW"))
        y = y + b[None, :, None, None]
        scale = gamma[task_id] / jnp.sqrt(var + eps)
        y = scale[None, :, None, None] * (y - mean[None, :, None, None]) \
            + beta[task_id][None, :, None, None]
        y = jnp.maximum(y, 0.0)
        return lax.reduce_window(y, -jnp.inf, lax.max, (1, 1, 2, 2), (1, 1, 2, 2), "VALID")

    out = layer(x, params["conv1_w"], params["conv1_b"], params["bn1_gamma"],
                params["bn1_beta"], params["bn1_mean"], params["bn1_var"])
    out = layer(out, params["conv2_w"], params["conv2_b"], params["bn2_gamma"],
                params["bn2_beta"], params["bn2_mean"], params["bn2_var"])
    out = out.reshape(out.shape[0], -1)
    out = jnp.maximum(out @ params["fc_w"] + params["fc_b"], 0.0)
    out = jnp.maximum(out @ params["fc1_w"] + params["fc1_b"], 0.0)
    out = out @ params["fc2_w"] + params["fc2_b"]
    return out[:, task_id]


if __name__ == "__main__":
    num_classes = 8    # task_id indexes both the BN modulation and the output column
    task_id = 3
    N, C0, H0, W0 = 16, 3, 32, 32
    TB = 8             # samples per grid step; grid length 2 keeps both v7x TCs busy
    key = jax.random.PRNGKey(0)
    ks = jax.random.split(key, 16)
    params = {
        "conv1_w": 0.1 * jax.random.normal(ks[0], (6, 3, 5, 5), jnp.float32),
        "conv1_b": 0.1 * jax.random.normal(ks[1], (6,), jnp.float32),
        "bn1_gamma": 1.0 + 0.1 * jax.random.normal(ks[2], (num_classes, 6), jnp.float32),
        "bn1_beta": 0.1 * jax.random.normal(ks[3], (num_classes, 6), jnp.float32),
        "bn1_mean": jnp.zeros((6,), jnp.float32),
        "bn1_var": jnp.ones((6,), jnp.float32),
        "conv2_w": 0.1 * jax.random.normal(ks[4], (16, 6, 5, 5), jnp.float32),
        "conv2_b": 0.1 * jax.random.normal(ks[5], (16,), jnp.float32),
        "bn2_gamma": 1.0 + 0.1 * jax.random.normal(ks[6], (num_classes, 16), jnp.float32),
        "bn2_beta": 0.1 * jax.random.normal(ks[7], (num_classes, 16), jnp.float32),
        "bn2_mean": jnp.zeros((16,), jnp.float32),
        "bn2_var": jnp.ones((16,), jnp.float32),
        "fc_w": 0.05 * jax.random.normal(ks[8], (400, 120), jnp.float32),
        "fc_b": 0.05 * jax.random.normal(ks[9], (120,), jnp.float32),
        "fc1_w": 0.05 * jax.random.normal(ks[10], (120, 84), jnp.float32),
        "fc1_b": 0.05 * jax.random.normal(ks[11], (84,), jnp.float32),
        "fc2_w": 0.05 * jax.random.normal(ks[12], (84, num_classes), jnp.float32),
        "fc2_b": 0.05 * jax.random.normal(ks[13], (num_classes,), jnp.float32),
    }
    x = jax.random.normal(ks[14], (N, C0, H0, W0), jnp.float32)

    out = jax.block_until_ready(lenet5_forward(params, x, task_id, tb=TB))
    assert out.shape == (N,)

    ref = jax.block_until_ready(_reference_forward(params, x, task_id))
    # bf16 MXU operands (f32 accumulation) vs f32 reference -> slightly looser tolerance.
    assert bool(jnp.allclose(out, ref, rtol=5e-2, atol=5e-2)), (out, ref)

    print("KERNEL_OK")
</pallas_src>

<mosaic_0001>
module attributes {stable_mosaic.version = 11 : i64} {
  func.func @kernel(%arg0: i32, %arg1: memref<600x784xbf16, #tpu.memory_space<vmem>>, %arg2: memref<48x600xbf16, #tpu.memory_space<vmem>>, %arg3: memref<48x1xf32, #tpu.memory_space<vmem>>, %arg4: memref<4x784x196xbf16, #tpu.memory_space<vmem>>, %arg5: memref<196x3200xbf16, #tpu.memory_space<vmem>>, %arg6: memref<128x1200xbf16, #tpu.memory_space<vmem>>, %arg7: memref<128x1xf32, #tpu.memory_space<vmem>>, %arg8: memref<4x128x25xbf16, #tpu.memory_space<vmem>>, %arg9: memref<25x2048xbf16, #tpu.memory_space<vmem>>, %arg10: memref<1x128xf32, #tpu.memory_space<vmem>>, %arg11: memref<128x84xbf16, #tpu.memory_space<vmem>>, %arg12: memref<1x84xf32, #tpu.memory_space<vmem>>, %arg13: memref<84x128xbf16, #tpu.memory_space<vmem>>, %arg14: memref<1x128xf32, #tpu.memory_space<vmem>>, %arg15: memref<8x128xf32, #tpu.memory_space<vmem>>, %arg16: memref<1200x128xbf16, #tpu.memory_space<vmem>>) attributes {dimension_semantics = [#tpu.dimension_semantics<parallel>], iteration_bounds = array<i64: 2>, scalar_prefetch = 0 : i64, scratch_operands = 1 : i64, tpu.core_type = #tpu.core_type<tc>, window_params = [{transform_indices = @transform_0, window_bounds = array<i64: 600, 784>}, {pipeline_mode = #tpu.pipeline_mode<synchronous>, transform_indices = @transform_1, window_bounds = array<i64: 48, 600>}, {pipeline_mode = #tpu.pipeline_mode<synchronous>, transform_indices = @transform_2, window_bounds = array<i64: 48, 1>}, {pipeline_mode = #tpu.pipeline_mode<synchronous>, transform_indices = @transform_3, window_bounds = array<i64: 4, 784, 196>}, {pipeline_mode = #tpu.pipeline_mode<synchronous>, transform_indices = @transform_4, window_bounds = array<i64: 196, 3200>}, {pipeline_mode = #tpu.pipeline_mode<synchronous>, transform_indices = @transform_5, window_bounds = array<i64: 128, 1200>}, {pipeline_mode = #tpu.pipeline_mode<synchronous>, transform_indices = @transform_6, window_bounds = array<i64: 128, 1>}, {pipeline_mode = #tpu.pipeline_mode<synchronous>, transform_indices = @transform_7, window_bounds = array<i64: 4, 128, 25>}, {pipeline_mode = #tpu.pipeline_mode<synchronous>, transform_indices = @transform_8, window_bounds = array<i64: 25, 2048>}, {pipeline_mode = #tpu.pipeline_mode<synchronous>, transform_indices = @transform_9, window_bounds = array<i64: 1, 128>}, {pipeline_mode = #tpu.pipeline_mode<synchronous>, transform_indices = @transform_10, window_bounds = array<i64: 128, 84>}, {pipeline_mode = #tpu.pipeline_mode<synchronous>, transform_indices = @transform_11, window_bounds = array<i64: 1, 84>}, {pipeline_mode = #tpu.pipeline_mode<synchronous>, transform_indices = @transform_12, window_bounds = array<i64: 84, 128>}, {pipeline_mode = #tpu.pipeline_mode<synchronous>, transform_indices = @transform_13, window_bounds = array<i64: 1, 128>}, {transform_indices = @transform_14, window_bounds = array<i64: 8, 128>}]} {
    %c0 = arith.constant 0 : index
    %c0_0 = arith.constant 0 : index
    %0 = vector.load %arg2[%c0, %c0_0] : memref<48x600xbf16, #tpu.memory_space<vmem>>, vector<48x600xbf16>
    %c0_1 = arith.constant 0 : index
    %c0_2 = arith.constant 0 : index
    %1 = vector.load %arg1[%c0_1, %c0_2] : memref<600x784xbf16, #tpu.memory_space<vmem>>, vector<600x784xbf16>
    %cst = arith.constant dense<0.000000e+00> : vector<48x784xf32>
    %2 = tpu.matmul %0, %1, %cst {dimension_numbers = #tpu.dot_dimension_numbers<[1], [0], [0], [1], [0, 0, 1, 1], [], []>} : vector<48x600xbf16>, vector<600x784xbf16>, vector<48x784xf32> -> vector<48x784xf32>
    %c0_3 = arith.constant 0 : index
    %c0_4 = arith.constant 0 : index
    %3 = vector.load %arg3[%c0_3, %c0_4] : memref<48x1xf32, #tpu.memory_space<vmem>>, vector<48x1xf32>
    %4 = vector.broadcast %3 : vector<48x1xf32> to vector<48x784xf32>
    %5 = arith.addf %2, %4 : vector<48x784xf32>
    %cst_5 = arith.constant 0.000000e+00 : f32
    %6 = vector.broadcast %cst_5 : f32 to vector<48x784xf32>
    %7 = arith.maximumf %5, %6 : vector<48x784xf32>
    %8 = arith.truncf %7 : vector<48x784xf32> to vector<48x784xbf16>
    %c0_6 = arith.constant 0 : index
    %c0_7 = arith.constant 0 : index
    %c0_8 = arith.constant 0 : index
    %9 = vector.load %arg4[%c0_6, %c0_7, %c0_8] : memref<4x784x196xbf16, #tpu.memory_space<vmem>>, vector<1x784x196xbf16>
    %10 = vector.shape_cast %9 : vector<1x784x196xbf16> to vector<784x196xbf16>
    %cst_9 = arith.constant dense<0.000000e+00> : vector<48x196xf32>
    %11 = tpu.matmul %8, %10, %cst_9 {dimension_numbers = #tpu.dot_dimension_numbers<[1], [0], [0], [1], [0, 0, 1, 1], [], []>} : vector<48x784xbf16>, vector<784x196xbf16>, vector<48x196xf32> -> vector<48x196xf32>
    %c1 = arith.constant 1 : index
    %c0_10 = arith.constant 0 : index
    %c0_11 = arith.constant 0 : index
    %12 = vector.load %arg4[%c1, %c0_10, %c0_11] : memref<4x784x196xbf16, #tpu.memory_space<vmem>>, vector<1x784x196xbf16>
    %13 = vector.shape_cast %12 : vector<1x784x196xbf16> to vector<784x196xbf16>
    %cst_12 = arith.constant dense<0.000000e+00> : vector<48x196xf32>
    %14 = tpu.matmul %8, %13, %cst_12 {dimension_numbers = #tpu.dot_dimension_numbers<[1], [0], [0], [1], [0, 0, 1, 1], [], []>} : vector<48x784xbf16>, vector<784x196xbf16>, vector<48x196xf32> -> vector<48x196xf32>
    %15 = arith.maximumf %11, %14 : vector<48x196xf32>
    %c2 = arith.constant 2 : index
    %c0_13 = arith.constant 0 : index
    %c0_14 = arith.constant 0 : index
    %16 = vector.load %arg4[%c2, %c0_13, %c0_14] : memref<4x784x196xbf16, #tpu.memory_space<vmem>>, vector<1x784x196xbf16>
    %17 = vector.shape_cast %16 : vector<1x784x196xbf16> to vector<784x196xbf16>
    %cst_15 = arith.constant dense<0.000000e+00> : vector<48x196xf32>
    %18 = tpu.matmul %8, %17, %cst_15 {dimension_numbers = #tpu.dot_dimension_numbers<[1], [0], [0], [1], [0, 0, 1, 1], [], []>} : vector<48x784xbf16>, vector<784x196xbf16>, vector<48x196xf32> -> vector<48x196xf32>
    %19 = arith.maximumf %15, %18 : vector<48x196xf32>
    %c3 = arith.constant 3 : index
    %c0_16 = arith.constant 0 : index
    %c0_17 = arith.constant 0 : index
    %20 = vector.load %arg4[%c3, %c0_16, %c0_17] : memref<4x784x196xbf16, #tpu.memory_space<vmem>>, vector<1x784x196xbf16>
    %21 = vector.shape_cast %20 : vector<1x784x196xbf16> to vector<784x196xbf16>
    %cst_18 = arith.constant dense<0.000000e+00> : vector<48x196xf32>
    %22 = tpu.matmul %8, %21, %cst_18 {dimension_numbers = #tpu.dot_dimension_numbers<[1], [0], [0], [1], [0, 0, 1, 1], [], []>} : vector<48x784xbf16>, vector<784x196xbf16>, vector<48x196xf32> -> vector<48x196xf32>
    %23 = arith.maximumf %19, %22 : vector<48x196xf32>
    %24 = arith.truncf %23 : vector<48x196xf32> to vector<48x196xbf16>
    %c0_19 = arith.constant 0 : index
    %c0_20 = arith.constant 0 : index
    %25 = vector.load %arg5[%c0_19, %c0_20] : memref<196x3200xbf16, #tpu.memory_space<vmem>>, vector<196x3200xbf16>
    %cst_21 = arith.constant dense<0.000000e+00> : vector<48x3200xf32>
    %26 = tpu.matmul %24, %25, %cst_21 {dimension_numbers = #tpu.dot_dimension_numbers<[1], [0], [0], [1], [0, 0, 1, 1], [], []>} : vector<48x196xbf16>, vector<196x3200xbf16>, vector<48x3200xf32> -> vector<48x3200xf32>
    %27 = arith.truncf %26 : vector<48x3200xf32> to vector<48x3200xbf16>
    %28 = vector.extract_strided_slice %27 {offsets = [0, 0], sizes = [48, 128], strides = [1, 1]} : vector<48x3200xbf16> to vector<48x128xbf16>
    %c0_22 = arith.constant 0 : index
    %c0_23 = arith.constant 0 : index
    %29 = vector.load %arg16[%c0_22, %c0_23] : memref<1200x128xbf16, #tpu.memory_space<vmem>>, vector<48x128xbf16>
    tpu.vector_store %arg16[%c0_22, %c0_23], %28 {strides = array<i32>} : memref<1200x128xbf16, #tpu.memory_space<vmem>>, vector<48x128xbf16>,
    %30 = vector.extract_strided_slice %27 {offsets = [0, 128], sizes = [48, 128], strides = [1, 1]} : vector<48x3200xbf16> to vector<48x128xbf16>
    %c48 = arith.constant 48 : index
    %c0_24 = arith.constant 0 : index
    %31 = vector.load %arg16[%c48, %c0_24] : memref<1200x128xbf16, #tpu.memory_space<vmem>>, vector<48x128xbf16>
    tpu.vector_store %arg16[%c48, %c0_24], %30 {strides = array<i32>} : memref<1200x128xbf16, #tpu.memory_space<vmem>>, vector<48x128xbf16>,
    %32 = vector.extract_strided_slice %27 {offsets = [0, 256], sizes = [48, 128], strides = [1, 1]} : vector<48x3200xbf16> to vector<48x128xbf16>
    %c96 = arith.constant 96 : index
    %c0_25 = arith.constant 0 : index
    %33 = vector.load %arg16[%c96, %c0_25] : memref<1200x128xbf16, #tpu.memory_space<vmem>>, vector<48x128xbf16>
    tpu.vector_store %arg16[%c96, %c0_25], %32 {strides = array<i32>} : memref<1200x128xbf16, #tpu.memory_space<vmem>>, vector<48x128xbf16>,
    %34 = vector.extract_strided_slice %27 {offsets = [0, 384], sizes = [48, 128], strides = [1, 1]} : vector<48x3200xbf16> to vector<48x128xbf16>
    %c144 = arith.constant 144 : index
    %c0_26 = arith.constant 0 : index
    %35 = vector.load %arg16[%c144, %c0_26] : memref<1200x128xbf16, #tpu.memory_space<vmem>>, vector<48x128xbf16>
    tpu.vector_store %arg16[%c144, %c0_26], %34 {strides = array<i32>} : memref<1200x128xbf16, #tpu.memory_space<vmem>>, vector<48x128xbf16>,
    %36 = vector.extract_strided_slice %27 {offsets = [0, 512], sizes = [48, 128], strides = [1, 1]} : vector<48x3200xbf16> to vector<48x128xbf16>
    %c192 = arith.constant 192 : index
    %c0_27 = arith.constant 0 : index
    %37 = vector.load %arg16[%c192, %c0_27] : memref<1200x128xbf16, #tpu.memory_space<vmem>>, vector<48x128xbf16>
    tpu.vector_store %arg16[%c192, %c0_27], %36 {strides = array<i32>} : memref<1200x128xbf16, #tpu.memory_space<vmem>>, vector<48x128xbf16>,
    %38 = vector.extract_strided_slice %27 {offsets = [0, 640], sizes = [48, 128], strides = [1, 1]} : vector<48x3200xbf16> to vector<48x128xbf16>
    %c240 = arith.constant 240 : index
    %c0_28 = arith.constant 0 : index
    %39 = vector.load %arg16[%c240, %c0_28] : memref<1200x128xbf16, #tpu.memory_space<vmem>>, vector<48x128xbf16>
    tpu.vector_store %arg16[%c240, %c0_28], %38 {strides = array<i32>} : memref<1200x128xbf16, #tpu.memory_space<vmem>>, vector<48x128xbf16>,
    %40 = vector.extract_strided_slice %27 {offsets = [0, 768], sizes = [48, 128], strides = [1, 1]} : vector<48x3200xbf16> to vector<48x128xbf16>
    %c288 = arith.constant 288 : index
    %c0_29 = arith.constant 0 : index
    %41 = vector.load %arg16[%c288, %c0_29] : memref<1200x128xbf16, #tpu.memory_space<vmem>>, vector<48x128xbf16>
    tpu.vector_store %arg16[%c288, %c0_29], %40 {strides = array<i32>} : memref<1200x128xbf16, #tpu.memory_space<vmem>>, vector<48x128xbf16>,
    %42 = vector.extract_strided_slice %27 {offsets = [0, 896], sizes = [48, 128], strides = [1, 1]} : vector<48x3200xbf16> to vector<48x128xbf16>
    %c336 = arith.constant 336 : index
    %c0_30 = arith.constant 0 : index
    %43 = vector.load %arg16[%c336, %c0_30] : memref<1200x128xbf16, #tpu.memory_space<vmem>>, vector<48x128xbf16>
    tpu.vector_store %arg16[%c336, %c0_30], %42 {strides = array<i32>} : memref<1200x128xbf16, #tpu.memory_space<vmem>>, vector<48x128xbf16>,
    %44 = vector.extract_strided_slice %27 {offsets = [0, 1024], sizes = [48, 128], strides = [1, 1]} : vector<48x3200xbf16> to vector<48x128xbf16>
    %c384 = arith.constant 384 : index
    %c0_31 = arith.constant 0 : index
    %45 = vector.load %arg16[%c384, %c0_31] : memref<1200x128xbf16, #tpu.memory_space<vmem>>, vector<48x128xbf16>
    tpu.vector_store %arg16[%c384, %c0_31], %44 {strides = array<i32>} : memref<1200x128xbf16, #tpu.memory_space<vmem>>, vector<48x128xbf16>,
    %46 = vector.extract_strided_slice %27 {offsets = [0, 1152], sizes = [48, 128], strides = [1, 1]} : vector<48x3200xbf16> to vector<48x128xbf16>
    %c432 = arith.constant 432 : index
    %c0_32 = arith.constant 0 : index
    %47 = vector.load %arg16[%c432, %c0_32] : memref<1200x128xbf16, #tpu.memory_space<vmem>>, vector<48x128xbf16>
    tpu.vector_store %arg16[%c432, %c0_32], %46 {strides = array<i32>} : memref<1200x128xbf16, #tpu.memory_space<vmem>>, vector<48x128xbf16>,
    %48 = vector.extract_strided_slice %27 {offsets = [0, 1280], sizes = [48, 128], strides = [1, 1]} : vector<48x3200xbf16> to vector<48x128xbf16>
    %c480 = arith.constant 480 : index
    %c0_33 = arith.constant 0 : index
    %49 = vector.load %arg16[%c480, %c0_33] : memref<1200x128xbf16, #tpu.memory_space<vmem>>, vector<48x128xbf16>
    tpu.vector_store %arg16[%c480, %c0_33], %48 {strides = array<i32>} : memref<1200x128xbf16, #tpu.memory_space<vmem>>, vector<48x128xbf16>,
    %50 = vector.extract_strided_slice %27 {offsets = [0, 1408], sizes = [48, 128], strides = [1, 1]} : vector<48x3200xbf16> to vector<48x128xbf16>
    %c528 = arith.constant 528 : index
    %c0_34 = arith.constant 0 : index
    %51 = vector.load %arg16[%c528, %c0_34] : memref<1200x128xbf16, #tpu.memory_space<vmem>>, vector<48x128xbf16>
    tpu.vector_store %arg16[%c528, %c0_34], %50 {strides = array<i32>} : memref<1200x128xbf16, #tpu.memory_space<vmem>>, vector<48x128xbf16>,
    %52 = vector.extract_strided_slice %27 {offsets = [0, 1536], sizes = [48, 128], strides = [1, 1]} : vector<48x3200xbf16> to vector<48x128xbf16>
    %c576 = arith.constant 576 : index
    %c0_35 = arith.constant 0 : index
    %53 = vector.load %arg16[%c576, %c0_35] : memref<1200x128xbf16, #tpu.memory_space<vmem>>, vector<48x128xbf16>
    tpu.vector_store %arg16[%c576, %c0_35], %52 {strides = array<i32>} : memref<1200x128xbf16, #tpu.memory_space<vmem>>, vector<48x128xbf16>,
    %54 = vector.extract_strided_slice %27 {offsets = [0, 1664], sizes = [48, 128], strides = [1, 1]} : vector<48x3200xbf16> to vector<48x128xbf16>
    %c624 = arith.constant 624 : index
    %c0_36 = arith.constant 0 : index
    %55 = vector.load %arg16[%c624, %c0_36] : memref<1200x128xbf16, #tpu.memory_space<vmem>>, vector<48x128xbf16>
    tpu.vector_store %arg16[%c624, %c0_36], %54 {strides = array<i32>} : memref<1200x128xbf16, #tpu.memory_space<vmem>>, vector<48x128xbf16>,
    %56 = vector.extract_strided_slice %27 {offsets = [0, 1792], sizes = [48, 128], strides = [1, 1]} : vector<48x3200xbf16> to vector<48x128xbf16>
    %c672 = arith.constant 672 : index
    %c0_37 = arith.constant 0 : index
    %57 = vector.load %arg16[%c672, %c0_37] : memref<1200x128xbf16, #tpu.memory_space<vmem>>, vector<48x128xbf16>
    tpu.vector_store %arg16[%c672, %c0_37], %56 {strides = array<i32>} : memref<1200x128xbf16, #tpu.memory_space<vmem>>, vector<48x128xbf16>,
    %58 = vector.extract_strided_slice %27 {offsets = [0, 1920], sizes = [48, 128], strides = [1, 1]} : vector<48x3200xbf16> to vector<48x128xbf16>
    %c720 = arith.constant 720 : index
    %c0_38 = arith.constant 0 : index
    %59 = vector.load %arg16[%c720, %c0_38] : memref<1200x128xbf16, #tpu.memory_space<vmem>>, vector<48x128xbf16>
    tpu.vector_store %arg16[%c720, %c0_38], %58 {strides = array<i32>} : memref<1200x128xbf16, #tpu.memory_space<vmem>>, vector<48x128xbf16>,
    %60 = vector.extract_strided_slice %27 {offsets = [0, 2048], sizes = [48, 128], strides = [1, 1]} : vector<48x3200xbf16> to vector<48x128xbf16>
    %c768 = arith.constant 768 : index
    %c0_39 = arith.constant 0 : index
    %61 = vector.load %arg16[%c768, %c0_39] : memref<1200x128xbf16, #tpu.memory_space<vmem>>, vector<48x128xbf16>
    tpu.vector_store %arg16[%c768, %c0_39], %60 {strides = array<i32>} : memref<1200x128xbf16, #tpu.memory_space<vmem>>, vector<48x128xbf16>,
    %62 = vector.extract_strided_slice %27 {offsets = [0, 2176], sizes = [48, 128], strides = [1, 1]} : vector<48x3200xbf16> to vector<48x128xbf16>
    %c816 = arith.constant 816 : index
    %c0_40 = arith.constant 0 : index
    %63 = vector.load %arg16[%c816, %c0_40] : memref<1200x128xbf16, #tpu.memory_space<vmem>>, vector<48x128xbf16>
    tpu.vector_store %arg16[%c816, %c0_40], %62 {strides = array<i32>} : memref<1200x128xbf16, #tpu.memory_space<vmem>>, vector<48x128xbf16>,
    %64 = vector.extract_strided_slice %27 {offsets = [0, 2304], sizes = [48, 128], strides = [1, 1]} : vector<48x3200xbf16> to vector<48x128xbf16>
    %c864 = arith.constant 864 : index
    %c0_41 = arith.constant 0 : index
    %65 = vector.load %arg16[%c864, %c0_41] : memref<1200x128xbf16, #tpu.memory_space<vmem>>, vector<48x128xbf16>
    tpu.vector_store %arg16[%c864, %c0_41], %64 {strides = array<i32>} : memref<1200x128xbf16, #tpu.memory_space<vmem>>, vector<48x128xbf16>,
    %66 = vector.extract_strided_slice %27 {offsets = [0, 2432], sizes = [48, 128], strides = [1, 1]} : vector<48x3200xbf16> to vector<48x128xbf16>
    %c912 = arith.constant 912 : index
    %c0_42 = arith.constant 0 : index
    %67 = vector.load %arg16[%c912, %c0_42] : memref<1200x128xbf16, #tpu.memory_space<vmem>>, vector<48x128xbf16>
    tpu.vector_store %arg16[%c912, %c0_42], %66 {strides = array<i32>} : memref<1200x128xbf16, #tpu.memory_space<vmem>>, vector<48x128xbf16>,
    %68 = vector.extract_strided_slice %27 {offsets = [0, 2560], sizes = [48, 128], strides = [1, 1]} : vector<48x3200xbf16> to vector<48x128xbf16>
    %c960 = arith.constant 960 : index
    %c0_43 = arith.constant 0 : index
    %69 = vector.load %arg16[%c960, %c0_43] : memref<1200x128xbf16, #tpu.memory_space<vmem>>, vector<48x128xbf16>
    tpu.vector_store %arg16[%c960, %c0_43], %68 {strides = array<i32>} : memref<1200x128xbf16, #tpu.memory_space<vmem>>, vector<48x128xbf16>,
    %70 = vector.extract_strided_slice %27 {offsets = [0, 2688], sizes = [48, 128], strides = [1, 1]} : vector<48x3200xbf16> to vector<48x128xbf16>
    %c1008 = arith.constant 1008 : index
    %c0_44 = arith.constant 0 : index
    %71 = vector.load %arg16[%c1008, %c0_44] : memref<1200x128xbf16, #tpu.memory_space<vmem>>, vector<48x128xbf16>
    tpu.vector_store %arg16[%c1008, %c0_44], %70 {strides = array<i32>} : memref<1200x128xbf16, #tpu.memory_space<vmem>>, vector<48x128xbf16>,
    %72 = vector.extract_strided_slice %27 {offsets = [0, 2816], sizes = [48, 128], strides = [1, 1]} : vector<48x3200xbf16> to vector<48x128xbf16>
    %c1056 = arith.constant 1056 : index
    %c0_45 = arith.constant 0 : index
    %73 = vector.load %arg16[%c1056, %c0_45] : memref<1200x128xbf16, #tpu.memory_space<vmem>>, vector<48x128xbf16>
    tpu.vector_store %arg16[%c1056, %c0_45], %72 {strides = array<i32>} : memref<1200x128xbf16, #tpu.memory_space<vmem>>, vector<48x128xbf16>,
    %74 = vector.extract_strided_slice %27 {offsets = [0, 2944], sizes = [48, 128], strides = [1, 1]} : vector<48x3200xbf16> to vector<48x128xbf16>
    %c1104 = arith.constant 1104 : index
    %c0_46 = arith.constant 0 : index
    %75 = vector.load %arg16[%c1104, %c0_46] : memref<1200x128xbf16, #tpu.memory_space<vmem>>, vector<48x128xbf16>
    tpu.vector_store %arg16[%c1104, %c0_46], %74 {strides = array<i32>} : memref<1200x128xbf16, #tpu.memory_space<vmem>>, vector<48x128xbf16>,
    %76 = vector.extract_strided_slice %27 {offsets = [0, 3072], sizes = [48, 128], strides = [1, 1]} : vector<48x3200xbf16> to vector<48x128xbf16>
    %c1152 = arith.constant 1152 : index
    %c0_47 = arith.constant 0 : index
    %77 = vector.load %arg16[%c1152, %c0_47] : memref<1200x128xbf16, #tpu.memory_space<vmem>>, vector<48x128xbf16>
    tpu.vector_store %arg16[%c1152, %c0_47], %76 {strides = array<i32>} : memref<1200x128xbf16, #tpu.memory_space<vmem>>, vector<48x128xbf16>,
    %c0_48 = arith.constant 0 : index
    %c0_49 = arith.constant 0 : index
    %78 = vector.load %arg6[%c0_48, %c0_49] : memref<128x1200xbf16, #tpu.memory_space<vmem>>, vector<128x1200xbf16>
    %c0_50 = arith.constant 0 : index
    %c0_51 = arith.constant 0 : index
    %79 = vector.load %arg16[%c0_50, %c0_51] : memref<1200x128xbf16, #tpu.memory_space<vmem>>, vector<1200x128xbf16>
    %cst_52 = arith.constant dense<0.000000e+00> : vector<128x128xf32>
    %80 = tpu.matmul %78, %79, %cst_52 {dimension_numbers = #tpu.dot_dimension_numbers<[1], [0], [0], [1], [0, 0, 1, 1], [], []>} : vector<128x1200xbf16>, vector<1200x128xbf16>, vector<128x128xf32> -> vector<128x128xf32>
    %c0_53 = arith.constant 0 : index
    %c0_54 = arith.constant 0 : index
    %81 = vector.load %arg7[%c0_53, %c0_54] : memref<128x1xf32, #tpu.memory_space<vmem>>, vector<128x1xf32>
    %82 = vector.broadcast %81 : vector<128x1xf32> to vector<128x128xf32>
    %83 = arith.addf %80, %82 : vector<128x128xf32>
    %cst_55 = arith.constant 0.000000e+00 : f32
    %84 = vector.broadcast %cst_55 : f32 to vector<128x128xf32>
    %85 = arith.maximumf %83, %84 : vector<128x128xf32>
    %86 = arith.truncf %85 : vector<128x128xf32> to vector<128x128xbf16>
    %c0_56 = arith.constant 0 : index
    %c0_57 = arith.constant 0 : index
    %c0_58 = arith.constant 0 : index
    %87 = vector.load %arg8[%c0_56, %c0_57, %c0_58] : memref<4x128x25xbf16, #tpu.memory_space<vmem>>, vector<1x128x25xbf16>
    %88 = vector.shape_cast %87 : vector<1x128x25xbf16> to vector<128x25xbf16>
    %cst_59 = arith.constant dense<0.000000e+00> : vector<128x25xf32>
    %89 = tpu.matmul %86, %88, %cst_59 {dimension_numbers = #tpu.dot_dimension_numbers<[1], [0], [0], [1], [0, 0, 1, 1], [], []>} : vector<128x128xbf16>, vector<128x25xbf16>, vector<128x25xf32> -> vector<128x25xf32>
    %c1_60 = arith.constant 1 : index
    %c0_61 = arith.constant 0 : index
    %c0_62 = arith.constant 0 : index
    %90 = vector.load %arg8[%c1_60, %c0_61, %c0_62] : memref<4x128x25xbf16, #tpu.memory_space<vmem>>, vector<1x128x25xbf16>
    %91 = vector.shape_cast %90 : vector<1x128x25xbf16> to vector<128x25xbf16>
    %cst_63 = arith.constant dense<0.000000e+00> : vector<128x25xf32>
    %92 = tpu.matmul %86, %91, %cst_63 {dimension_numbers = #tpu.dot_dimension_numbers<[1], [0], [0], [1], [0, 0, 1, 1], [], []>} : vector<128x128xbf16>, vector<128x25xbf16>, vector<128x25xf32> -> vector<128x25xf32>
    %93 = arith.maximumf %89, %92 : vector<128x25xf32>
    %c2_64 = arith.constant 2 : index
    %c0_65 = arith.constant 0 : index
    %c0_66 = arith.constant 0 : index
    %94 = vector.load %arg8[%c2_64, %c0_65, %c0_66] : memref<4x128x25xbf16, #tpu.memory_space<vmem>>, vector<1x128x25xbf16>
    %95 = vector.shape_cast %94 : vector<1x128x25xbf16> to vector<128x25xbf16>
    %cst_67 = arith.constant dense<0.000000e+00> : vector<128x25xf32>
    %96 = tpu.matmul %86, %95, %cst_67 {dimension_numbers = #tpu.dot_dimension_numbers<[1], [0], [0], [1], [0, 0, 1, 1], [], []>} : vector<128x128xbf16>, vector<128x25xbf16>, vector<128x25xf32> -> vector<128x25xf32>
    %97 = arith.maximumf %93, %96 : vector<128x25xf32>
    %c3_68 = arith.constant 3 : index
    %c0_69 = arith.constant 0 : index
    %c0_70 = arith.constant 0 : index
    %98 = vector.load %arg8[%c3_68, %c0_69, %c0_70] : memref<4x128x25xbf16, #tpu.memory_space<vmem>>, vector<1x128x25xbf16>
    %99 = vector.shape_cast %98 : vector<1x128x25xbf16> to vector<128x25xbf16>
    %cst_71 = arith.constant dense<0.000000e+00> : vector<128x25xf32>
    %100 = tpu.matmul %86, %99, %cst_71 {dimension_numbers = #tpu.dot_dimension_numbers<[1], [0], [0], [1], [0, 0, 1, 1], [], []>} : vector<128x128xbf16>, vector<128x25xbf16>, vector<128x25xf32> -> vector<128x25xf32>
    %101 = arith.maximumf %97, %100 : vector<128x25xf32>
    %102 = arith.truncf %101 : vector<128x25xf32> to vector<128x25xbf16>
    %c0_72 = arith.constant 0 : index
    %c0_73 = arith.constant 0 : index
    %103 = vector.load %arg9[%c0_72, %c0_73] : memref<25x2048xbf16, #tpu.memory_space<vmem>>, vector<25x2048xbf16>
    %cst_74 = arith.constant dense<0.000000e+00> : vector<128x2048xf32>
    %104 = tpu.matmul %102, %103, %cst_74 {dimension_numbers = #tpu.dot_dimension_numbers<[1], [0], [0], [1], [0, 0, 1, 1], [], []>} : vector<128x25xbf16>, vector<25x2048xbf16>, vector<128x2048xf32> -> vector<128x2048xf32>
    %105 = vector.extract_strided_slice %104 {offsets = [0, 0], sizes = [8, 128], strides = [1, 1]} : vector<128x2048xf32> to vector<8x128xf32>
    %106 = vector.extract_strided_slice %104 {offsets = [8, 128], sizes = [8, 128], strides = [1, 1]} : vector<128x2048xf32> to vector<8x128xf32>
    %107 = arith.addf %105, %106 : vector<8x128xf32>
    %108 = vector.extract_strided_slice %104 {offsets = [16, 256], sizes = [8, 128], strides = [1, 1]} : vector<128x2048xf32> to vector<8x128xf32>
    %109 = arith.addf %107, %108 : vector<8x128xf32>
    %110 = vector.extract_strided_slice %104 {offsets = [24, 384], sizes = [8, 128], strides = [1, 1]} : vector<128x2048xf32> to vector<8x128xf32>
    %111 = arith.addf %109, %110 : vector<8x128xf32>
    %112 = vector.extract_strided_slice %104 {offsets = [32, 512], sizes = [8, 128], strides = [1, 1]} : vector<128x2048xf32> to vector<8x128xf32>
    %113 = arith.addf %111, %112 : vector<8x128xf32>
    %114 = vector.extract_strided_slice %104 {offsets = [40, 640], sizes = [8, 128], strides = [1, 1]} : vector<128x2048xf32> to vector<8x128xf32>
    %115 = arith.addf %113, %114 : vector<8x128xf32>
    %116 = vector.extract_strided_slice %104 {offsets = [48, 768], sizes = [8, 128], strides = [1, 1]} : vector<128x2048xf32> to vector<8x128xf32>
    %117 = arith.addf %115, %116 : vector<8x128xf32>
    %118 = vector.extract_strided_slice %104 {offsets = [56, 896], sizes = [8, 128], strides = [1, 1]} : vector<128x2048xf32> to vector<8x128xf32>
    %119 = arith.addf %117, %118 : vector<8x128xf32>
    %120 = vector.extract_strided_slice %104 {offsets = [64, 1024], sizes = [8, 128], strides = [1, 1]} : vector<128x2048xf32> to vector<8x128xf32>
    %121 = arith.addf %119, %120 : vector<8x128xf32>
    %122 = vector.extract_strided_slice %104 {offsets = [72, 1152], sizes = [8, 128], strides = [1, 1]} : vector<128x2048xf32> to vector<8x128xf32>
    %123 = arith.addf %121, %122 : vector<8x128xf32>
    %124 = vector.extract_strided_slice %104 {offsets = [80, 1280], sizes = [8, 128], strides = [1, 1]} : vector<128x2048xf32> to vector<8x128xf32>
    %125 = arith.addf %123, %124 : vector<8x128xf32>
    %126 = vector.extract_strided_slice %104 {offsets = [88, 1408], sizes = [8, 128], strides = [1, 1]} : vector<128x2048xf32> to vector<8x128xf32>
    %127 = arith.addf %125, %126 : vector<8x128xf32>
    %128 = vector.extract_strided_slice %104 {offsets = [96, 1536], sizes = [8, 128], strides = [1, 1]} : vector<128x2048xf32> to vector<8x128xf32>
    %129 = arith.addf %127, %128 : vector<8x128xf32>
    %130 = vector.extract_strided_slice %104 {offsets = [104, 1664], sizes = [8, 128], strides = [1, 1]} : vector<128x2048xf32> to vector<8x128xf32>
    %131 = arith.addf %129, %130 : vector<8x128xf32>
    %132 = vector.extract_strided_slice %104 {offsets = [112, 1792], sizes = [8, 128], strides = [1, 1]} : vector<128x2048xf32> to vector<8x128xf32>
    %133 = arith.addf %131, %132 : vector<8x128xf32>
    %134 = vector.extract_strided_slice %104 {offsets = [120, 1920], sizes = [8, 128], strides = [1, 1]} : vector<128x2048xf32> to vector<8x128xf32>
    %135 = arith.addf %133, %134 : vector<8x128xf32>
    %c0_75 = arith.constant 0 : index
    %c0_76 = arith.constant 0 : index
    %136 = vector.load %arg10[%c0_75, %c0_76] : memref<1x128xf32, #tpu.memory_space<vmem>>, vector<1x128xf32>
    %137 = vector.broadcast %136 : vector<1x128xf32> to vector<8x128xf32>
    %138 = arith.addf %135, %137 : vector<8x128xf32>
    %cst_77 = arith.constant 0.000000e+00 : f32
    %139 = vector.broadcast %cst_77 : f32 to vector<8x128xf32>
    %140 = arith.maximumf %138, %139 : vector<8x128xf32>
    %141 = arith.truncf %140 : vector<8x128xf32> to vector<8x128xbf16>
    %c0_78 = arith.constant 0 : index
    %c0_79 = arith.constant 0 : index
    %142 = vector.load %arg11[%c0_78, %c0_79] : memref<128x84xbf16, #tpu.memory_space<vmem>>, vector<128x84xbf16>
    %cst_80 = arith.constant dense<0.000000e+00> : vector<8x84xf32>
    %143 = tpu.matmul %141, %142, %cst_80 {dimension_numbers = #tpu.dot_dimension_numbers<[1], [0], [0], [1], [0, 0, 1, 1], [], []>} : vector<8x128xbf16>, vector<128x84xbf16>, vector<8x84xf32> -> vector<8x84xf32>
    %c0_81 = arith.constant 0 : index
    %c0_82 = arith.constant 0 : index
    %144 = vector.load %arg12[%c0_81, %c0_82] : memref<1x84xf32, #tpu.memory_space<vmem>>, vector<1x84xf32>
    %145 = vector.broadcast %144 : vector<1x84xf32> to vector<8x84xf32>
    %146 = arith.addf %143, %145 : vector<8x84xf32>
    %cst_83 = arith.constant 0.000000e+00 : f32
    %147 = vector.broadcast %cst_83 : f32 to vector<8x84xf32>
    %148 = arith.maximumf %146, %147 : vector<8x84xf32>
    %149 = arith.truncf %148 : vector<8x84xf32> to vector<8x84xbf16>
    %c0_84 = arith.constant 0 : index
    %c0_85 = arith.constant 0 : index
    %150 = vector.load %arg13[%c0_84, %c0_85] : memref<84x128xbf16, #tpu.memory_space<vmem>>, vector<84x128xbf16>
    %cst_86 = arith.constant dense<0.000000e+00> : vector<8x128xf32>
    %151 = tpu.matmul %149, %150, %cst_86 {dimension_numbers = #tpu.dot_dimension_numbers<[1], [0], [0], [1], [0, 0, 1, 1], [], []>} : vector<8x84xbf16>, vector<84x128xbf16>, vector<8x128xf32> -> vector<8x128xf32>
    %c0_87 = arith.constant 0 : index
    %c0_88 = arith.constant 0 : index
    %152 = vector.load %arg14[%c0_87, %c0_88] : memref<1x128xf32, #tpu.memory_space<vmem>>, vector<1x128xf32>
    %153 = vector.broadcast %152 : vector<1x128xf32> to vector<8x128xf32>
    %154 = arith.addf %151, %153 : vector<8x128xf32>
    %c0_89 = arith.constant 0 : index
    %c0_90 = arith.constant 0 : index
    %155 = vector.load %arg15[%c0_89, %c0_90] : memref<8x128xf32, #tpu.memory_space<vmem>>, vector<8x128xf32>
    tpu.vector_store %arg15[%c0_89, %c0_90], %154 {strides = array<i32>} : memref<8x128xf32, #tpu.memory_space<vmem>>, vector<8x128xf32>,
    return
  }
  func.func @transform_0(%arg0: i32) -> (i32, i32) {
    %c0_i32 = arith.constant 0 : i32
    %c0_i32_0 = arith.constant 0 : i32
    return %arg0, %c0_i32 : i32, i32
  }
  func.func @transform_1(%arg0: i32) -> (i32, i32) {
    %c0_i32 = arith.constant 0 : i32
    %c0_i32_0 = arith.constant 0 : i32
    %c0_i32_1 = arith.constant 0 : i32
    return %c0_i32, %c0_i32_0 : i32, i32
  }
  func.func @transform_2(%arg0: i32) -> (i32, i32) {
    %c0_i32 = arith.constant 0 : i32
    %c0_i32_0 = arith.constant 0 : i32
    %c0_i32_1 = arith.constant 0 : i32
    return %c0_i32, %c0_i32_0 : i32, i32
  }
  func.func @transform_3(%arg0: i32) -> (i32, i32, i32) {
    %c0_i32 = arith.constant 0 : i32
    %c0_i32_0 = arith.constant 0 : i32
    %c0_i32_1 = arith.constant 0 : i32
    %c0_i32_2 = arith.constant 0 : i32
    return %c0_i32, %c0_i32_0, %c0_i32_1 : i32, i32, i32
  }
  func.func @transform_4(%arg0: i32) -> (i32, i32) {
    %c0_i32 = arith.constant 0 : i32
    %c0_i32_0 = arith.constant 0 : i32
    %c0_i32_1 = arith.constant 0 : i32
    return %c0_i32, %c0_i32_0 : i32, i32
  }
  func.func @transform_5(%arg0: i32) -> (i32, i32) {
    %c0_i32 = arith.constant 0 : i32
    %c0_i32_0 = arith.constant 0 : i32
    %c0_i32_1 = arith.constant 0 : i32
    return %c0_i32, %c0_i32_0 : i32, i32
  }
  func.func @transform_6(%arg0: i32) -> (i32, i32) {
    %c0_i32 = arith.constant 0 : i32
    %c0_i32_0 = arith.constant 0 : i32
    %c0_i32_1 = arith.constant 0 : i32
    return %c0_i32, %c0_i32_0 : i32, i32
  }
  func.func @transform_7(%arg0: i32) -> (i32, i32, i32) {
    %c0_i32 = arith.constant 0 : i32
    %c0_i32_0 = arith.constant 0 : i32
    %c0_i32_1 = arith.constant 0 : i32
    %c0_i32_2 = arith.constant 0 : i32
    return %c0_i32, %c0_i32_0, %c0_i32_1 : i32, i32, i32
  }
  func.func @transform_8(%arg0: i32) -> (i32, i32) {
    %c0_i32 = arith.constant 0 : i32
    %c0_i32_0 = arith.constant 0 : i32
    %c0_i32_1 = arith.constant 0 : i32
    return %c0_i32, %c0_i32_0 : i32, i32
  }
  func.func @transform_9(%arg0: i32) -> (i32, i32) {
    %c0_i32 = arith.constant 0 : i32
    %c0_i32_0 = arith.constant 0 : i32
    %c0_i32_1 = arith.constant 0 : i32
    return %c0_i32, %c0_i32_0 : i32, i32
  }
  func.func @transform_10(%arg0: i32) -> (i32, i32) {
    %c0_i32 = arith.constant 0 : i32
    %c0_i32_0 = arith.constant 0 : i32
    %c0_i32_1 = arith.constant 0 : i32
    return %c0_i32, %c0_i32_0 : i32, i32
  }
  func.func @transform_11(%arg0: i32) -> (i32, i32) {
    %c0_i32 = arith.constant 0 : i32
    %c0_i32_0 = arith.constant 0 : i32
    %c0_i32_1 = arith.constant 0 : i32
    return %c0_i32, %c0_i32_0 : i32, i32
  }
  func.func @transform_12(%arg0: i32) -> (i32, i32) {
    %c0_i32 = arith.constant 0 : i32
    %c0_i32_0 = arith.constant 0 : i32
    %c0_i32_1 = arith.constant 0 : i32
    return %c0_i32, %c0_i32_0 : i32, i32
  }
  func.func @transform_13(%arg0: i32) -> (i32, i32) {
    %c0_i32 = arith.constant 0 : i32
    %c0_i32_0 = arith.constant 0 : i32
    %c0_i32_1 = arith.constant 0 : i32
    return %c0_i32, %c0_i32_0 : i32, i32
  }
  func.func @transform_14(%arg0: i32) -> (i32, i32) {
    %c0_i32 = arith.constant 0 : i32
    %c0_i32_0 = arith.constant 0 : i32
    return %arg0, %c0_i32 : i32, i32
  }
}

</mosaic_0001>

<llo_original>
// kernel: tpu_custom_call.1
$region0: #{tpu_custom_call.1}
  #allocation0 [shape = 'u32[]', space=smem, size = 0x4, offset = 0x4, fixed_abs, tag = 'smem constant byte address 0x4 - core index']
  #allocation1 [shape = 'u32[144,128]{1,0:T(1,128)}', space=vmem, size = 0x12000, scoped, tag = 'internal scratch']
  #allocation2 [shape = 'bf16[1200,128]{1,0:T(16,128)(2,1)}', space=vmem, size = 0x4b000, scoped, tag = 'scratch operand']
  %s0 = inlined_call_operand.vmem [shape: bf16[1200,784], index: 0, kind: input, shape index: {}]
  %s1 = inlined_call_operand.vmem [shape: bf16[48,600], index: 1, kind: input, shape index: {}]
  %s2 = inlined_call_operand.vmem [shape: f32[48,1], index: 2, kind: input, shape index: {}]
  %s3 = inlined_call_operand.vmem [shape: bf16[4,784,196], index: 3, kind: input, shape index: {}]
  %s4 = inlined_call_operand.vmem [shape: bf16[196,3200], index: 4, kind: input, shape index: {}]
  %s5 = inlined_call_operand.vmem [shape: bf16[128,1200], index: 5, kind: input, shape index: {}]
  %s6 = inlined_call_operand.vmem [shape: f32[128,1], index: 6, kind: input, shape index: {}]
  %s7 = inlined_call_operand.vmem [shape: bf16[4,128,25], index: 7, kind: input, shape index: {}]
  %s8 = inlined_call_operand.vmem [shape: bf16[25,2048], index: 8, kind: input, shape index: {}]
  %s9 = inlined_call_operand.vmem [shape: f32[1,128], index: 9, kind: input, shape index: {}]
  %s10 = inlined_call_operand.vmem [shape: bf16[128,84], index: 10, kind: input, shape index: {}]
  %s11 = inlined_call_operand.vmem [shape: f32[1,84], index: 11, kind: input, shape index: {}]
  %s12 = inlined_call_operand.vmem [shape: bf16[84,128], index: 12, kind: input, shape index: {}]
  %s13 = inlined_call_operand.vmem [shape: f32[1,128], index: 13, kind: input, shape index: {}]
  %s14 = inlined_call_operand.hbm [shape: f32[16,128], index: 14, kind: output, shape index: {}]
  %s15 = sld [smem:[#allocation0]]
  $region89: #{tpu_custom_call.1} parent=0
    _
  %s17 = ssub.s32 1, %s15
  %s18 = scalar_select 0, %s17, %s15
  $region1: #{tpu_custom_call.1} parent=0
    #allocation3 [shape = 'u8[8192]{0}', space=vmem, size = 0x2000, scoped, tag = 'output window, operand 0']
    #allocation4 [shape = 's32[2]{0}', space=sflag, size = 0x8, scoped, tag = 'scoped memory for tpu_custom_call.1']
    %19 = vsyncpa [#allocation4], 0
    %s20 = scalar_lea.sflag [#allocation4], 1
    %21 = vsyncpa %s20, 0
    loop: start=0, step=1, limit=4
    $region2: #{tpu_custom_call.1} parent=1 // loop_pre_header
      _
    $region3: #{tpu_custom_call.1} parent=1 // loop_header
      %s23 = sphi 0, %s27
      %p24 = scmp.ge.s32.totalorder %s23, 4
      %s33 = sphi 0, %s35
      %s36 = sphi 0, %s33
      %s37 = sphi 0, %s36
      %s53 = sphi 0, %s37
      %s57 = sphi 0, %s57
      %s59 = sphi 0, %s57
      %s60 = sphi 0, %s59
      %s74 = sphi 0, %s60
      %s78 = sphi 0, %s78
      %s80 = sphi 0, %s78
      %s81 = sphi 0, %s80
      %s95 = sphi 0, %s81
      %s99 = sphi 0, %s99
      %s101 = sphi 0, %s99
      %s102 = sphi 0, %s101
      %s116 = sphi 0, %s102
      %s120 = sphi 0, %s120
      %s122 = sphi 0, %s120
      %s123 = sphi 0, %s122
      %s137 = sphi 0, %s123
      %s141 = sphi 0, %s141
      %s143 = sphi 0, %s141
      %s144 = sphi 0, %s143
      %s158 = sphi 0, %s144
      %s162 = sphi 0, %s162
      %s164 = sphi 0, %s162
      %s165 = sphi 0, %s164
      %s179 = sphi 0, %s165
      %s183 = sphi 0, %s183
      %s185 = sphi 0, %s183
      %s186 = sphi 0, %s185
      %s200 = sphi 0, %s186
      %s204 = sphi 0, %s204
      %s206 = sphi 0, %s204
      %s207 = sphi 0, %s206
      %s221 = sphi 0, %s207
      %s225 = sphi 0, %s225
      %s227 = sphi 0, %s225
      %s228 = sphi 0, %s227
      %s242 = sphi 0, %s228
      %s246 = sphi 0, %s246
      %s248 = sphi 0, %s246
      %s249 = sphi 0, %s248
      %s263 = sphi 0, %s249
      %s267 = sphi 0, %s267
      %s269 = sphi 0, %s267
      %s270 = sphi 0, %s269
      %s284 = sphi 0, %s270
      %s288 = sphi 0, %s288
      %s290 = sphi 0, %s288
      %s291 = sphi 0, %s290
      %s305 = sphi 0, %s291
      %s309 = sphi 0, %s309
      %s311 = sphi 0, %s309
      %s312 = sphi 0, %s311
      %s326 = sphi 0, %s312
      %s332 = sphi 0, %s334
      %s335 = sphi 0, %s332
      %s336 = sphi 0, %s335
      %s352 = sphi 0, %s336
    $region4: #{tpu_custom_call.1} parent=1 // loop_header_branch
      %26 = sbr.rel (%p24) target = $region8
    $region5: #{tpu_custom_call.1} parent=1 // loop_body
      %s28 = ssub.s32 %s23, 1
      %s29 = ssub.s32 %s23, 2
      %s30 = sadd.s32 %s23, 1
      %s31 = ssub.s32 %s23, %s30
      %p32 = scmp.eq.s32.totalorder %s31, 0
      %s34 = sadd.s32 %s33, 1
      %s35 = scalar_select %p32, %s33, %s34
      %p38 = pneg %p32
      %p39 = scmp.eq.s32.totalorder %s23, 1
      %p40 = por %p38, %p39
      %p41 = scmp.ne.s32.totalorder %s33, %s36
      %p42 = scmp.eq.s32.totalorder %s23, 0
      %p43 = por %p41, %p42
      %p44 = scmp.ne.s32.totalorder %s33, %s36
      %p45 = scmp.eq.s32.totalorder %s28, 1
      %p46 = por %p44, %p45
      %p47 = scmp.ne.s32.totalorder %s36, %s37
      %p48 = scmp.eq.s32.totalorder %s28, 0
      %p49 = por %p47, %p48
      %p50 = scmp.ne.s32.totalorder %s36, %s37
      %p51 = scmp.eq.s32.totalorder %s29, 1
      %p52 = por %p50, %p51
      %p54 = scmp.ne.s32.totalorder %s37, %s53
      %p55 = scmp.eq.s32.totalorder %s29, 0
      %p56 = por %p54, %p55
      %s58 = sadd.s32 %s57, 1
      %p61 = scmp.eq.s32.totalorder %s23, 1
      %p62 = scmp.ne.s32.totalorder %s57, %s59
      %p63 = scmp.eq.s32.totalorder %s23, 0
      %p64 = por %p62, %p63
      %p65 = scmp.ne.s32.totalorder %s57, %s59
      %p66 = scmp.eq.s32.totalorder %s28, 1
      %p67 = por %p65, %p66
      %p68 = scmp.ne.s32.totalorder %s59, %s60
      %p69 = scmp.eq.s32.totalorder %s28, 0
      %p70 = por %p68, %p69
      %p71 = scmp.ne.s32.totalorder %s59, %s60
      %p72 = scmp.eq.s32.totalorder %s29, 1
      %p73 = por %p71, %p72
      %p75 = scmp.ne.s32.totalorder %s60, %s74
      %p76 = scmp.eq.s32.totalorder %s29, 0
      %p77 = por %p75, %p76
      %s79 = sadd.s32 %s78, 1
      %p82 = scmp.eq.s32.totalorder %s23, 1
      %p83 = scmp.ne.s32.totalorder %s78, %s80
      %p84 = scmp.eq.s32.totalorder %s23, 0
      %p85 = por %p83, %p84
      %p86 = scmp.ne.s32.totalorder %s78, %s80
      %p87 = scmp.eq.s32.totalorder %s28, 1
      %p88 = por %p86, %p87
      %p89 = scmp.ne.s32.totalorder %s80, %s81
      %p90 = scmp.eq.s32.totalorder %s28, 0
      %p91 = por %p89, %p90
      %p92 = scmp.ne.s32.totalorder %s80, %s81
      %p93 = scmp.eq.s32.totalorder %s29, 1
      %p94 = por %p92, %p93
      %p96 = scmp.ne.s32.totalorder %s81, %s95
      %p97 = scmp.eq.s32.totalorder %s29, 0
      %p98 = por %p96, %p97
      %s100 = sadd.s32 %s99, 1
      %p103 = scmp.eq.s32.totalorder %s23, 1
      %p104 = scmp.ne.s32.totalorder %s99, %s101
      %p105 = scmp.eq.s32.totalorder %s23, 0
      %p106 = por %p104, %p105
      %p107 = scmp.ne.s32.totalorder %s99, %s101
      %p108 = scmp.eq.s32.totalorder %s28, 1
      %p109 = por %p107, %p108
      %p110 = scmp.ne.s32.totalorder %s101, %s102
      %p111 = scmp.eq.s32.totalorder %s28, 0
      %p112 = por %p110, %p111
      %p113 = scmp.ne.s32.totalorder %s101, %s102
      %p114 = scmp.eq.s32.totalorder %s29, 1
      %p115 = por %p113, %p114
      %p117 = scmp.ne.s32.totalorder %s102, %s116
      %p118 = scmp.eq.s32.totalorder %s29, 0
      %p119 = por %p117, %p118
      %s121 = sadd.s32 %s120, 1
      %p124 = scmp.eq.s32.totalorder %s23, 1
      %p125 = scmp.ne.s32.totalorder %s120, %s122
      %p126 = scmp.eq.s32.totalorder %s23, 0
      %p127 = por %p125, %p126
      %p128 = scmp.ne.s32.totalorder %s120, %s122
      %p129 = scmp.eq.s32.totalorder %s28, 1
      %p130 = por %p128, %p129
      %p131 = scmp.ne.s32.totalorder %s122, %s123
      %p132 = scmp.eq.s32.totalorder %s28, 0
      %p133 = por %p131, %p132
      %p134 = scmp.ne.s32.totalorder %s122, %s123
      %p135 = scmp.eq.s32.totalorder %s29, 1
      %p136 = por %p134, %p135
      %p138 = scmp.ne.s32.totalorder %s123, %s137
      %p139 = scmp.eq.s32.totalorder %s29, 0
      %p140 = por %p138, %p139
      %s142 = sadd.s32 %s141, 1
      %p145 = scmp.eq.s32.totalorder %s23, 1
      %p146 = scmp.ne.s32.totalorder %s141, %s143
      %p147 = scmp.eq.s32.totalorder %s23, 0
      %p148 = por %p146, %p147
      %p149 = scmp.ne.s32.totalorder %s141, %s143
      %p150 = scmp.eq.s32.totalorder %s28, 1
      %p151 = por %p149, %p150
      %p152 = scmp.ne.s32.totalorder %s143, %s144
      %p153 = scmp.eq.s32.totalorder %s28, 0
      %p154 = por %p152, %p153
      %p155 = scmp.ne.s32.totalorder %s143, %s144
      %p156 = scmp.eq.s32.totalorder %s29, 1
      %p157 = por %p155, %p156
      %p159 = scmp.ne.s32.totalorder %s144, %s158
      %p160 = scmp.eq.s32.totalorder %s29, 0
      %p161 = por %p159, %p160
      %s163 = sadd.s32 %s162, 1
      %p166 = scmp.eq.s32.totalorder %s23, 1
      %p167 = scmp.ne.s32.totalorder %s162, %s164
      %p168 = scmp.eq.s32.totalorder %s23, 0
      %p169 = por %p167, %p168
      %p170 = scmp.ne.s32.totalorder %s162, %s164
      %p171 = scmp.eq.s32.totalorder %s28, 1
      %p172 = por %p170, %p171
      %p173 = scmp.ne.s32.totalorder %s164, %s165
      %p174 = scmp.eq.s32.totalorder %s28, 0
      %p175 = por %p173, %p174
      %p176 = scmp.ne.s32.totalorder %s164, %s165
      %p177 = scmp.eq.s32.totalorder %s29, 1
      %p178 = por %p176, %p177
      %p180 = scmp.ne.s32.totalorder %s165, %s179
      %p181 = scmp.eq.s32.totalorder %s29, 0
      %p182 = por %p180, %p181
      %s184 = sadd.s32 %s183, 1
      %p187 = scmp.eq.s32.totalorder %s23, 1
      %p188 = scmp.ne.s32.totalorder %s183, %s185
      %p189 = scmp.eq.s32.totalorder %s23, 0
      %p190 = por %p188, %p189
      %p191 = scmp.ne.s32.totalorder %s183, %s185
      %p192 = scmp.eq.s32.totalorder %s28, 1
      %p193 = por %p191, %p192
      %p194 = scmp.ne.s32.totalorder %s185, %s186
      %p195 = scmp.eq.s32.totalorder %s28, 0
      %p196 = por %p194, %p195
      %p197 = scmp.ne.s32.totalorder %s185, %s186
      %p198 = scmp.eq.s32.totalorder %s29, 1
      %p199 = por %p197, %p198
      %p201 = scmp.ne.s32.totalorder %s186, %s200
      %p202 = scmp.eq.s32.totalorder %s29, 0
      %p203 = por %p201, %p202
      %s205 = sadd.s32 %s204, 1
      %p208 = scmp.eq.s32.totalorder %s23, 1
      %p209 = scmp.ne.s32.totalorder %s204, %s206
      %p210 = scmp.eq.s32.totalorder %s23, 0
      %p211 = por %p209, %p210
      %p212 = scmp.ne.s32.totalorder %s204, %s206
      %p213 = scmp.eq.s32.totalorder %s28, 1
      %p214 = por %p212, %p213
      %p215 = scmp.ne.s32.totalorder %s206, %s207
      %p216 = scmp.eq.s32.totalorder %s28, 0
      %p217 = por %p215, %p216
      %p218 = scmp.ne.s32.totalorder %s206, %s207
      %p219 = scmp.eq.s32.totalorder %s29, 1
      %p220 = por %p218, %p219
      %p222 = scmp.ne.s32.totalorder %s207, %s221
      %p223 = scmp.eq.s32.totalorder %s29, 0
      %p224 = por %p222, %p223
      %s226 = sadd.s32 %s225, 1
      %p229 = scmp.eq.s32.totalorder %s23, 1
      %p230 = scmp.ne.s32.totalorder %s225, %s227
      %p231 = scmp.eq.s32.totalorder %s23, 0
      %p232 = por %p230, %p231
      %p233 = scmp.ne.s32.totalorder %s225, %s227
      %p234 = scmp.eq.s32.totalorder %s28, 1
      %p235 = por %p233, %p234
      %p236 = scmp.ne.s32.totalorder %s227, %s228
      %p237 = scmp.eq.s32.totalorder %s28, 0
      %p238 = por %p236, %p237
      %p239 = scmp.ne.s32.totalorder %s227, %s228
      %p240 = scmp.eq.s32.totalorder %s29, 1
      %p241 = por %p239, %p240
      %p243 = scmp.ne.s32.totalorder %s228, %s242
      %p244 = scmp.eq.s32.totalorder %s29, 0
      %p245 = por %p243, %p244
      %s247 = sadd.s32 %s246, 1
      %p250 = scmp.eq.s32.totalorder %s23, 1
      %p251 = scmp.ne.s32.totalorder %s246, %s248
      %p252 = scmp.eq.s32.totalorder %s23, 0
      %p253 = por %p251, %p252
      %p254 = scmp.ne.s32.totalorder %s246, %s248
      %p255 = scmp.eq.s32.totalorder %s28, 1
      %p256 = por %p254, %p255
      %p257 = scmp.ne.s32.totalorder %s248, %s249
      %p258 = scmp.eq.s32.totalorder %s28, 0
      %p259 = por %p257, %p258
      %p260 = scmp.ne.s32.totalorder %s248, %s249
      %p261 = scmp.eq.s32.totalorder %s29, 1
      %p262 = por %p260, %p261
      %p264 = scmp.ne.s32.totalorder %s249, %s263
      %p265 = scmp.eq.s32.totalorder %s29, 0
      %p266 = por %p264, %p265
      %s268 = sadd.s32 %s267, 1
      %p271 = scmp.eq.s32.totalorder %s23, 1
      %p272 = scmp.ne.s32.totalorder %s267, %s269
      %p273 = scmp.eq.s32.totalorder %s23, 0
      %p274 = por %p272, %p273
      %p275 = scmp.ne.s32.totalorder %s267, %s269
      %p276 = scmp.eq.s32.totalorder %s28, 1
      %p277 = por %p275, %p276
      %p278 = scmp.ne.s32.totalorder %s269, %s270
      %p279 = scmp.eq.s32.totalorder %s28, 0
      %p280 = por %p278, %p279
      %p281 = scmp.ne.s32.totalorder %s269, %s270
      %p282 = scmp.eq.s32.totalorder %s29, 1
      %p283 = por %p281, %p282
      %p285 = scmp.ne.s32.totalorder %s270, %s284
      %p286 = scmp.eq.s32.totalorder %s29, 0
      %p287 = por %p285, %p286
      %s289 = sadd.s32 %s288, 1
      %p292 = scmp.eq.s32.totalorder %s23, 1
      %p293 = scmp.ne.s32.totalorder %s288, %s290
      %p294 = scmp.eq.s32.totalorder %s23, 0
      %p295 = por %p293, %p294
      %p296 = scmp.ne.s32.totalorder %s288, %s290
      %p297 = scmp.eq.s32.totalorder %s28, 1
      %p298 = por %p296, %p297
      %p299 = scmp.ne.s32.totalorder %s290, %s291
      %p300 = scmp.eq.s32.totalorder %s28, 0
      %p301 = por %p299, %p300
      %p302 = scmp.ne.s32.totalorder %s290, %s291
      %p303 = scmp.eq.s32.totalorder %s29, 1
      %p304 = por %p302, %p303
      %p306 = scmp.ne.s32.totalorder %s291, %s305
      %p307 = scmp.eq.s32.totalorder %s29, 0
      %p308 = por %p306, %p307
      %s310 = sadd.s32 %s309, 1
      %p313 = scmp.eq.s32.totalorder %s23, 1
      %p314 = scmp.ne.s32.totalorder %s309, %s311
      %p315 = scmp.eq.s32.totalorder %s23, 0
      %p316 = por %p314, %p315
      %p317 = scmp.ne.s32.totalorder %s309, %s311
      %p318 = scmp.eq.s32.totalorder %s28, 1
      %p319 = por %p317, %p318
      %p320 = scmp.ne.s32.totalorder %s311, %s312
      %p321 = scmp.eq.s32.totalorder %s28, 0
      %p322 = por %p320, %p321
      %p323 = scmp.ne.s32.totalorder %s311, %s312
      %p324 = scmp.eq.s32.totalorder %s29, 1
      %p325 = por %p323, %p324
      %p327 = scmp.ne.s32.totalorder %s312, %s326
      %p328 = scmp.eq.s32.totalorder %s29, 0
      %p329 = por %p327, %p328
      %s330 = ssub.s32 %s23, %s30
      %p331 = scmp.eq.s32.totalorder %s330, 0
      %s333 = sadd.s32 %s332, 1
      %s334 = scalar_select %p331, %s332, %s333
      %p337 = pneg %p331
      %p338 = scmp.eq.s32.totalorder %s23, 1
      %p339 = por %p337, %p338
      %p340 = scmp.ne.s32.totalorder %s332, %s335
      %p341 = scmp.eq.s32.totalorder %s23, 0
      %p342 = por %p340, %p341
      %p343 = scmp.ne.s32.totalorder %s332, %s335
      %p344 = scmp.eq.s32.totalorder %s28, 1
      %p345 = por %p343, %p344
      %p346 = scmp.ne.s32.totalorder %s335, %s336
      %p347 = scmp.eq.s32.totalorder %s28, 0
      %p348 = por %p346, %p347
      %p349 = scmp.ne.s32.totalorder %s335, %s336
      %p350 = scmp.eq.s32.totalorder %s29, 1
      %p351 = por %p349, %p350
      %p353 = scmp.ne.s32.totalorder %s336, %s352
      %p354 = scmp.eq.s32.totalorder %s29, 0
      %p355 = por %p353, %p354
      %p356 = scmp.le.s32.totalorder 1, %s23
      %p357 = scmp.lt.s32.totalorder %s23, 3
      %p358 = pnand %p356, %p357
      %p359 = pneg %p358
      // Predicated region
      $region9: #{tpu_custom_call.1} parent=5 // pred_check
        _
      $region10: #{tpu_custom_call.1} parent=5 // pred_check_branch
        %361 = sbr.rel (%p358) target = $region12
      $region11: #{tpu_custom_call.1} parent=5 // pred_region
        %s362 = ssub.s32 %s23, 1
        // Predicated region
        $region13: #{tpu_custom_call.1} parent=11 // pred_check
          %p363 = pneg %p70
        $region14: #{tpu_custom_call.1} parent=11 // pred_check_branch
          %365 = sbr.rel (%p363) target = $region16
        $region15: #{tpu_custom_call.1} parent=11 // pred_region
          _
        $region16: #{tpu_custom_call.1} parent=11 // pred_fallthru
          _
        // Predicated region
        $region17: #{tpu_custom_call.1} parent=11 // pred_check
          %p366 = pneg %p91
        $region18: #{tpu_custom_call.1} parent=11 // pred_check_branch
          %368 = sbr.rel (%p366) target = $region20
        $region19: #{tpu_custom_call.1} parent=11 // pred_region
          _
        $region20: #{tpu_custom_call.1} parent=11 // pred_fallthru
          _
        // Predicated region
        $region21: #{tpu_custom_call.1} parent=11 // pred_check
          %p369 = pneg %p112
        $region22: #{tpu_custom_call.1} parent=11 // pred_check_branch
          %371 = sbr.rel (%p369) target = $region24
        $region23: #{tpu_custom_call.1} parent=11 // pred_region
          _
        $region24: #{tpu_custom_call.1} parent=11 // pred_fallthru
          _
        // Predicated region
        $region25: #{tpu_custom_call.1} parent=11 // pred_check
          %p372 = pneg %p133
        $region26: #{tpu_custom_call.1} parent=11 // pred_check_branch
          %374 = sbr.rel (%p372) target = $region28
        $region27: #{tpu_custom_call.1} parent=11 // pred_region
          _
        $region28: #{tpu_custom_call.1} parent=11 // pred_fallthru
          _
        // Predicated region
        $region29: #{tpu_custom_call.1} parent=11 // pred_check
          %p375 = pneg %p154
        $region30: #{tpu_custom_call.1} parent=11 // pred_check_branch
          %377 = sbr.rel (%p375) target = $region32
        $region31: #{tpu_custom_call.1} parent=11 // pred_region
          _
        $region32: #{tpu_custom_call.1} parent=11 // pred_fallthru
          _
        // Predicated region
        $region33: #{tpu_custom_call.1} parent=11 // pred_check
          %p378 = pneg %p175
        $region34: #{tpu_custom_call.1} parent=11 // pred_check_branch
          %380 = sbr.rel (%p378) target = $region36
        $region35: #{tpu_custom_call.1} parent=11 // pred_region
          _
        $region36: #{tpu_custom_call.1} parent=11 // pred_fallthru
          _
        // Predicated region
        $region37: #{tpu_custom_call.1} parent=11 // pred_check
          %p381 = pneg %p196
        $region38: #{tpu_custom_call.1} parent=11 // pred_check_branch
          %383 = sbr.rel (%p381) target = $region40
        $region39: #{tpu_custom_call.1} parent=11 // pred_region
          _
        $region40: #{tpu_custom_call.1} parent=11 // pred_fallthru
          _
        // Predicated region
        $region41: #{tpu_custom_call.1} parent=11 // pred_check
          %p384 = pneg %p217
        $region42: #{tpu_custom_call.1} parent=11 // pred_check_branch
          %386 = sbr.rel (%p384) target = $region44
        $region43: #{tpu_custom_call.1} parent=11 // pred_region
          _
        $region44: #{tpu_custom_call.1} parent=11 // pred_fallthru
          _
        // Predicated region
        $region45: #{tpu_custom_call.1} parent=11 // pred_check
          %p387 = pneg %p238
        $region46: #{tpu_custom_call.1} parent=11 // pred_check_branch
          %389 = sbr.rel (%p387) target = $region48
        $region47: #{tpu_custom_call.1} parent=11 // pred_region
          _
        $region48: #{tpu_custom_call.1} parent=11 // pred_fallthru
          _
        // Predicated region
        $region49: #{tpu_custom_call.1} parent=11 // pred_check
          %p390 = pneg %p259
        $region50: #{tpu_custom_call.1} parent=11 // pred_check_branch
          %392 = sbr.rel (%p390) target = $region52
        $region51: #{tpu_custom_call.1} parent=11 // pred_region
          _
        $region52: #{tpu_custom_call.1} parent=11 // pred_fallthru
          _
        // Predicated region
        $region53: #{tpu_custom_call.1} parent=11 // pred_check
          %p393 = pneg %p280
        $region54: #{tpu_custom_call.1} parent=11 // pred_check_branch
          %395 = sbr.rel (%p393) target = $region56
        $region55: #{tpu_custom_call.1} parent=11 // pred_region
          _
        $region56: #{tpu_custom_call.1} parent=11 // pred_fallthru
          _
        // Predicated region
        $region57: #{tpu_custom_call.1} parent=11 // pred_check
          %p396 = pneg %p301
        $region58: #{tpu_custom_call.1} parent=11 // pred_check_branch
          %398 = sbr.rel (%p396) target = $region60
        $region59: #{tpu_custom_call.1} parent=11 // pred_region
          _
        $region60: #{tpu_custom_call.1} parent=11 // pred_fallthru
          _
        // Predicated region
        $region61: #{tpu_custom_call.1} parent=11 // pred_check
          %p399 = pneg %p322
        $region62: #{tpu_custom_call.1} parent=11 // pred_check_branch
          %401 = sbr.rel (%p399) target = $region64
        $region63: #{tpu_custom_call.1} parent=11 // pred_region
          _
        $region64: #{tpu_custom_call.1} parent=11 // pred_fallthru
          _
      $region12: #{tpu_custom_call.1} parent=5 // pred_fallthru
        _
      %p402 = scmp.lt.s32.totalorder %s23, 2
      // Predicated region
      $region65: #{tpu_custom_call.1} parent=5 // pred_check
        %p403 = pneg %p402
      $region66: #{tpu_custom_call.1} parent=5 // pred_check_branch
        %405 = sbr.rel (%p403) target = $region68
      $region67: #{tpu_custom_call.1} parent=5 // pred_region
        // Predicated region
        $region69: #{tpu_custom_call.1} parent=67 // pred_check
          %p406 = pneg %p43
        $region70: #{tpu_custom_call.1} parent=67 // pred_check_branch
          %408 = sbr.rel (%p406) target = $region72
        $region71: #{tpu_custom_call.1} parent=67 // pred_region
          %s409 = smul.u32 75, %s23
          %p410 = scmp.lt.s32.totalorder %s409, 149
          %s411 = scalar_select %p410, %s409, 149
          %s412 = smul.addr %s411, 7
          %s413 = smul.addr %s412, 4
          %s414 = scalar_lea.vmem %s0, %s413
          %s415 = smul.u32 75, %s23
        $region72: #{tpu_custom_call.1} parent=67 // pred_fallthru
          _
      $region68: #{tpu_custom_call.1} parent=5 // pred_fallthru
        _
      %p416 = scmp.le.s32.totalorder 1, %s23
      %p417 = scmp.lt.s32.totalorder %s23, 3
      %p418 = pnand %p416, %p417
      %p419 = pneg %p418
      // Predicated region
      $region73: #{tpu_custom_call.1} parent=5 // pred_check
        _
      $region74: #{tpu_custom_call.1} parent=5 // pred_check_branch
        %421 = sbr.rel (%p418) target = $region76
      $region75: #{tpu_custom_call.1} parent=5 // pred_region
        %s422 = ssub.s32 %s23, 1
        %s423 = smul.u32 75, %s28
        %p424 = scmp.lt.s32.totalorder %s423, 149
        %s425 = scalar_select %p424, %s423, 149
        %s426 = smul.addr %s425, 7
        %s427 = smul.addr %s426, 4
        %s428 = scalar_lea.vmem %s0, %s427
        %p429 = pneg %p49
        %p430 = pneg %p46
        %p431 = pneg %p70
        %p432 = pneg %p67
        %p433 = pneg %p91
        %p434 = pneg %p88
        %p435 = pneg %p112
        %p436 = pneg %p109
        %p437 = pneg %p133
        %p438 = pneg %p130
        %p439 = pneg %p154
        %p440 = pneg %p151
        %p441 = pneg %p175
        %p442 = pneg %p172
        %p443 = pneg %p196
        %p444 = pneg %p193
        %p445 = pneg %p217
        %p446 = pneg %p214
        %p447 = pneg %p238
        %p448 = pneg %p235
        %p449 = pneg %p259
        %p450 = pneg %p256
        %p451 = pneg %p280
        %p452 = pneg %p277
        %p453 = pneg %p301
        %p454 = pneg %p298
        %p455 = pneg %p322
        %p456 = pneg %p319
        %p457 = pneg %p348
        %p458 = pneg %p345
        %s459 = sand.u32 %s335, 1
        %s460 = scalar_lea.sflag [#allocation4], %s459
        %s461 = sand.u32 %s335, 1
        %s462 = smul.addr %s461, 8
        %s463 = scalar_lea.vmem [#allocation3], %s462
        %s464 = smul.u32 75, %s28
        %p465 = scmp.lt.s32.totalorder %s464, 149
        %s466 = scalar_select %p465, %s464, 149
        %s467 = smul.addr %s466, 7
        %s468 = smul.addr %s467, 4
        %s469 = scalar_lea.vmem %s0, %s468
        %s470 = smul.u32 75, %s28
        %v472 = vld [vmem:[%s1] sm:$0xff]
        %v473 = vld [vmem:[%s1 + $0x8] sm:$0xff]
        %v474 = vld [vmem:[%s1 + $0x10] sm:$0xf]
        %v475 = vld [vmem:[%s1 + $0x14] sm:$0xff]
        %v476 = vld [vmem:[%s1 + $0x1c] sm:$0xff]
        %v477 = vld [vmem:[%s1 + $0x24] sm:$0xf]
        %v478 = vld [vmem:[%s1 + $0x28] sm:$0xff]
        %v479 = vld [vmem:[%s1 + $0x30] sm:$0xff]
        %v480 = vld [vmem:[%s1 + $0x38] sm:$0xf]
        %v481 = vld [vmem:[%s1 + $0x3c] sm:$0xff]
        %v482 = vld [vmem:[%s1 + $0x44] sm:$0xff]
        %v483 = vld [vmem:[%s1 + $0x4c] sm:$0xf]
        %v484 = vld [vmem:[%s1 + $0x50] sm:$0xff]
        %v485 = vld [vmem:[%s1 + $0x58] sm:$0xff]
        %v486 = vld [vmem:[%s1 + $0x60] sm:$0xf]
        %v487 = vld [vmem:[%s1 + $0x64] sm:$0xff]
        %v488 = vld [vmem:[%s1 + $0x6c] sm:$0xff]
        %v489 = vld [vmem:[%s1 + $0x74] sm:$0xf]
        %v490 = vld [vmem:[%s469] sm:$0xff]
        %v491 = vld [vmem:[%s469 + $0x8] sm:$0xff]
        %v492 = vld [vmem:[%s469 + $0x10] sm:$0xff]
        %v493 = vld [vmem:[%s469 + $0x18] sm:$0xf]
        %v494 = vld [vmem:[%s469 + $0x1c] sm:$0xff]
        %v495 = vld [vmem:[%s469 + $0x24] sm:$0xff]
        %v496 = vld [vmem:[%s469 + $0x2c] sm:$0xff]
        %v497 = vld [vmem:[%s469 + $0x34] sm:$0xf]
        %v498 = vld [vmem:[%s469 + $0x38] sm:$0xff]
        %v499 = vld [vmem:[%s469 + $0x40] sm:$0xff]
        %v500 = vld [vmem:[%s469 + $0x48] sm:$0xff]
        %v501 = vld [vmem:[%s469 + $0x50] sm:$0xf]
        %v502 = vld [vmem:[%s469 + $0x54] sm:$0xff]
        %v503 = vld [vmem:[%s469 + $0x5c] sm:$0xff]
        %v504 = vld [vmem:[%s469 + $0x64] sm:$0xff]
        %v505 = vld [vmem:[%s469 + $0x6c] sm:$0xf]
        %v506 = vld [vmem:[%s469 + $0x70] sm:$0xff]
        %v507 = vld [vmem:[%s469 + $0x78] sm:$0xff]
        %v508 = vld [vmem:[%s469 + $0x80] sm:$0xff]
        %v509 = vld [vmem:[%s469 + $0x88] sm:$0xf]
        %v510 = vld [vmem:[%s469 + $0x8c] sm:$0xff]
        %v511 = vld [vmem:[%s469 + $0x94] sm:$0xff]
        %v512 = vld [vmem:[%s469 + $0x9c] sm:$0xff]
        %v513 = vld [vmem:[%s469 + $0xa4] sm:$0xf]
        %v514 = vld [vmem:[%s469 + $0xa8] sm:$0xff]
        %v515 = vld [vmem:[%s469 + $0xb0] sm:$0xff]
        %v516 = vld [vmem:[%s469 + $0xb8] sm:$0xff]
        %v517 = vld [vmem:[%s469 + $0xc0] sm:$0xf]
        %v518 = vld [vmem:[%s469 + $0xc4] sm:$0xff]
        %v519 = vld [vmem:[%s469 + $0xcc] sm:$0xff]
        %v520 = vld [vmem:[%s469 + $0xd4] sm:$0xff]
        %v521 = vld [vmem:[%s469 + $0xdc] sm:$0xf]
        %v522 = vld [vmem:[%s469 + $0xe0] sm:$0xff]
        %v523 = vld [vmem:[%s469 + $0xe8] sm:$0xff]
        %v524 = vld [vmem:[%s469 + $0xf0] sm:$0xff]
        %v525 = vld [vmem:[%s469 + $0xf8] sm:$0xf]
        %v526 = vld [vmem:[%s469 + $0xfc] sm:$0xff]
        %v527 = vld [vmem:[%s469 + $0x104] sm:$0xff]
        %v528 = vld [vmem:[%s469 + $0x10c] sm:$0xff]
        %v529 = vld [vmem:[%s469 + $0x114] sm:$0xf]
        %v530 = vld [vmem:[%s469 + $0x118] sm:$0xff]
        %v531 = vld [vmem:[%s469 + $0x120] sm:$0xff]
        %v532 = vld [vmem:[%s469 + $0x128] sm:$0xff]
        %v533 = vld [vmem:[%s469 + $0x130] sm:$0xf]
        %v534 = vld [vmem:[%s469 + $0x134] sm:$0xff]
        %v535 = vld [vmem:[%s469 + $0x13c] sm:$0xff]
        %v536 = vld [vmem:[%s469 + $0x144] sm:$0xff]
        %v537 = vld [vmem:[%s469 + $0x14c] sm:$0xf]
        %v538 = vld [vmem:[%s469 + $0x150] sm:$0xff]
        %v539 = vld [vmem:[%s469 + $0x158] sm:$0xff]
        %v540 = vld [vmem:[%s469 + $0x160] sm:$0xff]
        %v541 = vld [vmem:[%s469 + $0x168] sm:$0xf]
        %v542 = vld [vmem:[%s469 + $0x16c] sm:$0xff]
        %v543 = vld [vmem:[%s469 + $0x174] sm:$0xff]
        %v544 = vld [vmem:[%s469 + $0x17c] sm:$0xff]
        %v545 = vld [vmem:[%s469 + $0x184] sm:$0xf]
        %v546 = vld [vmem:[%s469 + $0x188] sm:$0xff]
        %v547 = vld [vmem:[%s469 + $0x190] sm:$0xff]
        %v548 = vld [vmem:[%s469 + $0x198] sm:$0xff]
        %v549 = vld [vmem:[%s469 + $0x1a0] sm:$0xf]
        %v550 = vld [vmem:[%s469 + $0x1a4] sm:$0xff]
        %v551 = vld [vmem:[%s469 + $0x1ac] sm:$0xff]
        %v552 = vld [vmem:[%s469 + $0x1b4] sm:$0xff]
        %v553 = vld [vmem:[%s469 + $0x1bc] sm:$0xf]
        %v554 = vld [vmem:[%s469 + $0x1c0] sm:$0xff]
        %v555 = vld [vmem:[%s469 + $0x1c8] sm:$0xff]
        %v556 = vld [vmem:[%s469 + $0x1d0] sm:$0xff]
        %v557 = vld [vmem:[%s469 + $0x1d8] sm:$0xf]
        %v558 = vld [vmem:[%s469 + $0x1dc] sm:$0xff]
        %v559 = vld [vmem:[%s469 + $0x1e4] sm:$0xff]
        %v560 = vld [vmem:[%s469 + $0x1ec] sm:$0xff]
        %v561 = vld [vmem:[%s469 + $0x1f4] sm:$0xf]
        %v562 = vld [vmem:[%s469 + $0x1f8] sm:$0xff]
        %v563 = vld [vmem:[%s469 + $0x200] sm:$0xff]
        %v564 = vld [vmem:[%s469 + $0x208] sm:$0xff]
        %v565 = vld [vmem:[%s469 + $0x210] sm:$0xf]
        %v566 = vld [vmem:[%s469 + $0x214] sm:$0xff]
        %v567 = vld [vmem:[%s469 + $0x21c] sm:$0xff]
        %v568 = vld [vmem:[%s469 + $0x224] sm:$0xff]
        %v569 = vld [vmem:[%s469 + $0x22c] sm:$0xf]
        %v570 = vld [vmem:[%s469 + $0x230] sm:$0xff]
        %v571 = vld [vmem:[%s469 + $0x238] sm:$0xff]
        %v572 = vld [vmem:[%s469 + $0x240] sm:$0xff]
        %v573 = vld [vmem:[%s469 + $0x248] sm:$0xf]
        %v574 = vld [vmem:[%s469 + $0x24c] sm:$0xff]
        %v575 = vld [vmem:[%s469 + $0x254] sm:$0xff]
        %v576 = vld [vmem:[%s469 + $0x25c] sm:$0xff]
        %v577 = vld [vmem:[%s469 + $0x264] sm:$0xf]
        %v578 = vld [vmem:[%s469 + $0x268] sm:$0xff]
        %v579 = vld [vmem:[%s469 + $0x270] sm:$0xff]
        %v580 = vld [vmem:[%s469 + $0x278] sm:$0xff]
        %v581 = vld [vmem:[%s469 + $0x280] sm:$0xf]
        %v582 = vld [vmem:[%s469 + $0x284] sm:$0xff]
        %v583 = vld [vmem:[%s469 + $0x28c] sm:$0xff]
        %v584 = vld [vmem:[%s469 + $0x294] sm:$0xff]
        %v585 = vld [vmem:[%s469 + $0x29c] sm:$0xf]
        %v586 = vld [vmem:[%s469 + $0x2a0] sm:$0xff]
        %v587 = vld [vmem:[%s469 + $0x2a8] sm:$0xff]
        %v588 = vld [vmem:[%s469 + $0x2b0] sm:$0xff]
        %v589 = vld [vmem:[%s469 + $0x2b8] sm:$0xf]
        %v590 = vld [vmem:[%s469 + $0x2bc] sm:$0xff]
        %v591 = vld [vmem:[%s469 + $0x2c4] sm:$0xff]
        %v592 = vld [vmem:[%s469 + $0x2cc] sm:$0xff]
        %v593 = vld [vmem:[%s469 + $0x2d4] sm:$0xf]
        %v594 = vld [vmem:[%s469 + $0x2d8] sm:$0xff]
        %v595 = vld [vmem:[%s469 + $0x2e0] sm:$0xff]
        %v596 = vld [vmem:[%s469 + $0x2e8] sm:$0xff]
        %v597 = vld [vmem:[%s469 + $0x2f0] sm:$0xf]
        %v598 = vld [vmem:[%s469 + $0x2f4] sm:$0xff]
        %v599 = vld [vmem:[%s469 + $0x2fc] sm:$0xff]
        %v600 = vld [vmem:[%s469 + $0x304] sm:$0xff]
        %v601 = vld [vmem:[%s469 + $0x30c] sm:$0xf]
        %v602 = vld [vmem:[%s469 + $0x310] sm:$0xff]
        %v603 = vld [vmem:[%s469 + $0x318] sm:$0xff]
        %v604 = vld [vmem:[%s469 + $0x320] sm:$0xff]
        %v605 = vld [vmem:[%s469 + $0x328] sm:$0xf]
        %v606 = vld [vmem:[%s469 + $0x32c] sm:$0xff]
        %v607 = vld [vmem:[%s469 + $0x334] sm:$0xff]
        %v608 = vld [vmem:[%s469 + $0x33c] sm:$0xff]
        %v609 = vld [vmem:[%s469 + $0x344] sm:$0xf]
        %v610 = vld [vmem:[%s469 + $0x348] sm:$0xff]
        %v611 = vld [vmem:[%s469 + $0x350] sm:$0xff]
        %v612 = vld [vmem:[%s469 + $0x358] sm:$0xff]
        %v613 = vld [vmem:[%s469 + $0x360] sm:$0xf]
        %v614 = vld [vmem:[%s469 + $0x364] sm:$0xff]
        %v615 = vld [vmem:[%s469 + $0x36c] sm:$0xff]
        %v616 = vld [vmem:[%s469 + $0x374] sm:$0xff]
        %v617 = vld [vmem:[%s469 + $0x37c] sm:$0xf]
        %v618 = vld [vmem:[%s469 + $0x380] sm:$0xff]
        %v619 = vld [vmem:[%s469 + $0x388] sm:$0xff]
        %v620 = vld [vmem:[%s469 + $0x390] sm:$0xff]
        %v621 = vld [vmem:[%s469 + $0x398] sm:$0xf]
        %v622 = vld [vmem:[%s469 + $0x39c] sm:$0xff]
        %v623 = vld [vmem:[%s469 + $0x3a4] sm:$0xff]
        %v624 = vld [vmem:[%s469 + $0x3ac] sm:$0xff]
        %v625 = vld [vmem:[%s469 + $0x3b4] sm:$0xf]
        %v626 = vld [vmem:[%s469 + $0x3b8] sm:$0xff]
        %v627 = vld [vmem:[%s469 + $0x3c0] sm:$0xff]
        %v628 = vld [vmem:[%s469 + $0x3c8] sm:$0xff]
        %v629 = vld [vmem:[%s469 + $0x3d0] sm:$0xf]
        %v630 = vld [vmem:[%s469 + $0x3d4] sm:$0xff]
        %v631 = vld [vmem:[%s469 + $0x3dc] sm:$0xff]
        %v632 = vld [vmem:[%s469 + $0x3e4] sm:$0xff]
        %v633 = vld [vmem:[%s469 + $0x3ec] sm:$0xf]
        %v634 = vld [vmem:[%s469 + $0x3f0] sm:$0xff]
        %v635 = vld [vmem:[%s469 + $0x3f8] sm:$0xff]
        %v636 = vld [vmem:[%s469 + $0x400] sm:$0xff]
        %v637 = vld [vmem:[%s469 + $0x408] sm:$0xf]
        %v638 = vld [vmem:[%s469 + $0x40c] sm:$0xff]
        %v639 = vld [vmem:[%s469 + $0x414] sm:$0xff]
        %v640 = vld [vmem:[%s469 + $0x41c] sm:$0xff]
        %v641 = vld [vmem:[%s469 + $0x424] sm:$0xf]
        %v642 = vld [vmem:[%s469 + $0x428] sm:$0xff]
        %v643 = vld [vmem:[%s469 + $0x430] sm:$0xff]
        %v644 = vld [vmem:[%s469 + $0x438] sm:$0xff]
        %v645 = vld [vmem:[%s469 + $0x440] sm:$0xf]
        %v646 = vld [vmem:[%s469 + $0x444] sm:$0xff]
        %v647 = vld [vmem:[%s469 + $0x44c] sm:$0xff]
        %v648 = vld [vmem:[%s469 + $0x454] sm:$0xff]
        %v649 = vld [vmem:[%s469 + $0x45c] sm:$0xf]
        %v650 = vld [vmem:[%s469 + $0x460] sm:$0xff]
        %v651 = vld [vmem:[%s469 + $0x468] sm:$0xff]
        %v652 = vld [vmem:[%s469 + $0x470] sm:$0xff]
        %v653 = vld [vmem:[%s469 + $0x478] sm:$0xf]
        %v654 = vld [vmem:[%s469 + $0x47c] sm:$0xff]
        %v655 = vld [vmem:[%s469 + $0x484] sm:$0xff]
        %v656 = vld [vmem:[%s469 + $0x48c] sm:$0xff]
        %v657 = vld [vmem:[%s469 + $0x494] sm:$0xf]
        %v658 = vld [vmem:[%s469 + $0x498] sm:$0xff]
        %v659 = vld [vmem:[%s469 + $0x4a0] sm:$0xff]
        %v660 = vld [vmem:[%s469 + $0x4a8] sm:$0xff]
        %v661 = vld [vmem:[%s469 + $0x4b0] sm:$0xf]
        %v662 = vld [vmem:[%s469 + $0x4b4] sm:$0xff]
        %v663 = vld [vmem:[%s469 + $0x4bc] sm:$0xff]
        %v664 = vld [vmem:[%s469 + $0x4c4] sm:$0xff]
        %v665 = vld [vmem:[%s469 + $0x4cc] sm:$0xf]
        %v666 = vld [vmem:[%s469 + $0x4d0] sm:$0xff]
        %v667 = vld [vmem:[%s469 + $0x4d8] sm:$0xff]
        %v668 = vld [vmem:[%s469 + $0x4e0] sm:$0xff]
        %v669 = vld [vmem:[%s469 + $0x4e8] sm:$0xf]
        %v670 = vld [vmem:[%s469 + $0x4ec] sm:$0xff]
        %v671 = vld [vmem:[%s469 + $0x4f4] sm:$0xff]
        %v672 = vld [vmem:[%s469 + $0x4fc] sm:$0xff]
        %v673 = vld [vmem:[%s469 + $0x504] sm:$0xf]
        %v674 = vld [vmem:[%s469 + $0x508] sm:$0xff]
        %v675 = vld [vmem:[%s469 + $0x510] sm:$0xff]
        %v676 = vld [vmem:[%s469 + $0x518] sm:$0xff]
        %v677 = vld [vmem:[%s469 + $0x520] sm:$0xf]
        %v678 = vld [vmem:[%s469 + $0x524] sm:$0xff]
        %v679 = vld [vmem:[%s469 + $0x52c] sm:$0xff]
        %v680 = vld [vmem:[%s469 + $0x534] sm:$0xff]
        %v681 = vld [vmem:[%s469 + $0x53c] sm:$0xf]
        %v682 = vld [vmem:[%s469 + $0x540] sm:$0xff]
        %v683 = vld [vmem:[%s469 + $0x548] sm:$0xff]
        %v684 = vld [vmem:[%s469 + $0x550] sm:$0xff]
        %v685 = vld [vmem:[%s469 + $0x558] sm:$0xf]
        %v686 = vld [vmem:[%s469 + $0x55c] sm:$0xff]
        %v687 = vld [vmem:[%s469 + $0x564] sm:$0xff]
        %v688 = vld [vmem:[%s469 + $0x56c] sm:$0xff]
        %v689 = vld [vmem:[%s469 + $0x574] sm:$0xf]
        %v690 = vld [vmem:[%s469 + $0x578] sm:$0xff]
        %v691 = vld [vmem:[%s469 + $0x580] sm:$0xff]
        %v692 = vld [vmem:[%s469 + $0x588] sm:$0xff]
        %v693 = vld [vmem:[%s469 + $0x590] sm:$0xf]
        %v694 = vld [vmem:[%s469 + $0x594] sm:$0xff]
        %v695 = vld [vmem:[%s469 + $0x59c] sm:$0xff]
        %v696 = vld [vmem:[%s469 + $0x5a4] sm:$0xff]
        %v697 = vld [vmem:[%s469 + $0x5ac] sm:$0xf]
        %v698 = vld [vmem:[%s469 + $0x5b0] sm:$0xff]
        %v699 = vld [vmem:[%s469 + $0x5b8] sm:$0xff]
        %v700 = vld [vmem:[%s469 + $0x5c0] sm:$0xff]
        %v701 = vld [vmem:[%s469 + $0x5c8] sm:$0xf]
        %v702 = vld [vmem:[%s469 + $0x5cc] sm:$0xff]
        %v703 = vld [vmem:[%s469 + $0x5d4] sm:$0xff]
        %v704 = vld [vmem:[%s469 + $0x5dc] sm:$0xff]
        %v705 = vld [vmem:[%s469 + $0x5e4] sm:$0xf]
        %v706 = vld [vmem:[%s469 + $0x5e8] sm:$0xff]
        %v707 = vld [vmem:[%s469 + $0x5f0] sm:$0xff]
        %v708 = vld [vmem:[%s469 + $0x5f8] sm:$0xff]
        %v709 = vld [vmem:[%s469 + $0x600] sm:$0xf]
        %v710 = vld [vmem:[%s469 + $0x604] sm:$0xff]
        %v711 = vld [vmem:[%s469 + $0x60c] sm:$0xff]
        %v712 = vld [vmem:[%s469 + $0x614] sm:$0xff]
        %v713 = vld [vmem:[%s469 + $0x61c] sm:$0xf]
        %v714 = vld [vmem:[%s469 + $0x620] sm:$0xff]
        %v715 = vld [vmem:[%s469 + $0x628] sm:$0xff]
        %v716 = vld [vmem:[%s469 + $0x630] sm:$0xff]
        %v717 = vld [vmem:[%s469 + $0x638] sm:$0xf]
        %v718 = vld [vmem:[%s469 + $0x63c] sm:$0xff]
        %v719 = vld [vmem:[%s469 + $0x644] sm:$0xff]
        %v720 = vld [vmem:[%s469 + $0x64c] sm:$0xff]
        %v721 = vld [vmem:[%s469 + $0x654] sm:$0xf]
        %v722 = vld [vmem:[%s469 + $0x658] sm:$0xff]
        %v723 = vld [vmem:[%s469 + $0x660] sm:$0xff]
        %v724 = vld [vmem:[%s469 + $0x668] sm:$0xff]
        %v725 = vld [vmem:[%s469 + $0x670] sm:$0xf]
        %v726 = vld [vmem:[%s469 + $0x674] sm:$0xff]
        %v727 = vld [vmem:[%s469 + $0x67c] sm:$0xff]
        %v728 = vld [vmem:[%s469 + $0x684] sm:$0xff]
        %v729 = vld [vmem:[%s469 + $0x68c] sm:$0xf]
        %v730 = vld [vmem:[%s469 + $0x690] sm:$0xff]
        %v731 = vld [vmem:[%s469 + $0x698] sm:$0xff]
        %v732 = vld [vmem:[%s469 + $0x6a0] sm:$0xff]
        %v733 = vld [vmem:[%s469 + $0x6a8] sm:$0xf]
        %v734 = vld [vmem:[%s469 + $0x6ac] sm:$0xff]
        %v735 = vld [vmem:[%s469 + $0x6b4] sm:$0xff]
        %v736 = vld [vmem:[%s469 + $0x6bc] sm:$0xff]
        %v737 = vld [vmem:[%s469 + $0x6c4] sm:$0xf]
        %v738 = vld [vmem:[%s469 + $0x6c8] sm:$0xff]
        %v739 = vld [vmem:[%s469 + $0x6d0] sm:$0xff]
        %v740 = vld [vmem:[%s469 + $0x6d8] sm:$0xff]
        %v741 = vld [vmem:[%s469 + $0x6e0] sm:$0xf]
        %v742 = vld [vmem:[%s469 + $0x6e4] sm:$0xff]
        %v743 = vld [vmem:[%s469 + $0x6ec] sm:$0xff]
        %v744 = vld [vmem:[%s469 + $0x6f4] sm:$0xff]
        %v745 = vld [vmem:[%s469 + $0x6fc] sm:$0xf]
        %v746 = vld [vmem:[%s469 + $0x700] sm:$0xff]
        %v747 = vld [vmem:[%s469 + $0x708] sm:$0xff]
        %v748 = vld [vmem:[%s469 + $0x710] sm:$0xff]
        %v749 = vld [vmem:[%s469 + $0x718] sm:$0xf]
        %v750 = vld [vmem:[%s469 + $0x71c] sm:$0xff]
        %v751 = vld [vmem:[%s469 + $0x724] sm:$0xff]
        %v752 = vld [vmem:[%s469 + $0x72c] sm:$0xff]
        %v753 = vld [vmem:[%s469 + $0x734] sm:$0xf]
        %v754 = vld [vmem:[%s469 + $0x738] sm:$0xff]
        %v755 = vld [vmem:[%s469 + $0x740] sm:$0xff]
        %v756 = vld [vmem:[%s469 + $0x748] sm:$0xff]
        %v757 = vld [vmem:[%s469 + $0x750] sm:$0xf]
        %v758 = vld [vmem:[%s469 + $0x754] sm:$0xff]
        %v759 = vld [vmem:[%s469 + $0x75c] sm:$0xff]
        %v760 = vld [vmem:[%s469 + $0x764] sm:$0xff]
        %v761 = vld [vmem:[%s469 + $0x76c] sm:$0xf]
        %v762 = vld [vmem:[%s469 + $0x770] sm:$0xff]
        %v763 = vld [vmem:[%s469 + $0x778] sm:$0xff]
        %v764 = vld [vmem:[%s469 + $0x780] sm:$0xff]
        %v765 = vld [vmem:[%s469 + $0x788] sm:$0xf]
        %v766 = vld [vmem:[%s469 + $0x78c] sm:$0xff]
        %v767 = vld [vmem:[%s469 + $0x794] sm:$0xff]
        %v768 = vld [vmem:[%s469 + $0x79c] sm:$0xff]
        %v769 = vld [vmem:[%s469 + $0x7a4] sm:$0xf]
        %v770 = vld [vmem:[%s469 + $0x7a8] sm:$0xff]
        %v771 = vld [vmem:[%s469 + $0x7b0] sm:$0xff]
        %v772 = vld [vmem:[%s469 + $0x7b8] sm:$0xff]
        %v773 = vld [vmem:[%s469 + $0x7c0] sm:$0xf]
        %v774 = vld [vmem:[%s469 + $0x7c4] sm:$0xff]
        %v775 = vld [vmem:[%s469 + $0x7cc] sm:$0xff]
        %v776 = vld [vmem:[%s469 + $0x7d4] sm:$0xff]
        %v777 = vld [vmem:[%s469 + $0x7dc] sm:$0xf]
        %v778 = vld [vmem:[%s469 + $0x7e0] sm:$0xff]
        %v779 = vld [vmem:[%s469 + $0x7e8] sm:$0xff]
        %v780 = vld [vmem:[%s469 + $0x7f0] sm:$0xff]
        %v781 = vld [vmem:[%s469 + $0x7f8] sm:$0xf]
        %v782 = vld [vmem:[%s469 + $0x7fc] sm:$0xff]
        %v783 = vld [vmem:[%s469 + $0x804] sm:$0xff]
        %v784 = vld [vmem:[%s469 + $0x80c] sm:$0xff]
        %v785 = vld [vmem:[%s469 + $0x814] sm:$0xf]
        %v786 = vld [vmem:[%s469 + $0x818] sm:$0xff]
        %v787 = vld [vmem:[%s469 + $0x820] sm:$0xff]
        %v788 = vld [vmem:[%s469 + $0x828] sm:$0xff]
        %v789 = vld [vmem:[%s469 + $0x830] sm:$0xf]
        %v790 = vld [vmem:[%s2] sm:$0xff]
        %v791 = vld [vmem:[%s2 + $0x8] sm:$0xff]
        %v792 = vld [vmem:[%s2 + $0x10] sm:$0xff]
        %v793 = vld [vmem:[%s2 + $0x18] sm:$0xff]
        %v794 = vld [vmem:[%s2 + $0x20] sm:$0xff]
        %v795 = vld [vmem:[%s2 + $0x28] sm:$0xff]
        %797 = vset.pattern.permute.xlu0 0
        %798 = vperm.xlu0 %797, %v790
        %v799 = vpop.permute.xlu0 %798
        %802 = vset.pattern.permute.xlu0 0
        %803 = vperm.xlu0 %802, %v791
        %v804 = vpop.permute.xlu0 %803
        %807 = vset.pattern.permute.xlu0 0
        %808 = vperm.xlu0 %807, %v792
        %v809 = vpop.permute.xlu0 %808
        %812 = vset.pattern.permute.xlu0 0
        %813 = vperm.xlu0 %812, %v793
        %v814 = vpop.permute.xlu0 %813
        %817 = vset.pattern.permute.xlu0 0
        %818 = vperm.xlu0 %817, %v794
        %v819 = vpop.permute.xlu0 %818
        %822 = vset.pattern.permute.xlu0 0
        %823 = vperm.xlu0 %822, %v795
        %v824 = vpop.permute.xlu0 %823
        %v844 = vunpack.c.l.b16 %v472
        %v845 = vunpack.c.h.b16 %v472
        %v846 = vunpack.c.l.b16 %v473
        %v847 = vunpack.c.h.b16 %v473
        %v848 = vunpack.c.l.b16 %v474
        %v849 = vunpack.c.l.b16 %v475
        %v850 = vunpack.c.h.b16 %v475
        %v851 = vunpack.c.l.b16 %v476
        %v852 = vunpack.c.h.b16 %v476
        %v853 = vunpack.c.l.b16 %v477
        %v854 = vunpack.c.l.b16 %v478
        %v855 = vunpack.c.h.b16 %v478
        %v856 = vunpack.c.l.b16 %v479
        %v857 = vunpack.c.h.b16 %v479
        %v858 = vunpack.c.l.b16 %v480
        %v859 = vunpack.c.l.b16 %v481
        %v860 = vunpack.c.h.b16 %v481
        %v861 = vunpack.c.l.b16 %v482
        %v862 = vunpack.c.h.b16 %v482
        %v863 = vunpack.c.l.b16 %v483
        %v864 = vunpack.c.l.b16 %v484
        %v865 = vunpack.c.h.b16 %v484
        %v866 = vunpack.c.l.b16 %v485
        %v867 = vunpack.c.h.b16 %v485
        %v868 = vunpack.c.l.b16 %v486
        %v869 = vunpack.c.l.b16 %v487
        %v870 = vunpack.c.h.b16 %v487
        %v871 = vunpack.c.l.b16 %v488
        %v872 = vunpack.c.h.b16 %v488
        %v873 = vunpack.c.l.b16 %v489
        %v874 = vpack.c.b16 %v849, %v844
        %v875 = vpack.c.b16 %v850, %v845
        %v876 = vpack.c.b16 %v851, %v846
        %v877 = vpack.c.b16 %v852, %v847
        %v878 = vpack.c.b16 %v853, %v848
        %v879 = vpack.c.b16 %v859, %v854
        %v880 = vpack.c.b16 %v860, %v855
        %v881 = vpack.c.b16 %v861, %v856
        %v882 = vpack.c.b16 %v862, %v857
        %v883 = vpack.c.b16 %v863, %v858
        %v884 = vpack.c.b16 %v869, %v864
        %v885 = vpack.c.b16 %v870, %v865
        %v886 = vpack.c.b16 %v871, %v866
        %v887 = vpack.c.b16 %v872, %v867
        %v888 = vpack.c.b16 %v873, %v868
        %v1201 = vunpack.c.l.b16 %v490
        %v1202 = vunpack.c.h.b16 %v490
        %v1203 = vunpack.c.l.b16 %v491
        %v1204 = vunpack.c.h.b16 %v491
        %v1205 = vunpack.c.l.b16 %v492
        %v1206 = vunpack.c.h.b16 %v492
        %v1207 = vunpack.c.l.b16 %v493
        %v1208 = vunpack.c.l.b16 %v494
        %v1209 = vunpack.c.h.b16 %v494
        %v1210 = vunpack.c.l.b16 %v495
        %v1211 = vunpack.c.h.b16 %v495
        %v1212 = vunpack.c.l.b16 %v496
        %v1213 = vunpack.c.h.b16 %v496
        %v1214 = vunpack.c.l.b16 %v497
        %v1215 = vunpack.c.l.b16 %v498
        %v1216 = vunpack.c.h.b16 %v498
        %v1217 = vunpack.c.l.b16 %v499
        %v1218 = vunpack.c.h.b16 %v499
        %v1219 = vunpack.c.l.b16 %v500
        %v1220 = vunpack.c.h.b16 %v500
        %v1221 = vunpack.c.l.b16 %v501
        %v1222 = vunpack.c.l.b16 %v502
        %v1223 = vunpack.c.h.b16 %v502
        %v1224 = vunpack.c.l.b16 %v503
        %v1225 = vunpack.c.h.b16 %v503
        %v1226 = vunpack.c.l.b16 %v504
        %v1227 = vunpack.c.h.b16 %v504
        %v1228 = vunpack.c.l.b16 %v505
        %v1229 = vunpack.c.l.b16 %v506
        %v1230 = vunpack.c.h.b16 %v506
        %v1231 = vunpack.c.l.b16 %v507
        %v1232 = vunpack.c.h.b16 %v507
        %v1233 = vunpack.c.l.b16 %v508
        %v1234 = vunpack.c.h.b16 %v508
        %v1235 = vunpack.c.l.b16 %v509
        %v1236 = vunpack.c.l.b16 %v510
        %v1237 = vunpack.c.h.b16 %v510
        %v1238 = vunpack.c.l.b16 %v511
        %v1239 = vunpack.c.h.b16 %v511
        %v1240 = vunpack.c.l.b16 %v512
        %v1241 = vunpack.c.h.b16 %v512
        %v1242 = vunpack.c.l.b16 %v513
        %v1243 = vunpack.c.l.b16 %v514
        %v1244 = vunpack.c.h.b16 %v514
        %v1245 = vunpack.c.l.b16 %v515
        %v1246 = vunpack.c.h.b16 %v515
        %v1247 = vunpack.c.l.b16 %v516
        %v1248 = vunpack.c.h.b16 %v516
        %v1249 = vunpack.c.l.b16 %v517
        %v1250 = vunpack.c.l.b16 %v518
        %v1251 = vunpack.c.h.b16 %v518
        %v1252 = vunpack.c.l.b16 %v519
        %v1253 = vunpack.c.h.b16 %v519
        %v1254 = vunpack.c.l.b16 %v520
        %v1255 = vunpack.c.h.b16 %v520
        %v1256 = vunpack.c.l.b16 %v521
        %v1257 = vunpack.c.l.b16 %v522
        %v1258 = vunpack.c.h.b16 %v522
        %v1259 = vunpack.c.l.b16 %v523
        %v1260 = vunpack.c.h.b16 %v523
        %v1261 = vunpack.c.l.b16 %v524
        %v1262 = vunpack.c.h.b16 %v524
        %v1263 = vunpack.c.l.b16 %v525
        %v1264 = vunpack.c.l.b16 %v526
        %v1265 = vunpack.c.h.b16 %v526
        %v1266 = vunpack.c.l.b16 %v527
        %v1267 = vunpack.c.h.b16 %v527
        %v1268 = vunpack.c.l.b16 %v528
        %v1269 = vunpack.c.h.b16 %v528
        %v1270 = vunpack.c.l.b16 %v529
        %v1271 = vunpack.c.l.b16 %v530
        %v1272 = vunpack.c.h.b16 %v530
        %v1273 = vunpack.c.l.b16 %v531
        %v1274 = vunpack.c.h.b16 %v531
        %v1275 = vunpack.c.l.b16 %v532
        %v1276 = vunpack.c.h.b16 %v532
        %v1277 = vunpack.c.l.b16 %v533
        %v1278 = vunpack.c.l.b16 %v534
        %v1279 = vunpack.c.h.b16 %v534
        %v1280 = vunpack.c.l.b16 %v535
        %v1281 = vunpack.c.h.b16 %v535
        %v1282 = vunpack.c.l.b16 %v536
        %v1283 = vunpack.c.h.b16 %v536
        %v1284 = vunpack.c.l.b16 %v537
        %v1285 = vunpack.c.l.b16 %v538
        %v1286 = vunpack.c.h.b16 %v538
        %v1287 = vunpack.c.l.b16 %v539
        %v1288 = vunpack.c.h.b16 %v539
        %v1289 = vunpack.c.l.b16 %v540
        %v1290 = vunpack.c.h.b16 %v540
        %v1291 = vunpack.c.l.b16 %v541
        %v1292 = vunpack.c.l.b16 %v542
        %v1293 = vunpack.c.h.b16 %v542
        %v1294 = vunpack.c.l.b16 %v543
        %v1295 = vunpack.c.h.b16 %v543
        %v1296 = vunpack.c.l.b16 %v544
        %v1297 = vunpack.c.h.b16 %v544
        %v1298 = vunpack.c.l.b16 %v545
        %v1299 = vunpack.c.l.b16 %v546
        %v1300 = vunpack.c.h.b16 %v546
        %v1301 = vunpack.c.l.b16 %v547
        %v1302 = vunpack.c.h.b16 %v547
        %v1303 = vunpack.c.l.b16 %v548
        %v1304 = vunpack.c.h.b16 %v548
        %v1305 = vunpack.c.l.b16 %v549
        %v1306 = vunpack.c.l.b16 %v550
        %v1307 = vunpack.c.h.b16 %v550
        %v1308 = vunpack.c.l.b16 %v551
        %v1309 = vunpack.c.h.b16 %v551
        %v1310 = vunpack.c.l.b16 %v552
        %v1311 = vunpack.c.h.b16 %v552
        %v1312 = vunpack.c.l.b16 %v553
        %v1313 = vunpack.c.l.b16 %v554
        %v1314 = vunpack.c.h.b16 %v554
        %v1315 = vunpack.c.l.b16 %v555
        %v1316 = vunpack.c.h.b16 %v555
        %v1317 = vunpack.c.l.b16 %v556
        %v1318 = vunpack.c.h.b16 %v556
        %v1319 = vunpack.c.l.b16 %v557
        %v1320 = vunpack.c.l.b16 %v558
        %v1321 = vunpack.c.h.b16 %v558
        %v1322 = vunpack.c.l.b16 %v559
        %v1323 = vunpack.c.h.b16 %v559
        %v1324 = vunpack.c.l.b16 %v560
        %v1325 = vunpack.c.h.b16 %v560
        %v1326 = vunpack.c.l.b16 %v561
        %v1327 = vunpack.c.l.b16 %v562
        %v1328 = vunpack.c.h.b16 %v562
        %v1329 = vunpack.c.l.b16 %v563
        %v1330 = vunpack.c.h.b16 %v563
        %v1331 = vunpack.c.l.b16 %v564
        %v1332 = vunpack.c.h.b16 %v564
        %v1333 = vunpack.c.l.b16 %v565
        %v1334 = vunpack.c.l.b16 %v566
        %v1335 = vunpack.c.h.b16 %v566
        %v1336 = vunpack.c.l.b16 %v567
        %v1337 = vunpack.c.h.b16 %v567
        %v1338 = vunpack.c.l.b16 %v568
        %v1339 = vunpack.c.h.b16 %v568
        %v1340 = vunpack.c.l.b16 %v569
        %v1341 = vunpack.c.l.b16 %v570
        %v1342 = vunpack.c.h.b16 %v570
        %v1343 = vunpack.c.l.b16 %v571
        %v1344 = vunpack.c.h.b16 %v571
        %v1345 = vunpack.c.l.b16 %v572
        %v1346 = vunpack.c.h.b16 %v572
        %v1347 = vunpack.c.l.b16 %v573
        %v1348 = vunpack.c.l.b16 %v574
        %v1349 = vunpack.c.h.b16 %v574
        %v1350 = vunpack.c.l.b16 %v575
        %v1351 = vunpack.c.h.b16 %v575
        %v1352 = vunpack.c.l.b16 %v576
        %v1353 = vunpack.c.h.b16 %v576
        %v1354 = vunpack.c.l.b16 %v577
        %v1355 = vunpack.c.l.b16 %v578
        %v1356 = vunpack.c.h.b16 %v578
        %v1357 = vunpack.c.l.b16 %v579
        %v1358 = vunpack.c.h.b16 %v579
        %v1359 = vunpack.c.l.b16 %v580
        %v1360 = vunpack.c.h.b16 %v580
        %v1361 = vunpack.c.l.b16 %v581
        %v1362 = vunpack.c.l.b16 %v582
        %v1363 = vunpack.c.h.b16 %v582
        %v1364 = vunpack.c.l.b16 %v583
        %v1365 = vunpack.c.h.b16 %v583
        %v1366 = vunpack.c.l.b16 %v584
        %v1367 = vunpack.c.h.b16 %v584
        %v1368 = vunpack.c.l.b16 %v585
        %v1369 = vunpack.c.l.b16 %v586
        %v1370 = vunpack.c.h.b16 %v586
        %v1371 = vunpack.c.l.b16 %v587
        %v1372 = vunpack.c.h.b16 %v587
        %v1373 = vunpack.c.l.b16 %v588
        %v1374 = vunpack.c.h.b16 %v588
        %v1375 = vunpack.c.l.b16 %v589
        %v1376 = vunpack.c.l.b16 %v590
        %v1377 = vunpack.c.h.b16 %v590
        %v1378 = vunpack.c.l.b16 %v591
        %v1379 = vunpack.c.h.b16 %v591
        %v1380 = vunpack.c.l.b16 %v592
        %v1381 = vunpack.c.h.b16 %v592
        %v1382 = vunpack.c.l.b16 %v593
        %v1383 = vunpack.c.l.b16 %v594
        %v1384 = vunpack.c.h.b16 %v594
        %v1385 = vunpack.c.l.b16 %v595
        %v1386 = vunpack.c.h.b16 %v595
        %v1387 = vunpack.c.l.b16 %v596
        %v1388 = vunpack.c.h.b16 %v596
        %v1389 = vunpack.c.l.b16 %v597
        %v1390 = vunpack.c.l.b16 %v598
        %v1391 = vunpack.c.h.b16 %v598
        %v1392 = vunpack.c.l.b16 %v599
        %v1393 = vunpack.c.h.b16 %v599
        %v1394 = vunpack.c.l.b16 %v600
        %v1395 = vunpack.c.h.b16 %v600
        %v1396 = vunpack.c.l.b16 %v601
        %v1397 = vunpack.c.l.b16 %v602
        %v1398 = vunpack.c.h.b16 %v602
        %v1399 = vunpack.c.l.b16 %v603
        %v1400 = vunpack.c.h.b16 %v603
        %v1401 = vunpack.c.l.b16 %v604
        %v1402 = vunpack.c.h.b16 %v604
        %v1403 = vunpack.c.l.b16 %v605
        %v1404 = vunpack.c.l.b16 %v606
        %v1405 = vunpack.c.h.b16 %v606
        %v1406 = vunpack.c.l.b16 %v607
        %v1407 = vunpack.c.h.b16 %v607
        %v1408 = vunpack.c.l.b16 %v608
        %v1409 = vunpack.c.h.b16 %v608
        %v1410 = vunpack.c.l.b16 %v609
        %v1411 = vunpack.c.l.b16 %v610
        %v1412 = vunpack.c.h.b16 %v610
        %v1413 = vunpack.c.l.b16 %v611
        %v1414 = vunpack.c.h.b16 %v611
        %v1415 = vunpack.c.l.b16 %v612
        %v1416 = vunpack.c.h.b16 %v612
        %v1417 = vunpack.c.l.b16 %v613
        %v1418 = vunpack.c.l.b16 %v614
        %v1419 = vunpack.c.h.b16 %v614
        %v1420 = vunpack.c.l.b16 %v615
        %v1421 = vunpack.c.h.b16 %v615
        %v1422 = vunpack.c.l.b16 %v616
        %v1423 = vunpack.c.h.b16 %v616
        %v1424 = vunpack.c.l.b16 %v617
        %v1425 = vunpack.c.l.b16 %v618
        %v1426 = vunpack.c.h.b16 %v618
        %v1427 = vunpack.c.l.b16 %v619
        %v1428 = vunpack.c.h.b16 %v619
        %v1429 = vunpack.c.l.b16 %v620
        %v1430 = vunpack.c.h.b16 %v620
        %v1431 = vunpack.c.l.b16 %v621
        %v1432 = vunpack.c.l.b16 %v622
        %v1433 = vunpack.c.h.b16 %v622
        %v1434 = vunpack.c.l.b16 %v623
        %v1435 = vunpack.c.h.b16 %v623
        %v1436 = vunpack.c.l.b16 %v624
        %v1437 = vunpack.c.h.b16 %v624
        %v1438 = vunpack.c.l.b16 %v625
        %v1439 = vunpack.c.l.b16 %v626
        %v1440 = vunpack.c.h.b16 %v626
        %v1441 = vunpack.c.l.b16 %v627
        %v1442 = vunpack.c.h.b16 %v627
        %v1443 = vunpack.c.l.b16 %v628
        %v1444 = vunpack.c.h.b16 %v628
        %v1445 = vunpack.c.l.b16 %v629
        %v1446 = vunpack.c.l.b16 %v630
        %v1447 = vunpack.c.h.b16 %v630
        %v1448 = vunpack.c.l.b16 %v631
        %v1449 = vunpack.c.h.b16 %v631
        %v1450 = vunpack.c.l.b16 %v632
        %v1451 = vunpack.c.h.b16 %v632
        %v1452 = vunpack.c.l.b16 %v633
        %v1453 = vunpack.c.l.b16 %v634
        %v1454 = vunpack.c.h.b16 %v634
        %v1455 = vunpack.c.l.b16 %v635
        %v1456 = vunpack.c.h.b16 %v635
        %v1457 = vunpack.c.l.b16 %v636
        %v1458 = vunpack.c.h.b16 %v636
        %v1459 = vunpack.c.l.b16 %v637
        %v1460 = vunpack.c.l.b16 %v638
        %v1461 = vunpack.c.h.b16 %v638
        %v1462 = vunpack.c.l.b16 %v639
        %v1463 = vunpack.c.h.b16 %v639
        %v1464 = vunpack.c.l.b16 %v640
        %v1465 = vunpack.c.h.b16 %v640
        %v1466 = vunpack.c.l.b16 %v641
        %v1467 = vunpack.c.l.b16 %v642
        %v1468 = vunpack.c.h.b16 %v642
        %v1469 = vunpack.c.l.b16 %v643
        %v1470 = vunpack.c.h.b16 %v643
        %v1471 = vunpack.c.l.b16 %v644
        %v1472 = vunpack.c.h.b16 %v644
        %v1473 = vunpack.c.l.b16 %v645
        %v1474 = vunpack.c.l.b16 %v646
        %v1475 = vunpack.c.h.b16 %v646
        %v1476 = vunpack.c.l.b16 %v647
        %v1477 = vunpack.c.h.b16 %v647
        %v1478 = vunpack.c.l.b16 %v648
        %v1479 = vunpack.c.h.b16 %v648
        %v1480 = vunpack.c.l.b16 %v649
        %v1481 = vunpack.c.l.b16 %v650
        %v1482 = vunpack.c.h.b16 %v650
        %v1483 = vunpack.c.l.b16 %v651
        %v1484 = vunpack.c.h.b16 %v651
        %v1485 = vunpack.c.l.b16 %v652
        %v1486 = vunpack.c.h.b16 %v652
        %v1487 = vunpack.c.l.b16 %v653
        %v1488 = vunpack.c.l.b16 %v654
        %v1489 = vunpack.c.h.b16 %v654
        %v1490 = vunpack.c.l.b16 %v655
        %v1491 = vunpack.c.h.b16 %v655
        %v1492 = vunpack.c.l.b16 %v656
        %v1493 = vunpack.c.h.b16 %v656
        %v1494 = vunpack.c.l.b16 %v657
        %v1495 = vunpack.c.l.b16 %v658
        %v1496 = vunpack.c.h.b16 %v658
        %v1497 = vunpack.c.l.b16 %v659
        %v1498 = vunpack.c.h.b16 %v659
        %v1499 = vunpack.c.l.b16 %v660
        %v1500 = vunpack.c.h.b16 %v660
        %v1501 = vunpack.c.l.b16 %v661
        %v1502 = vunpack.c.l.b16 %v662
        %v1503 = vunpack.c.h.b16 %v662
        %v1504 = vunpack.c.l.b16 %v663
        %v1505 = vunpack.c.h.b16 %v663
        %v1506 = vunpack.c.l.b16 %v664
        %v1507 = vunpack.c.h.b16 %v664
        %v1508 = vunpack.c.l.b16 %v665
        %v1509 = vunpack.c.l.b16 %v666
        %v1510 = vunpack.c.h.b16 %v666
        %v1511 = vunpack.c.l.b16 %v667
        %v1512 = vunpack.c.h.b16 %v667
        %v1513 = vunpack.c.l.b16 %v668
        %v1514 = vunpack.c.h.b16 %v668
        %v1515 = vunpack.c.l.b16 %v669
        %v1516 = vunpack.c.l.b16 %v670
        %v1517 = vunpack.c.h.b16 %v670
        %v1518 = vunpack.c.l.b16 %v671
        %v1519 = vunpack.c.h.b16 %v671
        %v1520 = vunpack.c.l.b16 %v672
        %v1521 = vunpack.c.h.b16 %v672
        %v1522 = vunpack.c.l.b16 %v673
        %v1523 = vunpack.c.l.b16 %v674
        %v1524 = vunpack.c.h.b16 %v674
        %v1525 = vunpack.c.l.b16 %v675
        %v1526 = vunpack.c.h.b16 %v675
        %v1527 = vunpack.c.l.b16 %v676
        %v1528 = vunpack.c.h.b16 %v676
        %v1529 = vunpack.c.l.b16 %v677
        %v1530 = vunpack.c.l.b16 %v678
        %v1531 = vunpack.c.h.b16 %v678
        %v1532 = vunpack.c.l.b16 %v679
        %v1533 = vunpack.c.h.b16 %v679
        %v1534 = vunpack.c.l.b16 %v680
        %v1535 = vunpack.c.h.b16 %v680
        %v1536 = vunpack.c.l.b16 %v681
        %v1537 = vunpack.c.l.b16 %v682
        %v1538 = vunpack.c.h.b16 %v682
        %v1539 = vunpack.c.l.b16 %v683
        %v1540 = vunpack.c.h.b16 %v683
        %v1541 = vunpack.c.l.b16 %v684
        %v1542 = vunpack.c.h.b16 %v684
        %v1543 = vunpack.c.l.b16 %v685
        %v1544 = vunpack.c.l.b16 %v686
        %v1545 = vunpack.c.h.b16 %v686
        %v1546 = vunpack.c.l.b16 %v687
        %v1547 = vunpack.c.h.b16 %v687
        %v1548 = vunpack.c.l.b16 %v688
        %v1549 = vunpack.c.h.b16 %v688
        %v1550 = vunpack.c.l.b16 %v689
        %v1551 = vunpack.c.l.b16 %v690
        %v1552 = vunpack.c.h.b16 %v690
        %v1553 = vunpack.c.l.b16 %v691
        %v1554 = vunpack.c.h.b16 %v691
        %v1555 = vunpack.c.l.b16 %v692
        %v1556 = vunpack.c.h.b16 %v692
        %v1557 = vunpack.c.l.b16 %v693
        %v1558 = vunpack.c.l.b16 %v694
        %v1559 = vunpack.c.h.b16 %v694
        %v1560 = vunpack.c.l.b16 %v695
        %v1561 = vunpack.c.h.b16 %v695
        %v1562 = vunpack.c.l.b16 %v696
        %v1563 = vunpack.c.h.b16 %v696
        %v1564 = vunpack.c.l.b16 %v697
        %v1565 = vunpack.c.l.b16 %v698
        %v1566 = vunpack.c.h.b16 %v698
        %v1567 = vunpack.c.l.b16 %v699
        %v1568 = vunpack.c.h.b16 %v699
        %v1569 = vunpack.c.l.b16 %v700
        %v1570 = vunpack.c.h.b16 %v700
        %v1571 = vunpack.c.l.b16 %v701
        %v1572 = vunpack.c.l.b16 %v702
        %v1573 = vunpack.c.h.b16 %v702
        %v1574 = vunpack.c.l.b16 %v703
        %v1575 = vunpack.c.h.b16 %v703
        %v1576 = vunpack.c.l.b16 %v704
        %v1577 = vunpack.c.h.b16 %v704
        %v1578 = vunpack.c.l.b16 %v705
        %v1579 = vunpack.c.l.b16 %v706
        %v1580 = vunpack.c.h.b16 %v706
        %v1581 = vunpack.c.l.b16 %v707
        %v1582 = vunpack.c.h.b16 %v707
        %v1583 = vunpack.c.l.b16 %v708
        %v1584 = vunpack.c.h.b16 %v708
        %v1585 = vunpack.c.l.b16 %v709
        %v1586 = vunpack.c.l.b16 %v710
        %v1587 = vunpack.c.h.b16 %v710
        %v1588 = vunpack.c.l.b16 %v711
        %v1589 = vunpack.c.h.b16 %v711
        %v1590 = vunpack.c.l.b16 %v712
        %v1591 = vunpack.c.h.b16 %v712
        %v1592 = vunpack.c.l.b16 %v713
        %v1593 = vunpack.c.l.b16 %v714
        %v1594 = vunpack.c.h.b16 %v714
        %v1595 = vunpack.c.l.b16 %v715
        %v1596 = vunpack.c.h.b16 %v715
        %v1597 = vunpack.c.l.b16 %v716
        %v1598 = vunpack.c.h.b16 %v716
        %v1599 = vunpack.c.l.b16 %v717
        %v1600 = vunpack.c.l.b16 %v718
        %v1601 = vunpack.c.h.b16 %v718
        %v1602 = vunpack.c.l.b16 %v719
        %v1603 = vunpack.c.h.b16 %v719
        %v1604 = vunpack.c.l.b16 %v720
        %v1605 = vunpack.c.h.b16 %v720
        %v1606 = vunpack.c.l.b16 %v721
        %v1607 = vunpack.c.l.b16 %v722
        %v1608 = vunpack.c.h.b16 %v722
        %v1609 = vunpack.c.l.b16 %v723
        %v1610 = vunpack.c.h.b16 %v723
        %v1611 = vunpack.c.l.b16 %v724
        %v1612 = vunpack.c.h.b16 %v724
        %v1613 = vunpack.c.l.b16 %v725
        %v1614 = vunpack.c.l.b16 %v726
        %v1615 = vunpack.c.h.b16 %v726
        %v1616 = vunpack.c.l.b16 %v727
        %v1617 = vunpack.c.h.b16 %v727
        %v1618 = vunpack.c.l.b16 %v728
        %v1619 = vunpack.c.h.b16 %v728
        %v1620 = vunpack.c.l.b16 %v729
        %v1621 = vunpack.c.l.b16 %v730
        %v1622 = vunpack.c.h.b16 %v730
        %v1623 = vunpack.c.l.b16 %v731
        %v1624 = vunpack.c.h.b16 %v731
        %v1625 = vunpack.c.l.b16 %v732
        %v1626 = vunpack.c.h.b16 %v732
        %v1627 = vunpack.c.l.b16 %v733
        %v1628 = vunpack.c.l.b16 %v734
        %v1629 = vunpack.c.h.b16 %v734
        %v1630 = vunpack.c.l.b16 %v735
        %v1631 = vunpack.c.h.b16 %v735
        %v1632 = vunpack.c.l.b16 %v736
        %v1633 = vunpack.c.h.b16 %v736
        %v1634 = vunpack.c.l.b16 %v737
        %v1635 = vunpack.c.l.b16 %v738
        %v1636 = vunpack.c.h.b16 %v738
        %v1637 = vunpack.c.l.b16 %v739
        %v1638 = vunpack.c.h.b16 %v739
        %v1639 = vunpack.c.l.b16 %v740
        %v1640 = vunpack.c.h.b16 %v740
        %v1641 = vunpack.c.l.b16 %v741
        %v1642 = vunpack.c.l.b16 %v742
        %v1643 = vunpack.c.h.b16 %v742
        %v1644 = vunpack.c.l.b16 %v743
        %v1645 = vunpack.c.h.b16 %v743
        %v1646 = vunpack.c.l.b16 %v744
        %v1647 = vunpack.c.h.b16 %v744
        %v1648 = vunpack.c.l.b16 %v745
        %v1649 = vunpack.c.l.b16 %v746
        %v1650 = vunpack.c.h.b16 %v746
        %v1651 = vunpack.c.l.b16 %v747
        %v1652 = vunpack.c.h.b16 %v747
        %v1653 = vunpack.c.l.b16 %v748
        %v1654 = vunpack.c.h.b16 %v748
        %v1655 = vunpack.c.l.b16 %v749
        %v1656 = vunpack.c.l.b16 %v750
        %v1657 = vunpack.c.h.b16 %v750
        %v1658 = vunpack.c.l.b16 %v751
        %v1659 = vunpack.c.h.b16 %v751
        %v1660 = vunpack.c.l.b16 %v752
        %v1661 = vunpack.c.h.b16 %v752
        %v1662 = vunpack.c.l.b16 %v753
        %v1663 = vunpack.c.l.b16 %v754
        %v1664 = vunpack.c.h.b16 %v754
        %v1665 = vunpack.c.l.b16 %v755
        %v1666 = vunpack.c.h.b16 %v755
        %v1667 = vunpack.c.l.b16 %v756
        %v1668 = vunpack.c.h.b16 %v756
        %v1669 = vunpack.c.l.b16 %v757
        %v1670 = vunpack.c.l.b16 %v758
        %v1671 = vunpack.c.h.b16 %v758
        %v1672 = vunpack.c.l.b16 %v759
        %v1673 = vunpack.c.h.b16 %v759
        %v1674 = vunpack.c.l.b16 %v760
        %v1675 = vunpack.c.h.b16 %v760
        %v1676 = vunpack.c.l.b16 %v761
        %v1677 = vunpack.c.l.b16 %v762
        %v1678 = vunpack.c.h.b16 %v762
        %v1679 = vunpack.c.l.b16 %v763
        %v1680 = vunpack.c.h.b16 %v763
        %v1681 = vunpack.c.l.b16 %v764
        %v1682 = vunpack.c.h.b16 %v764
        %v1683 = vunpack.c.l.b16 %v765
        %v1684 = vunpack.c.l.b16 %v766
        %v1685 = vunpack.c.h.b16 %v766
        %v1686 = vunpack.c.l.b16 %v767
        %v1687 = vunpack.c.h.b16 %v767
        %v1688 = vunpack.c.l.b16 %v768
        %v1689 = vunpack.c.h.b16 %v768
        %v1690 = vunpack.c.l.b16 %v769
        %v1691 = vunpack.c.l.b16 %v770
        %v1692 = vunpack.c.h.b16 %v770
        %v1693 = vunpack.c.l.b16 %v771
        %v1694 = vunpack.c.h.b16 %v771
        %v1695 = vunpack.c.l.b16 %v772
        %v1696 = vunpack.c.h.b16 %v772
        %v1697 = vunpack.c.l.b16 %v773
        %v1698 = vunpack.c.l.b16 %v774
        %v1699 = vunpack.c.h.b16 %v774
        %v1700 = vunpack.c.l.b16 %v775
        %v1701 = vunpack.c.h.b16 %v775
        %v1702 = vunpack.c.l.b16 %v776
        %v1703 = vunpack.c.h.b16 %v776
        %v1704 = vunpack.c.l.b16 %v777
        %v1705 = vunpack.c.l.b16 %v778
        %v1706 = vunpack.c.h.b16 %v778
        %v1707 = vunpack.c.l.b16 %v779
        %v1708 = vunpack.c.h.b16 %v779
        %v1709 = vunpack.c.l.b16 %v780
        %v1710 = vunpack.c.h.b16 %v780
        %v1711 = vunpack.c.l.b16 %v781
        %v1712 = vunpack.c.l.b16 %v782
        %v1713 = vunpack.c.h.b16 %v782
        %v1714 = vunpack.c.l.b16 %v783
        %v1715 = vunpack.c.h.b16 %v783
        %v1716 = vunpack.c.l.b16 %v784
        %v1717 = vunpack.c.h.b16 %v784
        %v1718 = vunpack.c.l.b16 %v785
        %v1719 = vunpack.c.l.b16 %v786
        %v1720 = vunpack.c.h.b16 %v786
        %v1721 = vunpack.c.l.b16 %v787
        %v1722 = vunpack.c.h.b16 %v787
        %v1723 = vunpack.c.l.b16 %v788
        %v1724 = vunpack.c.h.b16 %v788
        %v1725 = vunpack.c.l.b16 %v789
        %v1726 = vpack.c.b16 %v1208, %v1201
        %v1727 = vpack.c.b16 %v1209, %v1202
        %v1728 = vpack.c.b16 %v1210, %v1203
        %v1729 = vpack.c.b16 %v1211, %v1204
        %v1730 = vpack.c.b16 %v1212, %v1205
        %v1731 = vpack.c.b16 %v1213, %v1206
        %v1732 = vpack.c.b16 %v1214, %v1207
        %v1733 = vpack.c.b16 %v1222, %v1215
        %v1734 = vpack.c.b16 %v1223, %v1216
        %v1735 = vpack.c.b16 %v1224, %v1217
        %v1736 = vpack.c.b16 %v1225, %v1218
        %v1737 = vpack.c.b16 %v1226, %v1219
        %v1738 = vpack.c.b16 %v1227, %v1220
        %v1739 = vpack.c.b16 %v1228, %v1221
        %v1740 = vpack.c.b16 %v1236, %v1229
        %v1741 = vpack.c.b16 %v1237, %v1230
        %v1742 = vpack.c.b16 %v1238, %v1231
        %v1743 = vpack.c.b16 %v1239, %v1232
        %v1744 = vpack.c.b16 %v1240, %v1233
        %v1745 = vpack.c.b16 %v1241, %v1234
        %v1746 = vpack.c.b16 %v1242, %v1235
        %v1747 = vpack.c.b16 %v1250, %v1243
        %v1748 = vpack.c.b16 %v1251, %v1244
        %v1749 = vpack.c.b16 %v1252, %v1245
        %v1750 = vpack.c.b16 %v1253, %v1246
        %v1751 = vpack.c.b16 %v1254, %v1247
        %v1752 = vpack.c.b16 %v1255, %v1248
        %v1753 = vpack.c.b16 %v1256, %v1249
        %v1754 = vpack.c.b16 %v1264, %v1257
        %v1755 = vpack.c.b16 %v1265, %v1258
        %v1756 = vpack.c.b16 %v1266, %v1259
        %v1757 = vpack.c.b16 %v1267, %v1260
        %v1758 = vpack.c.b16 %v1268, %v1261
        %v1759 = vpack.c.b16 %v1269, %v1262
        %v1760 = vpack.c.b16 %v1270, %v1263
        %v1761 = vpack.c.b16 %v1278, %v1271
        %v1762 = vpack.c.b16 %v1279, %v1272
        %v1763 = vpack.c.b16 %v1280, %v1273
        %v1764 = vpack.c.b16 %v1281, %v1274
        %v1765 = vpack.c.b16 %v1282, %v1275
        %v1766 = vpack.c.b16 %v1283, %v1276
        %v1767 = vpack.c.b16 %v1284, %v1277
        %v1768 = vpack.c.b16 %v1292, %v1285
        %v1769 = vpack.c.b16 %v1293, %v1286
        %v1770 = vpack.c.b16 %v1294, %v1287
        %v1771 = vpack.c.b16 %v1295, %v1288
        %v1772 = vpack.c.b16 %v1296, %v1289
        %v1773 = vpack.c.b16 %v1297, %v1290
        %v1774 = vpack.c.b16 %v1298, %v1291
        %v1775 = vpack.c.b16 %v1306, %v1299
        %v1776 = vpack.c.b16 %v1307, %v1300
        %v1777 = vpack.c.b16 %v1308, %v1301
        %v1778 = vpack.c.b16 %v1309, %v1302
        %v1779 = vpack.c.b16 %v1310, %v1303
        %v1780 = vpack.c.b16 %v1311, %v1304
        %v1781 = vpack.c.b16 %v1312, %v1305
        %v1782 = vpack.c.b16 %v1320, %v1313
        %v1783 = vpack.c.b16 %v1321, %v1314
        %v1784 = vpack.c.b16 %v1322, %v1315
        %v1785 = vpack.c.b16 %v1323, %v1316
        %v1786 = vpack.c.b16 %v1324, %v1317
        %v1787 = vpack.c.b16 %v1325, %v1318
        %v1788 = vpack.c.b16 %v1326, %v1319
        %v1789 = vpack.c.b16 %v1334, %v1327
        %v1790 = vpack.c.b16 %v1335, %v1328
        %v1791 = vpack.c.b16 %v1336, %v1329
        %v1792 = vpack.c.b16 %v1337, %v1330
        %v1793 = vpack.c.b16 %v1338, %v1331
        %v1794 = vpack.c.b16 %v1339, %v1332
        %v1795 = vpack.c.b16 %v1340, %v1333
        %v1796 = vpack.c.b16 %v1348, %v1341
        %v1797 = vpack.c.b16 %v1349, %v1342
        %v1798 = vpack.c.b16 %v1350, %v1343
        %v1799 = vpack.c.b16 %v1351, %v1344
        %v1800 = vpack.c.b16 %v1352, %v1345
        %v1801 = vpack.c.b16 %v1353, %v1346
        %v1802 = vpack.c.b16 %v1354, %v1347
        %v1803 = vpack.c.b16 %v1362, %v1355
        %v1804 = vpack.c.b16 %v1363, %v1356
        %v1805 = vpack.c.b16 %v1364, %v1357
        %v1806 = vpack.c.b16 %v1365, %v1358
        %v1807 = vpack.c.b16 %v1366, %v1359
        %v1808 = vpack.c.b16 %v1367, %v1360
        %v1809 = vpack.c.b16 %v1368, %v1361
        %v1810 = vpack.c.b16 %v1376, %v1369
        %v1811 = vpack.c.b16 %v1377, %v1370
        %v1812 = vpack.c.b16 %v1378, %v1371
        %v1813 = vpack.c.b16 %v1379, %v1372
        %v1814 = vpack.c.b16 %v1380, %v1373
        %v1815 = vpack.c.b16 %v1381, %v1374
        %v1816 = vpack.c.b16 %v1382, %v1375
        %v1817 = vpack.c.b16 %v1390, %v1383
        %v1818 = vpack.c.b16 %v1391, %v1384
        %v1819 = vpack.c.b16 %v1392, %v1385
        %v1820 = vpack.c.b16 %v1393, %v1386
        %v1821 = vpack.c.b16 %v1394, %v1387
        %v1822 = vpack.c.b16 %v1395, %v1388
        %v1823 = vpack.c.b16 %v1396, %v1389
        %v1824 = vpack.c.b16 %v1404, %v1397
        %v1825 = vpack.c.b16 %v1405, %v1398
        %v1826 = vpack.c.b16 %v1406, %v1399
        %v1827 = vpack.c.b16 %v1407, %v1400
        %v1828 = vpack.c.b16 %v1408, %v1401
        %v1829 = vpack.c.b16 %v1409, %v1402
        %v1830 = vpack.c.b16 %v1410, %v1403
        %v1831 = vpack.c.b16 %v1418, %v1411
        %v1832 = vpack.c.b16 %v1419, %v1412
        %v1833 = vpack.c.b16 %v1420, %v1413
        %v1834 = vpack.c.b16 %v1421, %v1414
        %v1835 = vpack.c.b16 %v1422, %v1415
        %v1836 = vpack.c.b16 %v1423, %v1416
        %v1837 = vpack.c.b16 %v1424, %v1417
        %v1838 = vpack.c.b16 %v1432, %v1425
        %v1839 = vpack.c.b16 %v1433, %v1426
        %v1840 = vpack.c.b16 %v1434, %v1427
        %v1841 = vpack.c.b16 %v1435, %v1428
        %v1842 = vpack.c.b16 %v1436, %v1429
        %v1843 = vpack.c.b16 %v1437, %v1430
        %v1844 = vpack.c.b16 %v1438, %v1431
        %v1845 = vpack.c.b16 %v1446, %v1439
        %v1846 = vpack.c.b16 %v1447, %v1440
        %v1847 = vpack.c.b16 %v1448, %v1441
        %v1848 = vpack.c.b16 %v1449, %v1442
        %v1849 = vpack.c.b16 %v1450, %v1443
        %v1850 = vpack.c.b16 %v1451, %v1444
        %v1851 = vpack.c.b16 %v1452, %v1445
        %v1852 = vpack.c.b16 %v1460, %v1453
        %v1853 = vpack.c.b16 %v1461, %v1454
        %v1854 = vpack.c.b16 %v1462, %v1455
        %v1855 = vpack.c.b16 %v1463, %v1456
        %v1856 = vpack.c.b16 %v1464, %v1457
        %v1857 = vpack.c.b16 %v1465, %v1458
        %v1858 = vpack.c.b16 %v1466, %v1459
        %v1859 = vpack.c.b16 %v1474, %v1467
        %v1860 = vpack.c.b16 %v1475, %v1468
        %v1861 = vpack.c.b16 %v1476, %v1469
        %v1862 = vpack.c.b16 %v1477, %v1470
        %v1863 = vpack.c.b16 %v1478, %v1471
        %v1864 = vpack.c.b16 %v1479, %v1472
        %v1865 = vpack.c.b16 %v1480, %v1473
        %v1866 = vpack.c.b16 %v1488, %v1481
        %v1867 = vpack.c.b16 %v1489, %v1482
        %v1868 = vpack.c.b16 %v1490, %v1483
        %v1869 = vpack.c.b16 %v1491, %v1484
        %v1870 = vpack.c.b16 %v1492, %v1485
        %v1871 = vpack.c.b16 %v1493, %v1486
        %v1872 = vpack.c.b16 %v1494, %v1487
        %v1873 = vpack.c.b16 %v1502, %v1495
        %v1874 = vpack.c.b16 %v1503, %v1496
        %v1875 = vpack.c.b16 %v1504, %v1497
        %v1876 = vpack.c.b16 %v1505, %v1498
        %v1877 = vpack.c.b16 %v1506, %v1499
        %v1878 = vpack.c.b16 %v1507, %v1500
        %v1879 = vpack.c.b16 %v1508, %v1501
        %v1880 = vpack.c.b16 %v1516, %v1509
        %v1881 = vpack.c.b16 %v1517, %v1510
        %v1882 = vpack.c.b16 %v1518, %v1511
        %v1883 = vpack.c.b16 %v1519, %v1512
        %v1884 = vpack.c.b16 %v1520, %v1513
        %v1885 = vpack.c.b16 %v1521, %v1514
        %v1886 = vpack.c.b16 %v1522, %v1515
        %v1887 = vpack.c.b16 %v1530, %v1523
        %v1888 = vpack.c.b16 %v1531, %v1524
        %v1889 = vpack.c.b16 %v1532, %v1525
        %v1890 = vpack.c.b16 %v1533, %v1526
        %v1891 = vpack.c.b16 %v1534, %v1527
        %v1892 = vpack.c.b16 %v1535, %v1528
        %v1893 = vpack.c.b16 %v1536, %v1529
        %v1894 = vpack.c.b16 %v1544, %v1537
        %v1895 = vpack.c.b16 %v1545, %v1538
        %v1896 = vpack.c.b16 %v1546, %v1539
        %v1897 = vpack.c.b16 %v1547, %v1540
        %v1898 = vpack.c.b16 %v1548, %v1541
        %v1899 = vpack.c.b16 %v1549, %v1542
        %v1900 = vpack.c.b16 %v1550, %v1543
        %v1901 = vpack.c.b16 %v1558, %v1551
        %v1902 = vpack.c.b16 %v1559, %v1552
        %v1903 = vpack.c.b16 %v1560, %v1553
        %v1904 = vpack.c.b16 %v1561, %v1554
        %v1905 = vpack.c.b16 %v1562, %v1555
        %v1906 = vpack.c.b16 %v1563, %v1556
        %v1907 = vpack.c.b16 %v1564, %v1557
        %v1908 = vpack.c.b16 %v1572, %v1565
        %v1909 = vpack.c.b16 %v1573, %v1566
        %v1910 = vpack.c.b16 %v1574, %v1567
        %v1911 = vpack.c.b16 %v1575, %v1568
        %v1912 = vpack.c.b16 %v1576, %v1569
        %v1913 = vpack.c.b16 %v1577, %v1570
        %v1914 = vpack.c.b16 %v1578, %v1571
        %v1915 = vpack.c.b16 %v1586, %v1579
        %v1916 = vpack.c.b16 %v1587, %v1580
        %v1917 = vpack.c.b16 %v1588, %v1581
        %v1918 = vpack.c.b16 %v1589, %v1582
        %v1919 = vpack.c.b16 %v1590, %v1583
        %v1920 = vpack.c.b16 %v1591, %v1584
        %v1921 = vpack.c.b16 %v1592, %v1585
        %v1922 = vpack.c.b16 %v1600, %v1593
        %v1923 = vpack.c.b16 %v1601, %v1594
        %v1924 = vpack.c.b16 %v1602, %v1595
        %v1925 = vpack.c.b16 %v1603, %v1596
        %v1926 = vpack.c.b16 %v1604, %v1597
        %v1927 = vpack.c.b16 %v1605, %v1598
        %v1928 = vpack.c.b16 %v1606, %v1599
        %v1929 = vpack.c.b16 %v1614, %v1607
        %v1930 = vpack.c.b16 %v1615, %v1608
        %v1931 = vpack.c.b16 %v1616, %v1609
        %v1932 = vpack.c.b16 %v1617, %v1610
        %v1933 = vpack.c.b16 %v1618, %v1611
        %v1934 = vpack.c.b16 %v1619, %v1612
        %v1935 = vpack.c.b16 %v1620, %v1613
        %v1936 = vpack.c.b16 %v1628, %v1621
        %v1937 = vpack.c.b16 %v1629, %v1622
        %v1938 = vpack.c.b16 %v1630, %v1623
        %v1939 = vpack.c.b16 %v1631, %v1624
        %v1940 = vpack.c.b16 %v1632, %v1625
        %v1941 = vpack.c.b16 %v1633, %v1626
        %v1942 = vpack.c.b16 %v1634, %v1627
        %v1943 = vpack.c.b16 %v1642, %v1635
        %v1944 = vpack.c.b16 %v1643, %v1636
        %v1945 = vpack.c.b16 %v1644, %v1637
        %v1946 = vpack.c.b16 %v1645, %v1638
        %v1947 = vpack.c.b16 %v1646, %v1639
        %v1948 = vpack.c.b16 %v1647, %v1640
        %v1949 = vpack.c.b16 %v1648, %v1641
        %v1950 = vpack.c.b16 %v1656, %v1649
        %v1951 = vpack.c.b16 %v1657, %v1650
        %v1952 = vpack.c.b16 %v1658, %v1651
        %v1953 = vpack.c.b16 %v1659, %v1652
        %v1954 = vpack.c.b16 %v1660, %v1653
        %v1955 = vpack.c.b16 %v1661, %v1654
        %v1956 = vpack.c.b16 %v1662, %v1655
        %v1957 = vpack.c.b16 %v1670, %v1663
        %v1958 = vpack.c.b16 %v1671, %v1664
        %v1959 = vpack.c.b16 %v1672, %v1665
        %v1960 = vpack.c.b16 %v1673, %v1666
        %v1961 = vpack.c.b16 %v1674, %v1667
        %v1962 = vpack.c.b16 %v1675, %v1668
        %v1963 = vpack.c.b16 %v1676, %v1669
        %v1964 = vpack.c.b16 %v1684, %v1677
        %v1965 = vpack.c.b16 %v1685, %v1678
        %v1966 = vpack.c.b16 %v1686, %v1679
        %v1967 = vpack.c.b16 %v1687, %v1680
        %v1968 = vpack.c.b16 %v1688, %v1681
        %v1969 = vpack.c.b16 %v1689, %v1682
        %v1970 = vpack.c.b16 %v1690, %v1683
        %v1971 = vpack.c.b16 %v1698, %v1691
        %v1972 = vpack.c.b16 %v1699, %v1692
        %v1973 = vpack.c.b16 %v1700, %v1693
        %v1974 = vpack.c.b16 %v1701, %v1694
        %v1975 = vpack.c.b16 %v1702, %v1695
        %v1976 = vpack.c.b16 %v1703, %v1696
        %v1977 = vpack.c.b16 %v1704, %v1697
        %v1978 = vpack.c.b16 %v1712, %v1705
        %v1979 = vpack.c.b16 %v1713, %v1706
        %v1980 = vpack.c.b16 %v1714, %v1707
        %v1981 = vpack.c.b16 %v1715, %v1708
        %v1982 = vpack.c.b16 %v1716, %v1709
        %v1983 = vpack.c.b16 %v1717, %v1710
        %v1984 = vpack.c.b16 %v1718, %v1711
        %v1985 = vpack.c.b16 %v1719, %v1719
        %v1986 = vpack.c.b16 %v1720, %v1720
        %v1987 = vpack.c.b16 %v1721, %v1721
        %v1988 = vpack.c.b16 %v1722, %v1722
        %v1989 = vpack.c.b16 %v1723, %v1723
        %v1990 = vpack.c.b16 %v1724, %v1724
        %v1991 = vpack.c.b16 %v1725, %v1725
        %vm2251 = vcmask 719872
        %v2253 = vsel %vm2251, %v878, 0
        %v2256 = vsel %vm2251, %v883, 0
        %v2259 = vsel %vm2251, %v888, 0
        %vm2261 = vcmask 1043456
        %v2263 = vsel %vm2261, %v1985, 0
        %v2266 = vsel %vm2261, %v1986, 0
        %v2269 = vsel %vm2261, %v1987, 0
        %v2272 = vsel %vm2261, %v1988, 0
        %v2275 = vsel %vm2261, %v1989, 0
        %v2278 = vsel %vm2261, %v1990, 0
        %v2281 = vsel %vm2261, %v1991, 0
        %2283 = vmatprep.subr.bf16.mxu0 %v1727
        %2284 = vmatpush1.bf16.msra.mxu0 %v1726
        %2285 = vmatprep.subr.bf16.mxu0 %v1734
        %2286 = vmatpush1.bf16.msra.mxu0 %v1733
        %2287 = vmatprep.subr.bf16.mxu0 %v1741
        %2288 = vmatpush1.bf16.msra.mxu0 %v1740
        %2289 = vmatprep.subr.bf16.mxu0 %v1748
        %2290 = vmatpush1.bf16.msra.mxu0 %v1747
        %2291 = vmatprep.subr.bf16.mxu0 %v1755
        %2292 = vmatpush1.bf16.msra.mxu0 %v1754
        %2293 = vmatprep.subr.bf16.mxu0 %v1762
        %2294 = vmatpush1.bf16.msra.mxu0 %v1761
        %2295 = vmatprep.subr.bf16.mxu0 %v1769
        %2296 = vmatpush1.bf16.msra.mxu0 %v1768
        %2297 = vmatprep.subr.bf16.mxu0 %v1776
        %2298 = vmatpush1.bf16.msra.mxu0 %v1775
        %2299 = vmatprep.subr.bf16.mxu0 %v1783
        %2300 = vmatpush1.bf16.msra.mxu0 %v1782
        %2301 = vmatprep.subr.bf16.mxu0 %v1790
        %2302 = vmatpush1.bf16.msra.mxu0 %v1789
        %2303 = vmatprep.subr.bf16.mxu0 %v1797
        %2304 = vmatpush1.bf16.msra.mxu0 %v1796
        %2305 = vmatprep.subr.bf16.mxu0 %v1804
        %2306 = vmatpush1.bf16.msra.mxu0 %v1803
        %2307 = vmatprep.subr.bf16.mxu0 %v1811
        %2308 = vmatpush1.bf16.msra.mxu0 %v1810
        %2309 = vmatprep.subr.bf16.mxu0 %v1818
        %2310 = vmatpush1.bf16.msra.mxu0 %v1817
        %2311 = vmatprep.subr.bf16.mxu0 %v1825
        %2312 = vmatpush1.bf16.msra.mxu0 %v1824
        %2313 = vmatprep.subr.bf16.mxu0 %v1832
        %2314 = vmatpush1.bf16.msra.mxu0 %v1831
        %2315 = vmatprep.mubr.bf16.mxu0 %v875
        %2316 = vmatmul.mubr.bf16.gmra.mrb[0].mxu0 %v874
        %v2317 = vpop.f32.mrb[0].mxu0
        %v2318 = vadd.f32 %v799, %v2317
        %v2319 = vpop.f32.mrb[0].mxu0
        %v2320 = vadd.f32 %v799, %v2319
        %v2321 = vpop.f32.mrb[0].mxu0
        %v2322 = vadd.f32 %v804, %v2321
        %v2323 = vpop.f32.mrb[0].mxu0
        %v2324 = vadd.f32 %v804, %v2323
        %2325 = vmatprep.mubr.bf16.mxu0 %v880
        %2326 = vmatmul.mubr.bf16.gmra.mrb[0].mxu0 %v879
        %v2327 = vpop.f32.mrb[0].mxu0
        %v2328 = vadd.f32 %v809, %v2327
        %v2329 = vpop.f32.mrb[0].mxu0
        %v2330 = vadd.f32 %v809, %v2329
        %v2331 = vpop.f32.mrb[0].mxu0
        %v2332 = vadd.f32 %v814, %v2331
        %v2333 = vpop.f32.mrb[0].mxu0
        %v2334 = vadd.f32 %v814, %v2333
        %2335 = vmatprep.mubr.bf16.mxu0 %v885
        %2336 = vmatmul.mubr.bf16.gmra.mrb[0].mxu0 %v884
        %v2337 = vpop.f32.mrb[0].mxu0
        %v2338 = vadd.f32 %v819, %v2337
        %v2339 = vpop.f32.mrb[0].mxu0
        %v2340 = vadd.f32 %v819, %v2339
        %v2341 = vpop.f32.mrb[0].mxu0
        %v2342 = vadd.f32 %v824, %v2341
        %v2343 = vpop.f32.mrb[0].mxu0
        %v2344 = vadd.f32 %v824, %v2343
        %2345 = vdwg.mxu0
        %2346 = vmatprep.subr.bf16.mxu0 %v1839
        %2347 = vmatpush1.bf16.msra.mxu0 %v1838
        %2348 = vmatprep.subr.bf16.mxu0 %v1846
        %2349 = vmatpush1.bf16.msra.mxu0 %v1845
        %2350 = vmatprep.subr.bf16.mxu0 %v1853
        %2351 = vmatpush1.bf16.msra.mxu0 %v1852
        %2352 = vmatprep.subr.bf16.mxu0 %v1860
        %2353 = vmatpush1.bf16.msra.mxu0 %v1859
        %2354 = vmatprep.subr.bf16.mxu0 %v1867
        %2355 = vmatpush1.bf16.msra.mxu0 %v1866
        %2356 = vmatprep.subr.bf16.mxu0 %v1874
        %2357 = vmatpush1.bf16.msra.mxu0 %v1873
        %2358 = vmatprep.subr.bf16.mxu0 %v1881
        %2359 = vmatpush1.bf16.msra.mxu0 %v1880
        %2360 = vmatprep.subr.bf16.mxu0 %v1888
        %2361 = vmatpush1.bf16.msra.mxu0 %v1887
        %2362 = vmatprep.subr.bf16.mxu0 %v1895
        %2363 = vmatpush1.bf16.msra.mxu0 %v1894
        %2364 = vmatprep.subr.bf16.mxu0 %v1902
        %2365 = vmatpush1.bf16.msra.mxu0 %v1901
        %2366 = vmatprep.subr.bf16.mxu0 %v1909
        %2367 = vmatpush1.bf16.msra.mxu0 %v1908
        %2368 = vmatprep.subr.bf16.mxu0 %v1916
        %2369 = vmatpush1.bf16.msra.mxu0 %v1915
        %2370 = vmatprep.subr.bf16.mxu0 %v1923
        %2371 = vmatpush1.bf16.msra.mxu0 %v1922
        %2372 = vmatprep.subr.bf16.mxu0 %v1930
        %2373 = vmatpush1.bf16.msra.mxu0 %v1929
        %2374 = vmatprep.subr.bf16.mxu0 %v1937
        %2375 = vmatpush1.bf16.msra.mxu0 %v1936
        %2376 = vmatprep.subr.bf16.mxu0 %v1944
        %2377 = vmatpush1.bf16.msra.mxu0 %v1943
        %2378 = vmatprep.mubr.bf16.mxu0 %v877
        %2379 = vmatmul.mubr.bf16.gmra.mrb[0].mxu0 %v876
        %v2380 = vpop.f32.mrb[0].mxu0
        %v2381 = vadd.f32 %v2318, %v2380
        %v2382 = vpop.f32.mrb[0].mxu0
        %v2383 = vadd.f32 %v2320, %v2382
        %v2384 = vpop.f32.mrb[0].mxu0
        %v2385 = vadd.f32 %v2322, %v2384
        %v2386 = vpop.f32.mrb[0].mxu0
        %v2387 = vadd.f32 %v2324, %v2386
        %2388 = vmatprep.mubr.bf16.mxu0 %v882
        %2389 = vmatmul.mubr.bf16.gmra.mrb[0].mxu0 %v881
        %v2390 = vpop.f32.mrb[0].mxu0
        %v2391 = vadd.f32 %v2328, %v2390
        %v2392 = vpop.f32.mrb[0].mxu0
        %v2393 = vadd.f32 %v2330, %v2392
        %v2394 = vpop.f32.mrb[0].mxu0
        %v2395 = vadd.f32 %v2332, %v2394
        %v2396 = vpop.f32.mrb[0].mxu0
        %v2397 = vadd.f32 %v2334, %v2396
        %2398 = vmatprep.mubr.bf16.mxu0 %v887
        %2399 = vmatmul.mubr.bf16.gmra.mrb[0].mxu0 %v886
        %v2400 = vpop.f32.mrb[0].mxu0
        %v2401 = vadd.f32 %v2338, %v2400
        %v2402 = vpop.f32.mrb[0].mxu0
        %v2403 = vadd.f32 %v2340, %v2402
        %v2404 = vpop.f32.mrb[0].mxu0
        %v2405 = vadd.f32 %v2342, %v2404
        %v2406 = vpop.f32.mrb[0].mxu0
        %v2407 = vadd.f32 %v2344, %v2406
        %2408 = vdwg.mxu0
        %2409 = vmatprep.subr.bf16.mxu0 %v1951
        %2410 = vmatpush1.bf16.msra.mxu0 %v1950
        %2411 = vmatprep.subr.bf16.mxu0 %v1958
        %2412 = vmatpush1.bf16.msra.mxu0 %v1957
        %2413 = vmatprep.subr.bf16.mxu0 %v1965
        %2414 = vmatpush1.bf16.msra.mxu0 %v1964
        %2415 = vmatprep.subr.bf16.mxu0 %v1972
        %2416 = vmatpush1.bf16.msra.mxu0 %v1971
        %2417 = vmatprep.subr.bf16.mxu0 %v1979
        %2418 = vmatpush1.bf16.msra.mxu0 %v1978
        %2419 = vmatprep.subr.bf16.mxu0 %v2266
        %2420 = vmatpush1.bf16.msra.mxu0 %v2263
        %2421 = vmatprep.subr.bf16.mxu0 0
        %2422 = vmatpush1.bf16.msra.mxu0 0
        %2423 = vmatprep.subr.bf16.mxu0 0
        %2424 = vmatpush1.bf16.msra.mxu0 0
        %2425 = vmatprep.subr.bf16.mxu0 0
        %2426 = vmatpush1.bf16.msra.mxu0 0
        %2427 = vmatprep.subr.bf16.mxu0 0
        %2428 = vmatpush1.bf16.msra.mxu0 0
        %2429 = vmatprep.subr.bf16.mxu0 0
        %2430 = vmatpush1.bf16.msra.mxu0 0
        %2431 = vmatprep.subr.bf16.mxu0 0
        %2432 = vmatpush1.bf16.msra.mxu0 0
        %2433 = vmatprep.subr.bf16.mxu0 0
        %2434 = vmatpush1.bf16.msra.mxu0 0
        %2435 = vmatprep.subr.bf16.mxu0 0
        %2436 = vmatpush1.bf16.msra.mxu0 0
        %2437 = vmatprep.subr.bf16.mxu0 0
        %2438 = vmatpush1.bf16.msra.mxu0 0
        %2439 = vmatprep.subr.bf16.mxu0 0
        %2440 = vmatpush1.bf16.msra.mxu0 0
        %2441 = vmatprep.mubr.bf16.mxu0 0
        %2442 = vmatmul.mubr.bf16.gmra.mrb[0].mxu0 %v2253
        %v2443 = vpop.f32.mrb[0].mxu0
        %v2444 = vadd.f32 %v2381, %v2443
        %v2445 = vpop.f32.mrb[0].mxu0
        %v2446 = vadd.f32 %v2383, %v2445
        %v2447 = vpop.f32.mrb[0].mxu0
        %v2448 = vadd.f32 %v2385, %v2447
        %v2449 = vpop.f32.mrb[0].mxu0
        %v2450 = vadd.f32 %v2387, %v2449
        %2451 = vmatprep.mubr.bf16.mxu0 0
        %2452 = vmatmul.mubr.bf16.gmra.mrb[0].mxu0 %v2256
        %v2453 = vpop.f32.mrb[0].mxu0
        %v2454 = vadd.f32 %v2391, %v2453
        %v2455 = vpop.f32.mrb[0].mxu0
        %v2456 = vadd.f32 %v2393, %v2455
        %v2457 = vpop.f32.mrb[0].mxu0
        %v2458 = vadd.f32 %v2395, %v2457
        %v2459 = vpop.f32.mrb[0].mxu0
        %v2460 = vadd.f32 %v2397, %v2459
        %2461 = vmatprep.mubr.bf16.mxu0 0
        %2462 = vmatmul.mubr.bf16.gmra.mrb[0].mxu0 %v2259
        %v2463 = vpop.f32.mrb[0].mxu0
        %v2464 = vadd.f32 %v2401, %v2463
        %v2465 = vpop.f32.mrb[0].mxu0
        %v2466 = vadd.f32 %v2403, %v2465
        %v2467 = vpop.f32.mrb[0].mxu0
        %v2468 = vadd.f32 %v2405, %v2467
        %v2469 = vpop.f32.mrb[0].mxu0
        %v2470 = vadd.f32 %v2407, %v2469
        %2471 = vdwg.mxu0
        %2472 = vmatprep.subr.bf16.mxu0 %v1729
        %2473 = vmatpush1.bf16.msra.mxu0 %v1728
        %2474 = vmatprep.subr.bf16.mxu0 %v1736
        %2475 = vmatpush1.bf16.msra.mxu0 %v1735
        %2476 = vmatprep.subr.bf16.mxu0 %v1743
        %2477 = vmatpush1.bf16.msra.mxu0 %v1742
        %2478 = vmatprep.subr.bf16.mxu0 %v1750
        %2479 = vmatpush1.bf16.msra.mxu0 %v1749
        %2480 = vmatprep.subr.bf16.mxu0 %v1757
        %2481 = vmatpush1.bf16.msra.mxu0 %v1756
        %2482 = vmatprep.subr.bf16.mxu0 %v1764
        %2483 = vmatpush1.bf16.msra.mxu0 %v1763
        %2484 = vmatprep.subr.bf16.mxu0 %v1771
        %2485 = vmatpush1.bf16.msra.mxu0 %v1770
        %2486 = vmatprep.subr.bf16.mxu0 %v1778
        %2487 = vmatpush1.bf16.msra.mxu0 %v1777
        %2488 = vmatprep.subr.bf16.mxu0 %v1785
        %2489 = vmatpush1.bf16.msra.mxu0 %v1784
        %2490 = vmatprep.subr.bf16.mxu0 %v1792
        %2491 = vmatpush1.bf16.msra.mxu0 %v1791
        %2492 = vmatprep.subr.bf16.mxu0 %v1799
        %2493 = vmatpush1.bf16.msra.mxu0 %v1798
        %2494 = vmatprep.subr.bf16.mxu0 %v1806
        %2495 = vmatpush1.bf16.msra.mxu0 %v1805
        %2496 = vmatprep.subr.bf16.mxu0 %v1813
        %2497 = vmatpush1.bf16.msra.mxu0 %v1812
        %2498 = vmatprep.subr.bf16.mxu0 %v1820
        %2499 = vmatpush1.bf16.msra.mxu0 %v1819
        %2500 = vmatprep.subr.bf16.mxu0 %v1827
        %2501 = vmatpush1.bf16.msra.mxu0 %v1826
        %2502 = vmatprep.subr.bf16.mxu0 %v1834
        %2503 = vmatpush1.bf16.msra.mxu0 %v1833
        %2504 = vmatprep.mubr.bf16.mxu0 %v875
        %2505 = vmatmul.mubr.bf16.gmra.mrb[0].mxu0 %v874
        %v2506 = vpop.f32.mrb[0].mxu0
        %v2507 = vadd.f32 %v799, %v2506
        %v2508 = vpop.f32.mrb[0].mxu0
        %v2509 = vadd.f32 %v799, %v2508
        %v2510 = vpop.f32.mrb[0].mxu0
        %v2511 = vadd.f32 %v804, %v2510
        %v2512 = vpop.f32.mrb[0].mxu0
        %v2513 = vadd.f32 %v804, %v2512
        %2514 = vmatprep.mubr.bf16.mxu0 %v880
        %2515 = vmatmul.mubr.bf16.gmra.mrb[0].mxu0 %v879
        %v2516 = vpop.f32.mrb[0].mxu0
        %v2517 = vadd.f32 %v809, %v2516
        %v2518 = vpop.f32.mrb[0].mxu0
        %v2519 = vadd.f32 %v809, %v2518
        %v2520 = vpop.f32.mrb[0].mxu0
        %v2521 = vadd.f32 %v814, %v2520
        %v2522 = vpop.f32.mrb[0].mxu0
        %v2523 = vadd.f32 %v814, %v2522
        %2524 = vmatprep.mubr.bf16.mxu0 %v885
        %2525 = vmatmul.mubr.bf16.gmra.mrb[0].mxu0 %v884
        %v2526 = vpop.f32.mrb[0].mxu0
        %v2527 = vadd.f32 %v819, %v2526
        %v2528 = vpop.f32.mrb[0].mxu0
        %v2529 = vadd.f32 %v819, %v2528
        %v2530 = vpop.f32.mrb[0].mxu0
        %v2531 = vadd.f32 %v824, %v2530
        %v2532 = vpop.f32.mrb[0].mxu0
        %v2533 = vadd.f32 %v824, %v2532
        %2534 = vdwg.mxu0
        %2535 = vmatprep.subr.bf16.mxu0 %v1841
        %2536 = vmatpush1.bf16.msra.mxu0 %v1840
        %2537 = vmatprep.subr.bf16.mxu0 %v1848
        %2538 = vmatpush1.bf16.msra.mxu0 %v1847
        %2539 = vmatprep.subr.bf16.mxu0 %v1855
        %2540 = vmatpush1.bf16.msra.mxu0 %v1854
        %2541 = vmatprep.subr.bf16.mxu0 %v1862
        %2542 = vmatpush1.bf16.msra.mxu0 %v1861
        %2543 = vmatprep.subr.bf16.mxu0 %v1869
        %2544 = vmatpush1.bf16.msra.mxu0 %v1868
        %2545 = vmatprep.subr.bf16.mxu0 %v1876
        %2546 = vmatpush1.bf16.msra.mxu0 %v1875
        %2547 = vmatprep.subr.bf16.mxu0 %v1883
        %2548 = vmatpush1.bf16.msra.mxu0 %v1882
        %2549 = vmatprep.subr.bf16.mxu0 %v1890
        %2550 = vmatpush1.bf16.msra.mxu0 %v1889
        %2551 = vmatprep.subr.bf16.mxu0 %v1897
        %2552 = vmatpush1.bf16.msra.mxu0 %v1896
        %2553 = vmatprep.subr.bf16.mxu0 %v1904
        %2554 = vmatpush1.bf16.msra.mxu0 %v1903
        %2555 = vmatprep.subr.bf16.mxu0 %v1911
        %2556 = vmatpush1.bf16.msra.mxu0 %v1910
        %2557 = vmatprep.subr.bf16.mxu0 %v1918
        %2558 = vmatpush1.bf16.msra.mxu0 %v1917
        %2559 = vmatprep.subr.bf16.mxu0 %v1925
        %2560 = vmatpush1.bf16.msra.mxu0 %v1924
        %2561 = vmatprep.subr.bf16.mxu0 %v1932
        %2562 = vmatpush1.bf16.msra.mxu0 %v1931
        %2563 = vmatprep.subr.bf16.mxu0 %v1939
        %2564 = vmatpush1.bf16.msra.mxu0 %v1938
        %2565 = vmatprep.subr.bf16.mxu0 %v1946
        %2566 = vmatpush1.bf16.msra.mxu0 %v1945
        %2567 = vmatprep.mubr.bf16.mxu0 %v877
        %2568 = vmatmul.mubr.bf16.gmra.mrb[0].mxu0 %v876
        %v2569 = vpop.f32.mrb[0].mxu0
        %v2570 = vadd.f32 %v2507, %v2569
        %v2571 = vpop.f32.mrb[0].mxu0
        %v2572 = vadd.f32 %v2509, %v2571
        %v2573 = vpop.f32.mrb[0].mxu0
        %v2574 = vadd.f32 %v2511, %v2573
        %v2575 = vpop.f32.mrb[0].mxu0
        %v2576 = vadd.f32 %v2513, %v2575
        %2577 = vmatprep.mubr.bf16.mxu0 %v882
        %2578 = vmatmul.mubr.bf16.gmra.mrb[0].mxu0 %v881
        %v2579 = vpop.f32.mrb[0].mxu0
        %v2580 = vadd.f32 %v2517, %v2579
        %v2581 = vpop.f32.mrb[0].mxu0
        %v2582 = vadd.f32 %v2519, %v2581
        %v2583 = vpop.f32.mrb[0].mxu0
        %v2584 = vadd.f32 %v2521, %v2583
        %v2585 = vpop.f32.mrb[0].mxu0
        %v2586 = vadd.f32 %v2523, %v2585
        %2587 = vmatprep.mubr.bf16.mxu0 %v887
        %2588 = vmatmul.mubr.bf16.gmra.mrb[0].mxu0 %v886
        %v2589 = vpop.f32.mrb[0].mxu0
        %v2590 = vadd.f32 %v2527, %v2589
        %v2591 = vpop.f32.mrb[0].mxu0
        %v2592 = vadd.f32 %v2529, %v2591
        %v2593 = vpop.f32.mrb[0].mxu0
        %v2594 = vadd.f32 %v2531, %v2593
        %v2595 = vpop.f32.mrb[0].mxu0
        %v2596 = vadd.f32 %v2533, %v2595
        %2597 = vdwg.mxu0
        %2598 = vmatprep.subr.bf16.mxu0 %v1953
        %2599 = vmatpush1.bf16.msra.mxu0 %v1952
        %2600 = vmatprep.subr.bf16.mxu0 %v1960
        %2601 = vmatpush1.bf16.msra.mxu0 %v1959
        %2602 = vmatprep.subr.bf16.mxu0 %v1967
        %2603 = vmatpush1.bf16.msra.mxu0 %v1966
        %2604 = vmatprep.subr.bf16.mxu0 %v1974
        %2605 = vmatpush1.bf16.msra.mxu0 %v1973
        %2606 = vmatprep.subr.bf16.mxu0 %v1981
        %2607 = vmatpush1.bf16.msra.mxu0 %v1980
        %2608 = vmatprep.subr.bf16.mxu0 %v2272
        %2609 = vmatpush1.bf16.msra.mxu0 %v2269
        %2610 = vmatprep.subr.bf16.mxu0 0
        %2611 = vmatpush1.bf16.msra.mxu0 0
        %2612 = vmatprep.subr.bf16.mxu0 0
        %2613 = vmatpush1.bf16.msra.mxu0 0
        %2614 = vmatprep.subr.bf16.mxu0 0
        %2615 = vmatpush1.bf16.msra.mxu0 0
        %2616 = vmatprep.subr.bf16.mxu0 0
        %2617 = vmatpush1.bf16.msra.mxu0 0
        %2618 = vmatprep.subr.bf16.mxu0 0
        %2619 = vmatpush1.bf16.msra.mxu0 0
        %2620 = vmatprep.subr.bf16.mxu0 0
        %2621 = vmatpush1.bf16.msra.mxu0 0
        %2622 = vmatprep.subr.bf16.mxu0 0
        %2623 = vmatpush1.bf16.msra.mxu0 0
        %2624 = vmatprep.subr.bf16.mxu0 0
        %2625 = vmatpush1.bf16.msra.mxu0 0
        %2626 = vmatprep.subr.bf16.mxu0 0
        %2627 = vmatpush1.bf16.msra.mxu0 0
        %2628 = vmatprep.subr.bf16.mxu0 0
        %2629 = vmatpush1.bf16.msra.mxu0 0
        %2630 = vmatprep.mubr.bf16.mxu0 0
        %2631 = vmatmul.mubr.bf16.gmra.mrb[0].mxu0 %v2253
        %v2632 = vpop.f32.mrb[0].mxu0
        %v2633 = vadd.f32 %v2570, %v2632
        %v2634 = vpop.f32.mrb[0].mxu0
        %v2635 = vadd.f32 %v2572, %v2634
        %v2636 = vpop.f32.mrb[0].mxu0
        %v2637 = vadd.f32 %v2574, %v2636
        %v2638 = vpop.f32.mrb[0].mxu0
        %v2639 = vadd.f32 %v2576, %v2638
        %2640 = vmatprep.mubr.bf16.mxu0 0
        %2641 = vmatmul.mubr.bf16.gmra.mrb[0].mxu0 %v2256
        %v2642 = vpop.f32.mrb[0].mxu0
        %v2643 = vadd.f32 %v2580, %v2642
        %v2644 = vpop.f32.mrb[0].mxu0
        %v2645 = vadd.f32 %v2582, %v2644
        %v2646 = vpop.f32.mrb[0].mxu0
        %v2647 = vadd.f32 %v2584, %v2646
        %v2648 = vpop.f32.mrb[0].mxu0
        %v2649 = vadd.f32 %v2586, %v2648
        %2650 = vmatprep.mubr.bf16.mxu0 0
        %2651 = vmatmul.mubr.bf16.gmra.mrb[0].mxu0 %v2259
        %v2652 = vpop.f32.mrb[0].mxu0
        %v2653 = vadd.f32 %v2590, %v2652
        %v2654 = vpop.f32.mrb[0].mxu0
        %v2655 = vadd.f32 %v2592, %v2654
        %v2656 = vpop.f32.mrb[0].mxu0
        %v2657 = vadd.f32 %v2594, %v2656
        %v2658 = vpop.f32.mrb[0].mxu0
        %v2659 = vadd.f32 %v2596, %v2658
        %2660 = vdwg.mxu0
        %2661 = vmatprep.subr.bf16.mxu0 %v1731
        %2662 = vmatpush1.bf16.msra.mxu0 %v1730
        %2663 = vmatprep.subr.bf16.mxu0 %v1738
        %2664 = vmatpush1.bf16.msra.mxu0 %v1737
        %2665 = vmatprep.subr.bf16.mxu0 %v1745
        %2666 = vmatpush1.bf16.msra.mxu0 %v1744
        %2667 = vmatprep.subr.bf16.mxu0 %v1752
        %2668 = vmatpush1.bf16.msra.mxu0 %v1751
        %2669 = vmatprep.subr.bf16.mxu0 %v1759
        %2670 = vmatpush1.bf16.msra.mxu0 %v1758
        %2671 = vmatprep.subr.bf16.mxu0 %v1766
        %2672 = vmatpush1.bf16.msra.mxu0 %v1765
        %2673 = vmatprep.subr.bf16.mxu0 %v1773
        %2674 = vmatpush1.bf16.msra.mxu0 %v1772
        %2675 = vmatprep.subr.bf16.mxu0 %v1780
        %2676 = vmatpush1.bf16.msra.mxu0 %v1779
        %2677 = vmatprep.subr.bf16.mxu0 %v1787
        %2678 = vmatpush1.bf16.msra.mxu0 %v1786
        %2679 = vmatprep.subr.bf16.mxu0 %v1794
        %2680 = vmatpush1.bf16.msra.mxu0 %v1793
        %2681 = vmatprep.subr.bf16.mxu0 %v1801
        %2682 = vmatpush1.bf16.msra.mxu0 %v1800
        %2683 = vmatprep.subr.bf16.mxu0 %v1808
        %2684 = vmatpush1.bf16.msra.mxu0 %v1807
        %2685 = vmatprep.subr.bf16.mxu0 %v1815
        %2686 = vmatpush1.bf16.msra.mxu0 %v1814
        %2687 = vmatprep.subr.bf16.mxu0 %v1822
        %2688 = vmatpush1.bf16.msra.mxu0 %v1821
        %2689 = vmatprep.subr.bf16.mxu0 %v1829
        %2690 = vmatpush1.bf16.msra.mxu0 %v1828
        %2691 = vmatprep.subr.bf16.mxu0 %v1836
        %2692 = vmatpush1.bf16.msra.mxu0 %v1835
        %2693 = vmatprep.mubr.bf16.mxu0 %v875
        %2694 = vmatmul.mubr.bf16.gmra.mrb[0].mxu0 %v874
        %v2695 = vpop.f32.mrb[0].mxu0
        %v2696 = vadd.f32 %v799, %v2695
        %v2697 = vpop.f32.mrb[0].mxu0
        %v2698 = vadd.f32 %v799, %v2697
        %v2699 = vpop.f32.mrb[0].mxu0
        %v2700 = vadd.f32 %v804, %v2699
        %v2701 = vpop.f32.mrb[0].mxu0
        %v2702 = vadd.f32 %v804, %v2701
        %2703 = vmatprep.mubr.bf16.mxu0 %v880
        %2704 = vmatmul.mubr.bf16.gmra.mrb[0].mxu0 %v879
        %v2705 = vpop.f32.mrb[0].mxu0
        %v2706 = vadd.f32 %v809, %v2705
        %v2707 = vpop.f32.mrb[0].mxu0
        %v2708 = vadd.f32 %v809, %v2707
        %v2709 = vpop.f32.mrb[0].mxu0
        %v2710 = vadd.f32 %v814, %v2709
        %v2711 = vpop.f32.mrb[0].mxu0
        %v2712 = vadd.f32 %v814, %v2711
        %2713 = vmatprep.mubr.bf16.mxu0 %v885
        %2714 = vmatmul.mubr.bf16.gmra.mrb[0].mxu0 %v884
        %v2715 = vpop.f32.mrb[0].mxu0
        %v2716 = vadd.f32 %v819, %v2715
        %v2717 = vpop.f32.mrb[0].mxu0
        %v2718 = vadd.f32 %v819, %v2717
        %v2719 = vpop.f32.mrb[0].mxu0
        %v2720 = vadd.f32 %v824, %v2719
        %v2721 = vpop.f32.mrb[0].mxu0
        %v2722 = vadd.f32 %v824, %v2721
        %2723 = vdwg.mxu0
        %2724 = vmatprep.subr.bf16.mxu0 %v1843
        %2725 = vmatpush1.bf16.msra.mxu0 %v1842
        %2726 = vmatprep.subr.bf16.mxu0 %v1850
        %2727 = vmatpush1.bf16.msra.mxu0 %v1849
        %2728 = vmatprep.subr.bf16.mxu0 %v1857
        %2729 = vmatpush1.bf16.msra.mxu0 %v1856
        %2730 = vmatprep.subr.bf16.mxu0 %v1864
        %2731 = vmatpush1.bf16.msra.mxu0 %v1863
        %2732 = vmatprep.subr.bf16.mxu0 %v1871
        %2733 = vmatpush1.bf16.msra.mxu0 %v1870
        %2734 = vmatprep.subr.bf16.mxu0 %v1878
        %2735 = vmatpush1.bf16.msra.mxu0 %v1877
        %2736 = vmatprep.subr.bf16.mxu0 %v1885
        %2737 = vmatpush1.bf16.msra.mxu0 %v1884
        %2738 = vmatprep.subr.bf16.mxu0 %v1892
        %2739 = vmatpush1.bf16.msra.mxu0 %v1891
        %2740 = vmatprep.subr.bf16.mxu0 %v1899
        %2741 = vmatpush1.bf16.msra.mxu0 %v1898
        %2742 = vmatprep.subr.bf16.mxu0 %v1906
        %2743 = vmatpush1.bf16.msra.mxu0 %v1905
        %2744 = vmatprep.subr.bf16.mxu0 %v1913
        %2745 = vmatpush1.bf16.msra.mxu0 %v1912
        %2746 = vmatprep.subr.bf16.mxu0 %v1920
        %2747 = vmatpush1.bf16.msra.mxu0 %v1919
        %2748 = vmatprep.subr.bf16.mxu0 %v1927
        %2749 = vmatpush1.bf16.msra.mxu0 %v1926
        %2750 = vmatprep.subr.bf16.mxu0 %v1934
        %2751 = vmatpush1.bf16.msra.mxu0 %v1933
        %2752 = vmatprep.subr.bf16.mxu0 %v1941
        %2753 = vmatpush1.bf16.msra.mxu0 %v1940
        %2754 = vmatprep.subr.bf16.mxu0 %v1948
        %2755 = vmatpush1.bf16.msra.mxu0 %v1947
        %2756 = vmatprep.mubr.bf16.mxu0 %v877
        %2757 = vmatmul.mubr.bf16.gmra.mrb[0].mxu0 %v876
        %v2758 = vpop.f32.mrb[0].mxu0
        %v2759 = vadd.f32 %v2696, %v2758
        %v2760 = vpop.f32.mrb[0].mxu0
        %v2761 = vadd.f32 %v2698, %v2760
        %v2762 = vpop.f32.mrb[0].mxu0
        %v2763 = vadd.f32 %v2700, %v2762
        %v2764 = vpop.f32.mrb[0].mxu0
        %v2765 = vadd.f32 %v2702, %v2764
        %2766 = vmatprep.mubr.bf16.mxu0 %v882
        %2767 = vmatmul.mubr.bf16.gmra.mrb[0].mxu0 %v881
        %v2768 = vpop.f32.mrb[0].mxu0
        %v2769 = vadd.f32 %v2706, %v2768
        %v2770 = vpop.f32.mrb[0].mxu0
        %v2771 = vadd.f32 %v2708, %v2770
        %v2772 = vpop.f32.mrb[0].mxu0
        %v2773 = vadd.f32 %v2710, %v2772
        %v2774 = vpop.f32.mrb[0].mxu0
        %v2775 = vadd.f32 %v2712, %v2774
        %2776 = vmatprep.mubr.bf16.mxu0 %v887
        %2777 = vmatmul.mubr.bf16.gmra.mrb[0].mxu0 %v886
        %v2778 = vpop.f32.mrb[0].mxu0
        %v2779 = vadd.f32 %v2716, %v2778
        %v2780 = vpop.f32.mrb[0].mxu0
        %v2781 = vadd.f32 %v2718, %v2780
        %v2782 = vpop.f32.mrb[0].mxu0
        %v2783 = vadd.f32 %v2720, %v2782
        %v2784 = vpop.f32.mrb[0].mxu0
        %v2785 = vadd.f32 %v2722, %v2784
        %2786 = vdwg.mxu0
        %2787 = vmatprep.subr.bf16.mxu0 %v1955
        %2788 = vmatpush1.bf16.msra.mxu0 %v1954
        %2789 = vmatprep.subr.bf16.mxu0 %v1962
        %2790 = vmatpush1.bf16.msra.mxu0 %v1961
        %2791 = vmatprep.subr.bf16.mxu0 %v1969
        %2792 = vmatpush1.bf16.msra.mxu0 %v1968
        %2793 = vmatprep.subr.bf16.mxu0 %v1976
        %2794 = vmatpush1.bf16.msra.mxu0 %v1975
        %2795 = vmatprep.subr.bf16.mxu0 %v1983
        %2796 = vmatpush1.bf16.msra.mxu0 %v1982
        %2797 = vmatprep.subr.bf16.mxu0 %v2278
        %2798 = vmatpush1.bf16.msra.mxu0 %v2275
        %2799 = vmatprep.subr.bf16.mxu0 0
        %2800 = vmatpush1.bf16.msra.mxu0 0
        %2801 = vmatprep.subr.bf16.mxu0 0
        %2802 = vmatpush1.bf16.msra.mxu0 0
        %2803 = vmatprep.subr.bf16.mxu0 0
        %2804 = vmatpush1.bf16.msra.mxu0 0
        %2805 = vmatprep.subr.bf16.mxu0 0
        %2806 = vmatpush1.bf16.msra.mxu0 0
        %2807 = vmatprep.subr.bf16.mxu0 0
        %2808 = vmatpush1.bf16.msra.mxu0 0
        %2809 = vmatprep.subr.bf16.mxu0 0
        %2810 = vmatpush1.bf16.msra.mxu0 0
        %2811 = vmatprep.subr.bf16.mxu0 0
        %2812 = vmatpush1.bf16.msra.mxu0 0
        %2813 = vmatprep.subr.bf16.mxu0 0
        %2814 = vmatpush1.bf16.msra.mxu0 0
        %2815 = vmatprep.subr.bf16.mxu0 0
        %2816 = vmatpush1.bf16.msra.mxu0 0
        %2817 = vmatprep.subr.bf16.mxu0 0
        %2818 = vmatpush1.bf16.msra.mxu0 0
        %2819 = vmatprep.mubr.bf16.mxu0 0
        %2820 = vmatmul.mubr.bf16.gmra.mrb[0].mxu0 %v2253
        %v2821 = vpop.f32.mrb[0].mxu0
        %v2822 = vadd.f32 %v2759, %v2821
        %v2823 = vpop.f32.mrb[0].mxu0
        %v2824 = vadd.f32 %v2761, %v2823
        %v2825 = vpop.f32.mrb[0].mxu0
        %v2826 = vadd.f32 %v2763, %v2825
        %v2827 = vpop.f32.mrb[0].mxu0
        %v2828 = vadd.f32 %v2765, %v2827
        %2829 = vmatprep.mubr.bf16.mxu0 0
        %2830 = vmatmul.mubr.bf16.gmra.mrb[0].mxu0 %v2256
        %v2831 = vpop.f32.mrb[0].mxu0
        %v2832 = vadd.f32 %v2769, %v2831
        %v2833 = vpop.f32.mrb[0].mxu0
        %v2834 = vadd.f32 %v2771, %v2833
        %v2835 = vpop.f32.mrb[0].mxu0
        %v2836 = vadd.f32 %v2773, %v2835
        %v2837 = vpop.f32.mrb[0].mxu0
        %v2838 = vadd.f32 %v2775, %v2837
        %2839 = vmatprep.mubr.bf16.mxu0 0
        %2840 = vmatmul.mubr.bf16.gmra.mrb[0].mxu0 %v2259
        %v2841 = vpop.f32.mrb[0].mxu0
        %v2842 = vadd.f32 %v2779, %v2841
        %v2843 = vpop.f32.mrb[0].mxu0
        %v2844 = vadd.f32 %v2781, %v2843
        %v2845 = vpop.f32.mrb[0].mxu0
        %v2846 = vadd.f32 %v2783, %v2845
        %v2847 = vpop.f32.mrb[0].mxu0
        %v2848 = vadd.f32 %v2785, %v2847
        %2849 = vdwg.mxu0
        %2850 = vmatprep.subr.bf16.mxu0 0
        %2851 = vmatpush1.bf16.msra.mxu0 %v1732
        %2852 = vmatprep.subr.bf16.mxu0 0
        %2853 = vmatpush1.bf16.msra.mxu0 %v1739
        %2854 = vmatprep.subr.bf16.mxu0 0
        %2855 = vmatpush1.bf16.msra.mxu0 %v1746
        %2856 = vmatprep.subr.bf16.mxu0 0
        %2857 = vmatpush1.bf16.msra.mxu0 %v1753
        %2858 = vmatprep.subr.bf16.mxu0 0
        %2859 = vmatpush1.bf16.msra.mxu0 %v1760
        %2860 = vmatprep.subr.bf16.mxu0 0
        %2861 = vmatpush1.bf16.msra.mxu0 %v1767
        %2862 = vmatprep.subr.bf16.mxu0 0
        %2863 = vmatpush1.bf16.msra.mxu0 %v1774
        %2864 = vmatprep.subr.bf16.mxu0 0
        %2865 = vmatpush1.bf16.msra.mxu0 %v1781
        %2866 = vmatprep.subr.bf16.mxu0 0
        %2867 = vmatpush1.bf16.msra.mxu0 %v1788
        %2868 = vmatprep.subr.bf16.mxu0 0
        %2869 = vmatpush1.bf16.msra.mxu0 %v1795
        %2870 = vmatprep.subr.bf16.mxu0 0
        %2871 = vmatpush1.bf16.msra.mxu0 %v1802
        %2872 = vmatprep.subr.bf16.mxu0 0
        %2873 = vmatpush1.bf16.msra.mxu0 %v1809
        %2874 = vmatprep.subr.bf16.mxu0 0
        %2875 = vmatpush1.bf16.msra.mxu0 %v1816
        %2876 = vmatprep.subr.bf16.mxu0 0
        %2877 = vmatpush1.bf16.msra.mxu0 %v1823
        %2878 = vmatprep.subr.bf16.mxu0 0
        %2879 = vmatpush1.bf16.msra.mxu0 %v1830
        %2880 = vmatprep.subr.bf16.mxu0 0
        %2881 = vmatpush1.bf16.msra.mxu0 %v1837
        %2882 = vmatprep.mubr.bf16.mxu0 %v875
        %2883 = vmatmul.mubr.bf16.gmra.mrb[0].mxu0 %v874
        %v2884 = vpop.f32.mrb[0].mxu0
        %v2885 = vadd.f32 %v799, %v2884
        %v2886 = vpop.f32.mrb[0].mxu0
        %v2887 = vpop.f32.mrb[0].mxu0
        %v2888 = vadd.f32 %v804, %v2887
        %v2889 = vpop.f32.mrb[0].mxu0
        %2890 = vmatprep.mubr.bf16.mxu0 %v880
        %2891 = vmatmul.mubr.bf16.gmra.mrb[0].mxu0 %v879
        %v2892 = vpop.f32.mrb[0].mxu0
        %v2893 = vadd.f32 %v809, %v2892
        %v2894 = vpop.f32.mrb[0].mxu0
        %v2895 = vpop.f32.mrb[0].mxu0
        %v2896 = vadd.f32 %v814, %v2895
        %v2897 = vpop.f32.mrb[0].mxu0
        %2898 = vmatprep.mubr.bf16.mxu0 %v885
        %2899 = vmatmul.mubr.bf16.gmra.mrb[0].mxu0 %v884
        %v2900 = vpop.f32.mrb[0].mxu0
        %v2901 = vadd.f32 %v819, %v2900
        %v2902 = vpop.f32.mrb[0].mxu0
        %v2903 = vpop.f32.mrb[0].mxu0
        %v2904 = vadd.f32 %v824, %v2903
        %v2905 = vpop.f32.mrb[0].mxu0
        %2906 = vdwg.mxu0
        %2907 = vmatprep.subr.bf16.mxu0 0
        %2908 = vmatpush1.bf16.msra.mxu0 %v1844
        %2909 = vmatprep.subr.bf16.mxu0 0
        %2910 = vmatpush1.bf16.msra.mxu0 %v1851
        %2911 = vmatprep.subr.bf16.mxu0 0
        %2912 = vmatpush1.bf16.msra.mxu0 %v1858
        %2913 = vmatprep.subr.bf16.mxu0 0
        %2914 = vmatpush1.bf16.msra.mxu0 %v1865
        %2915 = vmatprep.subr.bf16.mxu0 0
        %2916 = vmatpush1.bf16.msra.mxu0 %v1872
        %2917 = vmatprep.subr.bf16.mxu0 0
        %2918 = vmatpush1.bf16.msra.mxu0 %v1879
        %2919 = vmatprep.subr.bf16.mxu0 0
        %2920 = vmatpush1.bf16.msra.mxu0 %v1886
        %2921 = vmatprep.subr.bf16.mxu0 0
        %2922 = vmatpush1.bf16.msra.mxu0 %v1893
        %2923 = vmatprep.subr.bf16.mxu0 0
        %2924 = vmatpush1.bf16.msra.mxu0 %v1900
        %2925 = vmatprep.subr.bf16.mxu0 0
        %2926 = vmatpush1.bf16.msra.mxu0 %v1907
        %2927 = vmatprep.subr.bf16.mxu0 0
        %2928 = vmatpush1.bf16.msra.mxu0 %v1914
        %2929 = vmatprep.subr.bf16.mxu0 0
        %2930 = vmatpush1.bf16.msra.mxu0 %v1921
        %2931 = vmatprep.subr.bf16.mxu0 0
        %2932 = vmatpush1.bf16.msra.mxu0 %v1928
        %2933 = vmatprep.subr.bf16.mxu0 0
        %2934 = vmatpush1.bf16.msra.mxu0 %v1935
        %2935 = vmatprep.subr.bf16.mxu0 0
        %2936 = vmatpush1.bf16.msra.mxu0 %v1942
        %2937 = vmatprep.subr.bf16.mxu0 0
        %2938 = vmatpush1.bf16.msra.mxu0 %v1949
        %2939 = vmatprep.mubr.bf16.mxu0 %v877
        %2940 = vmatmul.mubr.bf16.gmra.mrb[0].mxu0 %v876
        %v2941 = vpop.f32.mrb[0].mxu0
        %v2942 = vadd.f32 %v2885, %v2941
        %v2943 = vpop.f32.mrb[0].mxu0
        %v2944 = vpop.f32.mrb[0].mxu0
        %v2945 = vadd.f32 %v2888, %v2944
        %v2946 = vpop.f32.mrb[0].mxu0
        %2947 = vmatprep.mubr.bf16.mxu0 %v882
        %2948 = vmatmul.mubr.bf16.gmra.mrb[0].mxu0 %v881
        %v2949 = vpop.f32.mrb[0].mxu0
        %v2950 = vadd.f32 %v2893, %v2949
        %v2951 = vpop.f32.mrb[0].mxu0
        %v2952 = vpop.f32.mrb[0].mxu0
        %v2953 = vadd.f32 %v2896, %v2952
        %v2954 = vpop.f32.mrb[0].mxu0
        %2955 = vmatprep.mubr.bf16.mxu0 %v887
        %2956 = vmatmul.mubr.bf16.gmra.mrb[0].mxu0 %v886
        %v2957 = vpop.f32.mrb[0].mxu0
        %v2958 = vadd.f32 %v2901, %v2957
        %v2959 = vpop.f32.mrb[0].mxu0
        %v2960 = vpop.f32.mrb[0].mxu0
        %v2961 = vadd.f32 %v2904, %v2960
        %v2962 = vpop.f32.mrb[0].mxu0
        %2963 = vdwg.mxu0
        %2964 = vmatprep.subr.bf16.mxu0 0
        %2965 = vmatpush1.bf16.msra.mxu0 %v1956
        %2966 = vmatprep.subr.bf16.mxu0 0
        %2967 = vmatpush1.bf16.msra.mxu0 %v1963
        %2968 = vmatprep.subr.bf16.mxu0 0
        %2969 = vmatpush1.bf16.msra.mxu0 %v1970
        %2970 = vmatprep.subr.bf16.mxu0 0
        %2971 = vmatpush1.bf16.msra.mxu0 %v1977
        %2972 = vmatprep.subr.bf16.mxu0 0
        %2973 = vmatpush1.bf16.msra.mxu0 %v1984
        %2974 = vmatprep.subr.bf16.mxu0 0
        %2975 = vmatpush1.bf16.msra.mxu0 %v2281
        %2976 = vmatprep.subr.bf16.mxu0 0
        %2977 = vmatpush1.bf16.msra.mxu0 0
        %2978 = vmatprep.subr.bf16.mxu0 0
        %2979 = vmatpush1.bf16.msra.mxu0 0
        %2980 = vmatprep.subr.bf16.mxu0 0
        %2981 = vmatpush1.bf16.msra.mxu0 0
        %2982 = vmatprep.subr.bf16.mxu0 0
        %2983 = vmatpush1.bf16.msra.mxu0 0
        %2984 = vmatprep.subr.bf16.mxu0 0
        %2985 = vmatpush1.bf16.msra.mxu0 0
        %2986 = vmatprep.subr.bf16.mxu0 0
        %2987 = vmatpush1.bf16.msra.mxu0 0
        %2988 = vmatprep.subr.bf16.mxu0 0
        %2989 = vmatpush1.bf16.msra.mxu0 0
        %2990 = vmatprep.subr.bf16.mxu0 0
        %2991 = vmatpush1.bf16.msra.mxu0 0
        %2992 = vmatprep.subr.bf16.mxu0 0
        %2993 = vmatpush1.bf16.msra.mxu0 0
        %2994 = vmatprep.subr.bf16.mxu0 0
        %2995 = vmatpush1.bf16.msra.mxu0 0
        %2996 = vmatprep.mubr.bf16.mxu0 0
        %2997 = vmatmul.mubr.bf16.gmra.mrb[0].mxu0 %v2253
        %v2998 = vpop.f32.mrb[0].mxu0
        %v2999 = vadd.f32 %v2942, %v2998
        %v3000 = vpop.f32.mrb[0].mxu0
        %v3001 = vpop.f32.mrb[0].mxu0
        %v3002 = vadd.f32 %v2945, %v3001
        %v3003 = vpop.f32.mrb[0].mxu0
        %3004 = vmatprep.mubr.bf16.mxu0 0
        %3005 = vmatmul.mubr.bf16.gmra.mrb[0].mxu0 %v2256
        %v3006 = vpop.f32.mrb[0].mxu0
        %v3007 = vadd.f32 %v2950, %v3006
        %v3008 = vpop.f32.mrb[0].mxu0
        %v3009 = vpop.f32.mrb[0].mxu0
        %v3010 = vadd.f32 %v2953, %v3009
        %v3011 = vpop.f32.mrb[0].mxu0
        %3012 = vmatprep.mubr.bf16.mxu0 0
        %3013 = vmatmul.mubr.bf16.gmra.mrb[0].mxu0 %v2259
        %v3014 = vpop.f32.mrb[0].mxu0
        %v3015 = vadd.f32 %v2958, %v3014
        %v3016 = vpop.f32.mrb[0].mxu0
        %v3017 = vpop.f32.mrb[0].mxu0
        %v3018 = vadd.f32 %v2961, %v3017
        %v3019 = vpop.f32.mrb[0].mxu0
        %3020 = vdwg.mxu0
        %v3021 = vmax.f32 %v2444, 0.0
        %v3022 = vmax.f32 %v2446, 0.0
        %v3023 = vmax.f32 %v2633, 0.0
        %v3024 = vmax.f32 %v2635, 0.0
        %v3025 = vmax.f32 %v2822, 0.0
        %v3026 = vmax.f32 %v2824, 0.0
        %v3027 = vmax.f32 %v2999, 0.0
        %v3028 = vmax.f32 %v2448, 0.0
        %v3029 = vmax.f32 %v2450, 0.0
        %v3030 = vmax.f32 %v2637, 0.0
        %v3031 = vmax.f32 %v2639, 0.0
        %v3032 = vmax.f32 %v2826, 0.0
        %v3033 = vmax.f32 %v2828, 0.0
        %v3034 = vmax.f32 %v3002, 0.0
        %v3035 = vmax.f32 %v2454, 0.0
        %v3036 = vmax.f32 %v2456, 0.0
        %v3037 = vmax.f32 %v2643, 0.0
        %v3038 = vmax.f32 %v2645, 0.0
        %v3039 = vmax.f32 %v2832, 0.0
        %v3040 = vmax.f32 %v2834, 0.0
        %v3041 = vmax.f32 %v3007, 0.0
        %v3042 = vmax.f32 %v2458, 0.0
        %v3043 = vmax.f32 %v2460, 0.0
        %v3044 = vmax.f32 %v2647, 0.0
        %v3045 = vmax.f32 %v2649, 0.0
        %v3046 = vmax.f32 %v2836, 0.0
        %v3047 = vmax.f32 %v2838, 0.0
        %v3048 = vmax.f32 %v3010, 0.0
        %v3049 = vmax.f32 %v2464, 0.0
        %v3050 = vmax.f32 %v2466, 0.0
        %v3051 = vmax.f32 %v2653, 0.0
        %v3052 = vmax.f32 %v2655, 0.0
        %v3053 = vmax.f32 %v2842, 0.0
        %v3054 = vmax.f32 %v2844, 0.0
        %v3055 = vmax.f32 %v3015, 0.0
        %v3056 = vmax.f32 %v2468, 0.0
        %v3057 = vmax.f32 %v2470, 0.0
        %v3058 = vmax.f32 %v2657, 0.0
        %v3059 = vmax.f32 %v2659, 0.0
        %v3060 = vmax.f32 %v2846, 0.0
        %v3061 = vmax.f32 %v2848, 0.0
        %v3062 = vmax.f32 %v3018, 0.0
        %v3063 = vpack.c.bf16 %v3028, %v3021
        %v3064 = vpack.c.bf16 %v3029, %v3022
        %v3065 = vpack.c.bf16 %v3030, %v3023
        %v3066 = vpack.c.bf16 %v3031, %v3024
        %v3067 = vpack.c.bf16 %v3032, %v3025
        %v3068 = vpack.c.bf16 %v3033, %v3026
        %v3069 = vpack.c.bf16 %v3034, %v3027
        %v3070 = vpack.c.bf16 %v3042, %v3035
        %v3071 = vpack.c.bf16 %v3043, %v3036
        %v3072 = vpack.c.bf16 %v3044, %v3037
        %v3073 = vpack.c.bf16 %v3045, %v3038
        %v3074 = vpack.c.bf16 %v3046, %v3039
        %v3075 = vpack.c.bf16 %v3047, %v3040
        %v3076 = vpack.c.bf16 %v3048, %v3041
        %v3077 = vpack.c.bf16 %v3056, %v3049
        %v3078 = vpack.c.bf16 %v3057, %v3050
        %v3079 = vpack.c.bf16 %v3058, %v3051
        %v3080 = vpack.c.bf16 %v3059, %v3052
        %v3081 = vpack.c.bf16 %v3060, %v3053
        %v3082 = vpack.c.bf16 %v3061, %v3054
        %v3083 = vpack.c.bf16 %v3062, %v3055
        %v3084 = vld [vmem:[%s3] sm:$0xff]
        %v3085 = vld [vmem:[%s3 + $0x8] sm:$0xff]
        %v3086 = vld [vmem:[%s3 + $0x10] sm:$0xff]
        %v3087 = vld [vmem:[%s3 + $0x18] sm:$0xff]
        %v3088 = vld [vmem:[%s3 + $0x20] sm:$0xff]
        %v3089 = vld [vmem:[%s3 + $0x28] sm:$0xff]
        %v3090 = vld [vmem:[%s3 + $0x30] sm:$0xff]
        %v3091 = vld [vmem:[%s3 + $0x38] sm:$0xff]
        %v3092 = vld [vmem:[%s3 + $0x40] sm:$0xff]
        %v3093 = vld [vmem:[%s3 + $0x48] sm:$0xff]
        %v3094 = vld [vmem:[%s3 + $0x50] sm:$0xff]
        %v3095 = vld [vmem:[%s3 + $0x58] sm:$0xff]
        %v3096 = vld [vmem:[%s3 + $0x60] sm:$0xff]
        %v3097 = vld [vmem:[%s3 + $0x68] sm:$0xff]
        %v3098 = vld [vmem:[%s3 + $0x70] sm:$0xff]
        %v3099 = vld [vmem:[%s3 + $0x78] sm:$0xff]
        %v3100 = vld [vmem:[%s3 + $0x80] sm:$0xff]
        %v3101 = vld [vmem:[%s3 + $0x88] sm:$0xff]
        %v3102 = vld [vmem:[%s3 + $0x90] sm:$0xff]
        %v3103 = vld [vmem:[%s3 + $0x98] sm:$0xff]
        %v3104 = vld [vmem:[%s3 + $0xa0] sm:$0xff]
        %v3105 = vld [vmem:[%s3 + $0xa8] sm:$0xff]
        %v3106 = vld [vmem:[%s3 + $0xb0] sm:$0xff]
        %v3107 = vld [vmem:[%s3 + $0xb8] sm:$0xff]
        %v3108 = vld [vmem:[%s3 + $0xc0] sm:$0xff]
        %v3109 = vld [vmem:[%s3 + $0xc8] sm:$0xff]
        %v3110 = vld [vmem:[%s3 + $0xd0] sm:$0xff]
        %v3111 = vld [vmem:[%s3 + $0xd8] sm:$0xff]
        %v3112 = vld [vmem:[%s3 + $0xe0] sm:$0xff]
        %v3113 = vld [vmem:[%s3 + $0xe8] sm:$0xff]
        %v3114 = vld [vmem:[%s3 + $0xf0] sm:$0xff]
        %v3115 = vld [vmem:[%s3 + $0xf8] sm:$0xff]
        %v3116 = vld [vmem:[%s3 + $0x100] sm:$0xff]
        %v3117 = vld [vmem:[%s3 + $0x108] sm:$0xff]
        %v3118 = vld [vmem:[%s3 + $0x110] sm:$0xff]
        %v3119 = vld [vmem:[%s3 + $0x118] sm:$0xff]
        %v3120 = vld [vmem:[%s3 + $0x120] sm:$0xff]
        %v3121 = vld [vmem:[%s3 + $0x128] sm:$0xff]
        %v3122 = vld [vmem:[%s3 + $0x130] sm:$0xff]
        %v3123 = vld [vmem:[%s3 + $0x138] sm:$0xff]
        %v3124 = vld [vmem:[%s3 + $0x140] sm:$0xff]
        %v3125 = vld [vmem:[%s3 + $0x148] sm:$0xff]
        %v3126 = vld [vmem:[%s3 + $0x150] sm:$0xff]
        %v3127 = vld [vmem:[%s3 + $0x158] sm:$0xff]
        %v3128 = vld [vmem:[%s3 + $0x160] sm:$0xff]
        %v3129 = vld [vmem:[%s3 + $0x168] sm:$0xff]
        %v3130 = vld [vmem:[%s3 + $0x170] sm:$0xff]
        %v3131 = vld [vmem:[%s3 + $0x178] sm:$0xff]
        %v3132 = vld [vmem:[%s3 + $0x180] sm:$0xff]
        %v3133 = vld [vmem:[%s3 + $0x188] sm:$0xff]
        %v3134 = vld [vmem:[%s3 + $0x190] sm:$0xff]
        %v3135 = vld [vmem:[%s3 + $0x198] sm:$0xff]
        %v3136 = vld [vmem:[%s3 + $0x1a0] sm:$0xff]
        %v3137 = vld [vmem:[%s3 + $0x1a8] sm:$0xff]
        %v3138 = vld [vmem:[%s3 + $0x1b0] sm:$0xff]
        %v3139 = vld [vmem:[%s3 + $0x1b8] sm:$0xff]
        %v3140 = vld [vmem:[%s3 + $0x1c0] sm:$0xff]
        %v3141 = vld [vmem:[%s3 + $0x1c8] sm:$0xff]
        %v3142 = vld [vmem:[%s3 + $0x1d0] sm:$0xff]
        %v3143 = vld [vmem:[%s3 + $0x1d8] sm:$0xff]
        %v3144 = vld [vmem:[%s3 + $0x1e0] sm:$0xff]
        %v3145 = vld [vmem:[%s3 + $0x1e8] sm:$0xff]
        %v3146 = vld [vmem:[%s3 + $0x1f0] sm:$0xff]
        %v3147 = vld [vmem:[%s3 + $0x1f8] sm:$0xff]
        %v3148 = vld [vmem:[%s3 + $0x200] sm:$0xff]
        %v3149 = vld [vmem:[%s3 + $0x208] sm:$0xff]
        %v3150 = vld [vmem:[%s3 + $0x210] sm:$0xff]
        %v3151 = vld [vmem:[%s3 + $0x218] sm:$0xff]
        %v3152 = vld [vmem:[%s3 + $0x220] sm:$0xff]
        %v3153 = vld [vmem:[%s3 + $0x228] sm:$0xff]
        %v3154 = vld [vmem:[%s3 + $0x230] sm:$0xff]
        %v3155 = vld [vmem:[%s3 + $0x238] sm:$0xff]
        %v3156 = vld [vmem:[%s3 + $0x240] sm:$0xff]
        %v3157 = vld [vmem:[%s3 + $0x248] sm:$0xff]
        %v3158 = vld [vmem:[%s3 + $0x250] sm:$0xff]
        %v3159 = vld [vmem:[%s3 + $0x258] sm:$0xff]
        %v3160 = vld [vmem:[%s3 + $0x260] sm:$0xff]
        %v3161 = vld [vmem:[%s3 + $0x268] sm:$0xff]
        %v3162 = vld [vmem:[%s3 + $0x270] sm:$0xff]
        %v3163 = vld [vmem:[%s3 + $0x278] sm:$0xff]
        %v3164 = vld [vmem:[%s3 + $0x280] sm:$0xff]
        %v3165 = vld [vmem:[%s3 + $0x288] sm:$0xff]
        %v3166 = vld [vmem:[%s3 + $0x290] sm:$0xff]
        %v3167 = vld [vmem:[%s3 + $0x298] sm:$0xff]
        %v3168 = vld [vmem:[%s3 + $0x2a0] sm:$0xff]
        %v3169 = vld [vmem:[%s3 + $0x2a8] sm:$0xff]
        %v3170 = vld [vmem:[%s3 + $0x2b0] sm:$0xff]
        %v3171 = vld [vmem:[%s3 + $0x2b8] sm:$0xff]
        %v3172 = vld [vmem:[%s3 + $0x2c0] sm:$0xff]
        %v3173 = vld [vmem:[%s3 + $0x2c8] sm:$0xff]
        %v3174 = vld [vmem:[%s3 + $0x2d0] sm:$0xff]
        %v3175 = vld [vmem:[%s3 + $0x2d8] sm:$0xff]
        %v3176 = vld [vmem:[%s3 + $0x2e0] sm:$0xff]
        %v3177 = vld [vmem:[%s3 + $0x2e8] sm:$0xff]
        %v3178 = vld [vmem:[%s3 + $0x2f0] sm:$0xff]
        %v3179 = vld [vmem:[%s3 + $0x2f8] sm:$0xff]
        %v3180 = vld [vmem:[%s3 + $0x300] sm:$0xff]
        %v3181 = vld [vmem:[%s3 + $0x308] sm:$0xff]
        %v3280 = vunpack.c.l.b16 %v3084
        %v3281 = vunpack.c.h.b16 %v3084
        %v3282 = vunpack.c.l.b16 %v3085
        %v3283 = vunpack.c.h.b16 %v3085
        %v3284 = vunpack.c.l.b16 %v3086
        %v3285 = vunpack.c.h.b16 %v3086
        %v3286 = vunpack.c.l.b16 %v3087
        %v3287 = vunpack.c.h.b16 %v3087
        %v3288 = vunpack.c.l.b16 %v3088
        %v3289 = vunpack.c.h.b16 %v3088
        %v3290 = vunpack.c.l.b16 %v3089
        %v3291 = vunpack.c.h.b16 %v3089
        %v3292 = vunpack.c.l.b16 %v3090
        %v3293 = vunpack.c.h.b16 %v3090
        %v3294 = vunpack.c.l.b16 %v3091
        %v3295 = vunpack.c.h.b16 %v3091
        %v3296 = vunpack.c.l.b16 %v3092
        %v3297 = vunpack.c.h.b16 %v3092
        %v3298 = vunpack.c.l.b16 %v3093
        %v3299 = vunpack.c.h.b16 %v3093
        %v3300 = vunpack.c.l.b16 %v3094
        %v3301 = vunpack.c.h.b16 %v3094
        %v3302 = vunpack.c.l.b16 %v3095
        %v3303 = vunpack.c.h.b16 %v3095
        %v3304 = vunpack.c.l.b16 %v3096
        %v3305 = vunpack.c.h.b16 %v3096
        %v3306 = vunpack.c.l.b16 %v3097
        %v3307 = vunpack.c.h.b16 %v3097
        %v3308 = vunpack.c.l.b16 %v3098
        %v3309 = vunpack.c.h.b16 %v3098
        %v3310 = vunpack.c.l.b16 %v3099
        %v3311 = vunpack.c.h.b16 %v3099
        %v3312 = vunpack.c.l.b16 %v3100
        %v3313 = vunpack.c.h.b16 %v3100
        %v3314 = vunpack.c.l.b16 %v3101
        %v3315 = vunpack.c.h.b16 %v3101
        %v3316 = vunpack.c.l.b16 %v3102
        %v3317 = vunpack.c.h.b16 %v3102
        %v3318 = vunpack.c.l.b16 %v3103
        %v3319 = vunpack.c.h.b16 %v3103
        %v3320 = vunpack.c.l.b16 %v3104
        %v3321 = vunpack.c.h.b16 %v3104
        %v3322 = vunpack.c.l.b16 %v3105
        %v3323 = vunpack.c.h.b16 %v3105
        %v3324 = vunpack.c.l.b16 %v3106
        %v3325 = vunpack.c.h.b16 %v3106
        %v3326 = vunpack.c.l.b16 %v3107
        %v3327 = vunpack.c.h.b16 %v3107
        %v3328 = vunpack.c.l.b16 %v3108
        %v3329 = vunpack.c.h.b16 %v3108
        %v3330 = vunpack.c.l.b16 %v3109
        %v3331 = vunpack.c.h.b16 %v3109
        %v3332 = vunpack.c.l.b16 %v3110
        %v3333 = vunpack.c.h.b16 %v3110
        %v3334 = vunpack.c.l.b16 %v3111
        %v3335 = vunpack.c.h.b16 %v3111
        %v3336 = vunpack.c.l.b16 %v3112
        %v3337 = vunpack.c.h.b16 %v3112
        %v3338 = vunpack.c.l.b16 %v3113
        %v3339 = vunpack.c.h.b16 %v3113
        %v3340 = vunpack.c.l.b16 %v3114
        %v3341 = vunpack.c.h.b16 %v3114
        %v3342 = vunpack.c.l.b16 %v3115
        %v3343 = vunpack.c.h.b16 %v3115
        %v3344 = vunpack.c.l.b16 %v3116
        %v3345 = vunpack.c.h.b16 %v3116
        %v3346 = vunpack.c.l.b16 %v3117
        %v3347 = vunpack.c.h.b16 %v3117
        %v3348 = vunpack.c.l.b16 %v3118
        %v3349 = vunpack.c.h.b16 %v3118
        %v3350 = vunpack.c.l.b16 %v3119
        %v3351 = vunpack.c.h.b16 %v3119
        %v3352 = vunpack.c.l.b16 %v3120
        %v3353 = vunpack.c.h.b16 %v3120
        %v3354 = vunpack.c.l.b16 %v3121
        %v3355 = vunpack.c.h.b16 %v3121
        %v3356 = vunpack.c.l.b16 %v3122
        %v3357 = vunpack.c.h.b16 %v3122
        %v3358 = vunpack.c.l.b16 %v3123
        %v3359 = vunpack.c.h.b16 %v3123
        %v3360 = vunpack.c.l.b16 %v3124
        %v3361 = vunpack.c.h.b16 %v3124
        %v3362 = vunpack.c.l.b16 %v3125
        %v3363 = vunpack.c.h.b16 %v3125
        %v3364 = vunpack.c.l.b16 %v3126
        %v3365 = vunpack.c.h.b16 %v3126
        %v3366 = vunpack.c.l.b16 %v3127
        %v3367 = vunpack.c.h.b16 %v3127
        %v3368 = vunpack.c.l.b16 %v3128
        %v3369 = vunpack.c.h.b16 %v3128
        %v3370 = vunpack.c.l.b16 %v3129
        %v3371 = vunpack.c.h.b16 %v3129
        %v3372 = vunpack.c.l.b16 %v3130
        %v3373 = vunpack.c.h.b16 %v3130
        %v3374 = vunpack.c.l.b16 %v3131
        %v3375 = vunpack.c.h.b16 %v3131
        %v3376 = vunpack.c.l.b16 %v3132
        %v3377 = vunpack.c.h.b16 %v3132
        %v3378 = vunpack.c.l.b16 %v3133
        %v3379 = vunpack.c.h.b16 %v3133
        %v3380 = vunpack.c.l.b16 %v3134
        %v3381 = vunpack.c.h.b16 %v3134
        %v3382 = vunpack.c.l.b16 %v3135
        %v3383 = vunpack.c.h.b16 %v3135
        %v3384 = vunpack.c.l.b16 %v3136
        %v3385 = vunpack.c.h.b16 %v3136
        %v3386 = vunpack.c.l.b16 %v3137
        %v3387 = vunpack.c.h.b16 %v3137
        %v3388 = vunpack.c.l.b16 %v3138
        %v3389 = vunpack.c.h.b16 %v3138
        %v3390 = vunpack.c.l.b16 %v3139
        %v3391 = vunpack.c.h.b16 %v3139
        %v3392 = vunpack.c.l.b16 %v3140
        %v3393 = vunpack.c.h.b16 %v3140
        %v3394 = vunpack.c.l.b16 %v3141
        %v3395 = vunpack.c.h.b16 %v3141
        %v3396 = vunpack.c.l.b16 %v3142
        %v3397 = vunpack.c.h.b16 %v3142
        %v3398 = vunpack.c.l.b16 %v3143
        %v3399 = vunpack.c.h.b16 %v3143
        %v3400 = vunpack.c.l.b16 %v3144
        %v3401 = vunpack.c.h.b16 %v3144
        %v3402 = vunpack.c.l.b16 %v3145
        %v3403 = vunpack.c.h.b16 %v3145
        %v3404 = vunpack.c.l.b16 %v3146
        %v3405 = vunpack.c.h.b16 %v3146
        %v3406 = vunpack.c.l.b16 %v3147
        %v3407 = vunpack.c.h.b16 %v3147
        %v3408 = vunpack.c.l.b16 %v3148
        %v3409 = vunpack.c.h.b16 %v3148
        %v3410 = vunpack.c.l.b16 %v3149
        %v3411 = vunpack.c.h.b16 %v3149
        %v3412 = vunpack.c.l.b16 %v3150
        %v3413 = vunpack.c.h.b16 %v3150
        %v3414 = vunpack.c.l.b16 %v3151
        %v3415 = vunpack.c.h.b16 %v3151
        %v3416 = vunpack.c.l.b16 %v3152
        %v3417 = vunpack.c.h.b16 %v3152
        %v3418 = vunpack.c.l.b16 %v3153
        %v3419 = vunpack.c.h.b16 %v3153
        %v3420 = vunpack.c.l.b16 %v3154
        %v3421 = vunpack.c.h.b16 %v3154
        %v3422 = vunpack.c.l.b16 %v3155
        %v3423 = vunpack.c.h.b16 %v3155
        %v3424 = vunpack.c.l.b16 %v3156
        %v3425 = vunpack.c.h.b16 %v3156
        %v3426 = vunpack.c.l.b16 %v3157
        %v3427 = vunpack.c.h.b16 %v3157
        %v3428 = vunpack.c.l.b16 %v3158
        %v3429 = vunpack.c.h.b16 %v3158
        %v3430 = vunpack.c.l.b16 %v3159
        %v3431 = vunpack.c.h.b16 %v3159
        %v3432 = vunpack.c.l.b16 %v3160
        %v3433 = vunpack.c.h.b16 %v3160
        %v3434 = vunpack.c.l.b16 %v3161
        %v3435 = vunpack.c.h.b16 %v3161
        %v3436 = vunpack.c.l.b16 %v3162
        %v3437 = vunpack.c.h.b16 %v3162
        %v3438 = vunpack.c.l.b16 %v3163
        %v3439 = vunpack.c.h.b16 %v3163
        %v3440 = vunpack.c.l.b16 %v3164
        %v3441 = vunpack.c.h.b16 %v3164
        %v3442 = vunpack.c.l.b16 %v3165
        %v3443 = vunpack.c.h.b16 %v3165
        %v3444 = vunpack.c.l.b16 %v3166
        %v3445 = vunpack.c.h.b16 %v3166
        %v3446 = vunpack.c.l.b16 %v3167
        %v3447 = vunpack.c.h.b16 %v3167
        %v3448 = vunpack.c.l.b16 %v3168
        %v3449 = vunpack.c.h.b16 %v3168
        %v3450 = vunpack.c.l.b16 %v3169
        %v3451 = vunpack.c.h.b16 %v3169
        %v3452 = vunpack.c.l.b16 %v3170
        %v3453 = vunpack.c.h.b16 %v3170
        %v3454 = vunpack.c.l.b16 %v3171
        %v3455 = vunpack.c.h.b16 %v3171
        %v3456 = vunpack.c.l.b16 %v3172
        %v3457 = vunpack.c.h.b16 %v3172
        %v3458 = vunpack.c.l.b16 %v3173
        %v3459 = vunpack.c.h.b16 %v3173
        %v3460 = vunpack.c.l.b16 %v3174
        %v3461 = vunpack.c.h.b16 %v3174
        %v3462 = vunpack.c.l.b16 %v3175
        %v3463 = vunpack.c.h.b16 %v3175
        %v3464 = vunpack.c.l.b16 %v3176
        %v3465 = vunpack.c.h.b16 %v3176
        %v3466 = vunpack.c.l.b16 %v3177
        %v3467 = vunpack.c.h.b16 %v3177
        %v3468 = vunpack.c.l.b16 %v3178
        %v3469 = vunpack.c.h.b16 %v3178
        %v3470 = vunpack.c.l.b16 %v3179
        %v3471 = vunpack.c.h.b16 %v3179
        %v3472 = vunpack.c.l.b16 %v3180
        %v3473 = vunpack.c.h.b16 %v3180
        %v3474 = vunpack.c.l.b16 %v3181
        %v3475 = vunpack.c.h.b16 %v3181
        %v3476 = vpack.c.b16 %v3282, %v3280
        %v3477 = vpack.c.b16 %v3283, %v3281
        %v3478 = vpack.c.b16 %v3286, %v3284
        %v3479 = vpack.c.b16 %v3287, %v3285
        %v3480 = vpack.c.b16 %v3290, %v3288
        %v3481 = vpack.c.b16 %v3291, %v3289
        %v3482 = vpack.c.b16 %v3294, %v3292
        %v3483 = vpack.c.b16 %v3295, %v3293
        %v3484 = vpack.c.b16 %v3298, %v3296
        %v3485 = vpack.c.b16 %v3299, %v3297
        %v3486 = vpack.c.b16 %v3302, %v3300
        %v3487 = vpack.c.b16 %v3303, %v3301
        %v3488 = vpack.c.b16 %v3306, %v3304
        %v3489 = vpack.c.b16 %v3307, %v3305
        %v3490 = vpack.c.b16 %v3310, %v3308
        %v3491 = vpack.c.b16 %v3311, %v3309
        %v3492 = vpack.c.b16 %v3314, %v3312
        %v3493 = vpack.c.b16 %v3315, %v3313
        %v3494 = vpack.c.b16 %v3318, %v3316
        %v3495 = vpack.c.b16 %v3319, %v3317
        %v3496 = vpack.c.b16 %v3322, %v3320
        %v3497 = vpack.c.b16 %v3323, %v3321
        %v3498 = vpack.c.b16 %v3326, %v3324
        %v3499 = vpack.c.b16 %v3327, %v3325
        %v3500 = vpack.c.b16 %v3330, %v3328
        %v3501 = vpack.c.b16 %v3331, %v3329
        %v3502 = vpack.c.b16 %v3334, %v3332
        %v3503 = vpack.c.b16 %v3335, %v3333
        %v3504 = vpack.c.b16 %v3338, %v3336
        %v3505 = vpack.c.b16 %v3339, %v3337
        %v3506 = vpack.c.b16 %v3342, %v3340
        %v3507 = vpack.c.b16 %v3343, %v3341
        %v3508 = vpack.c.b16 %v3346, %v3344
        %v3509 = vpack.c.b16 %v3347, %v3345
        %v3510 = vpack.c.b16 %v3350, %v3348
        %v3511 = vpack.c.b16 %v3351, %v3349
        %v3512 = vpack.c.b16 %v3354, %v3352
        %v3513 = vpack.c.b16 %v3355, %v3353
        %v3514 = vpack.c.b16 %v3358, %v3356
        %v3515 = vpack.c.b16 %v3359, %v3357
        %v3516 = vpack.c.b16 %v3362, %v3360
        %v3517 = vpack.c.b16 %v3363, %v3361
        %v3518 = vpack.c.b16 %v3366, %v3364
        %v3519 = vpack.c.b16 %v3367, %v3365
        %v3520 = vpack.c.b16 %v3370, %v3368
        %v3521 = vpack.c.b16 %v3371, %v3369
        %v3522 = vpack.c.b16 %v3374, %v3372
        %v3523 = vpack.c.b16 %v3375, %v3373
        %v3524 = vpack.c.b16 %v3378, %v3376
        %v3525 = vpack.c.b16 %v3379, %v3377
        %v3526 = vpack.c.b16 %v3382, %v3380
        %v3527 = vpack.c.b16 %v3383, %v3381
        %v3528 = vpack.c.b16 %v3386, %v3384
        %v3529 = vpack.c.b16 %v3387, %v3385
        %v3530 = vpack.c.b16 %v3390, %v3388
        %v3531 = vpack.c.b16 %v3391, %v3389
        %v3532 = vpack.c.b16 %v3394, %v3392
        %v3533 = vpack.c.b16 %v3395, %v3393
        %v3534 = vpack.c.b16 %v3398, %v3396
        %v3535 = vpack.c.b16 %v3399, %v3397
        %v3536 = vpack.c.b16 %v3402, %v3400
        %v3537 = vpack.c.b16 %v3403, %v3401
        %v3538 = vpack.c.b16 %v3406, %v3404
        %v3539 = vpack.c.b16 %v3407, %v3405
        %v3540 = vpack.c.b16 %v3410, %v3408
        %v3541 = vpack.c.b16 %v3411, %v3409
        %v3542 = vpack.c.b16 %v3414, %v3412
        %v3543 = vpack.c.b16 %v3415, %v3413
        %v3544 = vpack.c.b16 %v3418, %v3416
        %v3545 = vpack.c.b16 %v3419, %v3417
        %v3546 = vpack.c.b16 %v3422, %v3420
        %v3547 = vpack.c.b16 %v3423, %v3421
        %v3548 = vpack.c.b16 %v3426, %v3424
        %v3549 = vpack.c.b16 %v3427, %v3425
        %v3550 = vpack.c.b16 %v3430, %v3428
        %v3551 = vpack.c.b16 %v3431, %v3429
        %v3552 = vpack.c.b16 %v3434, %v3432
        %v3553 = vpack.c.b16 %v3435, %v3433
        %v3554 = vpack.c.b16 %v3438, %v3436
        %v3555 = vpack.c.b16 %v3439, %v3437
        %v3556 = vpack.c.b16 %v3442, %v3440
        %v3557 = vpack.c.b16 %v3443, %v3441
        %v3558 = vpack.c.b16 %v3446, %v3444
        %v3559 = vpack.c.b16 %v3447, %v3445
        %v3560 = vpack.c.b16 %v3450, %v3448
        %v3561 = vpack.c.b16 %v3451, %v3449
        %v3562 = vpack.c.b16 %v3454, %v3452
        %v3563 = vpack.c.b16 %v3455, %v3453
        %v3564 = vpack.c.b16 %v3458, %v3456
        %v3565 = vpack.c.b16 %v3459, %v3457
        %v3566 = vpack.c.b16 %v3462, %v3460
        %v3567 = vpack.c.b16 %v3463, %v3461
        %v3568 = vpack.c.b16 %v3466, %v3464
        %v3569 = vpack.c.b16 %v3467, %v3465
        %v3570 = vpack.c.b16 %v3470, %v3468
        %v3571 = vpack.c.b16 %v3471, %v3469
        %v3572 = vpack.c.b16 %v3474, %v3472
        %v3573 = vpack.c.b16 %v3475, %v3473
        %vm3672 = vcmask 130048
        %v3674 = vsel %vm3672, %v3069, 0
        %v3677 = vsel %vm3672, %v3076, 0
        %v3680 = vsel %vm3672, %v3083, 0
        %3682 = vmatprep.subr.bf16.mxu0 %v3477
        %3683 = vmatpush1.bf16.msra.mxu0 %v3476
        %3684 = vmatprep.subr.bf16.mxu0 %v3479
        %3685 = vmatpush1.bf16.msra.mxu0 %v3478
        %3686 = vmatprep.subr.bf16.mxu0 %v3481
        %3687 = vmatpush1.bf16.msra.mxu0 %v3480
        %3688 = vmatprep.subr.bf16.mxu0 %v3483
        %3689 = vmatpush1.bf16.msra.mxu0 %v3482
        %3690 = vmatprep.subr.bf16.mxu0 %v3485
        %3691 = vmatpush1.bf16.msra.mxu0 %v3484
        %3692 = vmatprep.subr.bf16.mxu0 %v3487
        %3693 = vmatpush1.bf16.msra.mxu0 %v3486
        %3694 = vmatprep.subr.bf16.mxu0 %v3489
        %3695 = vmatpush1.bf16.msra.mxu0 %v3488
        %3696 = vmatprep.subr.bf16.mxu0 %v3491
        %3697 = vmatpush1.bf16.msra.mxu0 %v3490
        %3698 = vmatprep.subr.bf16.mxu0 %v3493
        %3699 = vmatpush1.bf16.msra.mxu0 %v3492
        %3700 = vmatprep.subr.bf16.mxu0 %v3495
        %3701 = vmatpush1.bf16.msra.mxu0 %v3494
        %3702 = vmatprep.subr.bf16.mxu0 %v3497
        %3703 = vmatpush1.bf16.msra.mxu0 %v3496
        %3704 = vmatprep.subr.bf16.mxu0 %v3499
        %3705 = vmatpush1.bf16.msra.mxu0 %v3498
        %3706 = vmatprep.subr.bf16.mxu0 %v3501
        %3707 = vmatpush1.bf16.msra.mxu0 %v3500
        %3708 = vmatprep.subr.bf16.mxu0 %v3503
        %3709 = vmatpush1.bf16.msra.mxu0 %v3502
        %3710 = vmatprep.subr.bf16.mxu0 %v3505
        %3711 = vmatpush1.bf16.msra.mxu0 %v3504
        %3712 = vmatprep.subr.bf16.mxu0 %v3507
        %3713 = vmatpush1.bf16.msra.mxu0 %v3506
        %3714 = vmatprep.mubr.bf16.mxu0 %v3064
        %3715 = vmatmul.mubr.bf16.gmra.mrb[0].mxu0 %v3063
        %v3716 = vpop.f32.mrb[0].mxu0
        %v3717 = vadd.f32 0.0, %v3716
        %v3718 = vpop.f32.mrb[0].mxu0
        %v3719 = vadd.f32 0.0, %v3718
        %v3720 = vpop.f32.mrb[0].mxu0
        %v3721 = vadd.f32 0.0, %v3720
        %v3722 = vpop.f32.mrb[0].mxu0
        %v3723 = vadd.f32 0.0, %v3722
        %3724 = vmatprep.mubr.bf16.mxu0 %v3071
        %3725 = vmatmul.mubr.bf16.gmra.mrb[0].mxu0 %v3070
        %v3726 = vpop.f32.mrb[0].mxu0
        %v3727 = vadd.f32 0.0, %v3726
        %v3728 = vpop.f32.mrb[0].mxu0
        %v3729 = vadd.f32 0.0, %v3728
        %v3730 = vpop.f32.mrb[0].mxu0
        %v3731 = vadd.f32 0.0, %v3730
        %v3732 = vpop.f32.mrb[0].mxu0
        %v3733 = vadd.f32 0.0, %v3732
        %3734 = vmatprep.mubr.bf16.mxu0 %v3078
        %3735 = vmatmul.mubr.bf16.gmra.mrb[0].mxu0 %v3077
        %v3736 = vpop.f32.mrb[0].mxu0
        %v3737 = vadd.f32 0.0, %v3736
        %v3738 = vpop.f32.mrb[0].mxu0
        %v3739 = vadd.f32 0.0, %v3738
        %v3740 = vpop.f32.mrb[0].mxu0
        %v3741 = vadd.f32 0.0, %v3740
        %v3742 = vpop.f32.mrb[0].mxu0
        %v3743 = vadd.f32 0.0, %v3742
        %3744 = vdwg.mxu0
        %3745 = vmatprep.subr.bf16.mxu0 %v3509
        %3746 = vmatpush1.bf16.msra.mxu0 %v3508
        %3747 = vmatprep.subr.bf16.mxu0 %v3511
        %3748 = vmatpush1.bf16.msra.mxu0 %v3510
        %3749 = vmatprep.subr.bf16.mxu0 %v3513
        %3750 = vmatpush1.bf16.msra.mxu0 %v3512
        %3751 = vmatprep.subr.bf16.mxu0 %v3515
        %3752 = vmatpush1.bf16.msra.mxu0 %v3514
        %3753 = vmatprep.subr.bf16.mxu0 %v3517
        %3754 = vmatpush1.bf16.msra.mxu0 %v3516
        %3755 = vmatprep.subr.bf16.mxu0 %v3519
        %3756 = vmatpush1.bf16.msra.mxu0 %v3518
        %3757 = vmatprep.subr.bf16.mxu0 %v3521
        %3758 = vmatpush1.bf16.msra.mxu0 %v3520
        %3759 = vmatprep.subr.bf16.mxu0 %v3523
        %3760 = vmatpush1.bf16.msra.mxu0 %v3522
        %3761 = vmatprep.subr.bf16.mxu0 %v3525
        %3762 = vmatpush1.bf16.msra.mxu0 %v3524
        %3763 = vmatprep.subr.bf16.mxu0 %v3527
        %3764 = vmatpush1.bf16.msra.mxu0 %v3526
        %3765 = vmatprep.subr.bf16.mxu0 %v3529
        %3766 = vmatpush1.bf16.msra.mxu0 %v3528
        %3767 = vmatprep.subr.bf16.mxu0 %v3531
        %3768 = vmatpush1.bf16.msra.mxu0 %v3530
        %3769 = vmatprep.subr.bf16.mxu0 %v3533
        %3770 = vmatpush1.bf16.msra.mxu0 %v3532
        %3771 = vmatprep.subr.bf16.mxu0 %v3535
        %3772 = vmatpush1.bf16.msra.mxu0 %v3534
        %3773 = vmatprep.subr.bf16.mxu0 %v3537
        %3774 = vmatpush1.bf16.msra.mxu0 %v3536
        %3775 = vmatprep.subr.bf16.mxu0 %v3539
        %3776 = vmatpush1.bf16.msra.mxu0 %v3538
        %3777 = vmatprep.mubr.bf16.mxu0 %v3066
        %3778 = vmatmul.mubr.bf16.gmra.mrb[0].mxu0 %v3065
        %v3779 = vpop.f32.mrb[0].mxu0
        %v3780 = vadd.f32 %v3717, %v3779
        %v3781 = vpop.f32.mrb[0].mxu0
        %v3782 = vadd.f32 %v3719, %v3781
        %v3783 = vpop.f32.mrb[0].mxu0
        %v3784 = vadd.f32 %v3721, %v3783
        %v3785 = vpop.f32.mrb[0].mxu0
        %v3786 = vadd.f32 %v3723, %v3785
        %3787 = vmatprep.mubr.bf16.mxu0 %v3073
        %3788 = vmatmul.mubr.bf16.gmra.mrb[0].mxu0 %v3072
        %v3789 = vpop.f32.mrb[0].mxu0
        %v3790 = vadd.f32 %v3727, %v3789
        %v3791 = vpop.f32.mrb[0].mxu0
        %v3792 = vadd.f32 %v3729, %v3791
        %v3793 = vpop.f32.mrb[0].mxu0
        %v3794 = vadd.f32 %v3731, %v3793
        %v3795 = vpop.f32.mrb[0].mxu0
        %v3796 = vadd.f32 %v3733, %v3795
        %3797 = vmatprep.mubr.bf16.mxu0 %v3080
        %3798 = vmatmul.mubr.bf16.gmra.mrb[0].mxu0 %v3079
        %v3799 = vpop.f32.mrb[0].mxu0
        %v3800 = vadd.f32 %v3737, %v3799
        %v3801 = vpop.f32.mrb[0].mxu0
        %v3802 = vadd.f32 %v3739, %v3801
        %v3803 = vpop.f32.mrb[0].mxu0
        %v3804 = vadd.f32 %v3741, %v3803
        %v3805 = vpop.f32.mrb[0].mxu0
        %v3806 = vadd.f32 %v3743, %v3805
        %3807 = vdwg.mxu0
        %3808 = vmatprep.subr.bf16.mxu0 %v3541
        %3809 = vmatpush1.bf16.msra.mxu0 %v3540
        %3810 = vmatprep.subr.bf16.mxu0 %v3543
        %3811 = vmatpush1.bf16.msra.mxu0 %v3542
        %3812 = vmatprep.subr.bf16.mxu0 %v3545
        %3813 = vmatpush1.bf16.msra.mxu0 %v3544
        %3814 = vmatprep.subr.bf16.mxu0 %v3547
        %3815 = vmatpush1.bf16.msra.mxu0 %v3546
        %3816 = vmatprep.subr.bf16.mxu0 %v3549
        %3817 = vmatpush1.bf16.msra.mxu0 %v3548
        %3818 = vmatprep.subr.bf16.mxu0 %v3551
        %3819 = vmatpush1.bf16.msra.mxu0 %v3550
        %3820 = vmatprep.subr.bf16.mxu0 %v3553
        %3821 = vmatpush1.bf16.msra.mxu0 %v3552
        %3822 = vmatprep.subr.bf16.mxu0 %v3555
        %3823 = vmatpush1.bf16.msra.mxu0 %v3554
        %3824 = vmatprep.subr.bf16.mxu0 %v3557
        %3825 = vmatpush1.bf16.msra.mxu0 %v3556
        %3826 = vmatprep.subr.bf16.mxu0 %v3559
        %3827 = vmatpush1.bf16.msra.mxu0 %v3558
        %3828 = vmatprep.subr.bf16.mxu0 %v3561
        %3829 = vmatpush1.bf16.msra.mxu0 %v3560
        %3830 = vmatprep.subr.bf16.mxu0 %v3563
        %3831 = vmatpush1.bf16.msra.mxu0 %v3562
        %3832 = vmatprep.subr.bf16.mxu0 %v3565
        %3833 = vmatpush1.bf16.msra.mxu0 %v3564
        %3834 = vmatprep.subr.bf16.mxu0 %v3567
        %3835 = vmatpush1.bf16.msra.mxu0 %v3566
        %3836 = vmatprep.subr.bf16.mxu0 %v3569
        %3837 = vmatpush1.bf16.msra.mxu0 %v3568
        %3838 = vmatprep.subr.bf16.mxu0 %v3571
        %3839 = vmatpush1.bf16.msra.mxu0 %v3570
        %3840 = vmatprep.mubr.bf16.mxu0 %v3068
        %3841 = vmatmul.mubr.bf16.gmra.mrb[0].mxu0 %v3067
        %v3842 = vpop.f32.mrb[0].mxu0
        %v3843 = vadd.f32 %v3780, %v3842
        %v3844 = vpop.f32.mrb[0].mxu0
        %v3845 = vadd.f32 %v3782, %v3844
        %v3846 = vpop.f32.mrb[0].mxu0
        %v3847 = vadd.f32 %v3784, %v3846
        %v3848 = vpop.f32.mrb[0].mxu0
        %v3849 = vadd.f32 %v3786, %v3848
        %3850 = vmatprep.mubr.bf16.mxu0 %v3075
        %3851 = vmatmul.mubr.bf16.gmra.mrb[0].mxu0 %v3074
        %v3852 = vpop.f32.mrb[0].mxu0
        %v3853 = vadd.f32 %v3790, %v3852
        %v3854 = vpop.f32.mrb[0].mxu0
        %v3855 = vadd.f32 %v3792, %v3854
        %v3856 = vpop.f32.mrb[0].mxu0
        %v3857 = vadd.f32 %v3794, %v3856
        %v3858 = vpop.f32.mrb[0].mxu0
        %v3859 = vadd.f32 %v3796, %v3858
        %3860 = vmatprep.mubr.bf16.mxu0 %v3082
        %3861 = vmatmul.mubr.bf16.gmra.mrb[0].mxu0 %v3081
        %v3862 = vpop.f32.mrb[0].mxu0
        %v3863 = vadd.f32 %v3800, %v3862
        %v3864 = vpop.f32.mrb[0].mxu0
        %v3865 = vadd.f32 %v3802, %v3864
        %v3866 = vpop.f32.mrb[0].mxu0
        %v3867 = vadd.f32 %v3804, %v3866
        %v3868 = vpop.f32.mrb[0].mxu0
        %v3869 = vadd.f32 %v3806, %v3868
        %3870 = vdwg.mxu0
        %3871 = vmatprep.subr.bf16.mxu0 %v3573
        %3872 = vmatpush1.bf16.msra.mxu0 %v3572
        %3873 = vmatprep.subr.bf16.mxu0 0
        %3874 = vmatpush1.bf16.msra.mxu0 0
        %3875 = vmatprep.subr.bf16.mxu0 0
        %3876 = vmatpush1.bf16.msra.mxu0 0
        %3877 = vmatprep.subr.bf16.mxu0 0
        %3878 = vmatpush1.bf16.msra.mxu0 0
        %3879 = vmatprep.subr.bf16.mxu0 0
        %3880 = vmatpush1.bf16.msra.mxu0 0
        %3881 = vmatprep.subr.bf16.mxu0 0
        %3882 = vmatpush1.bf16.msra.mxu0 0
        %3883 = vmatprep.subr.bf16.mxu0 0
        %3884 = vmatpush1.bf16.msra.mxu0 0
        %3885 = vmatprep.subr.bf16.mxu0 0
        %3886 = vmatpush1.bf16.msra.mxu0 0
        %3887 = vmatprep.subr.bf16.mxu0 0
        %3888 = vmatpush1.bf16.msra.mxu0 0
        %3889 = vmatprep.subr.bf16.mxu0 0
        %3890 = vmatpush1.bf16.msra.mxu0 0
        %3891 = vmatprep.subr.bf16.mxu0 0
        %3892 = vmatpush1.bf16.msra.mxu0 0
        %3893 = vmatprep.subr.bf16.mxu0 0
        %3894 = vmatpush1.bf16.msra.mxu0 0
        %3895 = vmatprep.subr.bf16.mxu0 0
        %3896 = vmatpush1.bf16.msra.mxu0 0
        %3897 = vmatprep.subr.bf16.mxu0 0
        %3898 = vmatpush1.bf16.msra.mxu0 0
        %3899 = vmatprep.subr.bf16.mxu0 0
        %3900 = vmatpush1.bf16.msra.mxu0 0
        %3901 = vmatprep.subr.bf16.mxu0 0
        %3902 = vmatpush1.bf16.msra.mxu0 0
        %3903 = vmatprep.mubr.bf16.mxu0 0
        %3904 = vmatmul.mubr.bf16.gmra.mrb[0].mxu0 %v3674
        %v3905 = vpop.f32.mrb[0].mxu0
        %v3906 = vadd.f32 %v3843, %v3905
        %v3907 = vpop.f32.mrb[0].mxu0
        %v3908 = vadd.f32 %v3845, %v3907
        %v3909 = vpop.f32.mrb[0].mxu0
        %v3910 = vadd.f32 %v3847, %v3909
        %v3911 = vpop.f32.mrb[0].mxu0
        %v3912 = vadd.f32 %v3849, %v3911
        %3913 = vmatprep.mubr.bf16.mxu0 0
        %3914 = vmatmul.mubr.bf16.gmra.mrb[0].mxu0 %v3677
        %v3915 = vpop.f32.mrb[0].mxu0
        %v3916 = vadd.f32 %v3853, %v3915
        %v3917 = vpop.f32.mrb[0].mxu0
        %v3918 = vadd.f32 %v3855, %v3917
        %v3919 = vpop.f32.mrb[0].mxu0
        %v3920 = vadd.f32 %v3857, %v3919
        %v3921 = vpop.f32.mrb[0].mxu0
        %v3922 = vadd.f32 %v3859, %v3921
        %3923 = vmatprep.mubr.bf16.mxu0 0
        %3924 = vmatmul.mubr.bf16.gmra.mrb[0].mxu0 %v3680
        %v3925 = vpop.f32.mrb[0].mxu0
        %v3926 = vadd.f32 %v3863, %v3925
        %v3927 = vpop.f32.mrb[0].mxu0
        %v3928 = vadd.f32 %v3865, %v3927
        %v3929 = vpop.f32.mrb[0].mxu0
        %v3930 = vadd.f32 %v3867, %v3929
        %v3931 = vpop.f32.mrb[0].mxu0
        %v3932 = vadd.f32 %v3869, %v3931
        %3933 = vdwg.mxu0
        %s3934 = scalar_lea.vmem %s3, 784
        %v3935 = vld [vmem:[%s3934] sm:$0xff]
        %v3936 = vld [vmem:[%s3934 + $0x8] sm:$0xff]
        %v3937 = vld [vmem:[%s3934 + $0x10] sm:$0xff]
        %v3938 = vld [vmem:[%s3934 + $0x18] sm:$0xff]
        %v3939 = vld [vmem:[%s3934 + $0x20] sm:$0xff]
        %v3940 = vld [vmem:[%s3934 + $0x28] sm:$0xff]
        %v3941 = vld [vmem:[%s3934 + $0x30] sm:$0xff]
        %v3942 = vld [vmem:[%s3934 + $0x38] sm:$0xff]
        %v3943 = vld [vmem:[%s3934 + $0x40] sm:$0xff]
        %v3944 = vld [vmem:[%s3934 + $0x48] sm:$0xff]
        %v3945 = vld [vmem:[%s3934 + $0x50] sm:$0xff]
        %v3946 = vld [vmem:[%s3934 + $0x58] sm:$0xff]
        %v3947 = vld [vmem:[%s3934 + $0x60] sm:$0xff]
        %v3948 = vld [vmem:[%s3934 + $0x68] sm:$0xff]
        %v3949 = vld [vmem:[%s3934 + $0x70] sm:$0xff]
        %v3950 = vld [vmem:[%s3934 + $0x78] sm:$0xff]
        %v3951 = vld [vmem:[%s3934 + $0x80] sm:$0xff]
        %v3952 = vld [vmem:[%s3934 + $0x88] sm:$0xff]
        %v3953 = vld [vmem:[%s3934 + $0x90] sm:$0xff]
        %v3954 = vld [vmem:[%s3934 + $0x98] sm:$0xff]
        %v3955 = vld [vmem:[%s3934 + $0xa0] sm:$0xff]
        %v3956 = vld [vmem:[%s3934 + $0xa8] sm:$0xff]
        %v3957 = vld [vmem:[%s3934 + $0xb0] sm:$0xff]
        %v3958 = vld [vmem:[%s3934 + $0xb8] sm:$0xff]
        %v3959 = vld [vmem:[%s3934 + $0xc0] sm:$0xff]
        %v3960 = vld [vmem:[%s3934 + $0xc8] sm:$0xff]
        %v3961 = vld [vmem:[%s3934 + $0xd0] sm:$0xff]
        %v3962 = vld [vmem:[%s3934 + $0xd8] sm:$0xff]
        %v3963 = vld [vmem:[%s3934 + $0xe0] sm:$0xff]
        %v3964 = vld [vmem:[%s3934 + $0xe8] sm:$0xff]
        %v3965 = vld [vmem:[%s3934 + $0xf0] sm:$0xff]
        %v3966 = vld [vmem:[%s3934 + $0xf8] sm:$0xff]
        %v3967 = vld [vmem:[%s3934 + $0x100] sm:$0xff]
        %v3968 = vld [vmem:[%s3934 + $0x108] sm:$0xff]
        %v3969 = vld [vmem:[%s3934 + $0x110] sm:$0xff]
        %v3970 = vld [vmem:[%s3934 + $0x118] sm:$0xff]
        %v3971 = vld [vmem:[%s3934 + $0x120] sm:$0xff]
        %v3972 = vld [vmem:[%s3934 + $0x128] sm:$0xff]
        %v3973 = vld [vmem:[%s3934 + $0x130] sm:$0xff]
        %v3974 = vld [vmem:[%s3934 + $0x138] sm:$0xff]
        %v3975 = vld [vmem:[%s3934 + $0x140] sm:$0xff]
        %v3976 = vld [vmem:[%s3934 + $0x148] sm:$0xff]
        %v3977 = vld [vmem:[%s3934 + $0x150] sm:$0xff]
        %v3978 = vld [vmem:[%s3934 + $0x158] sm:$0xff]
        %v3979 = vld [vmem:[%s3934 + $0x160] sm:$0xff]
        %v3980 = vld [vmem:[%s3934 + $0x168] sm:$0xff]
        %v3981 = vld [vmem:[%s3934 + $0x170] sm:$0xff]
        %v3982 = vld [vmem:[%s3934 + $0x178] sm:$0xff]
        %v3983 = vld [vmem:[%s3934 + $0x180] sm:$0xff]
        %v3984 = vld [vmem:[%s3934 + $0x188] sm:$0xff]
        %v3985 = vld [vmem:[%s3934 + $0x190] sm:$0xff]
        %v3986 = vld [vmem:[%s3934 + $0x198] sm:$0xff]
        %v3987 = vld [vmem:[%s3934 + $0x1a0] sm:$0xff]
        %v3988 = vld [vmem:[%s3934 + $0x1a8] sm:$0xff]
        %v3989 = vld [vmem:[%s3934 + $0x1b0] sm:$0xff]
        %v3990 = vld [vmem:[%s3934 + $0x1b8] sm:$0xff]
        %v3991 = vld [vmem:[%s3934 + $0x1c0] sm:$0xff]
        %v3992 = vld [vmem:[%s3934 + $0x1c8] sm:$0xff]
        %v3993 = vld [vmem:[%s3934 + $0x1d0] sm:$0xff]
        %v3994 = vld [vmem:[%s3934 + $0x1d8] sm:$0xff]
        %v3995 = vld [vmem:[%s3934 + $0x1e0] sm:$0xff]
        %v3996 = vld [vmem:[%s3934 + $0x1e8] sm:$0xff]
        %v3997 = vld [vmem:[%s3934 + $0x1f0] sm:$0xff]
        %v3998 = vld [vmem:[%s3934 + $0x1f8] sm:$0xff]
        %v3999 = vld [vmem:[%s3934 + $0x200] sm:$0xff]
        %v4000 = vld [vmem:[%s3934 + $0x208] sm:$0xff]
        %v4001 = vld [vmem:[%s3934 + $0x210] sm:$0xff]
        %v4002 = vld [vmem:[%s3934 + $0x218] sm:$0xff]
        %v4003 = vld [vmem:[%s3934 + $0x220] sm:$0xff]
        %v4004 = vld [vmem:[%s3934 + $0x228] sm:$0xff]
        %v4005 = vld [vmem:[%s3934 + $0x230] sm:$0xff]
        %v4006 = vld [vmem:[%s3934 + $0x238] sm:$0xff]
        %v4007 = vld [vmem:[%s3934 + $0x240] sm:$0xff]
        %v4008 = vld [vmem:[%s3934 + $0x248] sm:$0xff]
        %v4009 = vld [vmem:[%s3934 + $0x250] sm:$0xff]
        %v4010 = vld [vmem:[%s3934 + $0x258] sm:$0xff]
        %v4011 = vld [vmem:[%s3934 + $0x260] sm:$0xff]
        %v4012 = vld [vmem:[%s3934 + $0x268] sm:$0xff]
        %v4013 = vld [vmem:[%s3934 + $0x270] sm:$0xff]
        %v4014 = vld [vmem:[%s3934 + $0x278] sm:$0xff]
        %v4015 = vld [vmem:[%s3934 + $0x280] sm:$0xff]
        %v4016 = vld [vmem:[%s3934 + $0x288] sm:$0xff]
        %v4017 = vld [vmem:[%s3934 + $0x290] sm:$0xff]
        %v4018 = vld [vmem:[%s3934 + $0x298] sm:$0xff]
        %v4019 = vld [vmem:[%s3934 + $0x2a0] sm:$0xff]
        %v4020 = vld [vmem:[%s3934 + $0x2a8] sm:$0xff]
        %v4021 = vld [vmem:[%s3934 + $0x2b0] sm:$0xff]
        %v4022 = vld [vmem:[%s3934 + $0x2b8] sm:$0xff]
        %v4023 = vld [vmem:[%s3934 + $0x2c0] sm:$0xff]
        %v4024 = vld [vmem:[%s3934 + $0x2c8] sm:$0xff]
        %v4025 = vld [vmem:[%s3934 + $0x2d0] sm:$0xff]
        %v4026 = vld [vmem:[%s3934 + $0x2d8] sm:$0xff]
        %v4027 = vld [vmem:[%s3934 + $0x2e0] sm:$0xff]
        %v4028 = vld [vmem:[%s3934 + $0x2e8] sm:$0xff]
        %v4029 = vld [vmem:[%s3934 + $0x2f0] sm:$0xff]
        %v4030 = vld [vmem:[%s3934 + $0x2f8] sm:$0xff]
        %v4031 = vld [vmem:[%s3934 + $0x300] sm:$0xff]
        %v4032 = vld [vmem:[%s3934 + $0x308] sm:$0xff]
        %v4131 = vunpack.c.l.b16 %v3935
        %v4132 = vunpack.c.h.b16 %v3935
        %v4133 = vunpack.c.l.b16 %v3936
        %v4134 = vunpack.c.h.b16 %v3936
        %v4135 = vunpack.c.l.b16 %v3937
        %v4136 = vunpack.c.h.b16 %v3937
        %v4137 = vunpack.c.l.b16 %v3938
        %v4138 = vunpack.c.h.b16 %v3938
        %v4139 = vunpack.c.l.b16 %v3939
        %v4140 = vunpack.c.h.b16 %v3939
        %v4141 = vunpack.c.l.b16 %v3940
        %v4142 = vunpack.c.h.b16 %v3940
        %v4143 = vunpack.c.l.b16 %v3941
        %v4144 = vunpack.c.h.b16 %v3941
        %v4145 = vunpack.c.l.b16 %v3942
        %v4146 = vunpack.c.h.b16 %v3942
        %v4147 = vunpack.c.l.b16 %v3943
        %v4148 = vunpack.c.h.b16 %v3943
        %v4149 = vunpack.c.l.b16 %v3944
        %v4150 = vunpack.c.h.b16 %v3944
        %v4151 = vunpack.c.l.b16 %v3945
        %v4152 = vunpack.c.h.b16 %v3945
        %v4153 = vunpack.c.l.b16 %v3946
        %v4154 = vunpack.c.h.b16 %v3946
        %v4155 = vunpack.c.l.b16 %v3947
        %v4156 = vunpack.c.h.b16 %v3947
        %v4157 = vunpack.c.l.b16 %v3948
        %v4158 = vunpack.c.h.b16 %v3948
        %v4159 = vunpack.c.l.b16 %v3949
        %v4160 = vunpack.c.h.b16 %v3949
        %v4161 = vunpack.c.l.b16 %v3950
        %v4162 = vunpack.c.h.b16 %v3950
        %v4163 = vunpack.c.l.b16 %v3951
        %v4164 = vunpack.c.h.b16 %v3951
        %v4165 = vunpack.c.l.b16 %v3952
        %v4166 = vunpack.c.h.b16 %v3952
        %v4167 = vunpack.c.l.b16 %v3953
        %v4168 = vunpack.c.h.b16 %v3953
        %v4169 = vunpack.c.l.b16 %v3954
        %v4170 = vunpack.c.h.b16 %v3954
        %v4171 = vunpack.c.l.b16 %v3955
        %v4172 = vunpack.c.h.b16 %v3955
        %v4173 = vunpack.c.l.b16 %v3956
        %v4174 = vunpack.c.h.b16 %v3956
        %v4175 = vunpack.c.l.b16 %v3957
        %v4176 = vunpack.c.h.b16 %v3957
        %v4177 = vunpack.c.l.b16 %v3958
        %v4178 = vunpack.c.h.b16 %v3958
        %v4179 = vunpack.c.l.b16 %v3959
        %v4180 = vunpack.c.h.b16 %v3959
        %v4181 = vunpack.c.l.b16 %v3960
        %v4182 = vunpack.c.h.b16 %v3960
        %v4183 = vunpack.c.l.b16 %v3961
        %v4184 = vunpack.c.h.b16 %v3961
        %v4185 = vunpack.c.l.b16 %v3962
        %v4186 = vunpack.c.h.b16 %v3962
        %v4187 = vunpack.c.l.b16 %v3963
        %v4188 = vunpack.c.h.b16 %v3963
        %v4189 = vunpack.c.l.b16 %v3964
        %v4190 = vunpack.c.h.b16 %v3964
        %v4191 = vunpack.c.l.b16 %v3965
        %v4192 = vunpack.c.h.b16 %v3965
        %v4193 = vunpack.c.l.b16 %v3966
        %v4194 = vunpack.c.h.b16 %v3966
        %v4195 = vunpack.c.l.b16 %v3967
        %v4196 = vunpack.c.h.b16 %v3967
        %v4197 = vunpack.c.l.b16 %v3968
        %v4198 = vunpack.c.h.b16 %v3968
        %v4199 = vunpack.c.l.b16 %v3969
        %v4200 = vunpack.c.h.b16 %v3969
        %v4201 = vunpack.c.l.b16 %v3970
        %v4202 = vunpack.c.h.b16 %v3970
        %v4203 = vunpack.c.l.b16 %v3971
        %v4204 = vunpack.c.h.b16 %v3971
        %v4205 = vunpack.c.l.b16 %v3972
        %v4206 = vunpack.c.h.b16 %v3972
        %v4207 = vunpack.c.l.b16 %v3973
        %v4208 = vunpack.c.h.b16 %v3973
        %v4209 = vunpack.c.l.b16 %v3974
        %v4210 = vunpack.c.h.b16 %v3974
        %v4211 = vunpack.c.l.b16 %v3975
        %v4212 = vunpack.c.h.b16 %v3975
        %v4213 = vunpack.c.l.b16 %v3976
        %v4214 = vunpack.c.h.b16 %v3976
        %v4215 = vunpack.c.l.b16 %v3977
        %v4216 = vunpack.c.h.b16 %v3977
        %v4217 = vunpack.c.l.b16 %v3978
        %v4218 = vunpack.c.h.b16 %v3978
        %v4219 = vunpack.c.l.b16 %v3979
        %v4220 = vunpack.c.h.b16 %v3979
        %v4221 = vunpack.c.l.b16 %v3980
        %v4222 = vunpack.c.h.b16 %v3980
        %v4223 = vunpack.c.l.b16 %v3981
        %v4224 = vunpack.c.h.b16 %v3981
        %v4225 = vunpack.c.l.b16 %v3982
        %v4226 = vunpack.c.h.b16 %v3982
        %v4227 = vunpack.c.l.b16 %v3983
        %v4228 = vunpack.c.h.b16 %v3983
        %v4229 = vunpack.c.l.b16 %v3984
        %v4230 = vunpack.c.h.b16 %v3984
        %v4231 = vunpack.c.l.b16 %v3985
        %v4232 = vunpack.c.h.b16 %v3985
        %v4233 = vunpack.c.l.b16 %v3986
        %v4234 = vunpack.c.h.b16 %v3986
        %v4235 = vunpack.c.l.b16 %v3987
        %v4236 = vunpack.c.h.b16 %v3987
        %v4237 = vunpack.c.l.b16 %v3988
        %v4238 = vunpack.c.h.b16 %v3988
        %v4239 = vunpack.c.l.b16 %v3989
        %v4240 = vunpack.c.h.b16 %v3989
        %v4241 = vunpack.c.l.b16 %v3990
        %v4242 = vunpack.c.h.b16 %v3990
        %v4243 = vunpack.c.l.b16 %v3991
        %v4244 = vunpack.c.h.b16 %v3991
        %v4245 = vunpack.c.l.b16 %v3992
        %v4246 = vunpack.c.h.b16 %v3992
        %v4247 = vunpack.c.l.b16 %v3993
        %v4248 = vunpack.c.h.b16 %v3993
        %v4249 = vunpack.c.l.b16 %v3994
        %v4250 = vunpack.c.h.b16 %v3994
        %v4251 = vunpack.c.l.b16 %v3995
        %v4252 = vunpack.c.h.b16 %v3995
        %v4253 = vunpack.c.l.b16 %v3996
        %v4254 = vunpack.c.h.b16 %v3996
        %v4255 = vunpack.c.l.b16 %v3997
        %v4256 = vunpack.c.h.b16 %v3997
        %v4257 = vunpack.c.l.b16 %v3998
        %v4258 = vunpack.c.h.b16 %v3998
        %v4259 = vunpack.c.l.b16 %v3999
        %v4260 = vunpack.c.h.b16 %v3999
        %v4261 = vunpack.c.l.b16 %v4000
        %v4262 = vunpack.c.h.b16 %v4000
        %v4263 = vunpack.c.l.b16 %v4001
        %v4264 = vunpack.c.h.b16 %v4001
        %v4265 = vunpack.c.l.b16 %v4002
        %v4266 = vunpack.c.h.b16 %v4002
        %v4267 = vunpack.c.l.b16 %v4003
        %v4268 = vunpack.c.h.b16 %v4003
        %v4269 = vunpack.c.l.b16 %v4004
        %v4270 = vunpack.c.h.b16 %v4004
        %v4271 = vunpack.c.l.b16 %v4005
        %v4272 = vunpack.c.h.b16 %v4005
        %v4273 = vunpack.c.l.b16 %v4006
        %v4274 = vunpack.c.h.b16 %v4006
        %v4275 = vunpack.c.l.b16 %v4007
        %v4276 = vunpack.c.h.b16 %v4007
        %v4277 = vunpack.c.l.b16 %v4008
        %v4278 = vunpack.c.h.b16 %v4008
        %v4279 = vunpack.c.l.b16 %v4009
        %v4280 = vunpack.c.h.b16 %v4009
        %v4281 = vunpack.c.l.b16 %v4010
        %v4282 = vunpack.c.h.b16 %v4010
        %v4283 = vunpack.c.l.b16 %v4011
        %v4284 = vunpack.c.h.b16 %v4011
        %v4285 = vunpack.c.l.b16 %v4012
        %v4286 = vunpack.c.h.b16 %v4012
        %v4287 = vunpack.c.l.b16 %v4013
        %v4288 = vunpack.c.h.b16 %v4013
        %v4289 = vunpack.c.l.b16 %v4014
        %v4290 = vunpack.c.h.b16 %v4014
        %v4291 = vunpack.c.l.b16 %v4015
        %v4292 = vunpack.c.h.b16 %v4015
        %v4293 = vunpack.c.l.b16 %v4016
        %v4294 = vunpack.c.h.b16 %v4016
        %v4295 = vunpack.c.l.b16 %v4017
        %v4296 = vunpack.c.h.b16 %v4017
        %v4297 = vunpack.c.l.b16 %v4018
        %v4298 = vunpack.c.h.b16 %v4018
        %v4299 = vunpack.c.l.b16 %v4019
        %v4300 = vunpack.c.h.b16 %v4019
        %v4301 = vunpack.c.l.b16 %v4020
        %v4302 = vunpack.c.h.b16 %v4020
        %v4303 = vunpack.c.l.b16 %v4021
        %v4304 = vunpack.c.h.b16 %v4021
        %v4305 = vunpack.c.l.b16 %v4022
        %v4306 = vunpack.c.h.b16 %v4022
        %v4307 = vunpack.c.l.b16 %v4023
        %v4308 = vunpack.c.h.b16 %v4023
        %v4309 = vunpack.c.l.b16 %v4024
        %v4310 = vunpack.c.h.b16 %v4024
        %v4311 = vunpack.c.l.b16 %v4025
        %v4312 = vunpack.c.h.b16 %v4025
        %v4313 = vunpack.c.l.b16 %v4026
        %v4314 = vunpack.c.h.b16 %v4026
        %v4315 = vunpack.c.l.b16 %v4027
        %v4316 = vunpack.c.h.b16 %v4027
        %v4317 = vunpack.c.l.b16 %v4028
        %v4318 = vunpack.c.h.b16 %v4028
        %v4319 = vunpack.c.l.b16 %v4029
        %v4320 = vunpack.c.h.b16 %v4029
        %v4321 = vunpack.c.l.b16 %v4030
        %v4322 = vunpack.c.h.b16 %v4030
        %v4323 = vunpack.c.l.b16 %v4031
        %v4324 = vunpack.c.h.b16 %v4031
        %v4325 = vunpack.c.l.b16 %v4032
        %v4326 = vunpack.c.h.b16 %v4032
        %v4327 = vpack.c.b16 %v4133, %v4131
        %v4328 = vpack.c.b16 %v4134, %v4132
        %v4329 = vpack.c.b16 %v4137, %v4135
        %v4330 = vpack.c.b16 %v4138, %v4136
        %v4331 = vpack.c.b16 %v4141, %v4139
        %v4332 = vpack.c.b16 %v4142, %v4140
        %v4333 = vpack.c.b16 %v4145, %v4143
        %v4334 = vpack.c.b16 %v4146, %v4144
        %v4335 = vpack.c.b16 %v4149, %v4147
        %v4336 = vpack.c.b16 %v4150, %v4148
        %v4337 = vpack.c.b16 %v4153, %v4151
        %v4338 = vpack.c.b16 %v4154, %v4152
        %v4339 = vpack.c.b16 %v4157, %v4155
        %v4340 = vpack.c.b16 %v4158, %v4156
        %v4341 = vpack.c.b16 %v4161, %v4159
        %v4342 = vpack.c.b16 %v4162, %v4160
        %v4343 = vpack.c.b16 %v4165, %v4163
        %v4344 = vpack.c.b16 %v4166, %v4164
        %v4345 = vpack.c.b16 %v4169, %v4167
        %v4346 = vpack.c.b16 %v4170, %v4168
        %v4347 = vpack.c.b16 %v4173, %v4171
        %v4348 = vpack.c.b16 %v4174, %v4172
        %v4349 = vpack.c.b16 %v4177, %v4175
        %v4350 = vpack.c.b16 %v4178, %v4176
        %v4351 = vpack.c.b16 %v4181, %v4179
        %v4352 = vpack.c.b16 %v4182, %v4180
        %v4353 = vpack.c.b16 %v4185, %v4183
        %v4354 = vpack.c.b16 %v4186, %v4184
        %v4355 = vpack.c.b16 %v4189, %v4187
        %v4356 = vpack.c.b16 %v4190, %v4188
        %v4357 = vpack.c.b16 %v4193, %v4191
        %v4358 = vpack.c.b16 %v4194, %v4192
        %v4359 = vpack.c.b16 %v4197, %v4195
        %v4360 = vpack.c.b16 %v4198, %v4196
        %v4361 = vpack.c.b16 %v4201, %v4199
        %v4362 = vpack.c.b16 %v4202, %v4200
        %v4363 = vpack.c.b16 %v4205, %v4203
        %v4364 = vpack.c.b16 %v4206, %v4204
        %v4365 = vpack.c.b16 %v4209, %v4207
        %v4366 = vpack.c.b16 %v4210, %v4208
        %v4367 = vpack.c.b16 %v4213, %v4211
        %v4368 = vpack.c.b16 %v4214, %v4212
        %v4369 = vpack.c.b16 %v4217, %v4215
        %v4370 = vpack.c.b16 %v4218, %v4216
        %v4371 = vpack.c.b16 %v4221, %v4219
        %v4372 = vpack.c.b16 %v4222, %v4220
        %v4373 = vpack.c.b16 %v4225, %v4223
        %v4374 = vpack.c.b16 %v4226, %v4224
        %v4375 = vpack.c.b16 %v4229, %v4227
        %v4376 = vpack.c.b16 %v4230, %v4228
        %v4377 = vpack.c.b16 %v4233, %v4231
        %v4378 = vpack.c.b16 %v4234, %v4232
        %v4379 = vpack.c.b16 %v4237, %v4235
        %v4380 = vpack.c.b16 %v4238, %v4236
        %v4381 = vpack.c.b16 %v4241, %v4239
        %v4382 = vpack.c.b16 %v4242, %v4240
        %v4383 = vpack.c.b16 %v4245, %v4243
        %v4384 = vpack.c.b16 %v4246, %v4244
        %v4385 = vpack.c.b16 %v4249, %v4247
        %v4386 = vpack.c.b16 %v4250, %v4248
        %v4387 = vpack.c.b16 %v4253, %v4251
        %v4388 = vpack.c.b16 %v4254, %v4252
        %v4389 = vpack.c.b16 %v4257, %v4255
        %v4390 = vpack.c.b16 %v4258, %v4256
        %v4391 = vpack.c.b16 %v4261, %v4259
        %v4392 = vpack.c.b16 %v4262, %v4260
        %v4393 = vpack.c.b16 %v4265, %v4263
        %v4394 = vpack.c.b16 %v4266, %v4264
        %v4395 = vpack.c.b16 %v4269, %v4267
        %v4396 = vpack.c.b16 %v4270, %v4268
        %v4397 = vpack.c.b16 %v4273, %v4271
        %v4398 = vpack.c.b16 %v4274, %v4272
        %v4399 = vpack.c.b16 %v4277, %v4275
        %v4400 = vpack.c.b16 %v4278, %v4276
        %v4401 = vpack.c.b16 %v4281, %v4279
        %v4402 = vpack.c.b16 %v4282, %v4280
        %v4403 = vpack.c.b16 %v4285, %v4283
        %v4404 = vpack.c.b16 %v4286, %v4284
        %v4405 = vpack.c.b16 %v4289, %v4287
        %v4406 = vpack.c.b16 %v4290, %v4288
        %v4407 = vpack.c.b16 %v4293, %v4291
        %v4408 = vpack.c.b16 %v4294, %v4292
        %v4409 = vpack.c.b16 %v4297, %v4295
        %v4410 = vpack.c.b16 %v4298, %v4296
        %v4411 = vpack.c.b16 %v4301, %v4299
        %v4412 = vpack.c.b16 %v4302, %v4300
        %v4413 = vpack.c.b16 %v4305, %v4303
        %v4414 = vpack.c.b16 %v4306, %v4304
        %v4415 = vpack.c.b16 %v4309, %v4307
        %v4416 = vpack.c.b16 %v4310, %v4308
        %v4417 = vpack.c.b16 %v4313, %v4311
        %v4418 = vpack.c.b16 %v4314, %v4312
        %v4419 = vpack.c.b16 %v4317, %v4315
        %v4420 = vpack.c.b16 %v4318, %v4316
        %v4421 = vpack.c.b16 %v4321, %v4319
        %v4422 = vpack.c.b16 %v4322, %v4320
        %v4423 = vpack.c.b16 %v4325, %v4323
        %v4424 = vpack.c.b16 %v4326, %v4324
        %4523 = vmatprep.subr.bf16.mxu0 %v4328
        %4524 = vmatpush1.bf16.msra.mxu0 %v4327
        %4525 = vmatprep.subr.bf16.mxu0 %v4330
        %4526 = vmatpush1.bf16.msra.mxu0 %v4329
        %4527 = vmatprep.subr.bf16.mxu0 %v4332
        %4528 = vmatpush1.bf16.msra.mxu0 %v4331
        %4529 = vmatprep.subr.bf16.mxu0 %v4334
        %4530 = vmatpush1.bf16.msra.mxu0 %v4333
        %4531 = vmatprep.subr.bf16.mxu0 %v4336
        %4532 = vmatpush1.bf16.msra.mxu0 %v4335
        %4533 = vmatprep.subr.bf16.mxu0 %v4338
        %4534 = vmatpush1.bf16.msra.mxu0 %v4337
        %4535 = vmatprep.subr.bf16.mxu0 %v4340
        %4536 = vmatpush1.bf16.msra.mxu0 %v4339
        %4537 = vmatprep.subr.bf16.mxu0 %v4342
        %4538 = vmatpush1.bf16.msra.mxu0 %v4341
        %4539 = vmatprep.subr.bf16.mxu0 %v4344
        %4540 = vmatpush1.bf16.msra.mxu0 %v4343
        %4541 = vmatprep.subr.bf16.mxu0 %v4346
        %4542 = vmatpush1.bf16.msra.mxu0 %v4345
        %4543 = vmatprep.subr.bf16.mxu0 %v4348
        %4544 = vmatpush1.bf16.msra.mxu0 %v4347
        %4545 = vmatprep.subr.bf16.mxu0 %v4350
        %4546 = vmatpush1.bf16.msra.mxu0 %v4349
        %4547 = vmatprep.subr.bf16.mxu0 %v4352
        %4548 = vmatpush1.bf16.msra.mxu0 %v4351
        %4549 = vmatprep.subr.bf16.mxu0 %v4354
        %4550 = vmatpush1.bf16.msra.mxu0 %v4353
        %4551 = vmatprep.subr.bf16.mxu0 %v4356
        %4552 = vmatpush1.bf16.msra.mxu0 %v4355
        %4553 = vmatprep.subr.bf16.mxu0 %v4358
        %4554 = vmatpush1.bf16.msra.mxu0 %v4357
        %4555 = vmatprep.mubr.bf16.mxu0 %v3064
        %4556 = vmatmul.mubr.bf16.gmra.mrb[0].mxu0 %v3063
        %v4557 = vpop.f32.mrb[0].mxu0
        %v4558 = vadd.f32 0.0, %v4557
        %v4559 = vpop.f32.mrb[0].mxu0
        %v4560 = vadd.f32 0.0, %v4559
        %v4561 = vpop.f32.mrb[0].mxu0
        %v4562 = vadd.f32 0.0, %v4561
        %v4563 = vpop.f32.mrb[0].mxu0
        %v4564 = vadd.f32 0.0, %v4563
        %4565 = vmatprep.mubr.bf16.mxu0 %v3071
        %4566 = vmatmul.mubr.bf16.gmra.mrb[0].mxu0 %v3070
        %v4567 = vpop.f32.mrb[0].mxu0
        %v4568 = vadd.f32 0.0, %v4567
        %v4569 = vpop.f32.mrb[0].mxu0
        %v4570 = vadd.f32 0.0, %v4569
        %v4571 = vpop.f32.mrb[0].mxu0
        %v4572 = vadd.f32 0.0, %v4571
        %v4573 = vpop.f32.mrb[0].mxu0
        %v4574 = vadd.f32 0.0, %v4573
        %4575 = vmatprep.mubr.bf16.mxu0 %v3078
        %4576 = vmatmul.mubr.bf16.gmra.mrb[0].mxu0 %v3077
        %v4577 = vpop.f32.mrb[0].mxu0
        %v4578 = vadd.f32 0.0, %v4577
        %v4579 = vpop.f32.mrb[0].mxu0
        %v4580 = vadd.f32 0.0, %v4579
        %v4581 = vpop.f32.mrb[0].mxu0
        %v4582 = vadd.f32 0.0, %v4581
        %v4583 = vpop.f32.mrb[0].mxu0
        %v4584 = vadd.f32 0.0, %v4583
        %4585 = vdwg.mxu0
        %4586 = vmatprep.subr.bf16.mxu0 %v4360
        %4587 = vmatpush1.bf16.msra.mxu0 %v4359
        %4588 = vmatprep.subr.bf16.mxu0 %v4362
        %4589 = vmatpush1.bf16.msra.mxu0 %v4361
        %4590 = vmatprep.subr.bf16.mxu0 %v4364
        %4591 = vmatpush1.bf16.msra.mxu0 %v4363
        %4592 = vmatprep.subr.bf16.mxu0 %v4366
        %4593 = vmatpush1.bf16.msra.mxu0 %v4365
        %4594 = vmatprep.subr.bf16.mxu0 %v4368
        %4595 = vmatpush1.bf16.msra.mxu0 %v4367
        %4596 = vmatprep.subr.bf16.mxu0 %v4370
        %4597 = vmatpush1.bf16.msra.mxu0 %v4369
        %4598 = vmatprep.subr.bf16.mxu0 %v4372
        %4599 = vmatpush1.bf16.msra.mxu0 %v4371
        %4600 = vmatprep.subr.bf16.mxu0 %v4374
        %4601 = vmatpush1.bf16.msra.mxu0 %v4373
        %4602 = vmatprep.subr.bf16.mxu0 %v4376
        %4603 = vmatpush1.bf16.msra.mxu0 %v4375
        %4604 = vmatprep.subr.bf16.mxu0 %v4378
        %4605 = vmatpush1.bf16.msra.mxu0 %v4377
        %4606 = vmatprep.subr.bf16.mxu0 %v4380
        %4607 = vmatpush1.bf16.msra.mxu0 %v4379
        %4608 = vmatprep.subr.bf16.mxu0 %v4382
        %4609 = vmatpush1.bf16.msra.mxu0 %v4381
        %4610 = vmatprep.subr.bf16.mxu0 %v4384
        %4611 = vmatpush1.bf16.msra.mxu0 %v4383
        %4612 = vmatprep.subr.bf16.mxu0 %v4386
        %4613 = vmatpush1.bf16.msra.mxu0 %v4385
        %4614 = vmatprep.subr.bf16.mxu0 %v4388
        %4615 = vmatpush1.bf16.msra.mxu0 %v4387
        %4616 = vmatprep.subr.bf16.mxu0 %v4390
        %4617 = vmatpush1.bf16.msra.mxu0 %v4389
        %4618 = vmatprep.mubr.bf16.mxu0 %v3066
        %4619 = vmatmul.mubr.bf16.gmra.mrb[0].mxu0 %v3065
        %v4620 = vpop.f32.mrb[0].mxu0
        %v4621 = vadd.f32 %v4558, %v4620
        %v4622 = vpop.f32.mrb[0].mxu0
        %v4623 = vadd.f32 %v4560, %v4622
        %v4624 = vpop.f32.mrb[0].mxu0
        %v4625 = vadd.f32 %v4562, %v4624
        %v4626 = vpop.f32.mrb[0].mxu0
        %v4627 = vadd.f32 %v4564, %v4626
        %4628 = vmatprep.mubr.bf16.mxu0 %v3073
        %4629 = vmatmul.mubr.bf16.gmra.mrb[0].mxu0 %v3072
        %v4630 = vpop.f32.mrb[0].mxu0
        %v4631 = vadd.f32 %v4568, %v4630
        %v4632 = vpop.f32.mrb[0].mxu0
        %v4633 = vadd.f32 %v4570, %v4632
        %v4634 = vpop.f32.mrb[0].mxu0
        %v4635 = vadd.f32 %v4572, %v4634
        %v4636 = vpop.f32.mrb[0].mxu0
        %v4637 = vadd.f32 %v4574, %v4636
        %4638 = vmatprep.mubr.bf16.mxu0 %v3080
        %4639 = vmatmul.mubr.bf16.gmra.mrb[0].mxu0 %v3079
        %v4640 = vpop.f32.mrb[0].mxu0
        %v4641 = vadd.f32 %v4578, %v4640
        %v4642 = vpop.f32.mrb[0].mxu0
        %v4643 = vadd.f32 %v4580, %v4642
        %v4644 = vpop.f32.mrb[0].mxu0
        %v4645 = vadd.f32 %v4582, %v4644
        %v4646 = vpop.f32.mrb[0].mxu0
        %v4647 = vadd.f32 %v4584, %v4646
        %4648 = vdwg.mxu0
        %4649 = vmatprep.subr.bf16.mxu0 %v4392
        %4650 = vmatpush1.bf16.msra.mxu0 %v4391
        %4651 = vmatprep.subr.bf16.mxu0 %v4394
        %4652 = vmatpush1.bf16.msra.mxu0 %v4393
        %4653 = vmatprep.subr.bf16.mxu0 %v4396
        %4654 = vmatpush1.bf16.msra.mxu0 %v4395
        %4655 = vmatprep.subr.bf16.mxu0 %v4398
        %4656 = vmatpush1.bf16.msra.mxu0 %v4397
        %4657 = vmatprep.subr.bf16.mxu0 %v4400
        %4658 = vmatpush1.bf16.msra.mxu0 %v4399
        %4659 = vmatprep.subr.bf16.mxu0 %v4402
        %4660 = vmatpush1.bf16.msra.mxu0 %v4401
        %4661 = vmatprep.subr.bf16.mxu0 %v4404
        %4662 = vmatpush1.bf16.msra.mxu0 %v4403
        %4663 = vmatprep.subr.bf16.mxu0 %v4406
        %4664 = vmatpush1.bf16.msra.mxu0 %v4405
        %4665 = vmatprep.subr.bf16.mxu0 %v4408
        %4666 = vmatpush1.bf16.msra.mxu0 %v4407
        %4667 = vmatprep.subr.bf16.mxu0 %v4410
        %4668 = vmatpush1.bf16.msra.mxu0 %v4409
        %4669 = vmatprep.subr.bf16.mxu0 %v4412
        %4670 = vmatpush1.bf16.msra.mxu0 %v4411
        %4671 = vmatprep.subr.bf16.mxu0 %v4414
        %4672 = vmatpush1.bf16.msra.mxu0 %v4413
        %4673 = vmatprep.subr.bf16.mxu0 %v4416
        %4674 = vmatpush1.bf16.msra.mxu0 %v4415
        %4675 = vmatprep.subr.bf16.mxu0 %v4418
        %4676 = vmatpush1.bf16.msra.mxu0 %v4417
        %4677 = vmatprep.subr.bf16.mxu0 %v4420
        %4678 = vmatpush1.bf16.msra.mxu0 %v4419
        %4679 = vmatprep.subr.bf16.mxu0 %v4422
        %4680 = vmatpush1.bf16.msra.mxu0 %v4421
        %4681 = vmatprep.mubr.bf16.mxu0 %v3068
        %4682 = vmatmul.mubr.bf16.gmra.mrb[0].mxu0 %v3067
        %v4683 = vpop.f32.mrb[0].mxu0
        %v4684 = vadd.f32 %v4621, %v4683
        %v4685 = vpop.f32.mrb[0].mxu0
        %v4686 = vadd.f32 %v4623, %v4685
        %v4687 = vpop.f32.mrb[0].mxu0
        %v4688 = vadd.f32 %v4625, %v4687
        %v4689 = vpop.f32.mrb[0].mxu0
        %v4690 = vadd.f32 %v4627, %v4689
        %4691 = vmatprep.mubr.bf16.mxu0 %v3075
        %4692 = vmatmul.mubr.bf16.gmra.mrb[0].mxu0 %v3074
        %v4693 = vpop.f32.mrb[0].mxu0
        %v4694 = vadd.f32 %v4631, %v4693
        %v4695 = vpop.f32.mrb[0].mxu0
        %v4696 = vadd.f32 %v4633, %v4695
        %v4697 = vpop.f32.mrb[0].mxu0
        %v4698 = vadd.f32 %v4635, %v4697
        %v4699 = vpop.f32.mrb[0].mxu0
        %v4700 = vadd.f32 %v4637, %v4699
        %4701 = vmatprep.mubr.bf16.mxu0 %v3082
        %4702 = vmatmul.mubr.bf16.gmra.mrb[0].mxu0 %v3081
        %v4703 = vpop.f32.mrb[0].mxu0
        %v4704 = vadd.f32 %v4641, %v4703
        %v4705 = vpop.f32.mrb[0].mxu0
        %v4706 = vadd.f32 %v4643, %v4705
        %v4707 = vpop.f32.mrb[0].mxu0
        %v4708 = vadd.f32 %v4645, %v4707
        %v4709 = vpop.f32.mrb[0].mxu0
        %v4710 = vadd.f32 %v4647, %v4709
        %4711 = vdwg.mxu0
        %4712 = vmatprep.subr.bf16.mxu0 %v4424
        %4713 = vmatpush1.bf16.msra.mxu0 %v4423
        %4714 = vmatprep.subr.bf16.mxu0 0
        %4715 = vmatpush1.bf16.msra.mxu0 0
        %4716 = vmatprep.subr.bf16.mxu0 0
        %4717 = vmatpush1.bf16.msra.mxu0 0
        %4718 = vmatprep.subr.bf16.mxu0 0
        %4719 = vmatpush1.bf16.msra.mxu0 0
        %4720 = vmatprep.subr.bf16.mxu0 0
        %4721 = vmatpush1.bf16.msra.mxu0 0
        %4722 = vmatprep.subr.bf16.mxu0 0
        %4723 = vmatpush1.bf16.msra.mxu0 0
        %4724 = vmatprep.subr.bf16.mxu0 0
        %4725 = vmatpush1.bf16.msra.mxu0 0
        %4726 = vmatprep.subr.bf16.mxu0 0
        %4727 = vmatpush1.bf16.msra.mxu0 0
        %4728 = vmatprep.subr.bf16.mxu0 0
        %4729 = vmatpush1.bf16.msra.mxu0 0
        %4730 = vmatprep.subr.bf16.mxu0 0
        %4731 = vmatpush1.bf16.msra.mxu0 0
        %4732 = vmatprep.subr.bf16.mxu0 0
        %4733 = vmatpush1.bf16.msra.mxu0 0
        %4734 = vmatprep.subr.bf16.mxu0 0
        %4735 = vmatpush1.bf16.msra.mxu0 0
        %4736 = vmatprep.subr.bf16.mxu0 0
        %4737 = vmatpush1.bf16.msra.mxu0 0
        %4738 = vmatprep.subr.bf16.mxu0 0
        %4739 = vmatpush1.bf16.msra.mxu0 0
        %4740 = vmatprep.subr.bf16.mxu0 0
        %4741 = vmatpush1.bf16.msra.mxu0 0
        %4742 = vmatprep.subr.bf16.mxu0 0
        %4743 = vmatpush1.bf16.msra.mxu0 0
        %4744 = vmatprep.mubr.bf16.mxu0 0
        %4745 = vmatmul.mubr.bf16.gmra.mrb[0].mxu0 %v3674
        %v4746 = vpop.f32.mrb[0].mxu0
        %v4747 = vadd.f32 %v4684, %v4746
        %v4748 = vpop.f32.mrb[0].mxu0
        %v4749 = vadd.f32 %v4686, %v4748
        %v4750 = vpop.f32.mrb[0].mxu0
        %v4751 = vadd.f32 %v4688, %v4750
        %v4752 = vpop.f32.mrb[0].mxu0
        %v4753 = vadd.f32 %v4690, %v4752
        %4754 = vmatprep.mubr.bf16.mxu0 0
        %4755 = vmatmul.mubr.bf16.gmra.mrb[0].mxu0 %v3677
        %v4756 = vpop.f32.mrb[0].mxu0
        %v4757 = vadd.f32 %v4694, %v4756
        %v4758 = vpop.f32.mrb[0].mxu0
        %v4759 = vadd.f32 %v4696, %v4758
        %v4760 = vpop.f32.mrb[0].mxu0
        %v4761 = vadd.f32 %v4698, %v4760
        %v4762 = vpop.f32.mrb[0].mxu0
        %v4763 = vadd.f32 %v4700, %v4762
        %4764 = vmatprep.mubr.bf16.mxu0 0
        %4765 = vmatmul.mubr.bf16.gmra.mrb[0].mxu0 %v3680
        %v4766 = vpop.f32.mrb[0].mxu0
        %v4767 = vadd.f32 %v4704, %v4766
        %v4768 = vpop.f32.mrb[0].mxu0
        %v4769 = vadd.f32 %v4706, %v4768
        %v4770 = vpop.f32.mrb[0].mxu0
        %v4771 = vadd.f32 %v4708, %v4770
        %v4772 = vpop.f32.mrb[0].mxu0
        %v4773 = vadd.f32 %v4710, %v4772
        %4774 = vdwg.mxu0
        %v4775 = vmax.f32 %v3906, %v4747
        %v4776 = vmax.f32 %v3908, %v4749
        %v4777 = vmax.f32 %v3910, %v4751
        %v4778 = vmax.f32 %v3912, %v4753
        %v4779 = vmax.f32 %v3916, %v4757
        %v4780 = vmax.f32 %v3918, %v4759
        %v4781 = vmax.f32 %v3920, %v4761
        %v4782 = vmax.f32 %v3922, %v4763
        %v4783 = vmax.f32 %v3926, %v4767
        %v4784 = vmax.f32 %v3928, %v4769
        %v4785 = vmax.f32 %v3930, %v4771
        %v4786 = vmax.f32 %v3932, %v4773
        %s4787 = scalar_lea.vmem %s3, 1568
        %v4788 = vld [vmem:[%s4787] sm:$0xff]
        %v4789 = vld [vmem:[%s4787 + $0x8] sm:$0xff]
        %v4790 = vld [vmem:[%s4787 + $0x10] sm:$0xff]
        %v4791 = vld [vmem:[%s4787 + $0x18] sm:$0xff]
        %v4792 = vld [vmem:[%s4787 + $0x20] sm:$0xff]
        %v4793 = vld [vmem:[%s4787 + $0x28] sm:$0xff]
        %v4794 = vld [vmem:[%s4787 + $0x30] sm:$0xff]
        %v4795 = vld [vmem:[%s4787 + $0x38] sm:$0xff]
        %v4796 = vld [vmem:[%s4787 + $0x40] sm:$0xff]
        %v4797 = vld [vmem:[%s4787 + $0x48] sm:$0xff]
        %v4798 = vld [vmem:[%s4787 + $0x50] sm:$0xff]
        %v4799 = vld [vmem:[%s4787 + $0x58] sm:$0xff]
        %v4800 = vld [vmem:[%s4787 + $0x60] sm:$0xff]
        %v4801 = vld [vmem:[%s4787 + $0x68] sm:$0xff]
        %v4802 = vld [vmem:[%s4787 + $0x70] sm:$0xff]
        %v4803 = vld [vmem:[%s4787 + $0x78] sm:$0xff]
        %v4804 = vld [vmem:[%s4787 + $0x80] sm:$0xff]
        %v4805 = vld [vmem:[%s4787 + $0x88] sm:$0xff]
        %v4806 = vld [vmem:[%s4787 + $0x90] sm:$0xff]
        %v4807 = vld [vmem:[%s4787 + $0x98] sm:$0xff]
        %v4808 = vld [vmem:[%s4787 + $0xa0] sm:$0xff]
        %v4809 = vld [vmem:[%s4787 + $0xa8] sm:$0xff]
        %v4810 = vld [vmem:[%s4787 + $0xb0] sm:$0xff]
        %v4811 = vld [vmem:[%s4787 + $0xb8] sm:$0xff]
        %v4812 = vld [vmem:[%s4787 + $0xc0] sm:$0xff]
        %v4813 = vld [vmem:[%s4787 + $0xc8] sm:$0xff]
        %v4814 = vld [vmem:[%s4787 + $0xd0] sm:$0xff]
        %v4815 = vld [vmem:[%s4787 + $0xd8] sm:$0xff]
        %v4816 = vld [vmem:[%s4787 + $0xe0] sm:$0xff]
        %v4817 = vld [vmem:[%s4787 + $0xe8] sm:$0xff]
        %v4818 = vld [vmem:[%s4787 + $0xf0] sm:$0xff]
        %v4819 = vld [vmem:[%s4787 + $0xf8] sm:$0xff]
        %v4820 = vld [vmem:[%s4787 + $0x100] sm:$0xff]
        %v4821 = vld [vmem:[%s4787 + $0x108] sm:$0xff]
        %v4822 = vld [vmem:[%s4787 + $0x110] sm:$0xff]
        %v4823 = vld [vmem:[%s4787 + $0x118] sm:$0xff]
        %v4824 = vld [vmem:[%s4787 + $0x120] sm:$0xff]
        %v4825 = vld [vmem:[%s4787 + $0x128] sm:$0xff]
        %v4826 = vld [vmem:[%s4787 + $0x130] sm:$0xff]
        %v4827 = vld [vmem:[%s4787 + $0x138] sm:$0xff]
        %v4828 = vld [vmem:[%s4787 + $0x140] sm:$0xff]
        %v4829 = vld [vmem:[%s4787 + $0x148] sm:$0xff]
        %v4830 = vld [vmem:[%s4787 + $0x150] sm:$0xff]
        %v4831 = vld [vmem:[%s4787 + $0x158] sm:$0xff]
        %v4832 = vld [vmem:[%s4787 + $0x160] sm:$0xff]
        %v4833 = vld [vmem:[%s4787 + $0x168] sm:$0xff]
        %v4834 = vld [vmem:[%s4787 + $0x170] sm:$0xff]
        %v4835 = vld [vmem:[%s4787 + $0x178] sm:$0xff]
        %v4836 = vld [vmem:[%s4787 + $0x180] sm:$0xff]
        %v4837 = vld [vmem:[%s4787 + $0x188] sm:$0xff]
        %v4838 = vld [vmem:[%s4787 + $0x190] sm:$0xff]
        %v4839 = vld [vmem:[%s4787 + $0x198] sm:$0xff]
        %v4840 = vld [vmem:[%s4787 + $0x1a0] sm:$0xff]
        %v4841 = vld [vmem:[%s4787 + $0x1a8] sm:$0xff]
        %v4842 = vld [vmem:[%s4787 + $0x1b0] sm:$0xff]
        %v4843 = vld [vmem:[%s4787 + $0x1b8] sm:$0xff]
        %v4844 = vld [vmem:[%s4787 + $0x1c0] sm:$0xff]
        %v4845 = vld [vmem:[%s4787 + $0x1c8] sm:$0xff]
        %v4846 = vld [vmem:[%s4787 + $0x1d0] sm:$0xff]
        %v4847 = vld [vmem:[%s4787 + $0x1d8] sm:$0xff]
        %v4848 = vld [vmem:[%s4787 + $0x1e0] sm:$0xff]
        %v4849 = vld [vmem:[%s4787 + $0x1e8] sm:$0xff]
        %v4850 = vld [vmem:[%s4787 + $0x1f0] sm:$0xff]
        %v4851 = vld [vmem:[%s4787 + $0x1f8] sm:$0xff]
        %v4852 = vld [vmem:[%s4787 + $0x200] sm:$0xff]
        %v4853 = vld [vmem:[%s4787 + $0x208] sm:$0xff]
        %v4854 = vld [vmem:[%s4787 + $0x210] sm:$0xff]
        %v4855 = vld [vmem:[%s4787 + $0x218] sm:$0xff]
        %v4856 = vld [vmem:[%s4787 + $0x220] sm:$0xff]
        %v4857 = vld [vmem:[%s4787 + $0x228] sm:$0xff]
        %v4858 = vld [vmem:[%s4787 + $0x230] sm:$0xff]
        %v4859 = vld [vmem:[%s4787 + $0x238] sm:$0xff]
        %v4860 = vld [vmem:[%s4787 + $0x240] sm:$0xff]
        %v4861 = vld [vmem:[%s4787 + $0x248] sm:$0xff]
        %v4862 = vld [vmem:[%s4787 + $0x250] sm:$0xff]
        %v4863 = vld [vmem:[%s4787 + $0x258] sm:$0xff]
        %v4864 = vld [vmem:[%s4787 + $0x260] sm:$0xff]
        %v4865 = vld [vmem:[%s4787 + $0x268] sm:$0xff]
        %v4866 = vld [vmem:[%s4787 + $0x270] sm:$0xff]
        %v4867 = vld [vmem:[%s4787 + $0x278] sm:$0xff]
        %v4868 = vld [vmem:[%s4787 + $0x280] sm:$0xff]
        %v4869 = vld [vmem:[%s4787 + $0x288] sm:$0xff]
        %v4870 = vld [vmem:[%s4787 + $0x290] sm:$0xff]
        %v4871 = vld [vmem:[%s4787 + $0x298] sm:$0xff]
        %v4872 = vld [vmem:[%s4787 + $0x2a0] sm:$0xff]
        %v4873 = vld [vmem:[%s4787 + $0x2a8] sm:$0xff]
        %v4874 = vld [vmem:[%s4787 + $0x2b0] sm:$0xff]
        %v4875 = vld [vmem:[%s4787 + $0x2b8] sm:$0xff]
        %v4876 = vld [vmem:[%s4787 + $0x2c0] sm:$0xff]
        %v4877 = vld [vmem:[%s4787 + $0x2c8] sm:$0xff]
        %v4878 = vld [vmem:[%s4787 + $0x2d0] sm:$0xff]
        %v4879 = vld [vmem:[%s4787 + $0x2d8] sm:$0xff]
        %v4880 = vld [vmem:[%s4787 + $0x2e0] sm:$0xff]
        %v4881 = vld [vmem:[%s4787 + $0x2e8] sm:$0xff]
        %v4882 = vld [vmem:[%s4787 + $0x2f0] sm:$0xff]
        %v4883 = vld [vmem:[%s4787 + $0x2f8] sm:$0xff]
        %v4884 = vld [vmem:[%s4787 + $0x300] sm:$0xff]
        %v4885 = vld [vmem:[%s4787 + $0x308] sm:$0xff]
        %v4984 = vunpack.c.l.b16 %v4788
        %v4985 = vunpack.c.h.b16 %v4788
        %v4986 = vunpack.c.l.b16 %v4789
        %v4987 = vunpack.c.h.b16 %v4789
        %v4988 = vunpack.c.l.b16 %v4790
        %v4989 = vunpack.c.h.b16 %v4790
        %v4990 = vunpack.c.l.b16 %v4791
        %v4991 = vunpack.c.h.b16 %v4791
        %v4992 = vunpack.c.l.b16 %v4792
        %v4993 = vunpack.c.h.b16 %v4792
        %v4994 = vunpack.c.l.b16 %v4793
        %v4995 = vunpack.c.h.b16 %v4793
        %v4996 = vunpack.c.l.b16 %v4794
        %v4997 = vunpack.c.h.b16 %v4794
        %v4998 = vunpack.c.l.b16 %v4795
        %v4999 = vunpack.c.h.b16 %v4795
        %v5000 = vunpack.c.l.b16 %v4796
        %v5001 = vunpack.c.h.b16 %v4796
        %v5002 = vunpack.c.l.b16 %v4797
        %v5003 = vunpack.c.h.b16 %v4797
        %v5004 = vunpack.c.l.b16 %v4798
        %v5005 = vunpack.c.h.b16 %v4798
        %v5006 = vunpack.c.l.b16 %v4799
        %v5007 = vunpack.c.h.b16 %v4799
        %v5008 = vunpack.c.l.b16 %v4800
        %v5009 = vunpack.c.h.b16 %v4800
        %v5010 = vunpack.c.l.b16 %v4801
        %v5011 = vunpack.c.h.b16 %v4801
        %v5012 = vunpack.c.l.b16 %v4802
        %v5013 = vunpack.c.h.b16 %v4802
        %v5014 = vunpack.c.l.b16 %v4803
        %v5015 = vunpack.c.h.b16 %v4803
        %v5016 = vunpack.c.l.b16 %v4804
        %v5017 = vunpack.c.h.b16 %v4804
        %v5018 = vunpack.c.l.b16 %v4805
        %v5019 = vunpack.c.h.b16 %v4805
        %v5020 = vunpack.c.l.b16 %v4806
        %v5021 = vunpack.c.h.b16 %v4806
        %v5022 = vunpack.c.l.b16 %v4807
        %v5023 = vunpack.c.h.b16 %v4807
        %v5024 = vunpack.c.l.b16 %v4808
        %v5025 = vunpack.c.h.b16 %v4808
        %v5026 = vunpack.c.l.b16 %v4809
        %v5027 = vunpack.c.h.b16 %v4809
        %v5028 = vunpack.c.l.b16 %v4810
        %v5029 = vunpack.c.h.b16 %v4810
        %v5030 = vunpack.c.l.b16 %v4811
        %v5031 = vunpack.c.h.b16 %v4811
        %v5032 = vunpack.c.l.b16 %v4812
        %v5033 = vunpack.c.h.b16 %v4812
        %v5034 = vunpack.c.l.b16 %v4813
        %v5035 = vunpack.c.h.b16 %v4813
        %v5036 = vunpack.c.l.b16 %v4814
        %v5037 = vunpack.c.h.b16 %v4814
        %v5038 = vunpack.c.l.b16 %v4815
        %v5039 = vunpack.c.h.b16 %v4815
        %v5040 = vunpack.c.l.b16 %v4816
        %v5041 = vunpack.c.h.b16 %v4816
        %v5042 = vunpack.c.l.b16 %v4817
        %v5043 = vunpack.c.h.b16 %v4817
        %v5044 = vunpack.c.l.b16 %v4818
        %v5045 = vunpack.c.h.b16 %v4818
        %v5046 = vunpack.c.l.b16 %v4819
        %v5047 = vunpack.c.h.b16 %v4819
        %v5048 = vunpack.c.l.b16 %v4820
        %v5049 = vunpack.c.h.b16 %v4820
        %v5050 = vunpack.c.l.b16 %v4821
        %v5051 = vunpack.c.h.b16 %v4821
        %v5052 = vunpack.c.l.b16 %v4822
        %v5053 = vunpack.c.h.b16 %v4822
        %v5054 = vunpack.c.l.b16 %v4823
        %v5055 = vunpack.c.h.b16 %v4823
        %v5056 = vunpack.c.l.b16 %v4824
        %v5057 = vunpack.c.h.b16 %v4824
        %v5058 = vunpack.c.l.b16 %v4825
        %v5059 = vunpack.c.h.b16 %v4825
        %v5060 = vunpack.c.l.b16 %v4826
        %v5061 = vunpack.c.h.b16 %v4826
        %v5062 = vunpack.c.l.b16 %v4827
        %v5063 = vunpack.c.h.b16 %v4827
        %v5064 = vunpack.c.l.b16 %v4828
        %v5065 = vunpack.c.h.b16 %v4828
        %v5066 = vunpack.c.l.b16 %v4829
        %v5067 = vunpack.c.h.b16 %v4829
        %v5068 = vunpack.c.l.b16 %v4830
        %v5069 = vunpack.c.h.b16 %v4830
        %v5070 = vunpack.c.l.b16 %v4831
        %v5071 = vunpack.c.h.b16 %v4831
        %v5072 = vunpack.c.l.b16 %v4832
        %v5073 = vunpack.c.h.b16 %v4832
        %v5074 = vunpack.c.l.b16 %v4833
        %v5075 = vunpack.c.h.b16 %v4833
        %v5076 = vunpack.c.l.b16 %v4834
        %v5077 = vunpack.c.h.b16 %v4834
        %v5078 = vunpack.c.l.b16 %v4835
        %v5079 = vunpack.c.h.b16 %v4835
        %v5080 = vunpack.c.l.b16 %v4836
        %v5081 = vunpack.c.h.b16 %v4836
        %v5082 = vunpack.c.l.b16 %v4837
        %v5083 = vunpack.c.h.b16 %v4837
        %v5084 = vunpack.c.l.b16 %v4838
        %v5085 = vunpack.c.h.b16 %v4838
        %v5086 = vunpack.c.l.b16 %v4839
        %v5087 = vunpack.c.h.b16 %v4839
        %v5088 = vunpack.c.l.b16 %v4840
        %v5089 = vunpack.c.h.b16 %v4840
        %v5090 = vunpack.c.l.b16 %v4841
        %v5091 = vunpack.c.h.b16 %v4841
        %v5092 = vunpack.c.l.b16 %v4842
        %v5093 = vunpack.c.h.b16 %v4842
        %v5094 = vunpack.c.l.b16 %v4843
        %v5095 = vunpack.c.h.b16 %v4843
        %v5096 = vunpack.c.l.b16 %v4844
        %v5097 = vunpack.c.h.b16 %v4844
        %v5098 = vunpack.c.l.b16 %v4845
        %v5099 = vunpack.c.h.b16 %v4845
        %v5100 = vunpack.c.l.b16 %v4846
        %v5101 = vunpack.c.h.b16 %v4846
        %v5102 = vunpack.c.l.b16 %v4847
        %v5103 = vunpack.c.h.b16 %v4847
        %v5104 = vunpack.c.l.b16 %v4848
        %v5105 = vunpack.c.h.b16 %v4848
        %v5106 = vunpack.c.l.b16 %v4849
        %v5107 = vunpack.c.h.b16 %v4849
        %v5108 = vunpack.c.l.b16 %v4850
        %v5109 = vunpack.c.h.b16 %v4850
        %v5110 = vunpack.c.l.b16 %v4851
        %v5111 = vunpack.c.h.b16 %v4851
        %v5112 = vunpack.c.l.b16 %v4852
        %v5113 = vunpack.c.h.b16 %v4852
        %v5114 = vunpack.c.l.b16 %v4853
        %v5115 = vunpack.c.h.b16 %v4853
        %v5116 = vunpack.c.l.b16 %v4854
        %v5117 = vunpack.c.h.b16 %v4854
        %v5118 = vunpack.c.l.b16 %v4855
        %v5119 = vunpack.c.h.b16 %v4855
        %v5120 = vunpack.c.l.b16 %v4856
        %v5121 = vunpack.c.h.b16 %v4856
        %v5122 = vunpack.c.l.b16 %v4857
        %v5123 = vunpack.c.h.b16 %v4857
        %v5124 = vunpack.c.l.b16 %v4858
        %v5125 = vunpack.c.h.b16 %v4858
        %v5126 = vunpack.c.l.b16 %v4859
        %v5127 = vunpack.c.h.b16 %v4859
        %v5128 = vunpack.c.l.b16 %v4860
        %v5129 = vunpack.c.h.b16 %v4860
        %v5130 = vunpack.c.l.b16 %v4861
        %v5131 = vunpack.c.h.b16 %v4861
        %v5132 = vunpack.c.l.b16 %v4862
        %v5133 = vunpack.c.h.b16 %v4862
        %v5134 = vunpack.c.l.b16 %v4863
        %v5135 = vunpack.c.h.b16 %v4863
        %v5136 = vunpack.c.l.b16 %v4864
        %v5137 = vunpack.c.h.b16 %v4864
        %v5138 = vunpack.c.l.b16 %v4865
        %v5139 = vunpack.c.h.b16 %v4865
        %v5140 = vunpack.c.l.b16 %v4866
        %v5141 = vunpack.c.h.b16 %v4866
        %v5142 = vunpack.c.l.b16 %v4867
        %v5143 = vunpack.c.h.b16 %v4867
        %v5144 = vunpack.c.l.b16 %v4868
        %v5145 = vunpack.c.h.b16 %v4868
        %v5146 = vunpack.c.l.b16 %v4869
        %v5147 = vunpack.c.h.b16 %v4869
        %v5148 = vunpack.c.l.b16 %v4870
        %v5149 = vunpack.c.h.b16 %v4870
        %v5150 = vunpack.c.l.b16 %v4871
        %v5151 = vunpack.c.h.b16 %v4871
        %v5152 = vunpack.c.l.b16 %v4872
        %v5153 = vunpack.c.h.b16 %v4872
        %v5154 = vunpack.c.l.b16 %v4873
        %v5155 = vunpack.c.h.b16 %v4873
        %v5156 = vunpack.c.l.b16 %v4874
        %v5157 = vunpack.c.h.b16 %v4874
        %v5158 = vunpack.c.l.b16 %v4875
        %v5159 = vunpack.c.h.b16 %v4875
        %v5160 = vunpack.c.l.b16 %v4876
        %v5161 = vunpack.c.h.b16 %v4876
        %v5162 = vunpack.c.l.b16 %v4877
        %v5163 = vunpack.c.h.b16 %v4877
        %v5164 = vunpack.c.l.b16 %v4878
        %v5165 = vunpack.c.h.b16 %v4878
        %v5166 = vunpack.c.l.b16 %v4879
        %v5167 = vunpack.c.h.b16 %v4879
        %v5168 = vunpack.c.l.b16 %v4880
        %v5169 = vunpack.c.h.b16 %v4880
        %v5170 = vunpack.c.l.b16 %v4881
        %v5171 = vunpack.c.h.b16 %v4881
        %v5172 = vunpack.c.l.b16 %v4882
        %v5173 = vunpack.c.h.b16 %v4882
        %v5174 = vunpack.c.l.b16 %v4883
        %v5175 = vunpack.c.h.b16 %v4883
        %v5176 = vunpack.c.l.b16 %v4884
        %v5177 = vunpack.c.h.b16 %v4884
        %v5178 = vunpack.c.l.b16 %v4885
        %v5179 = vunpack.c.h.b16 %v4885
        %v5180 = vpack.c.b16 %v4986, %v4984
        %v5181 = vpack.c.b16 %v4987, %v4985
        %v5182 = vpack.c.b16 %v4990, %v4988
        %v5183 = vpack.c.b16 %v4991, %v4989
        %v5184 = vpack.c.b16 %v4994, %v4992
        %v5185 = vpack.c.b16 %v4995, %v4993
        %v5186 = vpack.c.b16 %v4998, %v4996
        %v5187 = vpack.c.b16 %v4999, %v4997
        %v5188 = vpack.c.b16 %v5002, %v5000
        %v5189 = vpack.c.b16 %v5003, %v5001
        %v5190 = vpack.c.b16 %v5006, %v5004
        %v5191 = vpack.c.b16 %v5007, %v5005
        %v5192 = vpack.c.b16 %v5010, %v5008
        %v5193 = vpack.c.b16 %v5011, %v5009
        %v5194 = vpack.c.b16 %v5014, %v5012
        %v5195 = vpack.c.b16 %v5015, %v5013
        %v5196 = vpack.c.b16 %v5018, %v5016
        %v5197 = vpack.c.b16 %v5019, %v5017
        %v5198 = vpack.c.b16 %v5022, %v5020
        %v5199 = vpack.c.b16 %v5023, %v5021
        %v5200 = vpack.c.b16 %v5026, %v5024
        %v5201 = vpack.c.b16 %v5027, %v5025
        %v5202 = vpack.c.b16 %v5030, %v5028
        %v5203 = vpack.c.b16 %v5031, %v5029
        %v5204 = vpack.c.b16 %v5034, %v5032
        %v5205 = vpack.c.b16 %v5035, %v5033
        %v5206 = vpack.c.b16 %v5038, %v5036
        %v5207 = vpack.c.b16 %v5039, %v5037
        %v5208 = vpack.c.b16 %v5042, %v5040
        %v5209 = vpack.c.b16 %v5043, %v5041
        %v5210 = vpack.c.b16 %v5046, %v5044
        %v5211 = vpack.c.b16 %v5047, %v5045
        %v5212 = vpack.c.b16 %v5050, %v5048
        %v5213 = vpack.c.b16 %v5051, %v5049
        %v5214 = vpack.c.b16 %v5054, %v5052
        %v5215 = vpack.c.b16 %v5055, %v5053
        %v5216 = vpack.c.b16 %v5058, %v5056
        %v5217 = vpack.c.b16 %v5059, %v5057
        %v5218 = vpack.c.b16 %v5062, %v5060
        %v5219 = vpack.c.b16 %v5063, %v5061
        %v5220 = vpack.c.b16 %v5066, %v5064
        %v5221 = vpack.c.b16 %v5067, %v5065
        %v5222 = vpack.c.b16 %v5070, %v5068
        %v5223 = vpack.c.b16 %v5071, %v5069
        %v5224 = vpack.c.b16 %v5074, %v5072
        %v5225 = vpack.c.b16 %v5075, %v5073
        %v5226 = vpack.c.b16 %v5078, %v5076
        %v5227 = vpack.c.b16 %v5079, %v5077
        %v5228 = vpack.c.b16 %v5082, %v5080
        %v5229 = vpack.c.b16 %v5083, %v5081
        %v5230 = vpack.c.b16 %v5086, %v5084
        %v5231 = vpack.c.b16 %v5087, %v5085
        %v5232 = vpack.c.b16 %v5090, %v5088
        %v5233 = vpack.c.b16 %v5091, %v5089
        %v5234 = vpack.c.b16 %v5094, %v5092
        %v5235 = vpack.c.b16 %v5095, %v5093
        %v5236 = vpack.c.b16 %v5098, %v5096
        %v5237 = vpack.c.b16 %v5099, %v5097
        %v5238 = vpack.c.b16 %v5102, %v5100
        %v5239 = vpack.c.b16 %v5103, %v5101
        %v5240 = vpack.c.b16 %v5106, %v5104
        %v5241 = vpack.c.b16 %v5107, %v5105
        %v5242 = vpack.c.b16 %v5110, %v5108
        %v5243 = vpack.c.b16 %v5111, %v5109
        %v5244 = vpack.c.b16 %v5114, %v5112
        %v5245 = vpack.c.b16 %v5115, %v5113
        %v5246 = vpack.c.b16 %v5118, %v5116
        %v5247 = vpack.c.b16 %v5119, %v5117
        %v5248 = vpack.c.b16 %v5122, %v5120
        %v5249 = vpack.c.b16 %v5123, %v5121
        %v5250 = vpack.c.b16 %v5126, %v5124
        %v5251 = vpack.c.b16 %v5127, %v5125
        %v5252 = vpack.c.b16 %v5130, %v5128
        %v5253 = vpack.c.b16 %v5131, %v5129
        %v5254 = vpack.c.b16 %v5134, %v5132
        %v5255 = vpack.c.b16 %v5135, %v5133
        %v5256 = vpack.c.b16 %v5138, %v5136
        %v5257 = vpack.c.b16 %v5139, %v5137
        %v5258 = vpack.c.b16 %v5142, %v5140
        %v5259 = vpack.c.b16 %v5143, %v5141
        %v5260 = vpack.c.b16 %v5146, %v5144
        %v5261 = vpack.c.b16 %v5147, %v5145
        %v5262 = vpack.c.b16 %v5150, %v5148
        %v5263 = vpack.c.b16 %v5151, %v5149
        %v5264 = vpack.c.b16 %v5154, %v5152
        %v5265 = vpack.c.b16 %v5155, %v5153
        %v5266 = vpack.c.b16 %v5158, %v5156
        %v5267 = vpack.c.b16 %v5159, %v5157
        %v5268 = vpack.c.b16 %v5162, %v5160
        %v5269 = vpack.c.b16 %v5163, %v5161
        %v5270 = vpack.c.b16 %v5166, %v5164
        %v5271 = vpack.c.b16 %v5167, %v5165
        %v5272 = vpack.c.b16 %v5170, %v5168
        %v5273 = vpack.c.b16 %v5171, %v5169
        %v5274 = vpack.c.b16 %v5174, %v5172
        %v5275 = vpack.c.b16 %v5175, %v5173
        %v5276 = vpack.c.b16 %v5178, %v5176
        %v5277 = vpack.c.b16 %v5179, %v5177
        %5376 = vmatprep.subr.bf16.mxu0 %v5181
        %5377 = vmatpush1.bf16.msra.mxu0 %v5180
        %5378 = vmatprep.subr.bf16.mxu0 %v5183
        %5379 = vmatpush1.bf16.msra.mxu0 %v5182
        %5380 = vmatprep.subr.bf16.mxu0 %v5185
        %5381 = vmatpush1.bf16.msra.mxu0 %v5184
        %5382 = vmatprep.subr.bf16.mxu0 %v5187
        %5383 = vmatpush1.bf16.msra.mxu0 %v5186
        %5384 = vmatprep.subr.bf16.mxu0 %v5189
        %5385 = vmatpush1.bf16.msra.mxu0 %v5188
        %5386 = vmatprep.subr.bf16.mxu0 %v5191
        %5387 = vmatpush1.bf16.msra.mxu0 %v5190
        %5388 = vmatprep.subr.bf16.mxu0 %v5193
        %5389 = vmatpush1.bf16.msra.mxu0 %v5192
        %5390 = vmatprep.subr.bf16.mxu0 %v5195
        %5391 = vmatpush1.bf16.msra.mxu0 %v5194
        %5392 = vmatprep.subr.bf16.mxu0 %v5197
        %5393 = vmatpush1.bf16.msra.mxu0 %v5196
        %5394 = vmatprep.subr.bf16.mxu0 %v5199
        %5395 = vmatpush1.bf16.msra.mxu0 %v5198
        %5396 = vmatprep.subr.bf16.mxu0 %v5201
        %5397 = vmatpush1.bf16.msra.mxu0 %v5200
        %5398 = vmatprep.subr.bf16.mxu0 %v5203
        %5399 = vmatpush1.bf16.msra.mxu0 %v5202
        %5400 = vmatprep.subr.bf16.mxu0 %v5205
        %5401 = vmatpush1.bf16.msra.mxu0 %v5204
        %5402 = vmatprep.subr.bf16.mxu0 %v5207
        %5403 = vmatpush1.bf16.msra.mxu0 %v5206
        %5404 = vmatprep.subr.bf16.mxu0 %v5209
        %5405 = vmatpush1.bf16.msra.mxu0 %v5208
        %5406 = vmatprep.subr.bf16.mxu0 %v5211
        %5407 = vmatpush1.bf16.msra.mxu0 %v5210
        %5408 = vmatprep.mubr.bf16.mxu0 %v3064
        %5409 = vmatmul.mubr.bf16.gmra.mrb[0].mxu0 %v3063
        %v5410 = vpop.f32.mrb[0].mxu0
        %v5411 = vadd.f32 0.0, %v5410
        %v5412 = vpop.f32.mrb[0].mxu0
        %v5413 = vadd.f32 0.0, %v5412
        %v5414 = vpop.f32.mrb[0].mxu0
        %v5415 = vadd.f32 0.0, %v5414
        %v5416 = vpop.f32.mrb[0].mxu0
        %v5417 = vadd.f32 0.0, %v5416
        %5418 = vmatprep.mubr.bf16.mxu0 %v3071
        %5419 = vmatmul.mubr.bf16.gmra.mrb[0].mxu0 %v3070
        %v5420 = vpop.f32.mrb[0].mxu0
        %v5421 = vadd.f32 0.0, %v5420
        %v5422 = vpop.f32.mrb[0].mxu0
        %v5423 = vadd.f32 0.0, %v5422
        %v5424 = vpop.f32.mrb[0].mxu0
        %v5425 = vadd.f32 0.0, %v5424
        %v5426 = vpop.f32.mrb[0].mxu0
        %v5427 = vadd.f32 0.0, %v5426
        %5428 = vmatprep.mubr.bf16.mxu0 %v3078
        %5429 = vmatmul.mubr.bf16.gmra.mrb[0].mxu0 %v3077
        %v5430 = vpop.f32.mrb[0].mxu0
        %v5431 = vadd.f32 0.0, %v5430
        %v5432 = vpop.f32.mrb[0].mxu0
        %v5433 = vadd.f32 0.0, %v5432
        %v5434 = vpop.f32.mrb[0].mxu0
        %v5435 = vadd.f32 0.0, %v5434
        %v5436 = vpop.f32.mrb[0].mxu0
        %v5437 = vadd.f32 0.0, %v5436
        %5438 = vdwg.mxu0
        %5439 = vmatprep.subr.bf16.mxu0 %v5213
        %5440 = vmatpush1.bf16.msra.mxu0 %v5212
        %5441 = vmatprep.subr.bf16.mxu0 %v5215
        %5442 = vmatpush1.bf16.msra.mxu0 %v5214
        %5443 = vmatprep.subr.bf16.mxu0 %v5217
        %5444 = vmatpush1.bf16.msra.mxu0 %v5216
        %5445 = vmatprep.subr.bf16.mxu0 %v5219
        %5446 = vmatpush1.bf16.msra.mxu0 %v5218
        %5447 = vmatprep.subr.bf16.mxu0 %v5221
        %5448 = vmatpush1.bf16.msra.mxu0 %v5220
        %5449 = vmatprep.subr.bf16.mxu0 %v5223
        %5450 = vmatpush1.bf16.msra.mxu0 %v5222
        %5451 = vmatprep.subr.bf16.mxu0 %v5225
        %5452 = vmatpush1.bf16.msra.mxu0 %v5224
        %5453 = vmatprep.subr.bf16.mxu0 %v5227
        %5454 = vmatpush1.bf16.msra.mxu0 %v5226
        %5455 = vmatprep.subr.bf16.mxu0 %v5229
        %5456 = vmatpush1.bf16.msra.mxu0 %v5228
        %5457 = vmatprep.subr.bf16.mxu0 %v5231
        %5458 = vmatpush1.bf16.msra.mxu0 %v5230
        %5459 = vmatprep.subr.bf16.mxu0 %v5233
        %5460 = vmatpush1.bf16.msra.mxu0 %v5232
        %5461 = vmatprep.subr.bf16.mxu0 %v5235
        %5462 = vmatpush1.bf16.msra.mxu0 %v5234
        %5463 = vmatprep.subr.bf16.mxu0 %v5237
        %5464 = vmatpush1.bf16.msra.mxu0 %v5236
        %5465 = vmatprep.subr.bf16.mxu0 %v5239
        %5466 = vmatpush1.bf16.msra.mxu0 %v5238
        %5467 = vmatprep.subr.bf16.mxu0 %v5241
        %5468 = vmatpush1.bf16.msra.mxu0 %v5240
        %5469 = vmatprep.subr.bf16.mxu0 %v5243
        %5470 = vmatpush1.bf16.msra.mxu0 %v5242
        %5471 = vmatprep.mubr.bf16.mxu0 %v3066
        %5472 = vmatmul.mubr.bf16.gmra.mrb[0].mxu0 %v3065
        %v5473 = vpop.f32.mrb[0].mxu0
        %v5474 = vadd.f32 %v5411, %v5473
        %v5475 = vpop.f32.mrb[0].mxu0
        %v5476 = vadd.f32 %v5413, %v5475
        %v5477 = vpop.f32.mrb[0].mxu0
        %v5478 = vadd.f32 %v5415, %v5477
        %v5479 = vpop.f32.mrb[0].mxu0
        %v5480 = vadd.f32 %v5417, %v5479
        %5481 = vmatprep.mubr.bf16.mxu0 %v3073
        %5482 = vmatmul.mubr.bf16.gmra.mrb[0].mxu0 %v3072
        %v5483 = vpop.f32.mrb[0].mxu0
        %v5484 = vadd.f32 %v5421, %v5483
        %v5485 = vpop.f32.mrb[0].mxu0
        %v5486 = vadd.f32 %v5423, %v5485
        %v5487 = vpop.f32.mrb[0].mxu0
        %v5488 = vadd.f32 %v5425, %v5487
        %v5489 = vpop.f32.mrb[0].mxu0
        %v5490 = vadd.f32 %v5427, %v5489
        %5491 = vmatprep.mubr.bf16.mxu0 %v3080
        %5492 = vmatmul.mubr.bf16.gmra.mrb[0].mxu0 %v3079
        %v5493 = vpop.f32.mrb[0].mxu0
        %v5494 = vadd.f32 %v5431, %v5493
        %v5495 = vpop.f32.mrb[0].mxu0
        %v5496 = vadd.f32 %v5433, %v5495
        %v5497 = vpop.f32.mrb[0].mxu0
        %v5498 = vadd.f32 %v5435, %v5497
        %v5499 = vpop.f32.mrb[0].mxu0
        %v5500 = vadd.f32 %v5437, %v5499
        %5501 = vdwg.mxu0
        %5502 = vmatprep.subr.bf16.mxu0 %v5245
        %5503 = vmatpush1.bf16.msra.mxu0 %v5244
        %5504 = vmatprep.subr.bf16.mxu0 %v5247
        %5505 = vmatpush1.bf16.msra.mxu0 %v5246
        %5506 = vmatprep.subr.bf16.mxu0 %v5249
        %5507 = vmatpush1.bf16.msra.mxu0 %v5248
        %5508 = vmatprep.subr.bf16.mxu0 %v5251
        %5509 = vmatpush1.bf16.msra.mxu0 %v5250
        %5510 = vmatprep.subr.bf16.mxu0 %v5253
        %5511 = vmatpush1.bf16.msra.mxu0 %v5252
        %5512 = vmatprep.subr.bf16.mxu0 %v5255
        %5513 = vmatpush1.bf16.msra.mxu0 %v5254
        %5514 = vmatprep.subr.bf16.mxu0 %v5257
        %5515 = vmatpush1.bf16.msra.mxu0 %v5256
        %5516 = vmatprep.subr.bf16.mxu0 %v5259
        %5517 = vmatpush1.bf16.msra.mxu0 %v5258
        %5518 = vmatprep.subr.bf16.mxu0 %v5261
        %5519 = vmatpush1.bf16.msra.mxu0 %v5260
        %5520 = vmatprep.subr.bf16.mxu0 %v5263
        %5521 = vmatpush1.bf16.msra.mxu0 %v5262
        %5522 = vmatprep.subr.bf16.mxu0 %v5265
        %5523 = vmatpush1.bf16.msra.mxu0 %v5264
        %5524 = vmatprep.subr.bf16.mxu0 %v5267
        %5525 = vmatpush1.bf16.msra.mxu0 %v5266
        %5526 = vmatprep.subr.bf16.mxu0 %v5269
        %5527 = vmatpush1.bf16.msra.mxu0 %v5268
        %5528 = vmatprep.subr.bf16.mxu0 %v5271
        %5529 = vmatpush1.bf16.msra.mxu0 %v5270
        %5530 = vmatprep.subr.bf16.mxu0 %v5273
        %5531 = vmatpush1.bf16.msra.mxu0 %v5272
        %5532 = vmatprep.subr.bf16.mxu0 %v5275
        %5533 = vmatpush1.bf16.msra.mxu0 %v5274
        %5534 = vmatprep.mubr.bf16.mxu0 %v3068
        %5535 = vmatmul.mubr.bf16.gmra.mrb[0].mxu0 %v3067
        %v5536 = vpop.f32.mrb[0].mxu0
        %v5537 = vadd.f32 %v5474, %v5536
        %v5538 = vpop.f32.mrb[0].mxu0
        %v5539 = vadd.f32 %v5476, %v5538
        %v5540 = vpop.f32.mrb[0].mxu0
        %v5541 = vadd.f32 %v5478, %v5540
        %v5542 = vpop.f32.mrb[0].mxu0
        %v5543 = vadd.f32 %v5480, %v5542
        %5544 = vmatprep.mubr.bf16.mxu0 %v3075
        %5545 = vmatmul.mubr.bf16.gmra.mrb[0].mxu0 %v3074
        %v5546 = vpop.f32.mrb[0].mxu0
        %v5547 = vadd.f32 %v5484, %v5546
        %v5548 = vpop.f32.mrb[0].mxu0
        %v5549 = vadd.f32 %v5486, %v5548
        %v5550 = vpop.f32.mrb[0].mxu0
        %v5551 = vadd.f32 %v5488, %v5550
        %v5552 = vpop.f32.mrb[0].mxu0
        %v5553 = vadd.f32 %v5490, %v5552
        %5554 = vmatprep.mubr.bf16.mxu0 %v3082
        %5555 = vmatmul.mubr.bf16.gmra.mrb[0].mxu0 %v3081
        %v5556 = vpop.f32.mrb[0].mxu0
        %v5557 = vadd.f32 %v5494, %v5556
        %v5558 = vpop.f32.mrb[0].mxu0
        %v5559 = vadd.f32 %v5496, %v5558
        %v5560 = vpop.f32.mrb[0].mxu0
        %v5561 = vadd.f32 %v5498, %v5560
        %v5562 = vpop.f32.mrb[0].mxu0
        %v5563 = vadd.f32 %v5500, %v5562
        %5564 = vdwg.mxu0
        %5565 = vmatprep.subr.bf16.mxu0 %v5277
        %5566 = vmatpush1.bf16.msra.mxu0 %v5276
        %5567 = vmatprep.subr.bf16.mxu0 0
        %5568 = vmatpush1.bf16.msra.mxu0 0
        %5569 = vmatprep.subr.bf16.mxu0 0
        %5570 = vmatpush1.bf16.msra.mxu0 0
        %5571 = vmatprep.subr.bf16.mxu0 0
        %5572 = vmatpush1.bf16.msra.mxu0 0
        %5573 = vmatprep.subr.bf16.mxu0 0
        %5574 = vmatpush1.bf16.msra.mxu0 0
        %5575 = vmatprep.subr.bf16.mxu0 0
        %5576 = vmatpush1.bf16.msra.mxu0 0
        %5577 = vmatprep.subr.bf16.mxu0 0
        %5578 = vmatpush1.bf16.msra.mxu0 0
        %5579 = vmatprep.subr.bf16.mxu0 0
        %5580 = vmatpush1.bf16.msra.mxu0 0
        %5581 = vmatprep.subr.bf16.mxu0 0
        %5582 = vmatpush1.bf16.msra.mxu0 0
        %5583 = vmatprep.subr.bf16.mxu0 0
        %5584 = vmatpush1.bf16.msra.mxu0 0
        %5585 = vmatprep.subr.bf16.mxu0 0
        %5586 = vmatpush1.bf16.msra.mxu0 0
        %5587 = vmatprep.subr.bf16.mxu0 0
        %5588 = vmatpush1.bf16.msra.mxu0 0
        %5589 = vmatprep.subr.bf16.mxu0 0
        %5590 = vmatpush1.bf16.msra.mxu0 0
        %5591 = vmatprep.subr.bf16.mxu0 0
        %5592 = vmatpush1.bf16.msra.mxu0 0
        %5593 = vmatprep.subr.bf16.mxu0 0
        %5594 = vmatpush1.bf16.msra.mxu0 0
        %5595 = vmatprep.subr.bf16.mxu0 0
        %5596 = vmatpush1.bf16.msra.mxu0 0
        %5597 = vmatprep.mubr.bf16.mxu0 0
        %5598 = vmatmul.mubr.bf16.gmra.mrb[0].mxu0 %v3674
        %v5599 = vpop.f32.mrb[0].mxu0
        %v5600 = vadd.f32 %v5537, %v5599
        %v5601 = vpop.f32.mrb[0].mxu0
        %v5602 = vadd.f32 %v5539, %v5601
        %v5603 = vpop.f32.mrb[0].mxu0
        %v5604 = vadd.f32 %v5541, %v5603
        %v5605 = vpop.f32.mrb[0].mxu0
        %v5606 = vadd.f32 %v5543, %v5605
        %5607 = vmatprep.mubr.bf16.mxu0 0
        %5608 = vmatmul.mubr.bf16.gmra.mrb[0].mxu0 %v3677
        %v5609 = vpop.f32.mrb[0].mxu0
        %v5610 = vadd.f32 %v5547, %v5609
        %v5611 = vpop.f32.mrb[0].mxu0
        %v5612 = vadd.f32 %v5549, %v5611
        %v5613 = vpop.f32.mrb[0].mxu0
        %v5614 = vadd.f32 %v5551, %v5613
        %v5615 = vpop.f32.mrb[0].mxu0
        %v5616 = vadd.f32 %v5553, %v5615
        %5617 = vmatprep.mubr.bf16.mxu0 0
        %5618 = vmatmul.mubr.bf16.gmra.mrb[0].mxu0 %v3680
        %v5619 = vpop.f32.mrb[0].mxu0
        %v5620 = vadd.f32 %v5557, %v5619
        %v5621 = vpop.f32.mrb[0].mxu0
        %v5622 = vadd.f32 %v5559, %v5621
        %v5623 = vpop.f32.mrb[0].mxu0
        %v5624 = vadd.f32 %v5561, %v5623
        %v5625 = vpop.f32.mrb[0].mxu0
        %v5626 = vadd.f32 %v5563, %v5625
        %5627 = vdwg.mxu0
        %v5628 = vmax.f32 %v4775, %v5600
        %v5629 = vmax.f32 %v4776, %v5602
        %v5630 = vmax.f32 %v4777, %v5604
        %v5631 = vmax.f32 %v4778, %v5606
        %v5632 = vmax.f32 %v4779, %v5610
        %v5633 = vmax.f32 %v4780, %v5612
        %v5634 = vmax.f32 %v4781, %v5614
        %v5635 = vmax.f32 %v4782, %v5616
        %v5636 = vmax.f32 %v4783, %v5620
        %v5637 = vmax.f32 %v4784, %v5622
        %v5638 = vmax.f32 %v4785, %v5624
        %v5639 = vmax.f32 %v4786, %v5626
        %s5640 = scalar_lea.vmem %s3, 2352
        %v5641 = vld [vmem:[%s5640] sm:$0xff]
        %v5642 = vld [vmem:[%s5640 + $0x8] sm:$0xff]
        %v5643 = vld [vmem:[%s5640 + $0x10] sm:$0xff]
        %v5644 = vld [vmem:[%s5640 + $0x18] sm:$0xff]
        %v5645 = vld [vmem:[%s5640 + $0x20] sm:$0xff]
        %v5646 = vld [vmem:[%s5640 + $0x28] sm:$0xff]
        %v5647 = vld [vmem:[%s5640 + $0x30] sm:$0xff]
        %v5648 = vld [vmem:[%s5640 + $0x38] sm:$0xff]
        %v5649 = vld [vmem:[%s5640 + $0x40] sm:$0xff]
        %v5650 = vld [vmem:[%s5640 + $0x48] sm:$0xff]
        %v5651 = vld [vmem:[%s5640 + $0x50] sm:$0xff]
        %v5652 = vld [vmem:[%s5640 + $0x58] sm:$0xff]
        %v5653 = vld [vmem:[%s5640 + $0x60] sm:$0xff]
        %v5654 = vld [vmem:[%s5640 + $0x68] sm:$0xff]
        %v5655 = vld [vmem:[%s5640 + $0x70] sm:$0xff]
        %v5656 = vld [vmem:[%s5640 + $0x78] sm:$0xff]
        %v5657 = vld [vmem:[%s5640 + $0x80] sm:$0xff]
        %v5658 = vld [vmem:[%s5640 + $0x88] sm:$0xff]
        %v5659 = vld [vmem:[%s5640 + $0x90] sm:$0xff]
        %v5660 = vld [vmem:[%s5640 + $0x98] sm:$0xff]
        %v5661 = vld [vmem:[%s5640 + $0xa0] sm:$0xff]
        %v5662 = vld [vmem:[%s5640 + $0xa8] sm:$0xff]
        %v5663 = vld [vmem:[%s5640 + $0xb0] sm:$0xff]
        %v5664 = vld [vmem:[%s5640 + $0xb8] sm:$0xff]
        %v5665 = vld [vmem:[%s5640 + $0xc0] sm:$0xff]
        %v5666 = vld [vmem:[%s5640 + $0xc8] sm:$0xff]
        %v5667 = vld [vmem:[%s5640 + $0xd0] sm:$0xff]
        %v5668 = vld [vmem:[%s5640 + $0xd8] sm:$0xff]
        %v5669 = vld [vmem:[%s5640 + $0xe0] sm:$0xff]
        %v5670 = vld [vmem:[%s5640 + $0xe8] sm:$0xff]
        %v5671 = vld [vmem:[%s5640 + $0xf0] sm:$0xff]
        %v5672 = vld [vmem:[%s5640 + $0xf8] sm:$0xff]
        %v5673 = vld [vmem:[%s5640 + $0x100] sm:$0xff]
        %v5674 = vld [vmem:[%s5640 + $0x108] sm:$0xff]
        %v5675 = vld [vmem:[%s5640 + $0x110] sm:$0xff]
        %v5676 = vld [vmem:[%s5640 + $0x118] sm:$0xff]
        %v5677 = vld [vmem:[%s5640 + $0x120] sm:$0xff]
        %v5678 = vld [vmem:[%s5640 + $0x128] sm:$0xff]
        %v5679 = vld [vmem:[%s5640 + $0x130] sm:$0xff]
        %v5680 = vld [vmem:[%s5640 + $0x138] sm:$0xff]
        %v5681 = vld [vmem:[%s5640 + $0x140] sm:$0xff]
        %v5682 = vld [vmem:[%s5640 + $0x148] sm:$0xff]
        %v5683 = vld [vmem:[%s5640 + $0x150] sm:$0xff]
        %v5684 = vld [vmem:[%s5640 + $0x158] sm:$0xff]
        %v5685 = vld [vmem:[%s5640 + $0x160] sm:$0xff]
        %v5686 = vld [vmem:[%s5640 + $0x168] sm:$0xff]
        %v5687 = vld [vmem:[%s5640 + $0x170] sm:$0xff]
        %v5688 = vld [vmem:[%s5640 + $0x178] sm:$0xff]
        %v5689 = vld [vmem:[%s5640 + $0x180] sm:$0xff]
        %v5690 = vld [vmem:[%s5640 + $0x188] sm:$0xff]
        %v5691 = vld [vmem:[%s5640 + $0x190] sm:$0xff]
        %v5692 = vld [vmem:[%s5640 + $0x198] sm:$0xff]
        %v5693 = vld [vmem:[%s5640 + $0x1a0] sm:$0xff]
        %v5694 = vld [vmem:[%s5640 + $0x1a8] sm:$0xff]
        %v5695 = vld [vmem:[%s5640 + $0x1b0] sm:$0xff]
        %v5696 = vld [vmem:[%s5640 + $0x1b8] sm:$0xff]
        %v5697 = vld [vmem:[%s5640 + $0x1c0] sm:$0xff]
        %v5698 = vld [vmem:[%s5640 + $0x1c8] sm:$0xff]
        %v5699 = vld [vmem:[%s5640 + $0x1d0] sm:$0xff]
        %v5700 = vld [vmem:[%s5640 + $0x1d8] sm:$0xff]
        %v5701 = vld [vmem:[%s5640 + $0x1e0] sm:$0xff]
        %v5702 = vld [vmem:[%s5640 + $0x1e8] sm:$0xff]
        %v5703 = vld [vmem:[%s5640 + $0x1f0] sm:$0xff]
        %v5704 = vld [vmem:[%s5640 + $0x1f8] sm:$0xff]
        %v5705 = vld [vmem:[%s5640 + $0x200] sm:$0xff]
        %v5706 = vld [vmem:[%s5640 + $0x208] sm:$0xff]
        %v5707 = vld [vmem:[%s5640 + $0x210] sm:$0xff]
        %v5708 = vld [vmem:[%s5640 + $0x218] sm:$0xff]
        %v5709 = vld [vmem:[%s5640 + $0x220] sm:$0xff]
        %v5710 = vld [vmem:[%s5640 + $0x228] sm:$0xff]
        %v5711 = vld [vmem:[%s5640 + $0x230] sm:$0xff]
        %v5712 = vld [vmem:[%s5640 + $0x238] sm:$0xff]
        %v5713 = vld [vmem:[%s5640 + $0x240] sm:$0xff]
        %v5714 = vld [vmem:[%s5640 + $0x248] sm:$0xff]
        %v5715 = vld [vmem:[%s5640 + $0x250] sm:$0xff]
        %v5716 = vld [vmem:[%s5640 + $0x258] sm:$0xff]
        %v5717 = vld [vmem:[%s5640 + $0x260] sm:$0xff]
        %v5718 = vld [vmem:[%s5640 + $0x268] sm:$0xff]
        %v5719 = vld [vmem:[%s5640 + $0x270] sm:$0xff]
        %v5720 = vld [vmem:[%s5640 + $0x278] sm:$0xff]
        %v5721 = vld [vmem:[%s5640 + $0x280] sm:$0xff]
        %v5722 = vld [vmem:[%s5640 + $0x288] sm:$0xff]
        %v5723 = vld [vmem:[%s5640 + $0x290] sm:$0xff]
        %v5724 = vld [vmem:[%s5640 + $0x298] sm:$0xff]
        %v5725 = vld [vmem:[%s5640 + $0x2a0] sm:$0xff]
        %v5726 = vld [vmem:[%s5640 + $0x2a8] sm:$0xff]
        %v5727 = vld [vmem:[%s5640 + $0x2b0] sm:$0xff]
        %v5728 = vld [vmem:[%s5640 + $0x2b8] sm:$0xff]
        %v5729 = vld [vmem:[%s5640 + $0x2c0] sm:$0xff]
        %v5730 = vld [vmem:[%s5640 + $0x2c8] sm:$0xff]
        %v5731 = vld [vmem:[%s5640 + $0x2d0] sm:$0xff]
        %v5732 = vld [vmem:[%s5640 + $0x2d8] sm:$0xff]
        %v5733 = vld [vmem:[%s5640 + $0x2e0] sm:$0xff]
        %v5734 = vld [vmem:[%s5640 + $0x2e8] sm:$0xff]
        %v5735 = vld [vmem:[%s5640 + $0x2f0] sm:$0xff]
        %v5736 = vld [vmem:[%s5640 + $0x2f8] sm:$0xff]
        %v5737 = vld [vmem:[%s5640 + $0x300] sm:$0xff]
        %v5738 = vld [vmem:[%s5640 + $0x308] sm:$0xff]
        %v5837 = vunpack.c.l.b16 %v5641
        %v5838 = vunpack.c.h.b16 %v5641
        %v5839 = vunpack.c.l.b16 %v5642
        %v5840 = vunpack.c.h.b16 %v5642
        %v5841 = vunpack.c.l.b16 %v5643
        %v5842 = vunpack.c.h.b16 %v5643
        %v5843 = vunpack.c.l.b16 %v5644
        %v5844 = vunpack.c.h.b16 %v5644
        %v5845 = vunpack.c.l.b16 %v5645
        %v5846 = vunpack.c.h.b16 %v5645
        %v5847 = vunpack.c.l.b16 %v5646
        %v5848 = vunpack.c.h.b16 %v5646
        %v5849 = vunpack.c.l.b16 %v5647
        %v5850 = vunpack.c.h.b16 %v5647
        %v5851 = vunpack.c.l.b16 %v5648
        %v5852 = vunpack.c.h.b16 %v5648
        %v5853 = vunpack.c.l.b16 %v5649
        %v5854 = vunpack.c.h.b16 %v5649
        %v5855 = vunpack.c.l.b16 %v5650
        %v5856 = vunpack.c.h.b16 %v5650
        %v5857 = vunpack.c.l.b16 %v5651
        %v5858 = vunpack.c.h.b16 %v5651
        %v5859 = vunpack.c.l.b16 %v5652
        %v5860 = vunpack.c.h.b16 %v5652
        %v5861 = vunpack.c.l.b16 %v5653
        %v5862 = vunpack.c.h.b16 %v5653
        %v5863 = vunpack.c.l.b16 %v5654
        %v5864 = vunpack.c.h.b16 %v5654
        %v5865 = vunpack.c.l.b16 %v5655
        %v5866 = vunpack.c.h.b16 %v5655
        %v5867 = vunpack.c.l.b16 %v5656
        %v5868 = vunpack.c.h.b16 %v5656
        %v5869 = vunpack.c.l.b16 %v5657
        %v5870 = vunpack.c.h.b16 %v5657
        %v5871 = vunpack.c.l.b16 %v5658
        %v5872 = vunpack.c.h.b16 %v5658
        %v5873 = vunpack.c.l.b16 %v5659
        %v5874 = vunpack.c.h.b16 %v5659
        %v5875 = vunpack.c.l.b16 %v5660
        %v5876 = vunpack.c.h.b16 %v5660
        %v5877 = vunpack.c.l.b16 %v5661
        %v5878 = vunpack.c.h.b16 %v5661
        %v5879 = vunpack.c.l.b16 %v5662
        %v5880 = vunpack.c.h.b16 %v5662
        %v5881 = vunpack.c.l.b16 %v5663
        %v5882 = vunpack.c.h.b16 %v5663
        %v5883 = vunpack.c.l.b16 %v5664
        %v5884 = vunpack.c.h.b16 %v5664
        %v5885 = vunpack.c.l.b16 %v5665
        %v5886 = vunpack.c.h.b16 %v5665
        %v5887 = vunpack.c.l.b16 %v5666
        %v5888 = vunpack.c.h.b16 %v5666
        %v5889 = vunpack.c.l.b16 %v5667
        %v5890 = vunpack.c.h.b16 %v5667
        %v5891 = vunpack.c.l.b16 %v5668
        %v5892 = vunpack.c.h.b16 %v5668
        %v5893 = vunpack.c.l.b16 %v5669
        %v5894 = vunpack.c.h.b16 %v5669
        %v5895 = vunpack.c.l.b16 %v5670
        %v5896 = vunpack.c.h.b16 %v5670
        %v5897 = vunpack.c.l.b16 %v5671
        %v5898 = vunpack.c.h.b16 %v5671
        %v5899 = vunpack.c.l.b16 %v5672
        %v5900 = vunpack.c.h.b16 %v5672
        %v5901 = vunpack.c.l.b16 %v5673
        %v5902 = vunpack.c.h.b16 %v5673
        %v5903 = vunpack.c.l.b16 %v5674
        %v5904 = vunpack.c.h.b16 %v5674
        %v5905 = vunpack.c.l.b16 %v5675
        %v5906 = vunpack.c.h.b16 %v5675
        %v5907 = vunpack.c.l.b16 %v5676
        %v5908 = vunpack.c.h.b16 %v5676
        %v5909 = vunpack.c.l.b16 %v5677
        %v5910 = vunpack.c.h.b16 %v5677
        %v5911 = vunpack.c.l.b16 %v5678
        %v5912 = vunpack.c.h.b16 %v5678
        %v5913 = vunpack.c.l.b16 %v5679
        %v5914 = vunpack.c.h.b16 %v5679
        %v5915 = vunpack.c.l.b16 %v5680
        %v5916 = vunpack.c.h.b16 %v5680
        %v5917 = vunpack.c.l.b16 %v5681
        %v5918 = vunpack.c.h.b16 %v5681
        %v5919 = vunpack.c.l.b16 %v5682
        %v5920 = vunpack.c.h.b16 %v5682
        %v5921 = vunpack.c.l.b16 %v5683
        %v5922 = vunpack.c.h.b16 %v5683
        %v5923 = vunpack.c.l.b16 %v5684
        %v5924 = vunpack.c.h.b16 %v5684
        %v5925 = vunpack.c.l.b16 %v5685
        %v5926 = vunpack.c.h.b16 %v5685
        %v5927 = vunpack.c.l.b16 %v5686
        %v5928 = vunpack.c.h.b16 %v5686
        %v5929 = vunpack.c.l.b16 %v5687
        %v5930 = vunpack.c.h.b16 %v5687
        %v5931 = vunpack.c.l.b16 %v5688
        %v5932 = vunpack.c.h.b16 %v5688
        %v5933 = vunpack.c.l.b16 %v5689
        %v5934 = vunpack.c.h.b16 %v5689
        %v5935 = vunpack.c.l.b16 %v5690
        %v5936 = vunpack.c.h.b16 %v5690
        %v5937 = vunpack.c.l.b16 %v5691
        %v5938 = vunpack.c.h.b16 %v5691
        %v5939 = vunpack.c.l.b16 %v5692
        %v5940 = vunpack.c.h.b16 %v5692
        %v5941 = vunpack.c.l.b16 %v5693
        %v5942 = vunpack.c.h.b16 %v5693
        %v5943 = vunpack.c.l.b16 %v5694
        %v5944 = vunpack.c.h.b16 %v5694
        %v5945 = vunpack.c.l.b16 %v5695
        %v5946 = vunpack.c.h.b16 %v5695
        %v5947 = vunpack.c.l.b16 %v5696
        %v5948 = vunpack.c.h.b16 %v5696
        %v5949 = vunpack.c.l.b16 %v5697
        %v5950 = vunpack.c.h.b16 %v5697
        %v5951 = vunpack.c.l.b16 %v5698
        %v5952 = vunpack.c.h.b16 %v5698
        %v5953 = vunpack.c.l.b16 %v5699
        %v5954 = vunpack.c.h.b16 %v5699
        %v5955 = vunpack.c.l.b16 %v5700
        %v5956 = vunpack.c.h.b16 %v5700
        %v5957 = vunpack.c.l.b16 %v5701
        %v5958 = vunpack.c.h.b16 %v5701
        %v5959 = vunpack.c.l.b16 %v5702
        %v5960 = vunpack.c.h.b16 %v5702
        %v5961 = vunpack.c.l.b16 %v5703
        %v5962 = vunpack.c.h.b16 %v5703
        %v5963 = vunpack.c.l.b16 %v5704
        %v5964 = vunpack.c.h.b16 %v5704
        %v5965 = vunpack.c.l.b16 %v5705
        %v5966 = vunpack.c.h.b16 %v5705
        %v5967 = vunpack.c.l.b16 %v5706
        %v5968 = vunpack.c.h.b16 %v5706
        %v5969 = vunpack.c.l.b16 %v5707
        %v5970 = vunpack.c.h.b16 %v5707
        %v5971 = vunpack.c.l.b16 %v5708
        %v5972 = vunpack.c.h.b16 %v5708
        %v5973 = vunpack.c.l.b16 %v5709
        %v5974 = vunpack.c.h.b16 %v5709
        %v5975 = vunpack.c.l.b16 %v5710
        %v5976 = vunpack.c.h.b16 %v5710
        %v5977 = vunpack.c.l.b16 %v5711
        %v5978 = vunpack.c.h.b16 %v5711
        %v5979 = vunpack.c.l.b16 %v5712
        %v5980 = vunpack.c.h.b16 %v5712
        %v5981 = vunpack.c.l.b16 %v5713
        %v5982 = vunpack.c.h.b16 %v5713
        %v5983 = vunpack.c.l.b16 %v5714
        %v5984 = vunpack.c.h.b16 %v5714
        %v5985 = vunpack.c.l.b16 %v5715
        %v5986 = vunpack.c.h.b16 %v5715
        %v5987 = vunpack.c.l.b16 %v5716
        %v5988 = vunpack.c.h.b16 %v5716
        %v5989 = vunpack.c.l.b16 %v5717
        %v5990 = vunpack.c.h.b16 %v5717
        %v5991 = vunpack.c.l.b16 %v5718
        %v5992 = vunpack.c.h.b16 %v5718
        %v5993 = vunpack.c.l.b16 %v5719
        %v5994 = vunpack.c.h.b16 %v5719
        %v5995 = vunpack.c.l.b16 %v5720
        %v5996 = vunpack.c.h.b16 %v5720
        %v5997 = vunpack.c.l.b16 %v5721
        %v5998 = vunpack.c.h.b16 %v5721
        %v5999 = vunpack.c.l.b16 %v5722
        %v6000 = vunpack.c.h.b16 %v5722
        %v6001 = vunpack.c.l.b16 %v5723
        %v6002 = vunpack.c.h.b16 %v5723
        %v6003 = vunpack.c.l.b16 %v5724
        %v6004 = vunpack.c.h.b16 %v5724
        %v6005 = vunpack.c.l.b16 %v5725
        %v6006 = vunpack.c.h.b16 %v5725
        %v6007 = vunpack.c.l.b16 %v5726
        %v6008 = vunpack.c.h.b16 %v5726
        %v6009 = vunpack.c.l.b16 %v5727
        %v6010 = vunpack.c.h.b16 %v5727
        %v6011 = vunpack.c.l.b16 %v5728
        %v6012 = vunpack.c.h.b16 %v5728
        %v6013 = vunpack.c.l.b16 %v5729
        %v6014 = vunpack.c.h.b16 %v5729
        %v6015 = vunpack.c.l.b16 %v5730
        %v6016 = vunpack.c.h.b16 %v5730
        %v6017 = vunpack.c.l.b16 %v5731
        %v6018 = vunpack.c.h.b16 %v5731
        %v6019 = vunpack.c.l.b16 %v5732
        %v6020 = vunpack.c.h.b16 %v5732
        %v6021 = vunpack.c.l.b16 %v5733
        %v6022 = vunpack.c.h.b16 %v5733
        %v6023 = vunpack.c.l.b16 %v5734
        %v6024 = vunpack.c.h.b16 %v5734
        %v6025 = vunpack.c.l.b16 %v5735
        %v6026 = vunpack.c.h.b16 %v5735
        %v6027 = vunpack.c.l.b16 %v5736
        %v6028 = vunpack.c.h.b16 %v5736
        %v6029 = vunpack.c.l.b16 %v5737
        %v6030 = vunpack.c.h.b16 %v5737
        %v6031 = vunpack.c.l.b16 %v5738
        %v6032 = vunpack.c.h.b16 %v5738
        %v6033 = vpack.c.b16 %v5839, %v5837
        %v6034 = vpack.c.b16 %v5840, %v5838
        %v6035 = vpack.c.b16 %v5843, %v5841
        %v6036 = vpack.c.b16 %v5844, %v5842
        %v6037 = vpack.c.b16 %v5847, %v5845
        %v6038 = vpack.c.b16 %v5848, %v5846
        %v6039 = vpack.c.b16 %v5851, %v5849
        %v6040 = vpack.c.b16 %v5852, %v5850
        %v6041 = vpack.c.b16 %v5855, %v5853
        %v6042 = vpack.c.b16 %v5856, %v5854
        %v6043 = vpack.c.b16 %v5859, %v5857
        %v6044 = vpack.c.b16 %v5860, %v5858
        %v6045 = vpack.c.b16 %v5863, %v5861
        %v6046 = vpack.c.b16 %v5864, %v5862
        %v6047 = vpack.c.b16 %v5867, %v5865
        %v6048 = vpack.c.b16 %v5868, %v5866
        %v6049 = vpack.c.b16 %v5871, %v5869
        %v6050 = vpack.c.b16 %v5872, %v5870
        %v6051 = vpack.c.b16 %v5875, %v5873
        %v6052 = vpack.c.b16 %v5876, %v5874
        %v6053 = vpack.c.b16 %v5879, %v5877
        %v6054 = vpack.c.b16 %v5880, %v5878
        %v6055 = vpack.c.b16 %v5883, %v5881
        %v6056 = vpack.c.b16 %v5884, %v5882
        %v6057 = vpack.c.b16 %v5887, %v5885
        %v6058 = vpack.c.b16 %v5888, %v5886
        %v6059 = vpack.c.b16 %v5891, %v5889
        %v6060 = vpack.c.b16 %v5892, %v5890
        %v6061 = vpack.c.b16 %v5895, %v5893
        %v6062 = vpack.c.b16 %v5896, %v5894
        %v6063 = vpack.c.b16 %v5899, %v5897
        %v6064 = vpack.c.b16 %v5900, %v5898
        %v6065 = vpack.c.b16 %v5903, %v5901
        %v6066 = vpack.c.b16 %v5904, %v5902
        %v6067 = vpack.c.b16 %v5907, %v5905
        %v6068 = vpack.c.b16 %v5908, %v5906
        %v6069 = vpack.c.b16 %v5911, %v5909
        %v6070 = vpack.c.b16 %v5912, %v5910
        %v6071 = vpack.c.b16 %v5915, %v5913
        %v6072 = vpack.c.b16 %v5916, %v5914
        %v6073 = vpack.c.b16 %v5919, %v5917
        %v6074 = vpack.c.b16 %v5920, %v5918
        %v6075 = vpack.c.b16 %v5923, %v5921
        %v6076 = vpack.c.b16 %v5924, %v5922
        %v6077 = vpack.c.b16 %v5927, %v5925
        %v6078 = vpack.c.b16 %v5928, %v5926
        %v6079 = vpack.c.b16 %v5931, %v5929
        %v6080 = vpack.c.b16 %v5932, %v5930
        %v6081 = vpack.c.b16 %v5935, %v5933
        %v6082 = vpack.c.b16 %v5936, %v5934
        %v6083 = vpack.c.b16 %v5939, %v5937
        %v6084 = vpack.c.b16 %v5940, %v5938
        %v6085 = vpack.c.b16 %v5943, %v5941
        %v6086 = vpack.c.b16 %v5944, %v5942
        %v6087 = vpack.c.b16 %v5947, %v5945
        %v6088 = vpack.c.b16 %v5948, %v5946
        %v6089 = vpack.c.b16 %v5951, %v5949
        %v6090 = vpack.c.b16 %v5952, %v5950
        %v6091 = vpack.c.b16 %v5955, %v5953
        %v6092 = vpack.c.b16 %v5956, %v5954
        %v6093 = vpack.c.b16 %v5959, %v5957
        %v6094 = vpack.c.b16 %v5960, %v5958
        %v6095 = vpack.c.b16 %v5963, %v5961
        %v6096 = vpack.c.b16 %v5964, %v5962
        %v6097 = vpack.c.b16 %v5967, %v5965
        %v6098 = vpack.c.b16 %v5968, %v5966
        %v6099 = vpack.c.b16 %v5971, %v5969
        %v6100 = vpack.c.b16 %v5972, %v5970
        %v6101 = vpack.c.b16 %v5975, %v5973
        %v6102 = vpack.c.b16 %v5976, %v5974
        %v6103 = vpack.c.b16 %v5979, %v5977
        %v6104 = vpack.c.b16 %v5980, %v5978
        %v6105 = vpack.c.b16 %v5983, %v5981
        %v6106 = vpack.c.b16 %v5984, %v5982
        %v6107 = vpack.c.b16 %v5987, %v5985
        %v6108 = vpack.c.b16 %v5988, %v5986
        %v6109 = vpack.c.b16 %v5991, %v5989
        %v6110 = vpack.c.b16 %v5992, %v5990
        %v6111 = vpack.c.b16 %v5995, %v5993
        %v6112 = vpack.c.b16 %v5996, %v5994
        %v6113 = vpack.c.b16 %v5999, %v5997
        %v6114 = vpack.c.b16 %v6000, %v5998
        %v6115 = vpack.c.b16 %v6003, %v6001
        %v6116 = vpack.c.b16 %v6004, %v6002
        %v6117 = vpack.c.b16 %v6007, %v6005
        %v6118 = vpack.c.b16 %v6008, %v6006
        %v6119 = vpack.c.b16 %v6011, %v6009
        %v6120 = vpack.c.b16 %v6012, %v6010
        %v6121 = vpack.c.b16 %v6015, %v6013
        %v6122 = vpack.c.b16 %v6016, %v6014
        %v6123 = vpack.c.b16 %v6019, %v6017
        %v6124 = vpack.c.b16 %v6020, %v6018
        %v6125 = vpack.c.b16 %v6023, %v6021
        %v6126 = vpack.c.b16 %v6024, %v6022
        %v6127 = vpack.c.b16 %v6027, %v6025
        %v6128 = vpack.c.b16 %v6028, %v6026
        %v6129 = vpack.c.b16 %v6031, %v6029
        %v6130 = vpack.c.b16 %v6032, %v6030
        %6229 = vmatprep.subr.bf16.mxu0 %v6034
        %6230 = vmatpush1.bf16.msra.mxu0 %v6033
        %6231 = vmatprep.subr.bf16.mxu0 %v6036
        %6232 = vmatpush1.bf16.msra.mxu0 %v6035
        %6233 = vmatprep.subr.bf16.mxu0 %v6038
        %6234 = vmatpush1.bf16.msra.mxu0 %v6037
        %6235 = vmatprep.subr.bf16.mxu0 %v6040
        %6236 = vmatpush1.bf16.msra.mxu0 %v6039
        %6237 = vmatprep.subr.bf16.mxu0 %v6042
        %6238 = vmatpush1.bf16.msra.mxu0 %v6041
        %6239 = vmatprep.subr.bf16.mxu0 %v6044
        %6240 = vmatpush1.bf16.msra.mxu0 %v6043
        %6241 = vmatprep.subr.bf16.mxu0 %v6046
        %6242 = vmatpush1.bf16.msra.mxu0 %v6045
        %6243 = vmatprep.subr.bf16.mxu0 %v6048
        %6244 = vmatpush1.bf16.msra.mxu0 %v6047
        %6245 = vmatprep.subr.bf16.mxu0 %v6050
        %6246 = vmatpush1.bf16.msra.mxu0 %v6049
        %6247 = vmatprep.subr.bf16.mxu0 %v6052
        %6248 = vmatpush1.bf16.msra.mxu0 %v6051
        %6249 = vmatprep.subr.bf16.mxu0 %v6054
        %6250 = vmatpush1.bf16.msra.mxu0 %v6053
        %6251 = vmatprep.subr.bf16.mxu0 %v6056
        %6252 = vmatpush1.bf16.msra.mxu0 %v6055
        %6253 = vmatprep.subr.bf16.mxu0 %v6058
        %6254 = vmatpush1.bf16.msra.mxu0 %v6057
        %6255 = vmatprep.subr.bf16.mxu0 %v6060
        %6256 = vmatpush1.bf16.msra.mxu0 %v6059
        %6257 = vmatprep.subr.bf16.mxu0 %v6062
        %6258 = vmatpush1.bf16.msra.mxu0 %v6061
        %6259 = vmatprep.subr.bf16.mxu0 %v6064
        %6260 = vmatpush1.bf16.msra.mxu0 %v6063
        %6261 = vmatprep.mubr.bf16.mxu0 %v3064
        %6262 = vmatmul.mubr.bf16.gmra.mrb[0].mxu0 %v3063
        %v6263 = vpop.f32.mrb[0].mxu0
        %v6264 = vadd.f32 0.0, %v6263
        %v6265 = vpop.f32.mrb[0].mxu0
        %v6266 = vadd.f32 0.0, %v6265
        %v6267 = vpop.f32.mrb[0].mxu0
        %v6268 = vadd.f32 0.0, %v6267
        %v6269 = vpop.f32.mrb[0].mxu0
        %v6270 = vadd.f32 0.0, %v6269
        %6271 = vmatprep.mubr.bf16.mxu0 %v3071
        %6272 = vmatmul.mubr.bf16.gmra.mrb[0].mxu0 %v3070
        %v6273 = vpop.f32.mrb[0].mxu0
        %v6274 = vadd.f32 0.0, %v6273
        %v6275 = vpop.f32.mrb[0].mxu0
        %v6276 = vadd.f32 0.0, %v6275
        %v6277 = vpop.f32.mrb[0].mxu0
        %v6278 = vadd.f32 0.0, %v6277
        %v6279 = vpop.f32.mrb[0].mxu0
        %v6280 = vadd.f32 0.0, %v6279
        %6281 = vmatprep.mubr.bf16.mxu0 %v3078
        %6282 = vmatmul.mubr.bf16.gmra.mrb[0].mxu0 %v3077
        %v6283 = vpop.f32.mrb[0].mxu0
        %v6284 = vadd.f32 0.0, %v6283
        %v6285 = vpop.f32.mrb[0].mxu0
        %v6286 = vadd.f32 0.0, %v6285
        %v6287 = vpop.f32.mrb[0].mxu0
        %v6288 = vadd.f32 0.0, %v6287
        %v6289 = vpop.f32.mrb[0].mxu0
        %v6290 = vadd.f32 0.0, %v6289
        %6291 = vdwg.mxu0
        %6292 = vmatprep.subr.bf16.mxu0 %v6066
        %6293 = vmatpush1.bf16.msra.mxu0 %v6065
        %6294 = vmatprep.subr.bf16.mxu0 %v6068
        %6295 = vmatpush1.bf16.msra.mxu0 %v6067
        %6296 = vmatprep.subr.bf16.mxu0 %v6070
        %6297 = vmatpush1.bf16.msra.mxu0 %v6069
        %6298 = vmatprep.subr.bf16.mxu0 %v6072
        %6299 = vmatpush1.bf16.msra.mxu0 %v6071
        %6300 = vmatprep.subr.bf16.mxu0 %v6074
        %6301 = vmatpush1.bf16.msra.mxu0 %v6073
        %6302 = vmatprep.subr.bf16.mxu0 %v6076
        %6303 = vmatpush1.bf16.msra.mxu0 %v6075
        %6304 = vmatprep.subr.bf16.mxu0 %v6078
        %6305 = vmatpush1.bf16.msra.mxu0 %v6077
        %6306 = vmatprep.subr.bf16.mxu0 %v6080
        %6307 = vmatpush1.bf16.msra.mxu0 %v6079
        %6308 = vmatprep.subr.bf16.mxu0 %v6082
        %6309 = vmatpush1.bf16.msra.mxu0 %v6081
        %6310 = vmatprep.subr.bf16.mxu0 %v6084
        %6311 = vmatpush1.bf16.msra.mxu0 %v6083
        %6312 = vmatprep.subr.bf16.mxu0 %v6086
        %6313 = vmatpush1.bf16.msra.mxu0 %v6085
        %6314 = vmatprep.subr.bf16.mxu0 %v6088
        %6315 = vmatpush1.bf16.msra.mxu0 %v6087
        %6316 = vmatprep.subr.bf16.mxu0 %v6090
        %6317 = vmatpush1.bf16.msra.mxu0 %v6089
        %6318 = vmatprep.subr.bf16.mxu0 %v6092
        %6319 = vmatpush1.bf16.msra.mxu0 %v6091
        %6320 = vmatprep.subr.bf16.mxu0 %v6094
        %6321 = vmatpush1.bf16.msra.mxu0 %v6093
        %6322 = vmatprep.subr.bf16.mxu0 %v6096
        %6323 = vmatpush1.bf16.msra.mxu0 %v6095
        %6324 = vmatprep.mubr.bf16.mxu0 %v3066
        %6325 = vmatmul.mubr.bf16.gmra.mrb[0].mxu0 %v3065
        %v6326 = vpop.f32.mrb[0].mxu0
        %v6327 = vadd.f32 %v6264, %v6326
        %v6328 = vpop.f32.mrb[0].mxu0
        %v6329 = vadd.f32 %v6266, %v6328
        %v6330 = vpop.f32.mrb[0].mxu0
        %v6331 = vadd.f32 %v6268, %v6330
        %v6332 = vpop.f32.mrb[0].mxu0
        %v6333 = vadd.f32 %v6270, %v6332
        %6334 = vmatprep.mubr.bf16.mxu0 %v3073
        %6335 = vmatmul.mubr.bf16.gmra.mrb[0].mxu0 %v3072
        %v6336 = vpop.f32.mrb[0].mxu0
        %v6337 = vadd.f32 %v6274, %v6336
        %v6338 = vpop.f32.mrb[0].mxu0
        %v6339 = vadd.f32 %v6276, %v6338
        %v6340 = vpop.f32.mrb[0].mxu0
        %v6341 = vadd.f32 %v6278, %v6340
        %v6342 = vpop.f32.mrb[0].mxu0
        %v6343 = vadd.f32 %v6280, %v6342
        %6344 = vmatprep.mubr.bf16.mxu0 %v3080
        %6345 = vmatmul.mubr.bf16.gmra.mrb[0].mxu0 %v3079
        %v6346 = vpop.f32.mrb[0].mxu0
        %v6347 = vadd.f32 %v6284, %v6346
        %v6348 = vpop.f32.mrb[0].mxu0
        %v6349 = vadd.f32 %v6286, %v6348
        %v6350 = vpop.f32.mrb[0].mxu0
        %v6351 = vadd.f32 %v6288, %v6350
        %v6352 = vpop.f32.mrb[0].mxu0
        %v6353 = vadd.f32 %v6290, %v6352
        %6354 = vdwg.mxu0
        %6355 = vmatprep.subr.bf16.mxu0 %v6098
        %6356 = vmatpush1.bf16.msra.mxu0 %v6097
        %6357 = vmatprep.subr.bf16.mxu0 %v6100
        %6358 = vmatpush1.bf16.msra.mxu0 %v6099
        %6359 = vmatprep.subr.bf16.mxu0 %v6102
        %6360 = vmatpush1.bf16.msra.mxu0 %v6101
        %6361 = vmatprep.subr.bf16.mxu0 %v6104
        %6362 = vmatpush1.bf16.msra.mxu0 %v6103
        %6363 = vmatprep.subr.bf16.mxu0 %v6106
        %6364 = vmatpush1.bf16.msra.mxu0 %v6105
        %6365 = vmatprep.subr.bf16.mxu0 %v6108
        %6366 = vmatpush1.bf16.msra.mxu0 %v6107
        %6367 = vmatprep.subr.bf16.mxu0 %v6110
        %6368 = vmatpush1.bf16.msra.mxu0 %v6109
        %6369 = vmatprep.subr.bf16.mxu0 %v6112
        %6370 = vmatpush1.bf16.msra.mxu0 %v6111
        %6371 = vmatprep.subr.bf16.mxu0 %v6114
        %6372 = vmatpush1.bf16.msra.mxu0 %v6113
        %6373 = vmatprep.subr.bf16.mxu0 %v6116
        %6374 = vmatpush1.bf16.msra.mxu0 %v6115
        %6375 = vmatprep.subr.bf16.mxu0 %v6118
        %6376 = vmatpush1.bf16.msra.mxu0 %v6117
        %6377 = vmatprep.subr.bf16.mxu0 %v6120
        %6378 = vmatpush1.bf16.msra.mxu0 %v6119
        %6379 = vmatprep.subr.bf16.mxu0 %v6122
        %6380 = vmatpush1.bf16.msra.mxu0 %v6121
        %6381 = vmatprep.subr.bf16.mxu0 %v6124
        %6382 = vmatpush1.bf16.msra.mxu0 %v6123
        %6383 = vmatprep.subr.bf16.mxu0 %v6126
        %6384 = vmatpush1.bf16.msra.mxu0 %v6125
        %6385 = vmatprep.subr.bf16.mxu0 %v6128
        %6386 = vmatpush1.bf16.msra.mxu0 %v6127
        %6387 = vmatprep.mubr.bf16.mxu0 %v3068
        %6388 = vmatmul.mubr.bf16.gmra.mrb[0].mxu0 %v3067
        %v6389 = vpop.f32.mrb[0].mxu0
        %v6390 = vadd.f32 %v6327, %v6389
        %v6391 = vpop.f32.mrb[0].mxu0
        %v6392 = vadd.f32 %v6329, %v6391
        %v6393 = vpop.f32.mrb[0].mxu0
        %v6394 = vadd.f32 %v6331, %v6393
        %v6395 = vpop.f32.mrb[0].mxu0
        %v6396 = vadd.f32 %v6333, %v6395
        %6397 = vmatprep.mubr.bf16.mxu0 %v3075
        %6398 = vmatmul.mubr.bf16.gmra.mrb[0].mxu0 %v3074
        %v6399 = vpop.f32.mrb[0].mxu0
        %v6400 = vadd.f32 %v6337, %v6399
        %v6401 = vpop.f32.mrb[0].mxu0
        %v6402 = vadd.f32 %v6339, %v6401
        %v6403 = vpop.f32.mrb[0].mxu0
        %v6404 = vadd.f32 %v6341, %v6403
        %v6405 = vpop.f32.mrb[0].mxu0
        %v6406 = vadd.f32 %v6343, %v6405
        %6407 = vmatprep.mubr.bf16.mxu0 %v3082
        %6408 = vmatmul.mubr.bf16.gmra.mrb[0].mxu0 %v3081
        %v6409 = vpop.f32.mrb[0].mxu0
        %v6410 = vadd.f32 %v6347, %v6409
        %v6411 = vpop.f32.mrb[0].mxu0
        %v6412 = vadd.f32 %v6349, %v6411
        %v6413 = vpop.f32.mrb[0].mxu0
        %v6414 = vadd.f32 %v6351, %v6413
        %v6415 = vpop.f32.mrb[0].mxu0
        %v6416 = vadd.f32 %v6353, %v6415
        %6417 = vdwg.mxu0
        %6418 = vmatprep.subr.bf16.mxu0 %v6130
        %6419 = vmatpush1.bf16.msra.mxu0 %v6129
        %6420 = vmatprep.subr.bf16.mxu0 0
        %6421 = vmatpush1.bf16.msra.mxu0 0
        %6422 = vmatprep.subr.bf16.mxu0 0
        %6423 = vmatpush1.bf16.msra.mxu0 0
        %6424 = vmatprep.subr.bf16.mxu0 0
        %6425 = vmatpush1.bf16.msra.mxu0 0
        %6426 = vmatprep.subr.bf16.mxu0 0
        %6427 = vmatpush1.bf16.msra.mxu0 0
        %6428 = vmatprep.subr.bf16.mxu0 0
        %6429 = vmatpush1.bf16.msra.mxu0 0
        %6430 = vmatprep.subr.bf16.mxu0 0
        %6431 = vmatpush1.bf16.msra.mxu0 0
        %6432 = vmatprep.subr.bf16.mxu0 0
        %6433 = vmatpush1.bf16.msra.mxu0 0
        %6434 = vmatprep.subr.bf16.mxu0 0
        %6435 = vmatpush1.bf16.msra.mxu0 0
        %6436 = vmatprep.subr.bf16.mxu0 0
        %6437 = vmatpush1.bf16.msra.mxu0 0
        %6438 = vmatprep.subr.bf16.mxu0 0
        %6439 = vmatpush1.bf16.msra.mxu0 0
        %6440 = vmatprep.subr.bf16.mxu0 0
        %6441 = vmatpush1.bf16.msra.mxu0 0
        %6442 = vmatprep.subr.bf16.mxu0 0
        %6443 = vmatpush1.bf16.msra.mxu0 0
        %6444 = vmatprep.subr.bf16.mxu0 0
        %6445 = vmatpush1.bf16.msra.mxu0 0
        %6446 = vmatprep.subr.bf16.mxu0 0
        %6447 = vmatpush1.bf16.msra.mxu0 0
        %6448 = vmatprep.subr.bf16.mxu0 0
        %6449 = vmatpush1.bf16.msra.mxu0 0
        %6450 = vmatprep.mubr.bf16.mxu0 0
        %6451 = vmatmul.mubr.bf16.gmra.mrb[0].mxu0 %v3674
        %v6452 = vpop.f32.mrb[0].mxu0
        %v6453 = vadd.f32 %v6390, %v6452
        %v6454 = vpop.f32.mrb[0].mxu0
        %v6455 = vadd.f32 %v6392, %v6454
        %v6456 = vpop.f32.mrb[0].mxu0
        %v6457 = vadd.f32 %v6394, %v6456
        %v6458 = vpop.f32.mrb[0].mxu0
        %v6459 = vadd.f32 %v6396, %v6458
        %6460 = vmatprep.mubr.bf16.mxu0 0
        %6461 = vmatmul.mubr.bf16.gmra.mrb[0].mxu0 %v3677
        %v6462 = vpop.f32.mrb[0].mxu0
        %v6463 = vadd.f32 %v6400, %v6462
        %v6464 = vpop.f32.mrb[0].mxu0
        %v6465 = vadd.f32 %v6402, %v6464
        %v6466 = vpop.f32.mrb[0].mxu0
        %v6467 = vadd.f32 %v6404, %v6466
        %v6468 = vpop.f32.mrb[0].mxu0
        %v6469 = vadd.f32 %v6406, %v6468
        %6470 = vmatprep.mubr.bf16.mxu0 0
        %6471 = vmatmul.mubr.bf16.gmra.mrb[0].mxu0 %v3680
        %v6472 = vpop.f32.mrb[0].mxu0
        %v6473 = vadd.f32 %v6410, %v6472
        %v6474 = vpop.f32.mrb[0].mxu0
        %v6475 = vadd.f32 %v6412, %v6474
        %v6476 = vpop.f32.mrb[0].mxu0
        %v6477 = vadd.f32 %v6414, %v6476
        %v6478 = vpop.f32.mrb[0].mxu0
        %v6479 = vadd.f32 %v6416, %v6478
        %6480 = vdwg.mxu0
        %v6481 = vmax.f32 %v5628, %v6453
        %v6482 = vmax.f32 %v5629, %v6455
        %v6483 = vmax.f32 %v5630, %v6457
        %v6484 = vmax.f32 %v5631, %v6459
        %v6485 = vmax.f32 %v5632, %v6463
        %v6486 = vmax.f32 %v5633, %v6465
        %v6487 = vmax.f32 %v5634, %v6467
        %v6488 = vmax.f32 %v5635, %v6469
        %v6489 = vmax.f32 %v5636, %v6473
        %v6490 = vmax.f32 %v5637, %v6475
        %v6491 = vmax.f32 %v5638, %v6477
        %v6492 = vmax.f32 %v5639, %v6479
        %v6493 = vpack.c.bf16 %v6483, %v6481
        %v6494 = vpack.c.bf16 %v6484, %v6482
        %v6495 = vpack.c.bf16 %v6487, %v6485
        %v6496 = vpack.c.bf16 %v6488, %v6486
        %v6497 = vpack.c.bf16 %v6491, %v6489
        %v6498 = vpack.c.bf16 %v6492, %v6490
        %v6499 = vld [vmem:[%s4] sm:$0xff]
        %v6500 = vld [vmem:[%s4 + $0x8] sm:$0xff]
        %v6501 = vld [vmem:[%s4 + $0x10] sm:$0xff]
        %v6502 = vld [vmem:[%s4 + $0x18] sm:$0xff]
        %v6503 = vld [vmem:[%s4 + $0x20] sm:$0xff]
        %v6504 = vld [vmem:[%s4 + $0x28] sm:$0xff]
        %v6505 = vld [vmem:[%s4 + $0x30] sm:$0xff]
        %v6506 = vld [vmem:[%s4 + $0x38] sm:$0xff]
        %v6507 = vld [vmem:[%s4 + $0x40] sm:$0xff]
        %v6508 = vld [vmem:[%s4 + $0x48] sm:$0xff]
        %v6509 = vld [vmem:[%s4 + $0x50] sm:$0xff]
        %v6510 = vld [vmem:[%s4 + $0x58] sm:$0xff]
        %v6511 = vld [vmem:[%s4 + $0x60] sm:$0xf]
        %v6512 = vld [vmem:[%s4 + $0x64] sm:$0xff]
        %v6513 = vld [vmem:[%s4 + $0x6c] sm:$0xff]
        %v6514 = vld [vmem:[%s4 + $0x74] sm:$0xff]
        %v6515 = vld [vmem:[%s4 + $0x7c] sm:$0xff]
        %v6516 = vld [vmem:[%s4 + $0x84] sm:$0xff]
        %v6517 = vld [vmem:[%s4 + $0x8c] sm:$0xff]
        %v6518 = vld [vmem:[%s4 + $0x94] sm:$0xff]
        %v6519 = vld [vmem:[%s4 + $0x9c] sm:$0xff]
        %v6520 = vld [vmem:[%s4 + $0xa4] sm:$0xff]
        %v6521 = vld [vmem:[%s4 + $0xac] sm:$0xff]
        %v6522 = vld [vmem:[%s4 + $0xb4] sm:$0xff]
        %v6523 = vld [vmem:[%s4 + $0xbc] sm:$0xff]
        %v6524 = vld [vmem:[%s4 + $0xc4] sm:$0xf]
        %v6525 = vld [vmem:[%s4 + $0xc8] sm:$0xff]
        %v6526 = vld [vmem:[%s4 + $0xd0] sm:$0xff]
        %v6527 = vld [vmem:[%s4 + $0xd8] sm:$0xff]
        %v6528 = vld [vmem:[%s4 + $0xe0] sm:$0xff]
        %v6529 = vld [vmem:[%s4 + $0xe8] sm:$0xff]
        %v6530 = vld [vmem:[%s4 + $0xf0] sm:$0xff]
        %v6531 = vld [vmem:[%s4 + $0xf8] sm:$0xff]
        %v6532 = vld [vmem:[%s4 + $0x100] sm:$0xff]
        %v6533 = vld [vmem:[%s4 + $0x108] sm:$0xff]
        %v6534 = vld [vmem:[%s4 + $0x110] sm:$0xff]
        %v6535 = vld [vmem:[%s4 + $0x118] sm:$0xff]
        %v6536 = vld [vmem:[%s4 + $0x120] sm:$0xff]
        %v6537 = vld [vmem:[%s4 + $0x128] sm:$0xf]
        %v6538 = vld [vmem:[%s4 + $0x12c] sm:$0xff]
        %v6539 = vld [vmem:[%s4 + $0x134] sm:$0xff]
        %v6540 = vld [vmem:[%s4 + $0x13c] sm:$0xff]
        %v6541 = vld [vmem:[%s4 + $0x144] sm:$0xff]
        %v6542 = vld [vmem:[%s4 + $0x14c] sm:$0xff]
        %v6543 = vld [vmem:[%s4 + $0x154] sm:$0xff]
        %v6544 = vld [vmem:[%s4 + $0x15c] sm:$0xff]
        %v6545 = vld [vmem:[%s4 + $0x164] sm:$0xff]
        %v6546 = vld [vmem:[%s4 + $0x16c] sm:$0xff]
        %v6547 = vld [vmem:[%s4 + $0x174] sm:$0xff]
        %v6548 = vld [vmem:[%s4 + $0x17c] sm:$0xff]
        %v6549 = vld [vmem:[%s4 + $0x184] sm:$0xff]
        %v6550 = vld [vmem:[%s4 + $0x18c] sm:$0xf]
        %v6551 = vld [vmem:[%s4 + $0x190] sm:$0xff]
        %v6552 = vld [vmem:[%s4 + $0x198] sm:$0xff]
        %v6553 = vld [vmem:[%s4 + $0x1a0] sm:$0xff]
        %v6554 = vld [vmem:[%s4 + $0x1a8] sm:$0xff]
        %v6555 = vld [vmem:[%s4 + $0x1b0] sm:$0xff]
        %v6556 = vld [vmem:[%s4 + $0x1b8] sm:$0xff]
        %v6557 = vld [vmem:[%s4 + $0x1c0] sm:$0xff]
        %v6558 = vld [vmem:[%s4 + $0x1c8] sm:$0xff]
        %v6559 = vld [vmem:[%s4 + $0x1d0] sm:$0xff]
        %v6560 = vld [vmem:[%s4 + $0x1d8] sm:$0xff]
        %v6561 = vld [vmem:[%s4 + $0x1e0] sm:$0xff]
        %v6562 = vld [vmem:[%s4 + $0x1e8] sm:$0xff]
        %v6563 = vld [vmem:[%s4 + $0x1f0] sm:$0xf]
        %v6564 = vld [vmem:[%s4 + $0x1f4] sm:$0xff]
        %v6565 = vld [vmem:[%s4 + $0x1fc] sm:$0xff]
        %v6566 = vld [vmem:[%s4 + $0x204] sm:$0xff]
        %v6567 = vld [vmem:[%s4 + $0x20c] sm:$0xff]
        %v6568 = vld [vmem:[%s4 + $0x214] sm:$0xff]
        %v6569 = vld [vmem:[%s4 + $0x21c] sm:$0xff]
        %v6570 = vld [vmem:[%s4 + $0x224] sm:$0xff]
        %v6571 = vld [vmem:[%s4 + $0x22c] sm:$0xff]
        %v6572 = vld [vmem:[%s4 + $0x234] sm:$0xff]
        %v6573 = vld [vmem:[%s4 + $0x23c] sm:$0xff]
        %v6574 = vld [vmem:[%s4 + $0x244] sm:$0xff]
        %v6575 = vld [vmem:[%s4 + $0x24c] sm:$0xff]
        %v6576 = vld [vmem:[%s4 + $0x254] sm:$0xf]
        %v6577 = vld [vmem:[%s4 + $0x258] sm:$0xff]
        %v6578 = vld [vmem:[%s4 + $0x260] sm:$0xff]
        %v6579 = vld [vmem:[%s4 + $0x268] sm:$0xff]
        %v6580 = vld [vmem:[%s4 + $0x270] sm:$0xff]
        %v6581 = vld [vmem:[%s4 + $0x278] sm:$0xff]
        %v6582 = vld [vmem:[%s4 + $0x280] sm:$0xff]
        %v6583 = vld [vmem:[%s4 + $0x288] sm:$0xff]
        %v6584 = vld [vmem:[%s4 + $0x290] sm:$0xff]
        %v6585 = vld [vmem:[%s4 + $0x298] sm:$0xff]
        %v6586 = vld [vmem:[%s4 + $0x2a0] sm:$0xff]
        %v6587 = vld [vmem:[%s4 + $0x2a8] sm:$0xff]
        %v6588 = vld [vmem:[%s4 + $0x2b0] sm:$0xff]
        %v6589 = vld [vmem:[%s4 + $0x2b8] sm:$0xf]
        %v6590 = vld [vmem:[%s4 + $0x2bc] sm:$0xff]
        %v6591 = vld [vmem:[%s4 + $0x2c4] sm:$0xff]
        %v6592 = vld [vmem:[%s4 + $0x2cc] sm:$0xff]
        %v6593 = vld [vmem:[%s4 + $0x2d4] sm:$0xff]
        %v6594 = vld [vmem:[%s4 + $0x2dc] sm:$0xff]
        %v6595 = vld [vmem:[%s4 + $0x2e4] sm:$0xff]
        %v6596 = vld [vmem:[%s4 + $0x2ec] sm:$0xff]
        %v6597 = vld [vmem:[%s4 + $0x2f4] sm:$0xff]
        %v6598 = vld [vmem:[%s4 + $0x2fc] sm:$0xff]
        %v6599 = vld [vmem:[%s4 + $0x304] sm:$0xff]
        %v6600 = vld [vmem:[%s4 + $0x30c] sm:$0xff]
        %v6601 = vld [vmem:[%s4 + $0x314] sm:$0xff]
        %v6602 = vld [vmem:[%s4 + $0x31c] sm:$0xf]
        %v6603 = vld [vmem:[%s4 + $0x320] sm:$0xff]
        %v6604 = vld [vmem:[%s4 + $0x328] sm:$0xff]
        %v6605 = vld [vmem:[%s4 + $0x330] sm:$0xff]
        %v6606 = vld [vmem:[%s4 + $0x338] sm:$0xff]
        %v6607 = vld [vmem:[%s4 + $0x340] sm:$0xff]
        %v6608 = vld [vmem:[%s4 + $0x348] sm:$0xff]
        %v6609 = vld [vmem:[%s4 + $0x350] sm:$0xff]
        %v6610 = vld [vmem:[%s4 + $0x358] sm:$0xff]
        %v6611 = vld [vmem:[%s4 + $0x360] sm:$0xff]
        %v6612 = vld [vmem:[%s4 + $0x368] sm:$0xff]
        %v6613 = vld [vmem:[%s4 + $0x370] sm:$0xff]
        %v6614 = vld [vmem:[%s4 + $0x378] sm:$0xff]
        %v6615 = vld [vmem:[%s4 + $0x380] sm:$0xf]
        %v6616 = vld [vmem:[%s4 + $0x384] sm:$0xff]
        %v6617 = vld [vmem:[%s4 + $0x38c] sm:$0xff]
        %v6618 = vld [vmem:[%s4 + $0x394] sm:$0xff]
        %v6619 = vld [vmem:[%s4 + $0x39c] sm:$0xff]
        %v6620 = vld [vmem:[%s4 + $0x3a4] sm:$0xff]
        %v6621 = vld [vmem:[%s4 + $0x3ac] sm:$0xff]
        %v6622 = vld [vmem:[%s4 + $0x3b4] sm:$0xff]
        %v6623 = vld [vmem:[%s4 + $0x3bc] sm:$0xff]
        %v6624 = vld [vmem:[%s4 + $0x3c4] sm:$0xff]
        %v6625 = vld [vmem:[%s4 + $0x3cc] sm:$0xff]
        %v6626 = vld [vmem:[%s4 + $0x3d4] sm:$0xff]
        %v6627 = vld [vmem:[%s4 + $0x3dc] sm:$0xff]
        %v6628 = vld [vmem:[%s4 + $0x3e4] sm:$0xf]
        %v6629 = vld [vmem:[%s4 + $0x3e8] sm:$0xff]
        %v6630 = vld [vmem:[%s4 + $0x3f0] sm:$0xff]
        %v6631 = vld [vmem:[%s4 + $0x3f8] sm:$0xff]
        %v6632 = vld [vmem:[%s4 + $0x400] sm:$0xff]
        %v6633 = vld [vmem:[%s4 + $0x408] sm:$0xff]
        %v6634 = vld [vmem:[%s4 + $0x410] sm:$0xff]
        %v6635 = vld [vmem:[%s4 + $0x418] sm:$0xff]
        %v6636 = vld [vmem:[%s4 + $0x420] sm:$0xff]
        %v6637 = vld [vmem:[%s4 + $0x428] sm:$0xff]
        %v6638 = vld [vmem:[%s4 + $0x430] sm:$0xff]
        %v6639 = vld [vmem:[%s4 + $0x438] sm:$0xff]
        %v6640 = vld [vmem:[%s4 + $0x440] sm:$0xff]
        %v6641 = vld [vmem:[%s4 + $0x448] sm:$0xf]
        %v6642 = vld [vmem:[%s4 + $0x44c] sm:$0xff]
        %v6643 = vld [vmem:[%s4 + $0x454] sm:$0xff]
        %v6644 = vld [vmem:[%s4 + $0x45c] sm:$0xff]
        %v6645 = vld [vmem:[%s4 + $0x464] sm:$0xff]
        %v6646 = vld [vmem:[%s4 + $0x46c] sm:$0xff]
        %v6647 = vld [vmem:[%s4 + $0x474] sm:$0xff]
        %v6648 = vld [vmem:[%s4 + $0x47c] sm:$0xff]
        %v6649 = vld [vmem:[%s4 + $0x484] sm:$0xff]
        %v6650 = vld [vmem:[%s4 + $0x48c] sm:$0xff]
        %v6651 = vld [vmem:[%s4 + $0x494] sm:$0xff]
        %v6652 = vld [vmem:[%s4 + $0x49c] sm:$0xff]
        %v6653 = vld [vmem:[%s4 + $0x4a4] sm:$0xff]
        %v6654 = vld [vmem:[%s4 + $0x4ac] sm:$0xf]
        %v6655 = vld [vmem:[%s4 + $0x4b0] sm:$0xff]
        %v6656 = vld [vmem:[%s4 + $0x4b8] sm:$0xff]
        %v6657 = vld [vmem:[%s4 + $0x4c0] sm:$0xff]
        %v6658 = vld [vmem:[%s4 + $0x4c8] sm:$0xff]
        %v6659 = vld [vmem:[%s4 + $0x4d0] sm:$0xff]
        %v6660 = vld [vmem:[%s4 + $0x4d8] sm:$0xff]
        %v6661 = vld [vmem:[%s4 + $0x4e0] sm:$0xff]
        %v6662 = vld [vmem:[%s4 + $0x4e8] sm:$0xff]
        %v6663 = vld [vmem:[%s4 + $0x4f0] sm:$0xff]
        %v6664 = vld [vmem:[%s4 + $0x4f8] sm:$0xff]
        %v6665 = vld [vmem:[%s4 + $0x500] sm:$0xff]
        %v6666 = vld [vmem:[%s4 + $0x508] sm:$0xff]
        %v6667 = vld [vmem:[%s4 + $0x510] sm:$0xf]
        %v6668 = vld [vmem:[%s4 + $0x514] sm:$0xff]
        %v6669 = vld [vmem:[%s4 + $0x51c] sm:$0xff]
        %v6670 = vld [vmem:[%s4 + $0x524] sm:$0xff]
        %v6671 = vld [vmem:[%s4 + $0x52c] sm:$0xff]
        %v6672 = vld [vmem:[%s4 + $0x534] sm:$0xff]
        %v6673 = vld [vmem:[%s4 + $0x53c] sm:$0xff]
        %v6674 = vld [vmem:[%s4 + $0x544] sm:$0xff]
        %v6675 = vld [vmem:[%s4 + $0x54c] sm:$0xff]
        %v6676 = vld [vmem:[%s4 + $0x554] sm:$0xff]
        %v6677 = vld [vmem:[%s4 + $0x55c] sm:$0xff]
        %v6678 = vld [vmem:[%s4 + $0x564] sm:$0xff]
        %v6679 = vld [vmem:[%s4 + $0x56c] sm:$0xff]
        %v6680 = vld [vmem:[%s4 + $0x574] sm:$0xf]
        %v6681 = vld [vmem:[%s4 + $0x578] sm:$0xff]
        %v6682 = vld [vmem:[%s4 + $0x580] sm:$0xff]
        %v6683 = vld [vmem:[%s4 + $0x588] sm:$0xff]
        %v6684 = vld [vmem:[%s4 + $0x590] sm:$0xff]
        %v6685 = vld [vmem:[%s4 + $0x598] sm:$0xff]
        %v6686 = vld [vmem:[%s4 + $0x5a0] sm:$0xff]
        %v6687 = vld [vmem:[%s4 + $0x5a8] sm:$0xff]
        %v6688 = vld [vmem:[%s4 + $0x5b0] sm:$0xff]
        %v6689 = vld [vmem:[%s4 + $0x5b8] sm:$0xff]
        %v6690 = vld [vmem:[%s4 + $0x5c0] sm:$0xff]
        %v6691 = vld [vmem:[%s4 + $0x5c8] sm:$0xff]
        %v6692 = vld [vmem:[%s4 + $0x5d0] sm:$0xff]
        %v6693 = vld [vmem:[%s4 + $0x5d8] sm:$0xf]
        %v6694 = vld [vmem:[%s4 + $0x5dc] sm:$0xff]
        %v6695 = vld [vmem:[%s4 + $0x5e4] sm:$0xff]
        %v6696 = vld [vmem:[%s4 + $0x5ec] sm:$0xff]
        %v6697 = vld [vmem:[%s4 + $0x5f4] sm:$0xff]
        %v6698 = vld [vmem:[%s4 + $0x5fc] sm:$0xff]
        %v6699 = vld [vmem:[%s4 + $0x604] sm:$0xff]
        %v6700 = vld [vmem:[%s4 + $0x60c] sm:$0xff]
        %v6701 = vld [vmem:[%s4 + $0x614] sm:$0xff]
        %v6702 = vld [vmem:[%s4 + $0x61c] sm:$0xff]
        %v6703 = vld [vmem:[%s4 + $0x624] sm:$0xff]
        %v6704 = vld [vmem:[%s4 + $0x62c] sm:$0xff]
        %v6705 = vld [vmem:[%s4 + $0x634] sm:$0xff]
        %v6706 = vld [vmem:[%s4 + $0x63c] sm:$0xf]
        %v6707 = vld [vmem:[%s4 + $0x640] sm:$0xff]
        %v6708 = vld [vmem:[%s4 + $0x648] sm:$0xff]
        %v6709 = vld [vmem:[%s4 + $0x650] sm:$0xff]
        %v6710 = vld [vmem:[%s4 + $0x658] sm:$0xff]
        %v6711 = vld [vmem:[%s4 + $0x660] sm:$0xff]
        %v6712 = vld [vmem:[%s4 + $0x668] sm:$0xff]
        %v6713 = vld [vmem:[%s4 + $0x670] sm:$0xff]
        %v6714 = vld [vmem:[%s4 + $0x678] sm:$0xff]
        %v6715 = vld [vmem:[%s4 + $0x680] sm:$0xff]
        %v6716 = vld [vmem:[%s4 + $0x688] sm:$0xff]
        %v6717 = vld [vmem:[%s4 + $0x690] sm:$0xff]
        %v6718 = vld [vmem:[%s4 + $0x698] sm:$0xff]
        %v6719 = vld [vmem:[%s4 + $0x6a0] sm:$0xf]
        %v6720 = vld [vmem:[%s4 + $0x6a4] sm:$0xff]
        %v6721 = vld [vmem:[%s4 + $0x6ac] sm:$0xff]
        %v6722 = vld [vmem:[%s4 + $0x6b4] sm:$0xff]
        %v6723 = vld [vmem:[%s4 + $0x6bc] sm:$0xff]
        %v6724 = vld [vmem:[%s4 + $0x6c4] sm:$0xff]
        %v6725 = vld [vmem:[%s4 + $0x6cc] sm:$0xff]
        %v6726 = vld [vmem:[%s4 + $0x6d4] sm:$0xff]
        %v6727 = vld [vmem:[%s4 + $0x6dc] sm:$0xff]
        %v6728 = vld [vmem:[%s4 + $0x6e4] sm:$0xff]
        %v6729 = vld [vmem:[%s4 + $0x6ec] sm:$0xff]
        %v6730 = vld [vmem:[%s4 + $0x6f4] sm:$0xff]
        %v6731 = vld [vmem:[%s4 + $0x6fc] sm:$0xff]
        %v6732 = vld [vmem:[%s4 + $0x704] sm:$0xf]
        %v6733 = vld [vmem:[%s4 + $0x708] sm:$0xff]
        %v6734 = vld [vmem:[%s4 + $0x710] sm:$0xff]
        %v6735 = vld [vmem:[%s4 + $0x718] sm:$0xff]
        %v6736 = vld [vmem:[%s4 + $0x720] sm:$0xff]
        %v6737 = vld [vmem:[%s4 + $0x728] sm:$0xff]
        %v6738 = vld [vmem:[%s4 + $0x730] sm:$0xff]
        %v6739 = vld [vmem:[%s4 + $0x738] sm:$0xff]
        %v6740 = vld [vmem:[%s4 + $0x740] sm:$0xff]
        %v6741 = vld [vmem:[%s4 + $0x748] sm:$0xff]
        %v6742 = vld [vmem:[%s4 + $0x750] sm:$0xff]
        %v6743 = vld [vmem:[%s4 + $0x758] sm:$0xff]
        %v6744 = vld [vmem:[%s4 + $0x760] sm:$0xff]
        %v6745 = vld [vmem:[%s4 + $0x768] sm:$0xf]
        %v6746 = vld [vmem:[%s4 + $0x76c] sm:$0xff]
        %v6747 = vld [vmem:[%s4 + $0x774] sm:$0xff]
        %v6748 = vld [vmem:[%s4 + $0x77c] sm:$0xff]
        %v6749 = vld [vmem:[%s4 + $0x784] sm:$0xff]
        %v6750 = vld [vmem:[%s4 + $0x78c] sm:$0xff]
        %v6751 = vld [vmem:[%s4 + $0x794] sm:$0xff]
        %v6752 = vld [vmem:[%s4 + $0x79c] sm:$0xff]
        %v6753 = vld [vmem:[%s4 + $0x7a4] sm:$0xff]
        %v6754 = vld [vmem:[%s4 + $0x7ac] sm:$0xff]
        %v6755 = vld [vmem:[%s4 + $0x7b4] sm:$0xff]
        %v6756 = vld [vmem:[%s4 + $0x7bc] sm:$0xff]
        %v6757 = vld [vmem:[%s4 + $0x7c4] sm:$0xff]
        %v6758 = vld [vmem:[%s4 + $0x7cc] sm:$0xf]
        %v6759 = vld [vmem:[%s4 + $0x7d0] sm:$0xff]
        %v6760 = vld [vmem:[%s4 + $0x7d8] sm:$0xff]
        %v6761 = vld [vmem:[%s4 + $0x7e0] sm:$0xff]
        %v6762 = vld [vmem:[%s4 + $0x7e8] sm:$0xff]
        %v6763 = vld [vmem:[%s4 + $0x7f0] sm:$0xff]
        %v6764 = vld [vmem:[%s4 + $0x7f8] sm:$0xff]
        %v6765 = vld [vmem:[%s4 + $0x800] sm:$0xff]
        %v6766 = vld [vmem:[%s4 + $0x808] sm:$0xff]
        %v6767 = vld [vmem:[%s4 + $0x810] sm:$0xff]
        %v6768 = vld [vmem:[%s4 + $0x818] sm:$0xff]
        %v6769 = vld [vmem:[%s4 + $0x820] sm:$0xff]
        %v6770 = vld [vmem:[%s4 + $0x828] sm:$0xff]
        %v6771 = vld [vmem:[%s4 + $0x830] sm:$0xf]
        %v6772 = vld [vmem:[%s4 + $0x834] sm:$0xff]
        %v6773 = vld [vmem:[%s4 + $0x83c] sm:$0xff]
        %v6774 = vld [vmem:[%s4 + $0x844] sm:$0xff]
        %v6775 = vld [vmem:[%s4 + $0x84c] sm:$0xff]
        %v6776 = vld [vmem:[%s4 + $0x854] sm:$0xff]
        %v6777 = vld [vmem:[%s4 + $0x85c] sm:$0xff]
        %v6778 = vld [vmem:[%s4 + $0x864] sm:$0xff]
        %v6779 = vld [vmem:[%s4 + $0x86c] sm:$0xff]
        %v6780 = vld [vmem:[%s4 + $0x874] sm:$0xff]
        %v6781 = vld [vmem:[%s4 + $0x87c] sm:$0xff]
        %v6782 = vld [vmem:[%s4 + $0x884] sm:$0xff]
        %v6783 = vld [vmem:[%s4 + $0x88c] sm:$0xff]
        %v6784 = vld [vmem:[%s4 + $0x894] sm:$0xf]
        %v6785 = vld [vmem:[%s4 + $0x898] sm:$0xff]
        %v6786 = vld [vmem:[%s4 + $0x8a0] sm:$0xff]
        %v6787 = vld [vmem:[%s4 + $0x8a8] sm:$0xff]
        %v6788 = vld [vmem:[%s4 + $0x8b0] sm:$0xff]
        %v6789 = vld [vmem:[%s4 + $0x8b8] sm:$0xff]
        %v6790 = vld [vmem:[%s4 + $0x8c0] sm:$0xff]
        %v6791 = vld [vmem:[%s4 + $0x8c8] sm:$0xff]
        %v6792 = vld [vmem:[%s4 + $0x8d0] sm:$0xff]
        %v6793 = vld [vmem:[%s4 + $0x8d8] sm:$0xff]
        %v6794 = vld [vmem:[%s4 + $0x8e0] sm:$0xff]
        %v6795 = vld [vmem:[%s4 + $0x8e8] sm:$0xff]
        %v6796 = vld [vmem:[%s4 + $0x8f0] sm:$0xff]
        %v6797 = vld [vmem:[%s4 + $0x8f8] sm:$0xf]
        %v6798 = vld [vmem:[%s4 + $0x8fc] sm:$0xff]
        %v6799 = vld [vmem:[%s4 + $0x904] sm:$0xff]
        %v6800 = vld [vmem:[%s4 + $0x90c] sm:$0xff]
        %v6801 = vld [vmem:[%s4 + $0x914] sm:$0xff]
        %v6802 = vld [vmem:[%s4 + $0x91c] sm:$0xff]
        %v6803 = vld [vmem:[%s4 + $0x924] sm:$0xff]
        %v6804 = vld [vmem:[%s4 + $0x92c] sm:$0xff]
        %v6805 = vld [vmem:[%s4 + $0x934] sm:$0xff]
        %v6806 = vld [vmem:[%s4 + $0x93c] sm:$0xff]
        %v6807 = vld [vmem:[%s4 + $0x944] sm:$0xff]
        %v6808 = vld [vmem:[%s4 + $0x94c] sm:$0xff]
        %v6809 = vld [vmem:[%s4 + $0x954] sm:$0xff]
        %v6810 = vld [vmem:[%s4 + $0x95c] sm:$0xf]
        %v6811 = vld [vmem:[%s4 + $0x960] sm:$0x33]
        %v6812 = vld [vmem:[%s4 + $0x968] sm:$0x33]
        %v6813 = vld [vmem:[%s4 + $0x970] sm:$0x33]
        %v6814 = vld [vmem:[%s4 + $0x978] sm:$0x33]
        %v6815 = vld [vmem:[%s4 + $0x980] sm:$0x33]
        %v6816 = vld [vmem:[%s4 + $0x988] sm:$0x33]
        %v6817 = vld [vmem:[%s4 + $0x990] sm:$0x33]
        %v6818 = vld [vmem:[%s4 + $0x998] sm:$0x33]
        %v6819 = vld [vmem:[%s4 + $0x9a0] sm:$0x33]
        %v6820 = vld [vmem:[%s4 + $0x9a8] sm:$0x33]
        %v6821 = vld [vmem:[%s4 + $0x9b0] sm:$0x33]
        %v6822 = vld [vmem:[%s4 + $0x9b8] sm:$0x33]
        %v6823 = vld [vmem:[%s4 + $0x9c0] sm:$0x3]
        %v7149 = vunpack.c.l.b16 %v6499
        %v7150 = vunpack.c.h.b16 %v6499
        %v7151 = vunpack.c.l.b16 %v6500
        %v7152 = vunpack.c.h.b16 %v6500
        %v7153 = vunpack.c.l.b16 %v6501
        %v7154 = vunpack.c.h.b16 %v6501
        %v7155 = vunpack.c.l.b16 %v6502
        %v7156 = vunpack.c.h.b16 %v6502
        %v7157 = vunpack.c.l.b16 %v6503
        %v7158 = vunpack.c.h.b16 %v6503
        %v7159 = vunpack.c.l.b16 %v6504
        %v7160 = vunpack.c.h.b16 %v6504
        %v7161 = vunpack.c.l.b16 %v6505
        %v7162 = vunpack.c.h.b16 %v6505
        %v7163 = vunpack.c.l.b16 %v6506
        %v7164 = vunpack.c.h.b16 %v6506
        %v7165 = vunpack.c.l.b16 %v6507
        %v7166 = vunpack.c.h.b16 %v6507
        %v7167 = vunpack.c.l.b16 %v6508
        %v7168 = vunpack.c.h.b16 %v6508
        %v7169 = vunpack.c.l.b16 %v6509
        %v7170 = vunpack.c.h.b16 %v6509
        %v7171 = vunpack.c.l.b16 %v6510
        %v7172 = vunpack.c.h.b16 %v6510
        %v7173 = vunpack.c.l.b16 %v6511
        %v7174 = vunpack.c.l.b16 %v6512
        %v7175 = vunpack.c.h.b16 %v6512
        %v7176 = vunpack.c.l.b16 %v6513
        %v7177 = vunpack.c.h.b16 %v6513
        %v7178 = vunpack.c.l.b16 %v6514
        %v7179 = vunpack.c.h.b16 %v6514
        %v7180 = vunpack.c.l.b16 %v6515
        %v7181 = vunpack.c.h.b16 %v6515
        %v7182 = vunpack.c.l.b16 %v6516
        %v7183 = vunpack.c.h.b16 %v6516
        %v7184 = vunpack.c.l.b16 %v6517
        %v7185 = vunpack.c.h.b16 %v6517
        %v7186 = vunpack.c.l.b16 %v6518
        %v7187 = vunpack.c.h.b16 %v6518
        %v7188 = vunpack.c.l.b16 %v6519
        %v7189 = vunpack.c.h.b16 %v6519
        %v7190 = vunpack.c.l.b16 %v6520
        %v7191 = vunpack.c.h.b16 %v6520
        %v7192 = vunpack.c.l.b16 %v6521
        %v7193 = vunpack.c.h.b16 %v6521
        %v7194 = vunpack.c.l.b16 %v6522
        %v7195 = vunpack.c.h.b16 %v6522
        %v7196 = vunpack.c.l.b16 %v6523
        %v7197 = vunpack.c.h.b16 %v6523
        %v7198 = vunpack.c.l.b16 %v6524
        %v7199 = vunpack.c.l.b16 %v6525
        %v7200 = vunpack.c.h.b16 %v6525
        %v7201 = vunpack.c.l.b16 %v6526
        %v7202 = vunpack.c.h.b16 %v6526
        %v7203 = vunpack.c.l.b16 %v6527
        %v7204 = vunpack.c.h.b16 %v6527
        %v7205 = vunpack.c.l.b16 %v6528
        %v7206 = vunpack.c.h.b16 %v6528
        %v7207 = vunpack.c.l.b16 %v6529
        %v7208 = vunpack.c.h.b16 %v6529
        %v7209 = vunpack.c.l.b16 %v6530
        %v7210 = vunpack.c.h.b16 %v6530
        %v7211 = vunpack.c.l.b16 %v6531
        %v7212 = vunpack.c.h.b16 %v6531
        %v7213 = vunpack.c.l.b16 %v6532
        %v7214 = vunpack.c.h.b16 %v6532
        %v7215 = vunpack.c.l.b16 %v6533
        %v7216 = vunpack.c.h.b16 %v6533
        %v7217 = vunpack.c.l.b16 %v6534
        %v7218 = vunpack.c.h.b16 %v6534
        %v7219 = vunpack.c.l.b16 %v6535
        %v7220 = vunpack.c.h.b16 %v6535
        %v7221 = vunpack.c.l.b16 %v6536
        %v7222 = vunpack.c.h.b16 %v6536
        %v7223 = vunpack.c.l.b16 %v6537
        %v7224 = vunpack.c.l.b16 %v6538
        %v7225 = vunpack.c.h.b16 %v6538
        %v7226 = vunpack.c.l.b16 %v6539
        %v7227 = vunpack.c.h.b16 %v6539
        %v7228 = vunpack.c.l.b16 %v6540
        %v7229 = vunpack.c.h.b16 %v6540
        %v7230 = vunpack.c.l.b16 %v6541
        %v7231 = vunpack.c.h.b16 %v6541
        %v7232 = vunpack.c.l.b16 %v6542
        %v7233 = vunpack.c.h.b16 %v6542
        %v7234 = vunpack.c.l.b16 %v6543
        %v7235 = vunpack.c.h.b16 %v6543
        %v7236 = vunpack.c.l.b16 %v6544
        %v7237 = vunpack.c.h.b16 %v6544
        %v7238 = vunpack.c.l.b16 %v6545
        %v7239 = vunpack.c.h.b16 %v6545
        %v7240 = vunpack.c.l.b16 %v6546
        %v7241 = vunpack.c.h.b16 %v6546
        %v7242 = vunpack.c.l.b16 %v6547
        %v7243 = vunpack.c.h.b16 %v6547
        %v7244 = vunpack.c.l.b16 %v6548
        %v7245 = vunpack.c.h.b16 %v6548
        %v7246 = vunpack.c.l.b16 %v6549
        %v7247 = vunpack.c.h.b16 %v6549
        %v7248 = vunpack.c.l.b16 %v6550
        %v7249 = vunpack.c.l.b16 %v6551
        %v7250 = vunpack.c.h.b16 %v6551
        %v7251 = vunpack.c.l.b16 %v6552
        %v7252 = vunpack.c.h.b16 %v6552
        %v7253 = vunpack.c.l.b16 %v6553
        %v7254 = vunpack.c.h.b16 %v6553
        %v7255 = vunpack.c.l.b16 %v6554
        %v7256 = vunpack.c.h.b16 %v6554
        %v7257 = vunpack.c.l.b16 %v6555
        %v7258 = vunpack.c.h.b16 %v6555
        %v7259 = vunpack.c.l.b16 %v6556
        %v7260 = vunpack.c.h.b16 %v6556
        %v7261 = vunpack.c.l.b16 %v6557
        %v7262 = vunpack.c.h.b16 %v6557
        %v7263 = vunpack.c.l.b16 %v6558
        %v7264 = vunpack.c.h.b16 %v6558
        %v7265 = vunpack.c.l.b16 %v6559
        %v7266 = vunpack.c.h.b16 %v6559
        %v7267 = vunpack.c.l.b16 %v6560
        %v7268 = vunpack.c.h.b16 %v6560
        %v7269 = vunpack.c.l.b16 %v6561
        %v7270 = vunpack.c.h.b16 %v6561
        %v7271 = vunpack.c.l.b16 %v6562
        %v7272 = vunpack.c.h.b16 %v6562
        %v7273 = vunpack.c.l.b16 %v6563
        %v7274 = vunpack.c.l.b16 %v6564
        %v7275 = vunpack.c.h.b16 %v6564
        %v7276 = vunpack.c.l.b16 %v6565
        %v7277 = vunpack.c.h.b16 %v6565
        %v7278 = vunpack.c.l.b16 %v6566
        %v7279 = vunpack.c.h.b16 %v6566
        %v7280 = vunpack.c.l.b16 %v6567
        %v7281 = vunpack.c.h.b16 %v6567
        %v7282 = vunpack.c.l.b16 %v6568
        %v7283 = vunpack.c.h.b16 %v6568
        %v7284 = vunpack.c.l.b16 %v6569
        %v7285 = vunpack.c.h.b16 %v6569
        %v7286 = vunpack.c.l.b16 %v6570
        %v7287 = vunpack.c.h.b16 %v6570
        %v7288 = vunpack.c.l.b16 %v6571
        %v7289 = vunpack.c.h.b16 %v6571
        %v7290 = vunpack.c.l.b16 %v6572
        %v7291 = vunpack.c.h.b16 %v6572
        %v7292 = vunpack.c.l.b16 %v6573
        %v7293 = vunpack.c.h.b16 %v6573
        %v7294 = vunpack.c.l.b16 %v6574
        %v7295 = vunpack.c.h.b16 %v6574
        %v7296 = vunpack.c.l.b16 %v6575
        %v7297 = vunpack.c.h.b16 %v6575
        %v7298 = vunpack.c.l.b16 %v6576
        %v7299 = vunpack.c.l.b16 %v6577
        %v7300 = vunpack.c.h.b16 %v6577
        %v7301 = vunpack.c.l.b16 %v6578
        %v7302 = vunpack.c.h.b16 %v6578
        %v7303 = vunpack.c.l.b16 %v6579
        %v7304 = vunpack.c.h.b16 %v6579
        %v7305 = vunpack.c.l.b16 %v6580
        %v7306 = vunpack.c.h.b16 %v6580
        %v7307 = vunpack.c.l.b16 %v6581
        %v7308 = vunpack.c.h.b16 %v6581
        %v7309 = vunpack.c.l.b16 %v6582
        %v7310 = vunpack.c.h.b16 %v6582
        %v7311 = vunpack.c.l.b16 %v6583
        %v7312 = vunpack.c.h.b16 %v6583
        %v7313 = vunpack.c.l.b16 %v6584
        %v7314 = vunpack.c.h.b16 %v6584
        %v7315 = vunpack.c.l.b16 %v6585
        %v7316 = vunpack.c.h.b16 %v6585
        %v7317 = vunpack.c.l.b16 %v6586
        %v7318 = vunpack.c.h.b16 %v6586
        %v7319 = vunpack.c.l.b16 %v6587
        %v7320 = vunpack.c.h.b16 %v6587
        %v7321 = vunpack.c.l.b16 %v6588
        %v7322 = vunpack.c.h.b16 %v6588
        %v7323 = vunpack.c.l.b16 %v6589
        %v7324 = vunpack.c.l.b16 %v6590
        %v7325 = vunpack.c.h.b16 %v6590
        %v7326 = vunpack.c.l.b16 %v6591
        %v7327 = vunpack.c.h.b16 %v6591
        %v7328 = vunpack.c.l.b16 %v6592
        %v7329 = vunpack.c.h.b16 %v6592
        %v7330 = vunpack.c.l.b16 %v6593
        %v7331 = vunpack.c.h.b16 %v6593
        %v7332 = vunpack.c.l.b16 %v6594
        %v7333 = vunpack.c.h.b16 %v6594
        %v7334 = vunpack.c.l.b16 %v6595
        %v7335 = vunpack.c.h.b16 %v6595
        %v7336 = vunpack.c.l.b16 %v6596
        %v7337 = vunpack.c.h.b16 %v6596
        %v7338 = vunpack.c.l.b16 %v6597
        %v7339 = vunpack.c.h.b16 %v6597
        %v7340 = vunpack.c.l.b16 %v6598
        %v7341 = vunpack.c.h.b16 %v6598
        %v7342 = vunpack.c.l.b16 %v6599
        %v7343 = vunpack.c.h.b16 %v6599
        %v7344 = vunpack.c.l.b16 %v6600
        %v7345 = vunpack.c.h.b16 %v6600
        %v7346 = vunpack.c.l.b16 %v6601
        %v7347 = vunpack.c.h.b16 %v6601
        %v7348 = vunpack.c.l.b16 %v6602
        %v7349 = vunpack.c.l.b16 %v6603
        %v7350 = vunpack.c.h.b16 %v6603
        %v7351 = vunpack.c.l.b16 %v6604
        %v7352 = vunpack.c.h.b16 %v6604
        %v7353 = vunpack.c.l.b16 %v6605
        %v7354 = vunpack.c.h.b16 %v6605
        %v7355 = vunpack.c.l.b16 %v6606
        %v7356 = vunpack.c.h.b16 %v6606
        %v7357 = vunpack.c.l.b16 %v6607
        %v7358 = vunpack.c.h.b16 %v6607
        %v7359 = vunpack.c.l.b16 %v6608
        %v7360 = vunpack.c.h.b16 %v6608
        %v7361 = vunpack.c.l.b16 %v6609
        %v7362 = vunpack.c.h.b16 %v6609
        %v7363 = vunpack.c.l.b16 %v6610
        %v7364 = vunpack.c.h.b16 %v6610
        %v7365 = vunpack.c.l.b16 %v6611
        %v7366 = vunpack.c.h.b16 %v6611
        %v7367 = vunpack.c.l.b16 %v6612
        %v7368 = vunpack.c.h.b16 %v6612
        %v7369 = vunpack.c.l.b16 %v6613
        %v7370 = vunpack.c.h.b16 %v6613
        %v7371 = vunpack.c.l.b16 %v6614
        %v7372 = vunpack.c.h.b16 %v6614
        %v7373 = vunpack.c.l.b16 %v6615
        %v7374 = vunpack.c.l.b16 %v6616
        %v7375 = vunpack.c.h.b16 %v6616
        %v7376 = vunpack.c.l.b16 %v6617
        %v7377 = vunpack.c.h.b16 %v6617
        %v7378 = vunpack.c.l.b16 %v6618
        %v7379 = vunpack.c.h.b16 %v6618
        %v7380 = vunpack.c.l.b16 %v6619
        %v7381 = vunpack.c.h.b16 %v6619
        %v7382 = vunpack.c.l.b16 %v6620
        %v7383 = vunpack.c.h.b16 %v6620
        %v7384 = vunpack.c.l.b16 %v6621
        %v7385 = vunpack.c.h.b16 %v6621
        %v7386 = vunpack.c.l.b16 %v6622
        %v7387 = vunpack.c.h.b16 %v6622
        %v7388 = vunpack.c.l.b16 %v6623
        %v7389 = vunpack.c.h.b16 %v6623
        %v7390 = vunpack.c.l.b16 %v6624
        %v7391 = vunpack.c.h.b16 %v6624
        %v7392 = vunpack.c.l.b16 %v6625
        %v7393 = vunpack.c.h.b16 %v6625
        %v7394 = vunpack.c.l.b16 %v6626
        %v7395 = vunpack.c.h.b16 %v6626
        %v7396 = vunpack.c.l.b16 %v6627
        %v7397 = vunpack.c.h.b16 %v6627
        %v7398 = vunpack.c.l.b16 %v6628
        %v7399 = vunpack.c.l.b16 %v6629
        %v7400 = vunpack.c.h.b16 %v6629
        %v7401 = vunpack.c.l.b16 %v6630
        %v7402 = vunpack.c.h.b16 %v6630
        %v7403 = vunpack.c.l.b16 %v6631
        %v7404 = vunpack.c.h.b16 %v6631
        %v7405 = vunpack.c.l.b16 %v6632
        %v7406 = vunpack.c.h.b16 %v6632
        %v7407 = vunpack.c.l.b16 %v6633
        %v7408 = vunpack.c.h.b16 %v6633
        %v7409 = vunpack.c.l.b16 %v6634
        %v7410 = vunpack.c.h.b16 %v6634
        %v7411 = vunpack.c.l.b16 %v6635
        %v7412 = vunpack.c.h.b16 %v6635
        %v7413 = vunpack.c.l.b16 %v6636
        %v7414 = vunpack.c.h.b16 %v6636
        %v7415 = vunpack.c.l.b16 %v6637
        %v7416 = vunpack.c.h.b16 %v6637
        %v7417 = vunpack.c.l.b16 %v6638
        %v7418 = vunpack.c.h.b16 %v6638
        %v7419 = vunpack.c.l.b16 %v6639
        %v7420 = vunpack.c.h.b16 %v6639
        %v7421 = vunpack.c.l.b16 %v6640
        %v7422 = vunpack.c.h.b16 %v6640
        %v7423 = vunpack.c.l.b16 %v6641
        %v7424 = vunpack.c.l.b16 %v6642
        %v7425 = vunpack.c.h.b16 %v6642
        %v7426 = vunpack.c.l.b16 %v6643
        %v7427 = vunpack.c.h.b16 %v6643
        %v7428 = vunpack.c.l.b16 %v6644
        %v7429 = vunpack.c.h.b16 %v6644
        %v7430 = vunpack.c.l.b16 %v6645
        %v7431 = vunpack.c.h.b16 %v6645
        %v7432 = vunpack.c.l.b16 %v6646
        %v7433 = vunpack.c.h.b16 %v6646
        %v7434 = vunpack.c.l.b16 %v6647
        %v7435 = vunpack.c.h.b16 %v6647
        %v7436 = vunpack.c.l.b16 %v6648
        %v7437 = vunpack.c.h.b16 %v6648
        %v7438 = vunpack.c.l.b16 %v6649
        %v7439 = vunpack.c.h.b16 %v6649
        %v7440 = vunpack.c.l.b16 %v6650
        %v7441 = vunpack.c.h.b16 %v6650
        %v7442 = vunpack.c.l.b16 %v6651
        %v7443 = vunpack.c.h.b16 %v6651
        %v7444 = vunpack.c.l.b16 %v6652
        %v7445 = vunpack.c.h.b16 %v6652
        %v7446 = vunpack.c.l.b16 %v6653
        %v7447 = vunpack.c.h.b16 %v6653
        %v7448 = vunpack.c.l.b16 %v6654
        %v7449 = vunpack.c.l.b16 %v6655
        %v7450 = vunpack.c.h.b16 %v6655
        %v7451 = vunpack.c.l.b16 %v6656
        %v7452 = vunpack.c.h.b16 %v6656
        %v7453 = vunpack.c.l.b16 %v6657
        %v7454 = vunpack.c.h.b16 %v6657
        %v7455 = vunpack.c.l.b16 %v6658
        %v7456 = vunpack.c.h.b16 %v6658
        %v7457 = vunpack.c.l.b16 %v6659
        %v7458 = vunpack.c.h.b16 %v6659
        %v7459 = vunpack.c.l.b16 %v6660
        %v7460 = vunpack.c.h.b16 %v6660
        %v7461 = vunpack.c.l.b16 %v6661
        %v7462 = vunpack.c.h.b16 %v6661
        %v7463 = vunpack.c.l.b16 %v6662
        %v7464 = vunpack.c.h.b16 %v6662
        %v7465 = vunpack.c.l.b16 %v6663
        %v7466 = vunpack.c.h.b16 %v6663
        %v7467 = vunpack.c.l.b16 %v6664
        %v7468 = vunpack.c.h.b16 %v6664
        %v7469 = vunpack.c.l.b16 %v6665
        %v7470 = vunpack.c.h.b16 %v6665
        %v7471 = vunpack.c.l.b16 %v6666
        %v7472 = vunpack.c.h.b16 %v6666
        %v7473 = vunpack.c.l.b16 %v6667
        %v7474 = vunpack.c.l.b16 %v6668
        %v7475 = vunpack.c.h.b16 %v6668
        %v7476 = vunpack.c.l.b16 %v6669
        %v7477 = vunpack.c.h.b16 %v6669
        %v7478 = vunpack.c.l.b16 %v6670
        %v7479 = vunpack.c.h.b16 %v6670
        %v7480 = vunpack.c.l.b16 %v6671
        %v7481 = vunpack.c.h.b16 %v6671
        %v7482 = vunpack.c.l.b16 %v6672
        %v7483 = vunpack.c.h.b16 %v6672
        %v7484 = vunpack.c.l.b16 %v6673
        %v7485 = vunpack.c.h.b16 %v6673
        %v7486 = vunpack.c.l.b16 %v6674
        %v7487 = vunpack.c.h.b16 %v6674
        %v7488 = vunpack.c.l.b16 %v6675
        %v7489 = vunpack.c.h.b16 %v6675
        %v7490 = vunpack.c.l.b16 %v6676
        %v7491 = vunpack.c.h.b16 %v6676
        %v7492 = vunpack.c.l.b16 %v6677
        %v7493 = vunpack.c.h.b16 %v6677
        %v7494 = vunpack.c.l.b16 %v6678
        %v7495 = vunpack.c.h.b16 %v6678
        %v7496 = vunpack.c.l.b16 %v6679
        %v7497 = vunpack.c.h.b16 %v6679
        %v7498 = vunpack.c.l.b16 %v6680
        %v7499 = vunpack.c.l.b16 %v6681
        %v7500 = vunpack.c.h.b16 %v6681
        %v7501 = vunpack.c.l.b16 %v6682
        %v7502 = vunpack.c.h.b16 %v6682
        %v7503 = vunpack.c.l.b16 %v6683
        %v7504 = vunpack.c.h.b16 %v6683
        %v7505 = vunpack.c.l.b16 %v6684
        %v7506 = vunpack.c.h.b16 %v6684
        %v7507 = vunpack.c.l.b16 %v6685
        %v7508 = vunpack.c.h.b16 %v6685
        %v7509 = vunpack.c.l.b16 %v6686
        %v7510 = vunpack.c.h.b16 %v6686
        %v7511 = vunpack.c.l.b16 %v6687
        %v7512 = vunpack.c.h.b16 %v6687
        %v7513 = vunpack.c.l.b16 %v6688
        %v7514 = vunpack.c.h.b16 %v6688
        %v7515 = vunpack.c.l.b16 %v6689
        %v7516 = vunpack.c.h.b16 %v6689
        %v7517 = vunpack.c.l.b16 %v6690
        %v7518 = vunpack.c.h.b16 %v6690
        %v7519 = vunpack.c.l.b16 %v6691
        %v7520 = vunpack.c.h.b16 %v6691
        %v7521 = vunpack.c.l.b16 %v6692
        %v7522 = vunpack.c.h.b16 %v6692
        %v7523 = vunpack.c.l.b16 %v6693
        %v7524 = vunpack.c.l.b16 %v6694
        %v7525 = vunpack.c.h.b16 %v6694
        %v7526 = vunpack.c.l.b16 %v6695
        %v7527 = vunpack.c.h.b16 %v6695
        %v7528 = vunpack.c.l.b16 %v6696
        %v7529 = vunpack.c.h.b16 %v6696
        %v7530 = vunpack.c.l.b16 %v6697
        %v7531 = vunpack.c.h.b16 %v6697
        %v7532 = vunpack.c.l.b16 %v6698
        %v7533 = vunpack.c.h.b16 %v6698
        %v7534 = vunpack.c.l.b16 %v6699
        %v7535 = vunpack.c.h.b16 %v6699
        %v7536 = vunpack.c.l.b16 %v6700
        %v7537 = vunpack.c.h.b16 %v6700
        %v7538 = vunpack.c.l.b16 %v6701
        %v7539 = vunpack.c.h.b16 %v6701
        %v7540 = vunpack.c.l.b16 %v6702
        %v7541 = vunpack.c.h.b16 %v6702
        %v7542 = vunpack.c.l.b16 %v6703
        %v7543 = vunpack.c.h.b16 %v6703
        %v7544 = vunpack.c.l.b16 %v6704
        %v7545 = vunpack.c.h.b16 %v6704
        %v7546 = vunpack.c.l.b16 %v6705
        %v7547 = vunpack.c.h.b16 %v6705
        %v7548 = vunpack.c.l.b16 %v6706
        %v7549 = vunpack.c.l.b16 %v6707
        %v7550 = vunpack.c.h.b16 %v6707
        %v7551 = vunpack.c.l.b16 %v6708
        %v7552 = vunpack.c.h.b16 %v6708
        %v7553 = vunpack.c.l.b16 %v6709
        %v7554 = vunpack.c.h.b16 %v6709
        %v7555 = vunpack.c.l.b16 %v6710
        %v7556 = vunpack.c.h.b16 %v6710
        %v7557 = vunpack.c.l.b16 %v6711
        %v7558 = vunpack.c.h.b16 %v6711
        %v7559 = vunpack.c.l.b16 %v6712
        %v7560 = vunpack.c.h.b16 %v6712
        %v7561 = vunpack.c.l.b16 %v6713
        %v7562 = vunpack.c.h.b16 %v6713
        %v7563 = vunpack.c.l.b16 %v6714
        %v7564 = vunpack.c.h.b16 %v6714
        %v7565 = vunpack.c.l.b16 %v6715
        %v7566 = vunpack.c.h.b16 %v6715
        %v7567 = vunpack.c.l.b16 %v6716
        %v7568 = vunpack.c.h.b16 %v6716
        %v7569 = vunpack.c.l.b16 %v6717
        %v7570 = vunpack.c.h.b16 %v6717
        %v7571 = vunpack.c.l.b16 %v6718
        %v7572 = vunpack.c.h.b16 %v6718
        %v7573 = vunpack.c.l.b16 %v6719
        %v7574 = vunpack.c.l.b16 %v6720
        %v7575 = vunpack.c.h.b16 %v6720
        %v7576 = vunpack.c.l.b16 %v6721
        %v7577 = vunpack.c.h.b16 %v6721
        %v7578 = vunpack.c.l.b16 %v6722
        %v7579 = vunpack.c.h.b16 %v6722
        %v7580 = vunpack.c.l.b16 %v6723
        %v7581 = vunpack.c.h.b16 %v6723
        %v7582 = vunpack.c.l.b16 %v6724
        %v7583 = vunpack.c.h.b16 %v6724
        %v7584 = vunpack.c.l.b16 %v6725
        %v7585 = vunpack.c.h.b16 %v6725
        %v7586 = vunpack.c.l.b16 %v6726
        %v7587 = vunpack.c.h.b16 %v6726
        %v7588 = vunpack.c.l.b16 %v6727
        %v7589 = vunpack.c.h.b16 %v6727
        %v7590 = vunpack.c.l.b16 %v6728
        %v7591 = vunpack.c.h.b16 %v6728
        %v7592 = vunpack.c.l.b16 %v6729
        %v7593 = vunpack.c.h.b16 %v6729
        %v7594 = vunpack.c.l.b16 %v6730
        %v7595 = vunpack.c.h.b16 %v6730
        %v7596 = vunpack.c.l.b16 %v6731
        %v7597 = vunpack.c.h.b16 %v6731
        %v7598 = vunpack.c.l.b16 %v6732
        %v7599 = vunpack.c.l.b16 %v6733
        %v7600 = vunpack.c.h.b16 %v6733
        %v7601 = vunpack.c.l.b16 %v6734
        %v7602 = vunpack.c.h.b16 %v6734
        %v7603 = vunpack.c.l.b16 %v6735
        %v7604 = vunpack.c.h.b16 %v6735
        %v7605 = vunpack.c.l.b16 %v6736
        %v7606 = vunpack.c.h.b16 %v6736
        %v7607 = vunpack.c.l.b16 %v6737
        %v7608 = vunpack.c.h.b16 %v6737
        %v7609 = vunpack.c.l.b16 %v6738
        %v7610 = vunpack.c.h.b16 %v6738
        %v7611 = vunpack.c.l.b16 %v6739
        %v7612 = vunpack.c.h.b16 %v6739
        %v7613 = vunpack.c.l.b16 %v6740
        %v7614 = vunpack.c.h.b16 %v6740
        %v7615 = vunpack.c.l.b16 %v6741
        %v7616 = vunpack.c.h.b16 %v6741
        %v7617 = vunpack.c.l.b16 %v6742
        %v7618 = vunpack.c.h.b16 %v6742
        %v7619 = vunpack.c.l.b16 %v6743
        %v7620 = vunpack.c.h.b16 %v6743
        %v7621 = vunpack.c.l.b16 %v6744
        %v7622 = vunpack.c.h.b16 %v6744
        %v7623 = vunpack.c.l.b16 %v6745
        %v7624 = vunpack.c.l.b16 %v6746
        %v7625 = vunpack.c.h.b16 %v6746
        %v7626 = vunpack.c.l.b16 %v6747
        %v7627 = vunpack.c.h.b16 %v6747
        %v7628 = vunpack.c.l.b16 %v6748
        %v7629 = vunpack.c.h.b16 %v6748
        %v7630 = vunpack.c.l.b16 %v6749
        %v7631 = vunpack.c.h.b16 %v6749
        %v7632 = vunpack.c.l.b16 %v6750
        %v7633 = vunpack.c.h.b16 %v6750
        %v7634 = vunpack.c.l.b16 %v6751
        %v7635 = vunpack.c.h.b16 %v6751
        %v7636 = vunpack.c.l.b16 %v6752
        %v7637 = vunpack.c.h.b16 %v6752
        %v7638 = vunpack.c.l.b16 %v6753
        %v7639 = vunpack.c.h.b16 %v6753
        %v7640 = vunpack.c.l.b16 %v6754
        %v7641 = vunpack.c.h.b16 %v6754
        %v7642 = vunpack.c.l.b16 %v6755
        %v7643 = vunpack.c.h.b16 %v6755
        %v7644 = vunpack.c.l.b16 %v6756
        %v7645 = vunpack.c.h.b16 %v6756
        %v7646 = vunpack.c.l.b16 %v6757
        %v7647 = vunpack.c.h.b16 %v6757
        %v7648 = vunpack.c.l.b16 %v6758
        %v7649 = vunpack.c.l.b16 %v6759
        %v7650 = vunpack.c.h.b16 %v6759
        %v7651 = vunpack.c.l.b16 %v6760
        %v7652 = vunpack.c.h.b16 %v6760
        %v7653 = vunpack.c.l.b16 %v6761
        %v7654 = vunpack.c.h.b16 %v6761
        %v7655 = vunpack.c.l.b16 %v6762
        %v7656 = vunpack.c.h.b16 %v6762
        %v7657 = vunpack.c.l.b16 %v6763
        %v7658 = vunpack.c.h.b16 %v6763
        %v7659 = vunpack.c.l.b16 %v6764
        %v7660 = vunpack.c.h.b16 %v6764
        %v7661 = vunpack.c.l.b16 %v6765
        %v7662 = vunpack.c.h.b16 %v6765
        %v7663 = vunpack.c.l.b16 %v6766
        %v7664 = vunpack.c.h.b16 %v6766
        %v7665 = vunpack.c.l.b16 %v6767
        %v7666 = vunpack.c.h.b16 %v6767
        %v7667 = vunpack.c.l.b16 %v6768
        %v7668 = vunpack.c.h.b16 %v6768
        %v7669 = vunpack.c.l.b16 %v6769
        %v7670 = vunpack.c.h.b16 %v6769
        %v7671 = vunpack.c.l.b16 %v6770
        %v7672 = vunpack.c.h.b16 %v6770
        %v7673 = vunpack.c.l.b16 %v6771
        %v7674 = vunpack.c.l.b16 %v6772
        %v7675 = vunpack.c.h.b16 %v6772
        %v7676 = vunpack.c.l.b16 %v6773
        %v7677 = vunpack.c.h.b16 %v6773
        %v7678 = vunpack.c.l.b16 %v6774
        %v7679 = vunpack.c.h.b16 %v6774
        %v7680 = vunpack.c.l.b16 %v6775
        %v7681 = vunpack.c.h.b16 %v6775
        %v7682 = vunpack.c.l.b16 %v6776
        %v7683 = vunpack.c.h.b16 %v6776
        %v7684 = vunpack.c.l.b16 %v6777
        %v7685 = vunpack.c.h.b16 %v6777
        %v7686 = vunpack.c.l.b16 %v6778
        %v7687 = vunpack.c.h.b16 %v6778
        %v7688 = vunpack.c.l.b16 %v6779
        %v7689 = vunpack.c.h.b16 %v6779
        %v7690 = vunpack.c.l.b16 %v6780
        %v7691 = vunpack.c.h.b16 %v6780
        %v7692 = vunpack.c.l.b16 %v6781
        %v7693 = vunpack.c.h.b16 %v6781
        %v7694 = vunpack.c.l.b16 %v6782
        %v7695 = vunpack.c.h.b16 %v6782
        %v7696 = vunpack.c.l.b16 %v6783
        %v7697 = vunpack.c.h.b16 %v6783
        %v7698 = vunpack.c.l.b16 %v6784
        %v7699 = vunpack.c.l.b16 %v6785
        %v7700 = vunpack.c.h.b16 %v6785
        %v7701 = vunpack.c.l.b16 %v6786
        %v7702 = vunpack.c.h.b16 %v6786
        %v7703 = vunpack.c.l.b16 %v6787
        %v7704 = vunpack.c.h.b16 %v6787
        %v7705 = vunpack.c.l.b16 %v6788
        %v7706 = vunpack.c.h.b16 %v6788
        %v7707 = vunpack.c.l.b16 %v6789
        %v7708 = vunpack.c.h.b16 %v6789
        %v7709 = vunpack.c.l.b16 %v6790
        %v7710 = vunpack.c.h.b16 %v6790
        %v7711 = vunpack.c.l.b16 %v6791
        %v7712 = vunpack.c.h.b16 %v6791
        %v7713 = vunpack.c.l.b16 %v6792
        %v7714 = vunpack.c.h.b16 %v6792
        %v7715 = vunpack.c.l.b16 %v6793
        %v7716 = vunpack.c.h.b16 %v6793
        %v7717 = vunpack.c.l.b16 %v6794
        %v7718 = vunpack.c.h.b16 %v6794
        %v7719 = vunpack.c.l.b16 %v6795
        %v7720 = vunpack.c.h.b16 %v6795
        %v7721 = vunpack.c.l.b16 %v6796
        %v7722 = vunpack.c.h.b16 %v6796
        %v7723 = vunpack.c.l.b16 %v6797
        %v7724 = vunpack.c.l.b16 %v6798
        %v7725 = vunpack.c.h.b16 %v6798
        %v7726 = vunpack.c.l.b16 %v6799
        %v7727 = vunpack.c.h.b16 %v6799
        %v7728 = vunpack.c.l.b16 %v6800
        %v7729 = vunpack.c.h.b16 %v6800
        %v7730 = vunpack.c.l.b16 %v6801
        %v7731 = vunpack.c.h.b16 %v6801
        %v7732 = vunpack.c.l.b16 %v6802
        %v7733 = vunpack.c.h.b16 %v6802
        %v7734 = vunpack.c.l.b16 %v6803
        %v7735 = vunpack.c.h.b16 %v6803
        %v7736 = vunpack.c.l.b16 %v6804
        %v7737 = vunpack.c.h.b16 %v6804
        %v7738 = vunpack.c.l.b16 %v6805
        %v7739 = vunpack.c.h.b16 %v6805
        %v7740 = vunpack.c.l.b16 %v6806
        %v7741 = vunpack.c.h.b16 %v6806
        %v7742 = vunpack.c.l.b16 %v6807
        %v7743 = vunpack.c.h.b16 %v6807
        %v7744 = vunpack.c.l.b16 %v6808
        %v7745 = vunpack.c.h.b16 %v6808
        %v7746 = vunpack.c.l.b16 %v6809
        %v7747 = vunpack.c.h.b16 %v6809
        %v7748 = vunpack.c.l.b16 %v6810
        %v7749 = vunpack.c.l.b16 %v6811
        %v7750 = vunpack.c.h.b16 %v6811
        %v7751 = vunpack.c.l.b16 %v6812
        %v7752 = vunpack.c.h.b16 %v6812
        %v7753 = vunpack.c.l.b16 %v6813
        %v7754 = vunpack.c.h.b16 %v6813
        %v7755 = vunpack.c.l.b16 %v6814
        %v7756 = vunpack.c.h.b16 %v6814
        %v7757 = vunpack.c.l.b16 %v6815
        %v7758 = vunpack.c.h.b16 %v6815
        %v7759 = vunpack.c.l.b16 %v6816
        %v7760 = vunpack.c.h.b16 %v6816
        %v7761 = vunpack.c.l.b16 %v6817
        %v7762 = vunpack.c.h.b16 %v6817
        %v7763 = vunpack.c.l.b16 %v6818
        %v7764 = vunpack.c.h.b16 %v6818
        %v7765 = vunpack.c.l.b16 %v6819
        %v7766 = vunpack.c.h.b16 %v6819
        %v7767 = vunpack.c.l.b16 %v6820
        %v7768 = vunpack.c.h.b16 %v6820
        %v7769 = vunpack.c.l.b16 %v6821
        %v7770 = vunpack.c.h.b16 %v6821
        %v7771 = vunpack.c.l.b16 %v6822
        %v7772 = vunpack.c.h.b16 %v6822
        %v7773 = vunpack.c.l.b16 %v6823
        %v7774 = vpack.c.b16 %v7174, %v7149
        %v7775 = vpack.c.b16 %v7175, %v7150
        %v7776 = vpack.c.b16 %v7176, %v7151
        %v7777 = vpack.c.b16 %v7177, %v7152
        %v7778 = vpack.c.b16 %v7178, %v7153
        %v7779 = vpack.c.b16 %v7179, %v7154
        %v7780 = vpack.c.b16 %v7180, %v7155
        %v7781 = vpack.c.b16 %v7181, %v7156
        %v7782 = vpack.c.b16 %v7182, %v7157
        %v7783 = vpack.c.b16 %v7183, %v7158
        %v7784 = vpack.c.b16 %v7184, %v7159
        %v7785 = vpack.c.b16 %v7185, %v7160
        %v7786 = vpack.c.b16 %v7186, %v7161
        %v7787 = vpack.c.b16 %v7187, %v7162
        %v7788 = vpack.c.b16 %v7188, %v7163
        %v7789 = vpack.c.b16 %v7189, %v7164
        %v7790 = vpack.c.b16 %v7190, %v7165
        %v7791 = vpack.c.b16 %v7191, %v7166
        %v7792 = vpack.c.b16 %v7192, %v7167
        %v7793 = vpack.c.b16 %v7193, %v7168
        %v7794 = vpack.c.b16 %v7194, %v7169
        %v7795 = vpack.c.b16 %v7195, %v7170
        %v7796 = vpack.c.b16 %v7196, %v7171
        %v7797 = vpack.c.b16 %v7197, %v7172
        %v7798 = vpack.c.b16 %v7198, %v7173
        %v7799 = vpack.c.b16 %v7224, %v7199
        %v7800 = vpack.c.b16 %v7225, %v7200
        %v7801 = vpack.c.b16 %v7226, %v7201
        %v7802 = vpack.c.b16 %v7227, %v7202
        %v7803 = vpack.c.b16 %v7228, %v7203
        %v7804 = vpack.c.b16 %v7229, %v7204
        %v7805 = vpack.c.b16 %v7230, %v7205
        %v7806 = vpack.c.b16 %v7231, %v7206
        %v7807 = vpack.c.b16 %v7232, %v7207
        %v7808 = vpack.c.b16 %v7233, %v7208
        %v7809 = vpack.c.b16 %v7234, %v7209
        %v7810 = vpack.c.b16 %v7235, %v7210
        %v7811 = vpack.c.b16 %v7236, %v7211
        %v7812 = vpack.c.b16 %v7237, %v7212
        %v7813 = vpack.c.b16 %v7238, %v7213
        %v7814 = vpack.c.b16 %v7239, %v7214
        %v7815 = vpack.c.b16 %v7240, %v7215
        %v7816 = vpack.c.b16 %v7241, %v7216
        %v7817 = vpack.c.b16 %v7242, %v7217
        %v7818 = vpack.c.b16 %v7243, %v7218
        %v7819 = vpack.c.b16 %v7244, %v7219
        %v7820 = vpack.c.b16 %v7245, %v7220
        %v7821 = vpack.c.b16 %v7246, %v7221
        %v7822 = vpack.c.b16 %v7247, %v7222
        %v7823 = vpack.c.b16 %v7248, %v7223
        %v7824 = vpack.c.b16 %v7274, %v7249
        %v7825 = vpack.c.b16 %v7275, %v7250
        %v7826 = vpack.c.b16 %v7276, %v7251
        %v7827 = vpack.c.b16 %v7277, %v7252
        %v7828 = vpack.c.b16 %v7278, %v7253
        %v7829 = vpack.c.b16 %v7279, %v7254
        %v7830 = vpack.c.b16 %v7280, %v7255
        %v7831 = vpack.c.b16 %v7281, %v7256
        %v7832 = vpack.c.b16 %v7282, %v7257
        %v7833 = vpack.c.b16 %v7283, %v7258
        %v7834 = vpack.c.b16 %v7284, %v7259
        %v7835 = vpack.c.b16 %v7285, %v7260
        %v7836 = vpack.c.b16 %v7286, %v7261
        %v7837 = vpack.c.b16 %v7287, %v7262
        %v7838 = vpack.c.b16 %v7288, %v7263
        %v7839 = vpack.c.b16 %v7289, %v7264
        %v7840 = vpack.c.b16 %v7290, %v7265
        %v7841 = vpack.c.b16 %v7291, %v7266
        %v7842 = vpack.c.b16 %v7292, %v7267
        %v7843 = vpack.c.b16 %v7293, %v7268
        %v7844 = vpack.c.b16 %v7294, %v7269
        %v7845 = vpack.c.b16 %v7295, %v7270
        %v7846 = vpack.c.b16 %v7296, %v7271
        %v7847 = vpack.c.b16 %v7297, %v7272
        %v7848 = vpack.c.b16 %v7298, %v7273
        %v7849 = vpack.c.b16 %v7324, %v7299
        %v7850 = vpack.c.b16 %v7325, %v7300
        %v7851 = vpack.c.b16 %v7326, %v7301
        %v7852 = vpack.c.b16 %v7327, %v7302
        %v7853 = vpack.c.b16 %v7328, %v7303
        %v7854 = vpack.c.b16 %v7329, %v7304
        %v7855 = vpack.c.b16 %v7330, %v7305
        %v7856 = vpack.c.b16 %v7331, %v7306
        %v7857 = vpack.c.b16 %v7332, %v7307
        %v7858 = vpack.c.b16 %v7333, %v7308
        %v7859 = vpack.c.b16 %v7334, %v7309
        %v7860 = vpack.c.b16 %v7335, %v7310
        %v7861 = vpack.c.b16 %v7336, %v7311
        %v7862 = vpack.c.b16 %v7337, %v7312
        %v7863 = vpack.c.b16 %v7338, %v7313
        %v7864 = vpack.c.b16 %v7339, %v7314
        %v7865 = vpack.c.b16 %v7340, %v7315
        %v7866 = vpack.c.b16 %v7341, %v7316
        %v7867 = vpack.c.b16 %v7342, %v7317
        %v7868 = vpack.c.b16 %v7343, %v7318
        %v7869 = vpack.c.b16 %v7344, %v7319
        %v7870 = vpack.c.b16 %v7345, %v7320
        %v7871 = vpack.c.b16 %v7346, %v7321
        %v7872 = vpack.c.b16 %v7347, %v7322
        %v7873 = vpack.c.b16 %v7348, %v7323
        %v7874 = vpack.c.b16 %v7374, %v7349
        %v7875 = vpack.c.b16 %v7375, %v7350
        %v7876 = vpack.c.b16 %v7376, %v7351
        %v7877 = vpack.c.b16 %v7377, %v7352
        %v7878 = vpack.c.b16 %v7378, %v7353
        %v7879 = vpack.c.b16 %v7379, %v7354
        %v7880 = vpack.c.b16 %v7380, %v7355
        %v7881 = vpack.c.b16 %v7381, %v7356
        %v7882 = vpack.c.b16 %v7382, %v7357
        %v7883 = vpack.c.b16 %v7383, %v7358
        %v7884 = vpack.c.b16 %v7384, %v7359
        %v7885 = vpack.c.b16 %v7385, %v7360
        %v7886 = vpack.c.b16 %v7386, %v7361
        %v7887 = vpack.c.b16 %v7387, %v7362
        %v7888 = vpack.c.b16 %v7388, %v7363
        %v7889 = vpack.c.b16 %v7389, %v7364
        %v7890 = vpack.c.b16 %v7390, %v7365
        %v7891 = vpack.c.b16 %v7391, %v7366
        %v7892 = vpack.c.b16 %v7392, %v7367
        %v7893 = vpack.c.b16 %v7393, %v7368
        %v7894 = vpack.c.b16 %v7394, %v7369
        %v7895 = vpack.c.b16 %v7395, %v7370
        %v7896 = vpack.c.b16 %v7396, %v7371
        %v7897 = vpack.c.b16 %v7397, %v7372
        %v7898 = vpack.c.b16 %v7398, %v7373
        %v7899 = vpack.c.b16 %v7424, %v7399
        %v7900 = vpack.c.b16 %v7425, %v7400
        %v7901 = vpack.c.b16 %v7426, %v7401
        %v7902 = vpack.c.b16 %v7427, %v7402
        %v7903 = vpack.c.b16 %v7428, %v7403
        %v7904 = vpack.c.b16 %v7429, %v7404
        %v7905 = vpack.c.b16 %v7430, %v7405
        %v7906 = vpack.c.b16 %v7431, %v7406
        %v7907 = vpack.c.b16 %v7432, %v7407
        %v7908 = vpack.c.b16 %v7433, %v7408
        %v7909 = vpack.c.b16 %v7434, %v7409
        %v7910 = vpack.c.b16 %v7435, %v7410
        %v7911 = vpack.c.b16 %v7436, %v7411
        %v7912 = vpack.c.b16 %v7437, %v7412
        %v7913 = vpack.c.b16 %v7438, %v7413
        %v7914 = vpack.c.b16 %v7439, %v7414
        %v7915 = vpack.c.b16 %v7440, %v7415
        %v7916 = vpack.c.b16 %v7441, %v7416
        %v7917 = vpack.c.b16 %v7442, %v7417
        %v7918 = vpack.c.b16 %v7443, %v7418
        %v7919 = vpack.c.b16 %v7444, %v7419
        %v7920 = vpack.c.b16 %v7445, %v7420
        %v7921 = vpack.c.b16 %v7446, %v7421
        %v7922 = vpack.c.b16 %v7447, %v7422
        %v7923 = vpack.c.b16 %v7448, %v7423
        %v7924 = vpack.c.b16 %v7474, %v7449
        %v7925 = vpack.c.b16 %v7475, %v7450
        %v7926 = vpack.c.b16 %v7476, %v7451
        %v7927 = vpack.c.b16 %v7477, %v7452
        %v7928 = vpack.c.b16 %v7478, %v7453
        %v7929 = vpack.c.b16 %v7479, %v7454
        %v7930 = vpack.c.b16 %v7480, %v7455
        %v7931 = vpack.c.b16 %v7481, %v7456
        %v7932 = vpack.c.b16 %v7482, %v7457
        %v7933 = vpack.c.b16 %v7483, %v7458
        %v7934 = vpack.c.b16 %v7484, %v7459
        %v7935 = vpack.c.b16 %v7485, %v7460
        %v7936 = vpack.c.b16 %v7486, %v7461
        %v7937 = vpack.c.b16 %v7487, %v7462
        %v7938 = vpack.c.b16 %v7488, %v7463
        %v7939 = vpack.c.b16 %v7489, %v7464
        %v7940 = vpack.c.b16 %v7490, %v7465
        %v7941 = vpack.c.b16 %v7491, %v7466
        %v7942 = vpack.c.b16 %v7492, %v7467
        %v7943 = vpack.c.b16 %v7493, %v7468
        %v7944 = vpack.c.b16 %v7494, %v7469
        %v7945 = vpack.c.b16 %v7495, %v7470
        %v7946 = vpack.c.b16 %v7496, %v7471
        %v7947 = vpack.c.b16 %v7497, %v7472
        %v7948 = vpack.c.b16 %v7498, %v7473
        %v7949 = vpack.c.b16 %v7524, %v7499
        %v7950 = vpack.c.b16 %v7525, %v7500
        %v7951 = vpack.c.b16 %v7526, %v7501
        %v7952 = vpack.c.b16 %v7527, %v7502
        %v7953 = vpack.c.b16 %v7528, %v7503
        %v7954 = vpack.c.b16 %v7529, %v7504
        %v7955 = vpack.c.b16 %v7530, %v7505
        %v7956 = vpack.c.b16 %v7531, %v7506
        %v7957 = vpack.c.b16 %v7532, %v7507
        %v7958 = vpack.c.b16 %v7533, %v7508
        %v7959 = vpack.c.b16 %v7534, %v7509
        %v7960 = vpack.c.b16 %v7535, %v7510
        %v7961 = vpack.c.b16 %v7536, %v7511
        %v7962 = vpack.c.b16 %v7537, %v7512
        %v7963 = vpack.c.b16 %v7538, %v7513
        %v7964 = vpack.c.b16 %v7539, %v7514
        %v7965 = vpack.c.b16 %v7540, %v7515
        %v7966 = vpack.c.b16 %v7541, %v7516
        %v7967 = vpack.c.b16 %v7542, %v7517
        %v7968 = vpack.c.b16 %v7543, %v7518
        %v7969 = vpack.c.b16 %v7544, %v7519
        %v7970 = vpack.c.b16 %v7545, %v7520
        %v7971 = vpack.c.b16 %v7546, %v7521
        %v7972 = vpack.c.b16 %v7547, %v7522
        %v7973 = vpack.c.b16 %v7548, %v7523
        %v7974 = vpack.c.b16 %v7574, %v7549
        %v7975 = vpack.c.b16 %v7575, %v7550
        %v7976 = vpack.c.b16 %v7576, %v7551
        %v7977 = vpack.c.b16 %v7577, %v7552
        %v7978 = vpack.c.b16 %v7578, %v7553
        %v7979 = vpack.c.b16 %v7579, %v7554
        %v7980 = vpack.c.b16 %v7580, %v7555
        %v7981 = vpack.c.b16 %v7581, %v7556
        %v7982 = vpack.c.b16 %v7582, %v7557
        %v7983 = vpack.c.b16 %v7583, %v7558
        %v7984 = vpack.c.b16 %v7584, %v7559
        %v7985 = vpack.c.b16 %v7585, %v7560
        %v7986 = vpack.c.b16 %v7586, %v7561
        %v7987 = vpack.c.b16 %v7587, %v7562
        %v7988 = vpack.c.b16 %v7588, %v7563
        %v7989 = vpack.c.b16 %v7589, %v7564
        %v7990 = vpack.c.b16 %v7590, %v7565
        %v7991 = vpack.c.b16 %v7591, %v7566
        %v7992 = vpack.c.b16 %v7592, %v7567
        %v7993 = vpack.c.b16 %v7593, %v7568
        %v7994 = vpack.c.b16 %v7594, %v7569
        %v7995 = vpack.c.b16 %v7595, %v7570
        %v7996 = vpack.c.b16 %v7596, %v7571
        %v7997 = vpack.c.b16 %v7597, %v7572
        %v7998 = vpack.c.b16 %v7598, %v7573
        %v7999 = vpack.c.b16 %v7624, %v7599
        %v8000 = vpack.c.b16 %v7625, %v7600
        %v8001 = vpack.c.b16 %v7626, %v7601
        %v8002 = vpack.c.b16 %v7627, %v7602
        %v8003 = vpack.c.b16 %v7628, %v7603
        %v8004 = vpack.c.b16 %v7629, %v7604
        %v8005 = vpack.c.b16 %v7630, %v7605
        %v8006 = vpack.c.b16 %v7631, %v7606
        %v8007 = vpack.c.b16 %v7632, %v7607
        %v8008 = vpack.c.b16 %v7633, %v7608
        %v8009 = vpack.c.b16 %v7634, %v7609
        %v8010 = vpack.c.b16 %v7635, %v7610
        %v8011 = vpack.c.b16 %v7636, %v7611
        %v8012 = vpack.c.b16 %v7637, %v7612
        %v8013 = vpack.c.b16 %v7638, %v7613
        %v8014 = vpack.c.b16 %v7639, %v7614
        %v8015 = vpack.c.b16 %v7640, %v7615
        %v8016 = vpack.c.b16 %v7641, %v7616
        %v8017 = vpack.c.b16 %v7642, %v7617
        %v8018 = vpack.c.b16 %v7643, %v7618
        %v8019 = vpack.c.b16 %v7644, %v7619
        %v8020 = vpack.c.b16 %v7645, %v7620
        %v8021 = vpack.c.b16 %v7646, %v7621
        %v8022 = vpack.c.b16 %v7647, %v7622
        %v8023 = vpack.c.b16 %v7648, %v7623
        %v8024 = vpack.c.b16 %v7674, %v7649
        %v8025 = vpack.c.b16 %v7675, %v7650
        %v8026 = vpack.c.b16 %v7676, %v7651
        %v8027 = vpack.c.b16 %v7677, %v7652
        %v8028 = vpack.c.b16 %v7678, %v7653
        %v8029 = vpack.c.b16 %v7679, %v7654
        %v8030 = vpack.c.b16 %v7680, %v7655
        %v8031 = vpack.c.b16 %v7681, %v7656
        %v8032 = vpack.c.b16 %v7682, %v7657
        %v8033 = vpack.c.b16 %v7683, %v7658
        %v8034 = vpack.c.b16 %v7684, %v7659
        %v8035 = vpack.c.b16 %v7685, %v7660
        %v8036 = vpack.c.b16 %v7686, %v7661
        %v8037 = vpack.c.b16 %v7687, %v7662
        %v8038 = vpack.c.b16 %v7688, %v7663
        %v8039 = vpack.c.b16 %v7689, %v7664
        %v8040 = vpack.c.b16 %v7690, %v7665
        %v8041 = vpack.c.b16 %v7691, %v7666
        %v8042 = vpack.c.b16 %v7692, %v7667
        %v8043 = vpack.c.b16 %v7693, %v7668
        %v8044 = vpack.c.b16 %v7694, %v7669
        %v8045 = vpack.c.b16 %v7695, %v7670
        %v8046 = vpack.c.b16 %v7696, %v7671
        %v8047 = vpack.c.b16 %v7697, %v7672
        %v8048 = vpack.c.b16 %v7698, %v7673
        %v8049 = vpack.c.b16 %v7724, %v7699
        %v8050 = vpack.c.b16 %v7725, %v7700
        %v8051 = vpack.c.b16 %v7726, %v7701
        %v8052 = vpack.c.b16 %v7727, %v7702
        %v8053 = vpack.c.b16 %v7728, %v7703
        %v8054 = vpack.c.b16 %v7729, %v7704
        %v8055 = vpack.c.b16 %v7730, %v7705
        %v8056 = vpack.c.b16 %v7731, %v7706
        %v8057 = vpack.c.b16 %v7732, %v7707
        %v8058 = vpack.c.b16 %v7733, %v7708
        %v8059 = vpack.c.b16 %v7734, %v7709
        %v8060 = vpack.c.b16 %v7735, %v7710
        %v8061 = vpack.c.b16 %v7736, %v7711
        %v8062 = vpack.c.b16 %v7737, %v7712
        %v8063 = vpack.c.b16 %v7738, %v7713
        %v8064 = vpack.c.b16 %v7739, %v7714
        %v8065 = vpack.c.b16 %v7740, %v7715
        %v8066 = vpack.c.b16 %v7741, %v7716
        %v8067 = vpack.c.b16 %v7742, %v7717
        %v8068 = vpack.c.b16 %v7743, %v7718
        %v8069 = vpack.c.b16 %v7744, %v7719
        %v8070 = vpack.c.b16 %v7745, %v7720
        %v8071 = vpack.c.b16 %v7746, %v7721
        %v8072 = vpack.c.b16 %v7747, %v7722
        %v8073 = vpack.c.b16 %v7748, %v7723
        %v8074 = vpack.c.b16 %v7749, %v7749
        %v8075 = vpack.c.b16 %v7750, %v7750
        %v8076 = vpack.c.b16 %v7751, %v7751
        %v8077 = vpack.c.b16 %v7752, %v7752
        %v8078 = vpack.c.b16 %v7753, %v7753
        %v8079 = vpack.c.b16 %v7754, %v7754
        %v8080 = vpack.c.b16 %v7755, %v7755
        %v8081 = vpack.c.b16 %v7756, %v7756
        %v8082 = vpack.c.b16 %v7757, %v7757
        %v8083 = vpack.c.b16 %v7758, %v7758
        %v8084 = vpack.c.b16 %v7759, %v7759
        %v8085 = vpack.c.b16 %v7760, %v7760
        %v8086 = vpack.c.b16 %v7761, %v7761
        %v8087 = vpack.c.b16 %v7762, %v7762
        %v8088 = vpack.c.b16 %v7763, %v7763
        %v8089 = vpack.c.b16 %v7764, %v7764
        %v8090 = vpack.c.b16 %v7765, %v7765
        %v8091 = vpack.c.b16 %v7766, %v7766
        %v8092 = vpack.c.b16 %v7767, %v7767
        %v8093 = vpack.c.b16 %v7768, %v7768
        %v8094 = vpack.c.b16 %v7769, %v7769
        %v8095 = vpack.c.b16 %v7770, %v7770
        %v8096 = vpack.c.b16 %v7771, %v7771
        %v8097 = vpack.c.b16 %v7772, %v7772
        %v8098 = vpack.c.b16 %v7773, %v7773
        %vm8399 = vcmask 556032
        %v8401 = vsel %vm8399, %v6494, 0
        %v8404 = vsel %vm8399, %v6496, 0
        %v8407 = vsel %vm8399, %v6498, 0
        %vm8409 = vcmask 1041408
        %v8411 = vsel %vm8409, %v8074, 0
        %v8414 = vsel %vm8409, %v8075, 0
        %v8417 = vsel %vm8409, %v8076, 0
        %v8420 = vsel %vm8409, %v8077, 0
        %v8423 = vsel %vm8409, %v8078, 0
        %v8426 = vsel %vm8409, %v8079, 0
        %v8429 = vsel %vm8409, %v8080, 0
        %v8432 = vsel %vm8409, %v8081, 0
        %v8435 = vsel %vm8409, %v8082, 0
        %v8438 = vsel %vm8409, %v8083, 0
        %v8441 = vsel %vm8409, %v8084, 0
        %v8444 = vsel %vm8409, %v8085, 0
        %v8447 = vsel %vm8409, %v8086, 0
        %v8450 = vsel %vm8409, %v8087, 0
        %v8453 = vsel %vm8409, %v8088, 0
        %v8456 = vsel %vm8409, %v8089, 0
        %v8459 = vsel %vm8409, %v8090, 0
        %v8462 = vsel %vm8409, %v8091, 0
        %v8465 = vsel %vm8409, %v8092, 0
        %v8468 = vsel %vm8409, %v8093, 0
        %v8471 = vsel %vm8409, %v8094, 0
        %v8474 = vsel %vm8409, %v8095, 0
        %v8477 = vsel %vm8409, %v8096, 0
        %v8480 = vsel %vm8409, %v8097, 0
        %v8483 = vsel %vm8409, %v8098, 0
        %8485 = vmatprep.subr.bf16.mxu0 %v7775
        %8486 = vmatpush1.bf16.msra.mxu0 %v7774
        %8487 = vmatprep.subr.bf16.mxu0 %v7800
        %8488 = vmatpush1.bf16.msra.mxu0 %v7799
        %8489 = vmatprep.subr.bf16.mxu0 %v7825
        %8490 = vmatpush1.bf16.msra.mxu0 %v7824
        %8491 = vmatprep.subr.bf16.mxu0 %v7850
        %8492 = vmatpush1.bf16.msra.mxu0 %v7849
        %8493 = vmatprep.subr.bf16.mxu0 %v7875
        %8494 = vmatpush1.bf16.msra.mxu0 %v7874
        %8495 = vmatprep.subr.bf16.mxu0 %v7900
        %8496 = vmatpush1.bf16.msra.mxu0 %v7899
        %8497 = vmatprep.subr.bf16.mxu0 %v7925
        %8498 = vmatpush1.bf16.msra.mxu0 %v7924
        %8499 = vmatprep.subr.bf16.mxu0 %v7950
        %8500 = vmatpush1.bf16.msra.mxu0 %v7949
        %8501 = vmatprep.subr.bf16.mxu0 %v7975
        %8502 = vmatpush1.bf16.msra.mxu0 %v7974
        %8503 = vmatprep.subr.bf16.mxu0 %v8000
        %8504 = vmatpush1.bf16.msra.mxu0 %v7999
        %8505 = vmatprep.subr.bf16.mxu0 %v8025
        %8506 = vmatpush1.bf16.msra.mxu0 %v8024
        %8507 = vmatprep.subr.bf16.mxu0 %v8050
        %8508 = vmatpush1.bf16.msra.mxu0 %v8049
        %8509 = vmatprep.subr.bf16.mxu0 %v8414
        %8510 = vmatpush1.bf16.msra.mxu0 %v8411
        %8511 = vmatprep.subr.bf16.mxu0 0
        %8512 = vmatpush1.bf16.msra.mxu0 0
        %8513 = vmatprep.subr.bf16.mxu0 0
        %8514 = vmatpush1.bf16.msra.mxu0 0
        %8515 = vmatprep.subr.bf16.mxu0 0
        %8516 = vmatpush1.bf16.msra.mxu0 0
        %8517 = vmatprep.mubr.bf16.mxu0 %v8401
        %8518 = vmatmul.mubr.bf16.gmra.mrb[0].mxu0 %v6493
        %v8519 = vpop.f32.mrb[0].mxu0
        %v8520 = vadd.f32 0.0, %v8519
        %v8521 = vpop.f32.mrb[0].mxu0
        %v8522 = vadd.f32 0.0, %v8521
        %v8523 = vpop.f32.mrb[0].mxu0
        %v8524 = vadd.f32 0.0, %v8523
        %v8525 = vpop.f32.mrb[0].mxu0
        %v8526 = vadd.f32 0.0, %v8525
        %8527 = vmatprep.mubr.bf16.mxu0 %v8404
        %8528 = vmatmul.mubr.bf16.gmra.mrb[0].mxu0 %v6495
        %v8529 = vpop.f32.mrb[0].mxu0
        %v8530 = vadd.f32 0.0, %v8529
        %v8531 = vpop.f32.mrb[0].mxu0
        %v8532 = vadd.f32 0.0, %v8531
        %v8533 = vpop.f32.mrb[0].mxu0
        %v8534 = vadd.f32 0.0, %v8533
        %v8535 = vpop.f32.mrb[0].mxu0
        %v8536 = vadd.f32 0.0, %v8535
        %8537 = vmatprep.mubr.bf16.mxu0 %v8407
        %8538 = vmatmul.mubr.bf16.gmra.mrb[0].mxu0 %v6497
        %v8539 = vpop.f32.mrb[0].mxu0
        %v8540 = vadd.f32 0.0, %v8539
        %v8541 = vpop.f32.mrb[0].mxu0
        %v8542 = vadd.f32 0.0, %v8541
        %v8543 = vpop.f32.mrb[0].mxu0
        %v8544 = vadd.f32 0.0, %v8543
        %v8545 = vpop.f32.mrb[0].mxu0
        %v8546 = vadd.f32 0.0, %v8545
        %8547 = vdwg.mxu0
        %8548 = vmatprep.subr.bf16.mxu0 %v7777
        %8549 = vmatpush1.bf16.msra.mxu0 %v7776
        %8550 = vmatprep.subr.bf16.mxu0 %v7802
        %8551 = vmatpush1.bf16.msra.mxu0 %v7801
        %8552 = vmatprep.subr.bf16.mxu0 %v7827
        %8553 = vmatpush1.bf16.msra.mxu0 %v7826
        %8554 = vmatprep.subr.bf16.mxu0 %v7852
        %8555 = vmatpush1.bf16.msra.mxu0 %v7851
        %8556 = vmatprep.subr.bf16.mxu0 %v7877
        %8557 = vmatpush1.bf16.msra.mxu0 %v7876
        %8558 = vmatprep.subr.bf16.mxu0 %v7902
        %8559 = vmatpush1.bf16.msra.mxu0 %v7901
        %8560 = vmatprep.subr.bf16.mxu0 %v7927
        %8561 = vmatpush1.bf16.msra.mxu0 %v7926
        %8562 = vmatprep.subr.bf16.mxu0 %v7952
        %8563 = vmatpush1.bf16.msra.mxu0 %v7951
        %8564 = vmatprep.subr.bf16.mxu0 %v7977
        %8565 = vmatpush1.bf16.msra.mxu0 %v7976
        %8566 = vmatprep.subr.bf16.mxu0 %v8002
        %8567 = vmatpush1.bf16.msra.mxu0 %v8001
        %8568 = vmatprep.subr.bf16.mxu0 %v8027
        %8569 = vmatpush1.bf16.msra.mxu0 %v8026
        %8570 = vmatprep.subr.bf16.mxu0 %v8052
        %8571 = vmatpush1.bf16.msra.mxu0 %v8051
        %8572 = vmatprep.subr.bf16.mxu0 %v8420
        %8573 = vmatpush1.bf16.msra.mxu0 %v8417
        %8574 = vmatprep.subr.bf16.mxu0 0
        %8575 = vmatpush1.bf16.msra.mxu0 0
        %8576 = vmatprep.subr.bf16.mxu0 0
        %8577 = vmatpush1.bf16.msra.mxu0 0
        %8578 = vmatprep.subr.bf16.mxu0 0
        %8579 = vmatpush1.bf16.msra.mxu0 0
        %8580 = vmatprep.mubr.bf16.mxu0 %v8401
        %8581 = vmatmul.mubr.bf16.gmra.mrb[0].mxu0 %v6493
        %v8582 = vpop.f32.mrb[0].mxu0
        %v8583 = vadd.f32 0.0, %v8582
        %v8584 = vpop.f32.mrb[0].mxu0
        %v8585 = vadd.f32 0.0, %v8584
        %v8586 = vpop.f32.mrb[0].mxu0
        %v8587 = vadd.f32 0.0, %v8586
        %v8588 = vpop.f32.mrb[0].mxu0
        %v8589 = vadd.f32 0.0, %v8588
        %8590 = vmatprep.mubr.bf16.mxu0 %v8404
        %8591 = vmatmul.mubr.bf16.gmra.mrb[0].mxu0 %v6495
        %v8592 = vpop.f32.mrb[0].mxu0
        %v8593 = vadd.f32 0.0, %v8592
        %v8594 = vpop.f32.mrb[0].mxu0
        %v8595 = vadd.f32 0.0, %v8594
        %v8596 = vpop.f32.mrb[0].mxu0
        %v8597 = vadd.f32 0.0, %v8596
        %v8598 = vpop.f32.mrb[0].mxu0
        %v8599 = vadd.f32 0.0, %v8598
        %8600 = vmatprep.mubr.bf16.mxu0 %v8407
        %8601 = vmatmul.mubr.bf16.gmra.mrb[0].mxu0 %v6497
        %v8602 = vpop.f32.mrb[0].mxu0
        %v8603 = vadd.f32 0.0, %v8602
        %v8604 = vpop.f32.mrb[0].mxu0
        %v8605 = vadd.f32 0.0, %v8604
        %v8606 = vpop.f32.mrb[0].mxu0
        %v8607 = vadd.f32 0.0, %v8606
        %v8608 = vpop.f32.mrb[0].mxu0
        %v8609 = vadd.f32 0.0, %v8608
        %8610 = vdwg.mxu0
        %8611 = vmatprep.subr.bf16.mxu0 %v7779
        %8612 = vmatpush1.bf16.msra.mxu0 %v7778
        %8613 = vmatprep.subr.bf16.mxu0 %v7804
        %8614 = vmatpush1.bf16.msra.mxu0 %v7803
        %8615 = vmatprep.subr.bf16.mxu0 %v7829
        %8616 = vmatpush1.bf16.msra.mxu0 %v7828
        %8617 = vmatprep.subr.bf16.mxu0 %v7854
        %8618 = vmatpush1.bf16.msra.mxu0 %v7853
        %8619 = vmatprep.subr.bf16.mxu0 %v7879
        %8620 = vmatpush1.bf16.msra.mxu0 %v7878
        %8621 = vmatprep.subr.bf16.mxu0 %v7904
        %8622 = vmatpush1.bf16.msra.mxu0 %v7903
        %8623 = vmatprep.subr.bf16.mxu0 %v7929
        %8624 = vmatpush1.bf16.msra.mxu0 %v7928
        %8625 = vmatprep.subr.bf16.mxu0 %v7954
        %8626 = vmatpush1.bf16.msra.mxu0 %v7953
        %8627 = vmatprep.subr.bf16.mxu0 %v7979
        %8628 = vmatpush1.bf16.msra.mxu0 %v7978
        %8629 = vmatprep.subr.bf16.mxu0 %v8004
        %8630 = vmatpush1.bf16.msra.mxu0 %v8003
        %8631 = vmatprep.subr.bf16.mxu0 %v8029
        %8632 = vmatpush1.bf16.msra.mxu0 %v8028
        %8633 = vmatprep.subr.bf16.mxu0 %v8054
        %8634 = vmatpush1.bf16.msra.mxu0 %v8053
        %8635 = vmatprep.subr.bf16.mxu0 %v8426
        %8636 = vmatpush1.bf16.msra.mxu0 %v8423
        %8637 = vmatprep.subr.bf16.mxu0 0
        %8638 = vmatpush1.bf16.msra.mxu0 0
        %8639 = vmatprep.subr.bf16.mxu0 0
        %8640 = vmatpush1.bf16.msra.mxu0 0
        %8641 = vmatprep.subr.bf16.mxu0 0
        %8642 = vmatpush1.bf16.msra.mxu0 0
        %8643 = vmatprep.mubr.bf16.mxu0 %v8401
        %8644 = vmatmul.mubr.bf16.gmra.mrb[0].mxu0 %v6493
        %v8645 = vpop.f32.mrb[0].mxu0
        %v8646 = vadd.f32 0.0, %v8645
        %v8647 = vpop.f32.mrb[0].mxu0
        %v8648 = vadd.f32 0.0, %v8647
        %v8649 = vpop.f32.mrb[0].mxu0
        %v8650 = vadd.f32 0.0, %v8649
        %v8651 = vpop.f32.mrb[0].mxu0
        %v8652 = vadd.f32 0.0, %v8651
        %8653 = vmatprep.mubr.bf16.mxu0 %v8404
        %8654 = vmatmul.mubr.bf16.gmra.mrb[0].mxu0 %v6495
        %v8655 = vpop.f32.mrb[0].mxu0
        %v8656 = vadd.f32 0.0, %v8655
        %v8657 = vpop.f32.mrb[0].mxu0
        %v8658 = vadd.f32 0.0, %v8657
        %v8659 = vpop.f32.mrb[0].mxu0
        %v8660 = vadd.f32 0.0, %v8659
        %v8661 = vpop.f32.mrb[0].mxu0
        %v8662 = vadd.f32 0.0, %v8661
        %8663 = vmatprep.mubr.bf16.mxu0 %v8407
        %8664 = vmatmul.mubr.bf16.gmra.mrb[0].mxu0 %v6497
        %v8665 = vpop.f32.mrb[0].mxu0
        %v8666 = vadd.f32 0.0, %v8665
        %v8667 = vpop.f32.mrb[0].mxu0
        %v8668 = vadd.f32 0.0, %v8667
        %v8669 = vpop.f32.mrb[0].mxu0
        %v8670 = vadd.f32 0.0, %v8669
        %v8671 = vpop.f32.mrb[0].mxu0
        %v8672 = vadd.f32 0.0, %v8671
        %8673 = vdwg.mxu0
        %8674 = vmatprep.subr.bf16.mxu0 %v7781
        %8675 = vmatpush1.bf16.msra.mxu0 %v7780
        %8676 = vmatprep.subr.bf16.mxu0 %v7806
        %8677 = vmatpush1.bf16.msra.mxu0 %v7805
        %8678 = vmatprep.subr.bf16.mxu0 %v7831
        %8679 = vmatpush1.bf16.msra.mxu0 %v7830
        %8680 = vmatprep.subr.bf16.mxu0 %v7856
        %8681 = vmatpush1.bf16.msra.mxu0 %v7855
        %8682 = vmatprep.subr.bf16.mxu0 %v7881
        %8683 = vmatpush1.bf16.msra.mxu0 %v7880
        %8684 = vmatprep.subr.bf16.mxu0 %v7906
        %8685 = vmatpush1.bf16.msra.mxu0 %v7905
        %8686 = vmatprep.subr.bf16.mxu0 %v7931
        %8687 = vmatpush1.bf16.msra.mxu0 %v7930
        %8688 = vmatprep.subr.bf16.mxu0 %v7956
        %8689 = vmatpush1.bf16.msra.mxu0 %v7955
        %8690 = vmatprep.subr.bf16.mxu0 %v7981
        %8691 = vmatpush1.bf16.msra.mxu0 %v7980
        %8692 = vmatprep.subr.bf16.mxu0 %v8006
        %8693 = vmatpush1.bf16.msra.mxu0 %v8005
        %8694 = vmatprep.subr.bf16.mxu0 %v8031
        %8695 = vmatpush1.bf16.msra.mxu0 %v8030
        %8696 = vmatprep.subr.bf16.mxu0 %v8056
        %8697 = vmatpush1.bf16.msra.mxu0 %v8055
        %8698 = vmatprep.subr.bf16.mxu0 %v8432
        %8699 = vmatpush1.bf16.msra.mxu0 %v8429
        %8700 = vmatprep.subr.bf16.mxu0 0
        %8701 = vmatpush1.bf16.msra.mxu0 0
        %8702 = vmatprep.subr.bf16.mxu0 0
        %8703 = vmatpush1.bf16.msra.mxu0 0
        %8704 = vmatprep.subr.bf16.mxu0 0
        %8705 = vmatpush1.bf16.msra.mxu0 0
        %8706 = vmatprep.mubr.bf16.mxu0 %v8401
        %8707 = vmatmul.mubr.bf16.gmra.mrb[0].mxu0 %v6493
        %v8708 = vpop.f32.mrb[0].mxu0
        %v8709 = vadd.f32 0.0, %v8708
        %v8710 = vpop.f32.mrb[0].mxu0
        %v8711 = vadd.f32 0.0, %v8710
        %v8712 = vpop.f32.mrb[0].mxu0
        %v8713 = vadd.f32 0.0, %v8712
        %v8714 = vpop.f32.mrb[0].mxu0
        %v8715 = vadd.f32 0.0, %v8714
        %8716 = vmatprep.mubr.bf16.mxu0 %v8404
        %8717 = vmatmul.mubr.bf16.gmra.mrb[0].mxu0 %v6495
        %v8718 = vpop.f32.mrb[0].mxu0
        %v8719 = vadd.f32 0.0, %v8718
        %v8720 = vpop.f32.mrb[0].mxu0
        %v8721 = vadd.f32 0.0, %v8720
        %v8722 = vpop.f32.mrb[0].mxu0
        %v8723 = vadd.f32 0.0, %v8722
        %v8724 = vpop.f32.mrb[0].mxu0
        %v8725 = vadd.f32 0.0, %v8724
        %8726 = vmatprep.mubr.bf16.mxu0 %v8407
        %8727 = vmatmul.mubr.bf16.gmra.mrb[0].mxu0 %v6497
        %v8728 = vpop.f32.mrb[0].mxu0
        %v8729 = vadd.f32 0.0, %v8728
        %v8730 = vpop.f32.mrb[0].mxu0
        %v8731 = vadd.f32 0.0, %v8730
        %v8732 = vpop.f32.mrb[0].mxu0
        %v8733 = vadd.f32 0.0, %v8732
        %v8734 = vpop.f32.mrb[0].mxu0
        %v8735 = vadd.f32 0.0, %v8734
        %8736 = vdwg.mxu0
        %8737 = vmatprep.subr.bf16.mxu0 %v7783
        %8738 = vmatpush1.bf16.msra.mxu0 %v7782
        %8739 = vmatprep.subr.bf16.mxu0 %v7808
        %8740 = vmatpush1.bf16.msra.mxu0 %v7807
        %8741 = vmatprep.subr.bf16.mxu0 %v7833
        %8742 = vmatpush1.bf16.msra.mxu0 %v7832
        %8743 = vmatprep.subr.bf16.mxu0 %v7858
        %8744 = vmatpush1.bf16.msra.mxu0 %v7857
        %8745 = vmatprep.subr.bf16.mxu0 %v7883
        %8746 = vmatpush1.bf16.msra.mxu0 %v7882
        %8747 = vmatprep.subr.bf16.mxu0 %v7908
        %8748 = vmatpush1.bf16.msra.mxu0 %v7907
        %8749 = vmatprep.subr.bf16.mxu0 %v7933
        %8750 = vmatpush1.bf16.msra.mxu0 %v7932
        %8751 = vmatprep.subr.bf16.mxu0 %v7958
        %8752 = vmatpush1.bf16.msra.mxu0 %v7957
        %8753 = vmatprep.subr.bf16.mxu0 %v7983
        %8754 = vmatpush1.bf16.msra.mxu0 %v7982
        %8755 = vmatprep.subr.bf16.mxu0 %v8008
        %8756 = vmatpush1.bf16.msra.mxu0 %v8007
        %8757 = vmatprep.subr.bf16.mxu0 %v8033
        %8758 = vmatpush1.bf16.msra.mxu0 %v8032
        %8759 = vmatprep.subr.bf16.mxu0 %v8058
        %8760 = vmatpush1.bf16.msra.mxu0 %v8057
        %8761 = vmatprep.subr.bf16.mxu0 %v8438
        %8762 = vmatpush1.bf16.msra.mxu0 %v8435
        %8763 = vmatprep.subr.bf16.mxu0 0
        %8764 = vmatpush1.bf16.msra.mxu0 0
        %8765 = vmatprep.subr.bf16.mxu0 0
        %8766 = vmatpush1.bf16.msra.mxu0 0
        %8767 = vmatprep.subr.bf16.mxu0 0
        %8768 = vmatpush1.bf16.msra.mxu0 0
        %8769 = vmatprep.mubr.bf16.mxu0 %v8401
        %8770 = vmatmul.mubr.bf16.gmra.mrb[0].mxu0 %v6493
        %v8771 = vpop.f32.mrb[0].mxu0
        %v8772 = vadd.f32 0.0, %v8771
        %v8773 = vpop.f32.mrb[0].mxu0
        %v8774 = vadd.f32 0.0, %v8773
        %v8775 = vpop.f32.mrb[0].mxu0
        %v8776 = vadd.f32 0.0, %v8775
        %v8777 = vpop.f32.mrb[0].mxu0
        %v8778 = vadd.f32 0.0, %v8777
        %8779 = vmatprep.mubr.bf16.mxu0 %v8404
        %8780 = vmatmul.mubr.bf16.gmra.mrb[0].mxu0 %v6495
        %v8781 = vpop.f32.mrb[0].mxu0
        %v8782 = vadd.f32 0.0, %v8781
        %v8783 = vpop.f32.mrb[0].mxu0
        %v8784 = vadd.f32 0.0, %v8783
        %v8785 = vpop.f32.mrb[0].mxu0
        %v8786 = vadd.f32 0.0, %v8785
        %v8787 = vpop.f32.mrb[0].mxu0
        %v8788 = vadd.f32 0.0, %v8787
        %8789 = vmatprep.mubr.bf16.mxu0 %v8407
        %8790 = vmatmul.mubr.bf16.gmra.mrb[0].mxu0 %v6497
        %v8791 = vpop.f32.mrb[0].mxu0
        %v8792 = vadd.f32 0.0, %v8791
        %v8793 = vpop.f32.mrb[0].mxu0
        %v8794 = vadd.f32 0.0, %v8793
        %v8795 = vpop.f32.mrb[0].mxu0
        %v8796 = vadd.f32 0.0, %v8795
        %v8797 = vpop.f32.mrb[0].mxu0
        %v8798 = vadd.f32 0.0, %v8797
        %8799 = vdwg.mxu0
        %8800 = vmatprep.subr.bf16.mxu0 %v7785
        %8801 = vmatpush1.bf16.msra.mxu0 %v7784
        %8802 = vmatprep.subr.bf16.mxu0 %v7810
        %8803 = vmatpush1.bf16.msra.mxu0 %v7809
        %8804 = vmatprep.subr.bf16.mxu0 %v7835
        %8805 = vmatpush1.bf16.msra.mxu0 %v7834
        %8806 = vmatprep.subr.bf16.mxu0 %v7860
        %8807 = vmatpush1.bf16.msra.mxu0 %v7859
        %8808 = vmatprep.subr.bf16.mxu0 %v7885
        %8809 = vmatpush1.bf16.msra.mxu0 %v7884
        %8810 = vmatprep.subr.bf16.mxu0 %v7910
        %8811 = vmatpush1.bf16.msra.mxu0 %v7909
        %8812 = vmatprep.subr.bf16.mxu0 %v7935
        %8813 = vmatpush1.bf16.msra.mxu0 %v7934
        %8814 = vmatprep.subr.bf16.mxu0 %v7960
        %8815 = vmatpush1.bf16.msra.mxu0 %v7959
        %8816 = vmatprep.subr.bf16.mxu0 %v7985
        %8817 = vmatpush1.bf16.msra.mxu0 %v7984
        %8818 = vmatprep.subr.bf16.mxu0 %v8010
        %8819 = vmatpush1.bf16.msra.mxu0 %v8009
        %8820 = vmatprep.subr.bf16.mxu0 %v8035
        %8821 = vmatpush1.bf16.msra.mxu0 %v8034
        %8822 = vmatprep.subr.bf16.mxu0 %v8060
        %8823 = vmatpush1.bf16.msra.mxu0 %v8059
        %8824 = vmatprep.subr.bf16.mxu0 %v8444
        %8825 = vmatpush1.bf16.msra.mxu0 %v8441
        %8826 = vmatprep.subr.bf16.mxu0 0
        %8827 = vmatpush1.bf16.msra.mxu0 0
        %8828 = vmatprep.subr.bf16.mxu0 0
        %8829 = vmatpush1.bf16.msra.mxu0 0
        %8830 = vmatprep.subr.bf16.mxu0 0
        %8831 = vmatpush1.bf16.msra.mxu0 0
        %8832 = vmatprep.mubr.bf16.mxu0 %v8401
        %8833 = vmatmul.mubr.bf16.gmra.mrb[0].mxu0 %v6493
        %v8834 = vpop.f32.mrb[0].mxu0
        %v8835 = vadd.f32 0.0, %v8834
        %v8836 = vpop.f32.mrb[0].mxu0
        %v8837 = vadd.f32 0.0, %v8836
        %v8838 = vpop.f32.mrb[0].mxu0
        %v8839 = vadd.f32 0.0, %v8838
        %v8840 = vpop.f32.mrb[0].mxu0
        %v8841 = vadd.f32 0.0, %v8840
        %8842 = vmatprep.mubr.bf16.mxu0 %v8404
        %8843 = vmatmul.mubr.bf16.gmra.mrb[0].mxu0 %v6495
        %v8844 = vpop.f32.mrb[0].mxu0
        %v8845 = vadd.f32 0.0, %v8844
        %v8846 = vpop.f32.mrb[0].mxu0
        %v8847 = vadd.f32 0.0, %v8846
        %v8848 = vpop.f32.mrb[0].mxu0
        %v8849 = vadd.f32 0.0, %v8848
        %v8850 = vpop.f32.mrb[0].mxu0
        %v8851 = vadd.f32 0.0, %v8850
        %8852 = vmatprep.mubr.bf16.mxu0 %v8407
        %8853 = vmatmul.mubr.bf16.gmra.mrb[0].mxu0 %v6497
        %v8854 = vpop.f32.mrb[0].mxu0
        %v8855 = vadd.f32 0.0, %v8854
        %v8856 = vpop.f32.mrb[0].mxu0
        %v8857 = vadd.f32 0.0, %v8856
        %v8858 = vpop.f32.mrb[0].mxu0
        %v8859 = vadd.f32 0.0, %v8858
        %v8860 = vpop.f32.mrb[0].mxu0
        %v8861 = vadd.f32 0.0, %v8860
        %8862 = vdwg.mxu0
        %8863 = vmatprep.subr.bf16.mxu0 %v7787
        %8864 = vmatpush1.bf16.msra.mxu0 %v7786
        %8865 = vmatprep.subr.bf16.mxu0 %v7812
        %8866 = vmatpush1.bf16.msra.mxu0 %v7811
        %8867 = vmatprep.subr.bf16.mxu0 %v7837
        %8868 = vmatpush1.bf16.msra.mxu0 %v7836
        %8869 = vmatprep.subr.bf16.mxu0 %v7862
        %8870 = vmatpush1.bf16.msra.mxu0 %v7861
        %8871 = vmatprep.subr.bf16.mxu0 %v7887
        %8872 = vmatpush1.bf16.msra.mxu0 %v7886
        %8873 = vmatprep.subr.bf16.mxu0 %v7912
        %8874 = vmatpush1.bf16.msra.mxu0 %v7911
        %8875 = vmatprep.subr.bf16.mxu0 %v7937
        %8876 = vmatpush1.bf16.msra.mxu0 %v7936
        %8877 = vmatprep.subr.bf16.mxu0 %v7962
        %8878 = vmatpush1.bf16.msra.mxu0 %v7961
        %8879 = vmatprep.subr.bf16.mxu0 %v7987
        %8880 = vmatpush1.bf16.msra.mxu0 %v7986
        %8881 = vmatprep.subr.bf16.mxu0 %v8012
        %8882 = vmatpush1.bf16.msra.mxu0 %v8011
        %8883 = vmatprep.subr.bf16.mxu0 %v8037
        %8884 = vmatpush1.bf16.msra.mxu0 %v8036
        %8885 = vmatprep.subr.bf16.mxu0 %v8062
        %8886 = vmatpush1.bf16.msra.mxu0 %v8061
        %8887 = vmatprep.subr.bf16.mxu0 %v8450
        %8888 = vmatpush1.bf16.msra.mxu0 %v8447
        %8889 = vmatprep.subr.bf16.mxu0 0
        %8890 = vmatpush1.bf16.msra.mxu0 0
        %8891 = vmatprep.subr.bf16.mxu0 0
        %8892 = vmatpush1.bf16.msra.mxu0 0
        %8893 = vmatprep.subr.bf16.mxu0 0
        %8894 = vmatpush1.bf16.msra.mxu0 0
        %8895 = vmatprep.mubr.bf16.mxu0 %v8401
        %8896 = vmatmul.mubr.bf16.gmra.mrb[0].mxu0 %v6493
        %v8897 = vpop.f32.mrb[0].mxu0
        %v8898 = vadd.f32 0.0, %v8897
        %v8899 = vpop.f32.mrb[0].mxu0
        %v8900 = vadd.f32 0.0, %v8899
        %v8901 = vpop.f32.mrb[0].mxu0
        %v8902 = vadd.f32 0.0, %v8901
        %v8903 = vpop.f32.mrb[0].mxu0
        %v8904 = vadd.f32 0.0, %v8903
        %8905 = vmatprep.mubr.bf16.mxu0 %v8404
        %8906 = vmatmul.mubr.bf16.gmra.mrb[0].mxu0 %v6495
        %v8907 = vpop.f32.mrb[0].mxu0
        %v8908 = vadd.f32 0.0, %v8907
        %v8909 = vpop.f32.mrb[0].mxu0
        %v8910 = vadd.f32 0.0, %v8909
        %v8911 = vpop.f32.mrb[0].mxu0
        %v8912 = vadd.f32 0.0, %v8911
        %v8913 = vpop.f32.mrb[0].mxu0
        %v8914 = vadd.f32 0.0, %v8913
        %8915 = vmatprep.mubr.bf16.mxu0 %v8407
        %8916 = vmatmul.mubr.bf16.gmra.mrb[0].mxu0 %v6497
        %v8917 = vpop.f32.mrb[0].mxu0
        %v8918 = vadd.f32 0.0, %v8917
        %v8919 = vpop.f32.mrb[0].mxu0
        %v8920 = vadd.f32 0.0, %v8919
        %v8921 = vpop.f32.mrb[0].mxu0
        %v8922 = vadd.f32 0.0, %v8921
        %v8923 = vpop.f32.mrb[0].mxu0
        %v8924 = vadd.f32 0.0, %v8923
        %8925 = vdwg.mxu0
        %8926 = vmatprep.subr.bf16.mxu0 %v7789
        %8927 = vmatpush1.bf16.msra.mxu0 %v7788
        %8928 = vmatprep.subr.bf16.mxu0 %v7814
        %8929 = vmatpush1.bf16.msra.mxu0 %v7813
        %8930 = vmatprep.subr.bf16.mxu0 %v7839
        %8931 = vmatpush1.bf16.msra.mxu0 %v7838
        %8932 = vmatprep.subr.bf16.mxu0 %v7864
        %8933 = vmatpush1.bf16.msra.mxu0 %v7863
        %8934 = vmatprep.subr.bf16.mxu0 %v7889
        %8935 = vmatpush1.bf16.msra.mxu0 %v7888
        %8936 = vmatprep.subr.bf16.mxu0 %v7914
        %8937 = vmatpush1.bf16.msra.mxu0 %v7913
        %8938 = vmatprep.subr.bf16.mxu0 %v7939
        %8939 = vmatpush1.bf16.msra.mxu0 %v7938
        %8940 = vmatprep.subr.bf16.mxu0 %v7964
        %8941 = vmatpush1.bf16.msra.mxu0 %v7963
        %8942 = vmatprep.subr.bf16.mxu0 %v7989
        %8943 = vmatpush1.bf16.msra.mxu0 %v7988
        %8944 = vmatprep.subr.bf16.mxu0 %v8014
        %8945 = vmatpush1.bf16.msra.mxu0 %v8013
        %8946 = vmatprep.subr.bf16.mxu0 %v8039
        %8947 = vmatpush1.bf16.msra.mxu0 %v8038
        %8948 = vmatprep.subr.bf16.mxu0 %v8064
        %8949 = vmatpush1.bf16.msra.mxu0 %v8063
        %8950 = vmatprep.subr.bf16.mxu0 %v8456
        %8951 = vmatpush1.bf16.msra.mxu0 %v8453
        %8952 = vmatprep.subr.bf16.mxu0 0
        %8953 = vmatpush1.bf16.msra.mxu0 0
        %8954 = vmatprep.subr.bf16.mxu0 0
        %8955 = vmatpush1.bf16.msra.mxu0 0
        %8956 = vmatprep.subr.bf16.mxu0 0
        %8957 = vmatpush1.bf16.msra.mxu0 0
        %8958 = vmatprep.mubr.bf16.mxu0 %v8401
        %8959 = vmatmul.mubr.bf16.gmra.mrb[0].mxu0 %v6493
        %v8960 = vpop.f32.mrb[0].mxu0
        %v8961 = vadd.f32 0.0, %v8960
        %v8962 = vpop.f32.mrb[0].mxu0
        %v8963 = vadd.f32 0.0, %v8962
        %v8964 = vpop.f32.mrb[0].mxu0
        %v8965 = vadd.f32 0.0, %v8964
        %v8966 = vpop.f32.mrb[0].mxu0
        %v8967 = vadd.f32 0.0, %v8966
        %8968 = vmatprep.mubr.bf16.mxu0 %v8404
        %8969 = vmatmul.mubr.bf16.gmra.mrb[0].mxu0 %v6495
        %v8970 = vpop.f32.mrb[0].mxu0
        %v8971 = vadd.f32 0.0, %v8970
        %v8972 = vpop.f32.mrb[0].mxu0
        %v8973 = vadd.f32 0.0, %v8972
        %v8974 = vpop.f32.mrb[0].mxu0
        %v8975 = vadd.f32 0.0, %v8974
        %v8976 = vpop.f32.mrb[0].mxu0
        %v8977 = vadd.f32 0.0, %v8976
        %8978 = vmatprep.mubr.bf16.mxu0 %v8407
        %8979 = vmatmul.mubr.bf16.gmra.mrb[0].mxu0 %v6497
        %v8980 = vpop.f32.mrb[0].mxu0
        %v8981 = vadd.f32 0.0, %v8980
        %v8982 = vpop.f32.mrb[0].mxu0
        %v8983 = vadd.f32 0.0, %v8982
        %v8984 = vpop.f32.mrb[0].mxu0
        %v8985 = vadd.f32 0.0, %v8984
        %v8986 = vpop.f32.mrb[0].mxu0
        %v8987 = vadd.f32 0.0, %v8986
        %8988 = vdwg.mxu0
        %8989 = vmatprep.subr.bf16.mxu0 %v7791
        %8990 = vmatpush1.bf16.msra.mxu0 %v7790
        %8991 = vmatprep.subr.bf16.mxu0 %v7816
        %8992 = vmatpush1.bf16.msra.mxu0 %v7815
        %8993 = vmatprep.subr.bf16.mxu0 %v7841
        %8994 = vmatpush1.bf16.msra.mxu0 %v7840
        %8995 = vmatprep.subr.bf16.mxu0 %v7866
        %8996 = vmatpush1.bf16.msra.mxu0 %v7865
        %8997 = vmatprep.subr.bf16.mxu0 %v7891
        %8998 = vmatpush1.bf16.msra.mxu0 %v7890
        %8999 = vmatprep.subr.bf16.mxu0 %v7916
        %9000 = vmatpush1.bf16.msra.mxu0 %v7915
        %9001 = vmatprep.subr.bf16.mxu0 %v7941
        %9002 = vmatpush1.bf16.msra.mxu0 %v7940
        %9003 = vmatprep.subr.bf16.mxu0 %v7966
        %9004 = vmatpush1.bf16.msra.mxu0 %v7965
        %9005 = vmatprep.subr.bf16.mxu0 %v7991
        %9006 = vmatpush1.bf16.msra.mxu0 %v7990
        %9007 = vmatprep.subr.bf16.mxu0 %v8016
        %9008 = vmatpush1.bf16.msra.mxu0 %v8015
        %9009 = vmatprep.subr.bf16.mxu0 %v8041
        %9010 = vmatpush1.bf16.msra.mxu0 %v8040
        %9011 = vmatprep.subr.bf16.mxu0 %v8066
        %9012 = vmatpush1.bf16.msra.mxu0 %v8065
        %9013 = vmatprep.subr.bf16.mxu0 %v8462
        %9014 = vmatpush1.bf16.msra.mxu0 %v8459
        %9015 = vmatprep.subr.bf16.mxu0 0
        %9016 = vmatpush1.bf16.msra.mxu0 0
        %9017 = vmatprep.subr.bf16.mxu0 0
        %9018 = vmatpush1.bf16.msra.mxu0 0
        %9019 = vmatprep.subr.bf16.mxu0 0
        %9020 = vmatpush1.bf16.msra.mxu0 0
        %9021 = vmatprep.mubr.bf16.mxu0 %v8401
        %9022 = vmatmul.mubr.bf16.gmra.mrb[0].mxu0 %v6493
        %v9023 = vpop.f32.mrb[0].mxu0
        %v9024 = vadd.f32 0.0, %v9023
        %v9025 = vpop.f32.mrb[0].mxu0
        %v9026 = vadd.f32 0.0, %v9025
        %v9027 = vpop.f32.mrb[0].mxu0
        %v9028 = vadd.f32 0.0, %v9027
        %v9029 = vpop.f32.mrb[0].mxu0
        %v9030 = vadd.f32 0.0, %v9029
        %9031 = vmatprep.mubr.bf16.mxu0 %v8404
        %9032 = vmatmul.mubr.bf16.gmra.mrb[0].mxu0 %v6495
        %v9033 = vpop.f32.mrb[0].mxu0
        %v9034 = vadd.f32 0.0, %v9033
        %v9035 = vpop.f32.mrb[0].mxu0
        %v9036 = vadd.f32 0.0, %v9035
        %v9037 = vpop.f32.mrb[0].mxu0
        %v9038 = vadd.f32 0.0, %v9037
        %v9039 = vpop.f32.mrb[0].mxu0
        %v9040 = vadd.f32 0.0, %v9039
        %9041 = vmatprep.mubr.bf16.mxu0 %v8407
        %9042 = vmatmul.mubr.bf16.gmra.mrb[0].mxu0 %v6497
        %v9043 = vpop.f32.mrb[0].mxu0
        %v9044 = vadd.f32 0.0, %v9043
        %v9045 = vpop.f32.mrb[0].mxu0
        %v9046 = vadd.f32 0.0, %v9045
        %v9047 = vpop.f32.mrb[0].mxu0
        %v9048 = vadd.f32 0.0, %v9047
        %v9049 = vpop.f32.mrb[0].mxu0
        %v9050 = vadd.f32 0.0, %v9049
        %9051 = vdwg.mxu0
        %9052 = vmatprep.subr.bf16.mxu0 %v7793
        %9053 = vmatpush1.bf16.msra.mxu0 %v7792
        %9054 = vmatprep.subr.bf16.mxu0 %v7818
        %9055 = vmatpush1.bf16.msra.mxu0 %v7817
        %9056 = vmatprep.subr.bf16.mxu0 %v7843
        %9057 = vmatpush1.bf16.msra.mxu0 %v7842
        %9058 = vmatprep.subr.bf16.mxu0 %v7868
        %9059 = vmatpush1.bf16.msra.mxu0 %v7867
        %9060 = vmatprep.subr.bf16.mxu0 %v7893
        %9061 = vmatpush1.bf16.msra.mxu0 %v7892
        %9062 = vmatprep.subr.bf16.mxu0 %v7918
        %9063 = vmatpush1.bf16.msra.mxu0 %v7917
        %9064 = vmatprep.subr.bf16.mxu0 %v7943
        %9065 = vmatpush1.bf16.msra.mxu0 %v7942
        %9066 = vmatprep.subr.bf16.mxu0 %v7968
        %9067 = vmatpush1.bf16.msra.mxu0 %v7967
        %9068 = vmatprep.subr.bf16.mxu0 %v7993
        %9069 = vmatpush1.bf16.msra.mxu0 %v7992
        %9070 = vmatprep.subr.bf16.mxu0 %v8018
        %9071 = vmatpush1.bf16.msra.mxu0 %v8017
        %9072 = vmatprep.subr.bf16.mxu0 %v8043
        %9073 = vmatpush1.bf16.msra.mxu0 %v8042
        %9074 = vmatprep.subr.bf16.mxu0 %v8068
        %9075 = vmatpush1.bf16.msra.mxu0 %v8067
        %9076 = vmatprep.subr.bf16.mxu0 %v8468
        %9077 = vmatpush1.bf16.msra.mxu0 %v8465
        %9078 = vmatprep.subr.bf16.mxu0 0
        %9079 = vmatpush1.bf16.msra.mxu0 0
        %9080 = vmatprep.subr.bf16.mxu0 0
        %9081 = vmatpush1.bf16.msra.mxu0 0
        %9082 = vmatprep.subr.bf16.mxu0 0
        %9083 = vmatpush1.bf16.msra.mxu0 0
        %9084 = vmatprep.mubr.bf16.mxu0 %v8401
        %9085 = vmatmul.mubr.bf16.gmra.mrb[0].mxu0 %v6493
        %v9086 = vpop.f32.mrb[0].mxu0
        %v9087 = vadd.f32 0.0, %v9086
        %v9088 = vpop.f32.mrb[0].mxu0
        %v9089 = vadd.f32 0.0, %v9088
        %v9090 = vpop.f32.mrb[0].mxu0
        %v9091 = vadd.f32 0.0, %v9090
        %v9092 = vpop.f32.mrb[0].mxu0
        %v9093 = vadd.f32 0.0, %v9092
        %9094 = vmatprep.mubr.bf16.mxu0 %v8404
        %9095 = vmatmul.mubr.bf16.gmra.mrb[0].mxu0 %v6495
        %v9096 = vpop.f32.mrb[0].mxu0
        %v9097 = vadd.f32 0.0, %v9096
        %v9098 = vpop.f32.mrb[0].mxu0
        %v9099 = vadd.f32 0.0, %v9098
        %v9100 = vpop.f32.mrb[0].mxu0
        %v9101 = vadd.f32 0.0, %v9100
        %v9102 = vpop.f32.mrb[0].mxu0
        %v9103 = vadd.f32 0.0, %v9102
        %9104 = vmatprep.mubr.bf16.mxu0 %v8407
        %9105 = vmatmul.mubr.bf16.gmra.mrb[0].mxu0 %v6497
        %v9106 = vpop.f32.mrb[0].mxu0
        %v9107 = vadd.f32 0.0, %v9106
        %v9108 = vpop.f32.mrb[0].mxu0
        %v9109 = vadd.f32 0.0, %v9108
        %v9110 = vpop.f32.mrb[0].mxu0
        %v9111 = vadd.f32 0.0, %v9110
        %v9112 = vpop.f32.mrb[0].mxu0
        %v9113 = vadd.f32 0.0, %v9112
        %9114 = vdwg.mxu0
        %9115 = vmatprep.subr.bf16.mxu0 %v7795
        %9116 = vmatpush1.bf16.msra.mxu0 %v7794
        %9117 = vmatprep.subr.bf16.mxu0 %v7820
        %9118 = vmatpush1.bf16.msra.mxu0 %v7819
        %9119 = vmatprep.subr.bf16.mxu0 %v7845
        %9120 = vmatpush1.bf16.msra.mxu0 %v7844
        %9121 = vmatprep.subr.bf16.mxu0 %v7870
        %9122 = vmatpush1.bf16.msra.mxu0 %v7869
        %9123 = vmatprep.subr.bf16.mxu0 %v7895
        %9124 = vmatpush1.bf16.msra.mxu0 %v7894
        %9125 = vmatprep.subr.bf16.mxu0 %v7920
        %9126 = vmatpush1.bf16.msra.mxu0 %v7919
        %9127 = vmatprep.subr.bf16.mxu0 %v7945
        %9128 = vmatpush1.bf16.msra.mxu0 %v7944
        %9129 = vmatprep.subr.bf16.mxu0 %v7970
        %9130 = vmatpush1.bf16.msra.mxu0 %v7969
        %9131 = vmatprep.subr.bf16.mxu0 %v7995
        %9132 = vmatpush1.bf16.msra.mxu0 %v7994
        %9133 = vmatprep.subr.bf16.mxu0 %v8020
        %9134 = vmatpush1.bf16.msra.mxu0 %v8019
        %9135 = vmatprep.subr.bf16.mxu0 %v8045
        %9136 = vmatpush1.bf16.msra.mxu0 %v8044
        %9137 = vmatprep.subr.bf16.mxu0 %v8070
        %9138 = vmatpush1.bf16.msra.mxu0 %v8069
        %9139 = vmatprep.subr.bf16.mxu0 %v8474
        %9140 = vmatpush1.bf16.msra.mxu0 %v8471
        %9141 = vmatprep.subr.bf16.mxu0 0
        %9142 = vmatpush1.bf16.msra.mxu0 0
        %9143 = vmatprep.subr.bf16.mxu0 0
        %9144 = vmatpush1.bf16.msra.mxu0 0
        %9145 = vmatprep.subr.bf16.mxu0 0
        %9146 = vmatpush1.bf16.msra.mxu0 0
        %9147 = vmatprep.mubr.bf16.mxu0 %v8401
        %9148 = vmatmul.mubr.bf16.gmra.mrb[0].mxu0 %v6493
        %v9149 = vpop.f32.mrb[0].mxu0
        %v9150 = vadd.f32 0.0, %v9149
        %v9151 = vpop.f32.mrb[0].mxu0
        %v9152 = vadd.f32 0.0, %v9151
        %v9153 = vpop.f32.mrb[0].mxu0
        %v9154 = vadd.f32 0.0, %v9153
        %v9155 = vpop.f32.mrb[0].mxu0
        %v9156 = vadd.f32 0.0, %v9155
        %9157 = vmatprep.mubr.bf16.mxu0 %v8404
        %9158 = vmatmul.mubr.bf16.gmra.mrb[0].mxu0 %v6495
        %v9159 = vpop.f32.mrb[0].mxu0
        %v9160 = vadd.f32 0.0, %v9159
        %v9161 = vpop.f32.mrb[0].mxu0
        %v9162 = vadd.f32 0.0, %v9161
        %v9163 = vpop.f32.mrb[0].mxu0
        %v9164 = vadd.f32 0.0, %v9163
        %v9165 = vpop.f32.mrb[0].mxu0
        %v9166 = vadd.f32 0.0, %v9165
        %9167 = vmatprep.mubr.bf16.mxu0 %v8407
        %9168 = vmatmul.mubr.bf16.gmra.mrb[0].mxu0 %v6497
        %v9169 = vpop.f32.mrb[0].mxu0
        %v9170 = vadd.f32 0.0, %v9169
        %v9171 = vpop.f32.mrb[0].mxu0
        %v9172 = vadd.f32 0.0, %v9171
        %v9173 = vpop.f32.mrb[0].mxu0
        %v9174 = vadd.f32 0.0, %v9173
        %v9175 = vpop.f32.mrb[0].mxu0
        %v9176 = vadd.f32 0.0, %v9175
        %9177 = vdwg.mxu0
        %9178 = vmatprep.subr.bf16.mxu0 %v7797
        %9179 = vmatpush1.bf16.msra.mxu0 %v7796
        %9180 = vmatprep.subr.bf16.mxu0 %v7822
        %9181 = vmatpush1.bf16.msra.mxu0 %v7821
        %9182 = vmatprep.subr.bf16.mxu0 %v7847
        %9183 = vmatpush1.bf16.msra.mxu0 %v7846
        %9184 = vmatprep.subr.bf16.mxu0 %v7872
        %9185 = vmatpush1.bf16.msra.mxu0 %v7871
        %9186 = vmatprep.subr.bf16.mxu0 %v7897
        %9187 = vmatpush1.bf16.msra.mxu0 %v7896
        %9188 = vmatprep.subr.bf16.mxu0 %v7922
        %9189 = vmatpush1.bf16.msra.mxu0 %v7921
        %9190 = vmatprep.subr.bf16.mxu0 %v7947
        %9191 = vmatpush1.bf16.msra.mxu0 %v7946
        %9192 = vmatprep.subr.bf16.mxu0 %v7972
        %9193 = vmatpush1.bf16.msra.mxu0 %v7971
        %9194 = vmatprep.subr.bf16.mxu0 %v7997
        %9195 = vmatpush1.bf16.msra.mxu0 %v7996
        %9196 = vmatprep.subr.bf16.mxu0 %v8022
        %9197 = vmatpush1.bf16.msra.mxu0 %v8021
        %9198 = vmatprep.subr.bf16.mxu0 %v8047
        %9199 = vmatpush1.bf16.msra.mxu0 %v8046
        %9200 = vmatprep.subr.bf16.mxu0 %v8072
        %9201 = vmatpush1.bf16.msra.mxu0 %v8071
        %9202 = vmatprep.subr.bf16.mxu0 %v8480
        %9203 = vmatpush1.bf16.msra.mxu0 %v8477
        %9204 = vmatprep.subr.bf16.mxu0 0
        %9205 = vmatpush1.bf16.msra.mxu0 0
        %9206 = vmatprep.subr.bf16.mxu0 0
        %9207 = vmatpush1.bf16.msra.mxu0 0
        %9208 = vmatprep.subr.bf16.mxu0 0
        %9209 = vmatpush1.bf16.msra.mxu0 0
        %9210 = vmatprep.mubr.bf16.mxu0 %v8401
        %9211 = vmatmul.mubr.bf16.gmra.mrb[0].mxu0 %v6493
        %v9212 = vpop.f32.mrb[0].mxu0
        %v9213 = vadd.f32 0.0, %v9212
        %v9214 = vpop.f32.mrb[0].mxu0
        %v9215 = vadd.f32 0.0, %v9214
        %v9216 = vpop.f32.mrb[0].mxu0
        %v9217 = vadd.f32 0.0, %v9216
        %v9218 = vpop.f32.mrb[0].mxu0
        %v9219 = vadd.f32 0.0, %v9218
        %9220 = vmatprep.mubr.bf16.mxu0 %v8404
        %9221 = vmatmul.mubr.bf16.gmra.mrb[0].mxu0 %v6495
        %v9222 = vpop.f32.mrb[0].mxu0
        %v9223 = vadd.f32 0.0, %v9222
        %v9224 = vpop.f32.mrb[0].mxu0
        %v9225 = vadd.f32 0.0, %v9224
        %v9226 = vpop.f32.mrb[0].mxu0
        %v9227 = vadd.f32 0.0, %v9226
        %v9228 = vpop.f32.mrb[0].mxu0
        %v9229 = vadd.f32 0.0, %v9228
        %9230 = vmatprep.mubr.bf16.mxu0 %v8407
        %9231 = vmatmul.mubr.bf16.gmra.mrb[0].mxu0 %v6497
        %v9232 = vpop.f32.mrb[0].mxu0
        %v9233 = vadd.f32 0.0, %v9232
        %v9234 = vpop.f32.mrb[0].mxu0
        %v9235 = vadd.f32 0.0, %v9234
        %v9236 = vpop.f32.mrb[0].mxu0
        %v9237 = vadd.f32 0.0, %v9236
        %v9238 = vpop.f32.mrb[0].mxu0
        %v9239 = vadd.f32 0.0, %v9238
        %9240 = vdwg.mxu0
        %9241 = vmatprep.subr.bf16.mxu0 0
        %9242 = vmatpush1.bf16.msra.mxu0 %v7798
        %9243 = vmatprep.subr.bf16.mxu0 0
        %9244 = vmatpush1.bf16.msra.mxu0 %v7823
        %9245 = vmatprep.subr.bf16.mxu0 0
        %9246 = vmatpush1.bf16.msra.mxu0 %v7848
        %9247 = vmatprep.subr.bf16.mxu0 0
        %9248 = vmatpush1.bf16.msra.mxu0 %v7873
        %9249 = vmatprep.subr.bf16.mxu0 0
        %9250 = vmatpush1.bf16.msra.mxu0 %v7898
        %9251 = vmatprep.subr.bf16.mxu0 0
        %9252 = vmatpush1.bf16.msra.mxu0 %v7923
        %9253 = vmatprep.subr.bf16.mxu0 0
        %9254 = vmatpush1.bf16.msra.mxu0 %v7948
        %9255 = vmatprep.subr.bf16.mxu0 0
        %9256 = vmatpush1.bf16.msra.mxu0 %v7973
        %9257 = vmatprep.subr.bf16.mxu0 0
        %9258 = vmatpush1.bf16.msra.mxu0 %v7998
        %9259 = vmatprep.subr.bf16.mxu0 0
        %9260 = vmatpush1.bf16.msra.mxu0 %v8023
        %9261 = vmatprep.subr.bf16.mxu0 0
        %9262 = vmatpush1.bf16.msra.mxu0 %v8048
        %9263 = vmatprep.subr.bf16.mxu0 0
        %9264 = vmatpush1.bf16.msra.mxu0 %v8073
        %9265 = vmatprep.subr.bf16.mxu0 0
        %9266 = vmatpush1.bf16.msra.mxu0 %v8483
        %9267 = vmatprep.subr.bf16.mxu0 0
        %9268 = vmatpush1.bf16.msra.mxu0 0
        %9269 = vmatprep.subr.bf16.mxu0 0
        %9270 = vmatpush1.bf16.msra.mxu0 0
        %9271 = vmatprep.subr.bf16.mxu0 0
        %9272 = vmatpush1.bf16.msra.mxu0 0
        %9273 = vmatprep.mubr.bf16.mxu0 %v8401
        %9274 = vmatmul.mubr.bf16.gmra.mrb[0].mxu0 %v6493
        %v9275 = vpop.f32.mrb[0].mxu0
        %v9276 = vadd.f32 0.0, %v9275
        %v9277 = vpop.f32.mrb[0].mxu0
        %v9278 = vpop.f32.mrb[0].mxu0
        %v9279 = vadd.f32 0.0, %v9278
        %v9280 = vpop.f32.mrb[0].mxu0
        %9281 = vmatprep.mubr.bf16.mxu0 %v8404
        %9282 = vmatmul.mubr.bf16.gmra.mrb[0].mxu0 %v6495
        %v9283 = vpop.f32.mrb[0].mxu0
        %v9284 = vadd.f32 0.0, %v9283
        %v9285 = vpop.f32.mrb[0].mxu0
        %v9286 = vpop.f32.mrb[0].mxu0
        %v9287 = vadd.f32 0.0, %v9286
        %v9288 = vpop.f32.mrb[0].mxu0
        %9289 = vmatprep.mubr.bf16.mxu0 %v8407
        %9290 = vmatmul.mubr.bf16.gmra.mrb[0].mxu0 %v6497
        %v9291 = vpop.f32.mrb[0].mxu0
        %v9292 = vadd.f32 0.0, %v9291
        %v9293 = vpop.f32.mrb[0].mxu0
        %v9294 = vpop.f32.mrb[0].mxu0
        %v9295 = vadd.f32 0.0, %v9294
        %v9296 = vpop.f32.mrb[0].mxu0
        %9297 = vdwg.mxu0
        %v9298 = vpack.c.bf16 %v8524, %v8520
        %v9299 = vpack.c.bf16 %v8526, %v8522
        %v9300 = vpack.c.bf16 %v8587, %v8583
        %v9301 = vpack.c.bf16 %v8589, %v8585
        %v9302 = vpack.c.bf16 %v8650, %v8646
        %v9303 = vpack.c.bf16 %v8652, %v8648
        %v9304 = vpack.c.bf16 %v8713, %v8709
        %v9305 = vpack.c.bf16 %v8715, %v8711
        %v9306 = vpack.c.bf16 %v8776, %v8772
        %v9307 = vpack.c.bf16 %v8778, %v8774
        %v9308 = vpack.c.bf16 %v8839, %v8835
        %v9309 = vpack.c.bf16 %v8841, %v8837
        %v9310 = vpack.c.bf16 %v8902, %v8898
        %v9311 = vpack.c.bf16 %v8904, %v8900
        %v9312 = vpack.c.bf16 %v8965, %v8961
        %v9313 = vpack.c.bf16 %v8967, %v8963
        %v9314 = vpack.c.bf16 %v9028, %v9024
        %v9315 = vpack.c.bf16 %v9030, %v9026
        %v9316 = vpack.c.bf16 %v9091, %v9087
        %v9317 = vpack.c.bf16 %v9093, %v9089
        %v9318 = vpack.c.bf16 %v9154, %v9150
        %v9319 = vpack.c.bf16 %v9156, %v9152
        %v9320 = vpack.c.bf16 %v9217, %v9213
        %v9321 = vpack.c.bf16 %v9219, %v9215
        %v9322 = vpack.c.bf16 %v9279, %v9276
        %v9323 = vpack.c.bf16 %v8534, %v8530
        %v9324 = vpack.c.bf16 %v8536, %v8532
        %v9325 = vpack.c.bf16 %v8597, %v8593
        %v9326 = vpack.c.bf16 %v8599, %v8595
        %v9327 = vpack.c.bf16 %v8660, %v8656
        %v9328 = vpack.c.bf16 %v8662, %v8658
        %v9329 = vpack.c.bf16 %v8723, %v8719
        %v9330 = vpack.c.bf16 %v8725, %v8721
        %v9331 = vpack.c.bf16 %v8786, %v8782
        %v9332 = vpack.c.bf16 %v8788, %v8784
        %v9333 = vpack.c.bf16 %v8849, %v8845
        %v9334 = vpack.c.bf16 %v8851, %v8847
        %v9335 = vpack.c.bf16 %v8912, %v8908
        %v9336 = vpack.c.bf16 %v8914, %v8910
        %v9337 = vpack.c.bf16 %v8975, %v8971
        %v9338 = vpack.c.bf16 %v8977, %v8973
        %v9339 = vpack.c.bf16 %v9038, %v9034
        %v9340 = vpack.c.bf16 %v9040, %v9036
        %v9341 = vpack.c.bf16 %v9101, %v9097
        %v9342 = vpack.c.bf16 %v9103, %v9099
        %v9343 = vpack.c.bf16 %v9164, %v9160
        %v9344 = vpack.c.bf16 %v9166, %v9162
        %v9345 = vpack.c.bf16 %v9227, %v9223
        %v9346 = vpack.c.bf16 %v9229, %v9225
        %v9347 = vpack.c.bf16 %v9287, %v9284
        %v9348 = vpack.c.bf16 %v8544, %v8540
        %v9349 = vpack.c.bf16 %v8546, %v8542
        %v9350 = vpack.c.bf16 %v8607, %v8603
        %v9351 = vpack.c.bf16 %v8609, %v8605
        %v9352 = vpack.c.bf16 %v8670, %v8666
        %v9353 = vpack.c.bf16 %v8672, %v8668
        %v9354 = vpack.c.bf16 %v8733, %v8729
        %v9355 = vpack.c.bf16 %v8735, %v8731
        %v9356 = vpack.c.bf16 %v8796, %v8792
        %v9357 = vpack.c.bf16 %v8798, %v8794
        %v9358 = vpack.c.bf16 %v8859, %v8855
        %v9359 = vpack.c.bf16 %v8861, %v8857
        %v9360 = vpack.c.bf16 %v8922, %v8918
        %v9361 = vpack.c.bf16 %v8924, %v8920
        %v9362 = vpack.c.bf16 %v8985, %v8981
        %v9363 = vpack.c.bf16 %v8987, %v8983
        %v9364 = vpack.c.bf16 %v9048, %v9044
        %v9365 = vpack.c.bf16 %v9050, %v9046
        %v9366 = vpack.c.bf16 %v9111, %v9107
        %v9367 = vpack.c.bf16 %v9113, %v9109
        %v9368 = vpack.c.bf16 %v9174, %v9170
        %v9369 = vpack.c.bf16 %v9176, %v9172
        %v9370 = vpack.c.bf16 %v9237, %v9233
        %v9371 = vpack.c.bf16 %v9239, %v9235
        %v9372 = vpack.c.bf16 %v9295, %v9292
        %9373 = vst [vmem:[#allocation2] sm:$0xff] %v9298
        %9374 = vst [vmem:[#allocation2 + $0x8] sm:$0xff] %v9323
        %9375 = vst [vmem:[#allocation2 + $0x10] sm:$0xff] %v9348
        %9376 = vst [vmem:[#allocation2 + $0x18] sm:$0xff] %v9299
        %9377 = vst [vmem:[#allocation2 + $0x20] sm:$0xff] %v9324
        %9378 = vst [vmem:[#allocation2 + $0x28] sm:$0xff] %v9349
        %9379 = vst [vmem:[#allocation2 + $0x30] sm:$0xff] %v9300
        %9380 = vst [vmem:[#allocation2 + $0x38] sm:$0xff] %v9325
        %9381 = vst [vmem:[#allocation2 + $0x40] sm:$0xff] %v9350
        %9382 = vst [vmem:[#allocation2 + $0x48] sm:$0xff] %v9301
        %9383 = vst [vmem:[#allocation2 + $0x50] sm:$0xff] %v9326
        %9384 = vst [vmem:[#allocation2 + $0x58] sm:$0xff] %v9351
        %9385 = vst [vmem:[#allocation2 + $0x60] sm:$0xff] %v9302
        %9386 = vst [vmem:[#allocation2 + $0x68] sm:$0xff] %v9327
        %9387 = vst [vmem:[#allocation2 + $0x70] sm:$0xff] %v9352
        %9388 = vst [vmem:[#allocation2 + $0x78] sm:$0xff] %v9303
        %9389 = vst [vmem:[#allocation2 + $0x80] sm:$0xff] %v9328
        %9390 = vst [vmem:[#allocation2 + $0x88] sm:$0xff] %v9353
        %9391 = vst [vmem:[#allocation2 + $0x90] sm:$0xff] %v9304
        %9392 = vst [vmem:[#allocation2 + $0x98] sm:$0xff] %v9329
        %9393 = vst [vmem:[#allocation2 + $0xa0] sm:$0xff] %v9354
        %9394 = vst [vmem:[#allocation2 + $0xa8] sm:$0xff] %v9305
        %9395 = vst [vmem:[#allocation2 + $0xb0] sm:$0xff] %v9330
        %9396 = vst [vmem:[#allocation2 + $0xb8] sm:$0xff] %v9355
        %9397 = vst [vmem:[#allocation2 + $0xc0] sm:$0xff] %v9306
        %9398 = vst [vmem:[#allocation2 + $0xc8] sm:$0xff] %v9331
        %9399 = vst [vmem:[#allocation2 + $0xd0] sm:$0xff] %v9356
        %9400 = vst [vmem:[#allocation2 + $0xd8] sm:$0xff] %v9307
        %9401 = vst [vmem:[#allocation2 + $0xe0] sm:$0xff] %v9332
        %9402 = vst [vmem:[#allocation2 + $0xe8] sm:$0xff] %v9357
        %9403 = vst [vmem:[#allocation2 + $0xf0] sm:$0xff] %v9308
        %9404 = vst [vmem:[#allocation2 + $0xf8] sm:$0xff] %v9333
        %9405 = vst [vmem:[#allocation2 + $0x100] sm:$0xff] %v9358
        %9406 = vst [vmem:[#allocation2 + $0x108] sm:$0xff] %v9309
        %9407 = vst [vmem:[#allocation2 + $0x110] sm:$0xff] %v9334
        %9408 = vst [vmem:[#allocation2 + $0x118] sm:$0xff] %v9359
        %9409 = vst [vmem:[#allocation2 + $0x120] sm:$0xff] %v9310
        %9410 = vst [vmem:[#allocation2 + $0x128] sm:$0xff] %v9335
        %9411 = vst [vmem:[#allocation2 + $0x130] sm:$0xff] %v9360
        %9412 = vst [vmem:[#allocation2 + $0x138] sm:$0xff] %v9311
        %9413 = vst [vmem:[#allocation2 + $0x140] sm:$0xff] %v9336
        %9414 = vst [vmem:[#allocation2 + $0x148] sm:$0xff] %v9361
        %9415 = vst [vmem:[#allocation2 + $0x150] sm:$0xff] %v9312
        %9416 = vst [vmem:[#allocation2 + $0x158] sm:$0xff] %v9337
        %9417 = vst [vmem:[#allocation2 + $0x160] sm:$0xff] %v9362
        %9418 = vst [vmem:[#allocation2 + $0x168] sm:$0xff] %v9313
        %9419 = vst [vmem:[#allocation2 + $0x170] sm:$0xff] %v9338
        %9420 = vst [vmem:[#allocation2 + $0x178] sm:$0xff] %v9363
        %9421 = vst [vmem:[#allocation2 + $0x180] sm:$0xff] %v9314
        %9422 = vst [vmem:[#allocation2 + $0x188] sm:$0xff] %v9339
        %9423 = vst [vmem:[#allocation2 + $0x190] sm:$0xff] %v9364
        %9424 = vst [vmem:[#allocation2 + $0x198] sm:$0xff] %v9315
        %9425 = vst [vmem:[#allocation2 + $0x1a0] sm:$0xff] %v9340
        %9426 = vst [vmem:[#allocation2 + $0x1a8] sm:$0xff] %v9365
        %9427 = vst [vmem:[#allocation2 + $0x1b0] sm:$0xff] %v9316
        %9428 = vst [vmem:[#allocation2 + $0x1b8] sm:$0xff] %v9341
        %9429 = vst [vmem:[#allocation2 + $0x1c0] sm:$0xff] %v9366
        %9430 = vst [vmem:[#allocation2 + $0x1c8] sm:$0xff] %v9317
        %9431 = vst [vmem:[#allocation2 + $0x1d0] sm:$0xff] %v9342
        %9432 = vst [vmem:[#allocation2 + $0x1d8] sm:$0xff] %v9367
        %9433 = vst [vmem:[#allocation2 + $0x1e0] sm:$0xff] %v9318
        %9434 = vst [vmem:[#allocation2 + $0x1e8] sm:$0xff] %v9343
        %9435 = vst [vmem:[#allocation2 + $0x1f0] sm:$0xff] %v9368
        %9436 = vst [vmem:[#allocation2 + $0x1f8] sm:$0xff] %v9319
        %9437 = vst [vmem:[#allocation2 + $0x200] sm:$0xff] %v9344
        %9438 = vst [vmem:[#allocation2 + $0x208] sm:$0xff] %v9369
        %9439 = vst [vmem:[#allocation2 + $0x210] sm:$0xff] %v9320
        %9440 = vst [vmem:[#allocation2 + $0x218] sm:$0xff] %v9345
        %9441 = vst [vmem:[#allocation2 + $0x220] sm:$0xff] %v9370
        %9442 = vst [vmem:[#allocation2 + $0x228] sm:$0xff] %v9321
        %9443 = vst [vmem:[#allocation2 + $0x230] sm:$0xff] %v9346
        %9444 = vst [vmem:[#allocation2 + $0x238] sm:$0xff] %v9371
        %9445 = vst [vmem:[#allocation2 + $0x240] sm:$0xff] %v9322
        %9446 = vst [vmem:[#allocation2 + $0x248] sm:$0xff] %v9347
        %9447 = vst [vmem:[#allocation2 + $0x250] sm:$0xff] %v9372
        %v9448 = vld [vmem:[%s5] sm:$0xff]
        %v9449 = vld [vmem:[%s5 + $0x8] sm:$0xff]
        %v9450 = vld [vmem:[%s5 + $0x10] sm:$0xff]
        %v9451 = vld [vmem:[%s5 + $0x18] sm:$0xff]
        %v9452 = vld [vmem:[%s5 + $0x20] sm:$0xff]
        %v9453 = vld [vmem:[%s5 + $0x28] sm:$0xff]
        %v9454 = vld [vmem:[%s5 + $0x30] sm:$0xff]
        %v9455 = vld [vmem:[%s5 + $0x38] sm:$0xff]
        %v9456 = vld [vmem:[%s5 + $0x40] sm:$0xff]
        %v9457 = vld [vmem:[%s5 + $0x48] sm:$0xff]
        %v9458 = vld [vmem:[%s5 + $0x50] sm:$0xff]
        %v9459 = vld [vmem:[%s5 + $0x58] sm:$0xff]
        %v9460 = vld [vmem:[%s5 + $0x60] sm:$0xff]
        %v9461 = vld [vmem:[%s5 + $0x68] sm:$0xff]
        %v9462 = vld [vmem:[%s5 + $0x70] sm:$0xff]
        %v9463 = vld [vmem:[%s5 + $0x78] sm:$0xff]
        %v9464 = vld [vmem:[%s5 + $0x80] sm:$0xff]
        %v9465 = vld [vmem:[%s5 + $0x88] sm:$0xff]
        %v9466 = vld [vmem:[%s5 + $0x90] sm:$0xff]
        %v9467 = vld [vmem:[%s5 + $0x98] sm:$0xff]
        %v9468 = vld [vmem:[%s5 + $0xa0] sm:$0xff]
        %v9469 = vld [vmem:[%s5 + $0xa8] sm:$0xff]
        %v9470 = vld [vmem:[%s5 + $0xb0] sm:$0xff]
        %v9471 = vld [vmem:[%s5 + $0xb8] sm:$0xff]
        %v9472 = vld [vmem:[%s5 + $0xc0] sm:$0xff]
        %v9473 = vld [vmem:[%s5 + $0xc8] sm:$0xff]
        %v9474 = vld [vmem:[%s5 + $0xd0] sm:$0xff]
        %v9475 = vld [vmem:[%s5 + $0xd8] sm:$0xff]
        %v9476 = vld [vmem:[%s5 + $0xe0] sm:$0xff]
        %v9477 = vld [vmem:[%s5 + $0xe8] sm:$0xff]
        %v9478 = vld [vmem:[%s5 + $0xf0] sm:$0xff]
        %v9479 = vld [vmem:[%s5 + $0xf8] sm:$0xff]
        %v9480 = vld [vmem:[%s5 + $0x100] sm:$0xff]
        %v9481 = vld [vmem:[%s5 + $0x108] sm:$0xff]
        %v9482 = vld [vmem:[%s5 + $0x110] sm:$0xff]
        %v9483 = vld [vmem:[%s5 + $0x118] sm:$0xff]
        %v9484 = vld [vmem:[%s5 + $0x120] sm:$0xff]
        %v9485 = vld [vmem:[%s5 + $0x128] sm:$0xff]
        %v9486 = vld [vmem:[%s5 + $0x130] sm:$0xff]
        %v9487 = vld [vmem:[%s5 + $0x138] sm:$0xff]
        %v9488 = vld [vmem:[%s5 + $0x140] sm:$0xff]
        %v9489 = vld [vmem:[%s5 + $0x148] sm:$0xff]
        %v9490 = vld [vmem:[%s5 + $0x150] sm:$0xff]
        %v9491 = vld [vmem:[%s5 + $0x158] sm:$0xff]
        %v9492 = vld [vmem:[%s5 + $0x160] sm:$0xff]
        %v9493 = vld [vmem:[%s5 + $0x168] sm:$0xff]
        %v9494 = vld [vmem:[%s5 + $0x170] sm:$0xff]
        %v9495 = vld [vmem:[%s5 + $0x178] sm:$0xff]
        %v9496 = vld [vmem:[%s5 + $0x180] sm:$0xff]
        %v9497 = vld [vmem:[%s5 + $0x188] sm:$0xff]
        %v9498 = vld [vmem:[%s5 + $0x190] sm:$0xff]
        %v9499 = vld [vmem:[%s5 + $0x198] sm:$0xff]
        %v9500 = vld [vmem:[%s5 + $0x1a0] sm:$0xff]
        %v9501 = vld [vmem:[%s5 + $0x1a8] sm:$0xff]
        %v9502 = vld [vmem:[%s5 + $0x1b0] sm:$0xff]
        %v9503 = vld [vmem:[%s5 + $0x1b8] sm:$0xff]
        %v9504 = vld [vmem:[%s5 + $0x1c0] sm:$0xff]
        %v9505 = vld [vmem:[%s5 + $0x1c8] sm:$0xff]
        %v9506 = vld [vmem:[%s5 + $0x1d0] sm:$0xff]
        %v9507 = vld [vmem:[%s5 + $0x1d8] sm:$0xff]
        %v9508 = vld [vmem:[%s5 + $0x1e0] sm:$0xff]
        %v9509 = vld [vmem:[%s5 + $0x1e8] sm:$0xff]
        %v9510 = vld [vmem:[%s5 + $0x1f0] sm:$0xff]
        %v9511 = vld [vmem:[%s5 + $0x1f8] sm:$0xff]
        %v9512 = vld [vmem:[%s5 + $0x200] sm:$0xff]
        %v9513 = vld [vmem:[%s5 + $0x208] sm:$0xff]
        %v9514 = vld [vmem:[%s5 + $0x210] sm:$0xff]
        %v9515 = vld [vmem:[%s5 + $0x218] sm:$0xff]
        %v9516 = vld [vmem:[%s5 + $0x220] sm:$0xff]
        %v9517 = vld [vmem:[%s5 + $0x228] sm:$0xff]
        %v9518 = vld [vmem:[%s5 + $0x230] sm:$0xff]
        %v9519 = vld [vmem:[%s5 + $0x238] sm:$0xff]
        %v9520 = vld [vmem:[%s5 + $0x240] sm:$0xff]
        %v9521 = vld [vmem:[%s5 + $0x248] sm:$0xff]
        %v9522 = vld [vmem:[%s5 + $0x250] sm:$0xff]
        %v9523 = vld [vmem:[%s5 + $0x258] sm:$0xff]
        %v9524 = vld [vmem:[%s5 + $0x260] sm:$0xff]
        %v9525 = vld [vmem:[%s5 + $0x268] sm:$0xff]
        %v9526 = vld [vmem:[%s5 + $0x270] sm:$0xff]
        %v9527 = vld [vmem:[%s5 + $0x278] sm:$0xff]
        %v9528 = vld [vmem:[#allocation2] sm:$0xff]
        %v9529 = vld [vmem:[#allocation2 + $0x8] sm:$0xff]
        %v9530 = vld [vmem:[#allocation2 + $0x10] sm:$0xff]
        %v9531 = vld [vmem:[#allocation2 + $0x18] sm:$0xff]
        %v9532 = vld [vmem:[#allocation2 + $0x20] sm:$0xff]
        %v9533 = vld [vmem:[#allocation2 + $0x28] sm:$0xff]
        %v9534 = vld [vmem:[#allocation2 + $0x30] sm:$0xff]
        %v9535 = vld [vmem:[#allocation2 + $0x38] sm:$0xff]
        %v9536 = vld [vmem:[#allocation2 + $0x40] sm:$0xff]
        %v9537 = vld [vmem:[#allocation2 + $0x48] sm:$0xff]
        %v9538 = vld [vmem:[#allocation2 + $0x50] sm:$0xff]
        %v9539 = vld [vmem:[#allocation2 + $0x58] sm:$0xff]
        %v9540 = vld [vmem:[#allocation2 + $0x60] sm:$0xff]
        %v9541 = vld [vmem:[#allocation2 + $0x68] sm:$0xff]
        %v9542 = vld [vmem:[#allocation2 + $0x70] sm:$0xff]
        %v9543 = vld [vmem:[#allocation2 + $0x78] sm:$0xff]
        %v9544 = vld [vmem:[#allocation2 + $0x80] sm:$0xff]
        %v9545 = vld [vmem:[#allocation2 + $0x88] sm:$0xff]
        %v9546 = vld [vmem:[#allocation2 + $0x90] sm:$0xff]
        %v9547 = vld [vmem:[#allocation2 + $0x98] sm:$0xff]
        %v9548 = vld [vmem:[#allocation2 + $0xa0] sm:$0xff]
        %v9549 = vld [vmem:[#allocation2 + $0xa8] sm:$0xff]
        %v9550 = vld [vmem:[#allocation2 + $0xb0] sm:$0xff]
        %v9551 = vld [vmem:[#allocation2 + $0xb8] sm:$0xff]
        %v9552 = vld [vmem:[#allocation2 + $0xc0] sm:$0xff]
        %v9553 = vld [vmem:[#allocation2 + $0xc8] sm:$0xff]
        %v9554 = vld [vmem:[#allocation2 + $0xd0] sm:$0xff]
        %v9555 = vld [vmem:[#allocation2 + $0xd8] sm:$0xff]
        %v9556 = vld [vmem:[#allocation2 + $0xe0] sm:$0xff]
        %v9557 = vld [vmem:[#allocation2 + $0xe8] sm:$0xff]
        %v9558 = vld [vmem:[#allocation2 + $0xf0] sm:$0xff]
        %v9559 = vld [vmem:[#allocation2 + $0xf8] sm:$0xff]
        %v9560 = vld [vmem:[#allocation2 + $0x100] sm:$0xff]
        %v9561 = vld [vmem:[#allocation2 + $0x108] sm:$0xff]
        %v9562 = vld [vmem:[#allocation2 + $0x110] sm:$0xff]
        %v9563 = vld [vmem:[#allocation2 + $0x118] sm:$0xff]
        %v9564 = vld [vmem:[#allocation2 + $0x120] sm:$0xff]
        %v9565 = vld [vmem:[#allocation2 + $0x128] sm:$0xff]
        %v9566 = vld [vmem:[#allocation2 + $0x130] sm:$0xff]
        %v9567 = vld [vmem:[#allocation2 + $0x138] sm:$0xff]
        %v9568 = vld [vmem:[#allocation2 + $0x140] sm:$0xff]
        %v9569 = vld [vmem:[#allocation2 + $0x148] sm:$0xff]
        %v9570 = vld [vmem:[#allocation2 + $0x150] sm:$0xff]
        %v9571 = vld [vmem:[#allocation2 + $0x158] sm:$0xff]
        %v9572 = vld [vmem:[#allocation2 + $0x160] sm:$0xff]
        %v9573 = vld [vmem:[#allocation2 + $0x168] sm:$0xff]
        %v9574 = vld [vmem:[#allocation2 + $0x170] sm:$0xff]
        %v9575 = vld [vmem:[#allocation2 + $0x178] sm:$0xff]
        %v9576 = vld [vmem:[#allocation2 + $0x180] sm:$0xff]
        %v9577 = vld [vmem:[#allocation2 + $0x188] sm:$0xff]
        %v9578 = vld [vmem:[#allocation2 + $0x190] sm:$0xff]
        %v9579 = vld [vmem:[#allocation2 + $0x198] sm:$0xff]
        %v9580 = vld [vmem:[#allocation2 + $0x1a0] sm:$0xff]
        %v9581 = vld [vmem:[#allocation2 + $0x1a8] sm:$0xff]
        %v9582 = vld [vmem:[#allocation2 + $0x1b0] sm:$0xff]
        %v9583 = vld [vmem:[#allocation2 + $0x1b8] sm:$0xff]
        %v9584 = vld [vmem:[#allocation2 + $0x1c0] sm:$0xff]
        %v9585 = vld [vmem:[#allocation2 + $0x1c8] sm:$0xff]
        %v9586 = vld [vmem:[#allocation2 + $0x1d0] sm:$0xff]
        %v9587 = vld [vmem:[#allocation2 + $0x1d8] sm:$0xff]
        %v9588 = vld [vmem:[#allocation2 + $0x1e0] sm:$0xff]
        %v9589 = vld [vmem:[#allocation2 + $0x1e8] sm:$0xff]
        %v9590 = vld [vmem:[#allocation2 + $0x1f0] sm:$0xff]
        %v9591 = vld [vmem:[#allocation2 + $0x1f8] sm:$0xff]
        %v9592 = vld [vmem:[#allocation2 + $0x200] sm:$0xff]
        %v9593 = vld [vmem:[#allocation2 + $0x208] sm:$0xff]
        %v9594 = vld [vmem:[#allocation2 + $0x210] sm:$0xff]
        %v9595 = vld [vmem:[#allocation2 + $0x218] sm:$0xff]
        %v9596 = vld [vmem:[#allocation2 + $0x220] sm:$0xff]
        %v9597 = vld [vmem:[#allocation2 + $0x228] sm:$0xff]
        %v9598 = vld [vmem:[#allocation2 + $0x230] sm:$0xff]
        %v9599 = vld [vmem:[#allocation2 + $0x238] sm:$0xff]
        %v9600 = vld [vmem:[#allocation2 + $0x240] sm:$0xff]
        %v9601 = vld [vmem:[#allocation2 + $0x248] sm:$0xff]
        %v9602 = vld [vmem:[#allocation2 + $0x250] sm:$0xff]
        %v9603 = vld [vmem:[%s6] sm:$0xff]
        %v9604 = vld [vmem:[%s6 + $0x8] sm:$0xff]
        %v9605 = vld [vmem:[%s6 + $0x10] sm:$0xff]
        %v9606 = vld [vmem:[%s6 + $0x18] sm:$0xff]
        %v9607 = vld [vmem:[%s6 + $0x20] sm:$0xff]
        %v9608 = vld [vmem:[%s6 + $0x28] sm:$0xff]
        %v9609 = vld [vmem:[%s6 + $0x30] sm:$0xff]
        %v9610 = vld [vmem:[%s6 + $0x38] sm:$0xff]
        %v9611 = vld [vmem:[%s6 + $0x40] sm:$0xff]
        %v9612 = vld [vmem:[%s6 + $0x48] sm:$0xff]
        %v9613 = vld [vmem:[%s6 + $0x50] sm:$0xff]
        %v9614 = vld [vmem:[%s6 + $0x58] sm:$0xff]
        %v9615 = vld [vmem:[%s6 + $0x60] sm:$0xff]
        %v9616 = vld [vmem:[%s6 + $0x68] sm:$0xff]
        %v9617 = vld [vmem:[%s6 + $0x70] sm:$0xff]
        %v9618 = vld [vmem:[%s6 + $0x78] sm:$0xff]
        %9620 = vset.pattern.permute.xlu0 0
        %9621 = vperm.xlu0 %9620, %v9603
        %v9622 = vpop.permute.xlu0 %9621
        %9625 = vset.pattern.permute.xlu0 0
        %9626 = vperm.xlu0 %9625, %v9604
        %v9627 = vpop.permute.xlu0 %9626
        %9630 = vset.pattern.permute.xlu0 0
        %9631 = vperm.xlu0 %9630, %v9605
        %v9632 = vpop.permute.xlu0 %9631
        %9635 = vset.pattern.permute.xlu0 0
        %9636 = vperm.xlu0 %9635, %v9606
        %v9637 = vpop.permute.xlu0 %9636
        %9640 = vset.pattern.permute.xlu0 0
        %9641 = vperm.xlu0 %9640, %v9607
        %v9642 = vpop.permute.xlu0 %9641
        %9645 = vset.pattern.permute.xlu0 0
        %9646 = vperm.xlu0 %9645, %v9608
        %v9647 = vpop.permute.xlu0 %9646
        %9650 = vset.pattern.permute.xlu0 0
        %9651 = vperm.xlu0 %9650, %v9609
        %v9652 = vpop.permute.xlu0 %9651
        %9655 = vset.pattern.permute.xlu0 0
        %9656 = vperm.xlu0 %9655, %v9610
        %v9657 = vpop.permute.xlu0 %9656
        %9660 = vset.pattern.permute.xlu0 0
        %9661 = vperm.xlu0 %9660, %v9611
        %v9662 = vpop.permute.xlu0 %9661
        %9665 = vset.pattern.permute.xlu0 0
        %9666 = vperm.xlu0 %9665, %v9612
        %v9667 = vpop.permute.xlu0 %9666
        %9670 = vset.pattern.permute.xlu0 0
        %9671 = vperm.xlu0 %9670, %v9613
        %v9672 = vpop.permute.xlu0 %9671
        %9675 = vset.pattern.permute.xlu0 0
        %9676 = vperm.xlu0 %9675, %v9614
        %v9677 = vpop.permute.xlu0 %9676
        %9680 = vset.pattern.permute.xlu0 0
        %9681 = vperm.xlu0 %9680, %v9615
        %v9682 = vpop.permute.xlu0 %9681
        %9685 = vset.pattern.permute.xlu0 0
        %9686 = vperm.xlu0 %9685, %v9616
        %v9687 = vpop.permute.xlu0 %9686
        %9690 = vset.pattern.permute.xlu0 0
        %9691 = vperm.xlu0 %9690, %v9617
        %v9692 = vpop.permute.xlu0 %9691
        %9695 = vset.pattern.permute.xlu0 0
        %9696 = vperm.xlu0 %9695, %v9618
        %v9697 = vpop.permute.xlu0 %9696
        %v9779 = vunpack.c.l.b16 %v9448
        %v9780 = vunpack.c.h.b16 %v9448
        %v9781 = vunpack.c.l.b16 %v9449
        %v9782 = vunpack.c.h.b16 %v9449
        %v9783 = vunpack.c.l.b16 %v9450
        %v9784 = vunpack.c.h.b16 %v9450
        %v9785 = vunpack.c.l.b16 %v9451
        %v9786 = vunpack.c.h.b16 %v9451
        %v9787 = vunpack.c.l.b16 %v9452
        %v9788 = vunpack.c.h.b16 %v9452
        %v9789 = vunpack.c.l.b16 %v9453
        %v9790 = vunpack.c.h.b16 %v9453
        %v9791 = vunpack.c.l.b16 %v9454
        %v9792 = vunpack.c.h.b16 %v9454
        %v9793 = vunpack.c.l.b16 %v9455
        %v9794 = vunpack.c.h.b16 %v9455
        %v9795 = vunpack.c.l.b16 %v9456
        %v9796 = vunpack.c.h.b16 %v9456
        %v9797 = vunpack.c.l.b16 %v9457
        %v9798 = vunpack.c.h.b16 %v9457
        %v9799 = vunpack.c.l.b16 %v9458
        %v9800 = vunpack.c.h.b16 %v9458
        %v9801 = vunpack.c.l.b16 %v9459
        %v9802 = vunpack.c.h.b16 %v9459
        %v9803 = vunpack.c.l.b16 %v9460
        %v9804 = vunpack.c.h.b16 %v9460
        %v9805 = vunpack.c.l.b16 %v9461
        %v9806 = vunpack.c.h.b16 %v9461
        %v9807 = vunpack.c.l.b16 %v9462
        %v9808 = vunpack.c.h.b16 %v9462
        %v9809 = vunpack.c.l.b16 %v9463
        %v9810 = vunpack.c.h.b16 %v9463
        %v9811 = vunpack.c.l.b16 %v9464
        %v9812 = vunpack.c.h.b16 %v9464
        %v9813 = vunpack.c.l.b16 %v9465
        %v9814 = vunpack.c.h.b16 %v9465
        %v9815 = vunpack.c.l.b16 %v9466
        %v9816 = vunpack.c.h.b16 %v9466
        %v9817 = vunpack.c.l.b16 %v9467
        %v9818 = vunpack.c.h.b16 %v9467
        %v9819 = vunpack.c.l.b16 %v9468
        %v9820 = vunpack.c.h.b16 %v9468
        %v9821 = vunpack.c.l.b16 %v9469
        %v9822 = vunpack.c.h.b16 %v9469
        %v9823 = vunpack.c.l.b16 %v9470
        %v9824 = vunpack.c.h.b16 %v9470
        %v9825 = vunpack.c.l.b16 %v9471
        %v9826 = vunpack.c.h.b16 %v9471
        %v9827 = vunpack.c.l.b16 %v9472
        %v9828 = vunpack.c.h.b16 %v9472
        %v9829 = vunpack.c.l.b16 %v9473
        %v9830 = vunpack.c.h.b16 %v9473
        %v9831 = vunpack.c.l.b16 %v9474
        %v9832 = vunpack.c.h.b16 %v9474
        %v9833 = vunpack.c.l.b16 %v9475
        %v9834 = vunpack.c.h.b16 %v9475
        %v9835 = vunpack.c.l.b16 %v9476
        %v9836 = vunpack.c.h.b16 %v9476
        %v9837 = vunpack.c.l.b16 %v9477
        %v9838 = vunpack.c.h.b16 %v9477
        %v9839 = vunpack.c.l.b16 %v9478
        %v9840 = vunpack.c.h.b16 %v9478
        %v9841 = vunpack.c.l.b16 %v9479
        %v9842 = vunpack.c.h.b16 %v9479
        %v9843 = vunpack.c.l.b16 %v9480
        %v9844 = vunpack.c.h.b16 %v9480
        %v9845 = vunpack.c.l.b16 %v9481
        %v9846 = vunpack.c.h.b16 %v9481
        %v9847 = vunpack.c.l.b16 %v9482
        %v9848 = vunpack.c.h.b16 %v9482
        %v9849 = vunpack.c.l.b16 %v9483
        %v9850 = vunpack.c.h.b16 %v9483
        %v9851 = vunpack.c.l.b16 %v9484
        %v9852 = vunpack.c.h.b16 %v9484
        %v9853 = vunpack.c.l.b16 %v9485
        %v9854 = vunpack.c.h.b16 %v9485
        %v9855 = vunpack.c.l.b16 %v9486
        %v9856 = vunpack.c.h.b16 %v9486
        %v9857 = vunpack.c.l.b16 %v9487
        %v9858 = vunpack.c.h.b16 %v9487
        %v9859 = vunpack.c.l.b16 %v9488
        %v9860 = vunpack.c.h.b16 %v9488
        %v9861 = vunpack.c.l.b16 %v9489
        %v9862 = vunpack.c.h.b16 %v9489
        %v9863 = vunpack.c.l.b16 %v9490
        %v9864 = vunpack.c.h.b16 %v9490
        %v9865 = vunpack.c.l.b16 %v9491
        %v9866 = vunpack.c.h.b16 %v9491
        %v9867 = vunpack.c.l.b16 %v9492
        %v9868 = vunpack.c.h.b16 %v9492
        %v9869 = vunpack.c.l.b16 %v9493
        %v9870 = vunpack.c.h.b16 %v9493
        %v9871 = vunpack.c.l.b16 %v9494
        %v9872 = vunpack.c.h.b16 %v9494
        %v9873 = vunpack.c.l.b16 %v9495
        %v9874 = vunpack.c.h.b16 %v9495
        %v9875 = vunpack.c.l.b16 %v9496
        %v9876 = vunpack.c.h.b16 %v9496
        %v9877 = vunpack.c.l.b16 %v9497
        %v9878 = vunpack.c.h.b16 %v9497
        %v9879 = vunpack.c.l.b16 %v9498
        %v9880 = vunpack.c.h.b16 %v9498
        %v9881 = vunpack.c.l.b16 %v9499
        %v9882 = vunpack.c.h.b16 %v9499
        %v9883 = vunpack.c.l.b16 %v9500
        %v9884 = vunpack.c.h.b16 %v9500
        %v9885 = vunpack.c.l.b16 %v9501
        %v9886 = vunpack.c.h.b16 %v9501
        %v9887 = vunpack.c.l.b16 %v9502
        %v9888 = vunpack.c.h.b16 %v9502
        %v9889 = vunpack.c.l.b16 %v9503
        %v9890 = vunpack.c.h.b16 %v9503
        %v9891 = vunpack.c.l.b16 %v9504
        %v9892 = vunpack.c.h.b16 %v9504
        %v9893 = vunpack.c.l.b16 %v9505
        %v9894 = vunpack.c.h.b16 %v9505
        %v9895 = vunpack.c.l.b16 %v9506
        %v9896 = vunpack.c.h.b16 %v9506
        %v9897 = vunpack.c.l.b16 %v9507
        %v9898 = vunpack.c.h.b16 %v9507
        %v9899 = vunpack.c.l.b16 %v9508
        %v9900 = vunpack.c.h.b16 %v9508
        %v9901 = vunpack.c.l.b16 %v9509
        %v9902 = vunpack.c.h.b16 %v9509
        %v9903 = vunpack.c.l.b16 %v9510
        %v9904 = vunpack.c.h.b16 %v9510
        %v9905 = vunpack.c.l.b16 %v9511
        %v9906 = vunpack.c.h.b16 %v9511
        %v9907 = vunpack.c.l.b16 %v9512
        %v9908 = vunpack.c.h.b16 %v9512
        %v9909 = vunpack.c.l.b16 %v9513
        %v9910 = vunpack.c.h.b16 %v9513
        %v9911 = vunpack.c.l.b16 %v9514
        %v9912 = vunpack.c.h.b16 %v9514
        %v9913 = vunpack.c.l.b16 %v9515
        %v9914 = vunpack.c.h.b16 %v9515
        %v9915 = vunpack.c.l.b16 %v9516
        %v9916 = vunpack.c.h.b16 %v9516
        %v9917 = vunpack.c.l.b16 %v9517
        %v9918 = vunpack.c.h.b16 %v9517
        %v9919 = vunpack.c.l.b16 %v9518
        %v9920 = vunpack.c.h.b16 %v9518
        %v9921 = vunpack.c.l.b16 %v9519
        %v9922 = vunpack.c.h.b16 %v9519
        %v9923 = vunpack.c.l.b16 %v9520
        %v9924 = vunpack.c.h.b16 %v9520
        %v9925 = vunpack.c.l.b16 %v9521
        %v9926 = vunpack.c.h.b16 %v9521
        %v9927 = vunpack.c.l.b16 %v9522
        %v9928 = vunpack.c.h.b16 %v9522
        %v9929 = vunpack.c.l.b16 %v9523
        %v9930 = vunpack.c.h.b16 %v9523
        %v9931 = vunpack.c.l.b16 %v9524
        %v9932 = vunpack.c.h.b16 %v9524
        %v9933 = vunpack.c.l.b16 %v9525
        %v9934 = vunpack.c.h.b16 %v9525
        %v9935 = vunpack.c.l.b16 %v9526
        %v9936 = vunpack.c.h.b16 %v9526
        %v9937 = vunpack.c.l.b16 %v9527
        %v9938 = vunpack.c.h.b16 %v9527
        %v9939 = vpack.c.b16 %v9789, %v9779
        %v9940 = vpack.c.b16 %v9790, %v9780
        %v9941 = vpack.c.b16 %v9791, %v9781
        %v9942 = vpack.c.b16 %v9792, %v9782
        %v9943 = vpack.c.b16 %v9793, %v9783
        %v9944 = vpack.c.b16 %v9794, %v9784
        %v9945 = vpack.c.b16 %v9795, %v9785
        %v9946 = vpack.c.b16 %v9796, %v9786
        %v9947 = vpack.c.b16 %v9797, %v9787
        %v9948 = vpack.c.b16 %v9798, %v9788
        %v9949 = vpack.c.b16 %v9809, %v9799
        %v9950 = vpack.c.b16 %v9810, %v9800
        %v9951 = vpack.c.b16 %v9811, %v9801
        %v9952 = vpack.c.b16 %v9812, %v9802
        %v9953 = vpack.c.b16 %v9813, %v9803
        %v9954 = vpack.c.b16 %v9814, %v9804
        %v9955 = vpack.c.b16 %v9815, %v9805
        %v9956 = vpack.c.b16 %v9816, %v9806
        %v9957 = vpack.c.b16 %v9817, %v9807
        %v9958 = vpack.c.b16 %v9818, %v9808
        %v9959 = vpack.c.b16 %v9829, %v9819
        %v9960 = vpack.c.b16 %v9830, %v9820
        %v9961 = vpack.c.b16 %v9831, %v9821
        %v9962 = vpack.c.b16 %v9832, %v9822
        %v9963 = vpack.c.b16 %v9833, %v9823
        %v9964 = vpack.c.b16 %v9834, %v9824
        %v9965 = vpack.c.b16 %v9835, %v9825
        %v9966 = vpack.c.b16 %v9836, %v9826
        %v9967 = vpack.c.b16 %v9837, %v9827
        %v9968 = vpack.c.b16 %v9838, %v9828
        %v9969 = vpack.c.b16 %v9849, %v9839
        %v9970 = vpack.c.b16 %v9850, %v9840
        %v9971 = vpack.c.b16 %v9851, %v9841
        %v9972 = vpack.c.b16 %v9852, %v9842
        %v9973 = vpack.c.b16 %v9853, %v9843
        %v9974 = vpack.c.b16 %v9854, %v9844
        %v9975 = vpack.c.b16 %v9855, %v9845
        %v9976 = vpack.c.b16 %v9856, %v9846
        %v9977 = vpack.c.b16 %v9857, %v9847
        %v9978 = vpack.c.b16 %v9858, %v9848
        %v9979 = vpack.c.b16 %v9869, %v9859
        %v9980 = vpack.c.b16 %v9870, %v9860
        %v9981 = vpack.c.b16 %v9871, %v9861
        %v9982 = vpack.c.b16 %v9872, %v9862
        %v9983 = vpack.c.b16 %v9873, %v9863
        %v9984 = vpack.c.b16 %v9874, %v9864
        %v9985 = vpack.c.b16 %v9875, %v9865
        %v9986 = vpack.c.b16 %v9876, %v9866
        %v9987 = vpack.c.b16 %v9877, %v9867
        %v9988 = vpack.c.b16 %v9878, %v9868
        %v9989 = vpack.c.b16 %v9889, %v9879
        %v9990 = vpack.c.b16 %v9890, %v9880
        %v9991 = vpack.c.b16 %v9891, %v9881
        %v9992 = vpack.c.b16 %v9892, %v9882
        %v9993 = vpack.c.b16 %v9893, %v9883
        %v9994 = vpack.c.b16 %v9894, %v9884
        %v9995 = vpack.c.b16 %v9895, %v9885
        %v9996 = vpack.c.b16 %v9896, %v9886
        %v9997 = vpack.c.b16 %v9897, %v9887
        %v9998 = vpack.c.b16 %v9898, %v9888
        %v9999 = vpack.c.b16 %v9909, %v9899
        %v10000 = vpack.c.b16 %v9910, %v9900
        %v10001 = vpack.c.b16 %v9911, %v9901
        %v10002 = vpack.c.b16 %v9912, %v9902
        %v10003 = vpack.c.b16 %v9913, %v9903
        %v10004 = vpack.c.b16 %v9914, %v9904
        %v10005 = vpack.c.b16 %v9915, %v9905
        %v10006 = vpack.c.b16 %v9916, %v9906
        %v10007 = vpack.c.b16 %v9917, %v9907
        %v10008 = vpack.c.b16 %v9918, %v9908
        %v10009 = vpack.c.b16 %v9929, %v9919
        %v10010 = vpack.c.b16 %v9930, %v9920
        %v10011 = vpack.c.b16 %v9931, %v9921
        %v10012 = vpack.c.b16 %v9932, %v9922
        %v10013 = vpack.c.b16 %v9933, %v9923
        %v10014 = vpack.c.b16 %v9934, %v9924
        %v10015 = vpack.c.b16 %v9935, %v9925
        %v10016 = vpack.c.b16 %v9936, %v9926
        %v10017 = vpack.c.b16 %v9937, %v9927
        %v10018 = vpack.c.b16 %v9938, %v9928
        %vm10091 = vcmask 392192
        %v10093 = vsel %vm10091, %v9948, 0
        %v10096 = vsel %vm10091, %v9958, 0
        %v10099 = vsel %vm10091, %v9968, 0
        %v10102 = vsel %vm10091, %v9978, 0
        %v10105 = vsel %vm10091, %v9988, 0
        %v10108 = vsel %vm10091, %v9998, 0
        %v10111 = vsel %vm10091, %v10008, 0
        %v10114 = vsel %vm10091, %v10018, 0
        %10116 = vmatprep.subr.bf16.mxu0 0
        %10117 = vmatpush1.bf16.msra.mxu0 %v9528
        %10118 = vmatprep.subr.bf16.mxu0 0
        %10119 = vmatpush1.bf16.msra.mxu0 %v9529
        %10120 = vmatprep.subr.bf16.mxu0 0
        %10121 = vmatpush1.bf16.msra.mxu0 %v9530
        %10122 = vmatprep.subr.bf16.mxu0 0
        %10123 = vmatpush1.bf16.msra.mxu0 %v9531
        %10124 = vmatprep.subr.bf16.mxu0 0
        %10125 = vmatpush1.bf16.msra.mxu0 %v9532
        %10126 = vmatprep.subr.bf16.mxu0 0
        %10127 = vmatpush1.bf16.msra.mxu0 %v9533
        %10128 = vmatprep.subr.bf16.mxu0 0
        %10129 = vmatpush1.bf16.msra.mxu0 %v9534
        %10130 = vmatprep.subr.bf16.mxu0 0
        %10131 = vmatpush1.bf16.msra.mxu0 %v9535
        %10132 = vmatprep.subr.bf16.mxu0 0
        %10133 = vmatpush1.bf16.msra.mxu0 %v9536
        %10134 = vmatprep.subr.bf16.mxu0 0
        %10135 = vmatpush1.bf16.msra.mxu0 %v9537
        %10136 = vmatprep.subr.bf16.mxu0 0
        %10137 = vmatpush1.bf16.msra.mxu0 %v9538
        %10138 = vmatprep.subr.bf16.mxu0 0
        %10139 = vmatpush1.bf16.msra.mxu0 %v9539
        %10140 = vmatprep.subr.bf16.mxu0 0
        %10141 = vmatpush1.bf16.msra.mxu0 %v9540
        %10142 = vmatprep.subr.bf16.mxu0 0
        %10143 = vmatpush1.bf16.msra.mxu0 %v9541
        %10144 = vmatprep.subr.bf16.mxu0 0
        %10145 = vmatpush1.bf16.msra.mxu0 %v9542
        %10146 = vmatprep.subr.bf16.mxu0 0
        %10147 = vmatpush1.bf16.msra.mxu0 %v9543
        %10148 = vmatprep.mubr.bf16.mxu0 %v9940
        %10149 = vmatmul.mubr.bf16.gmra.mrb[0].mxu0 %v9939
        %v10150 = vpop.f32.mrb[0].mxu0
        %v10151 = vadd.f32 %v9622, %v10150
        %v10152 = vpop.f32.mrb[0].mxu0
        %v10153 = vpop.f32.mrb[0].mxu0
        %v10154 = vadd.f32 %v9627, %v10153
        %v10155 = vpop.f32.mrb[0].mxu0
        %10156 = vmatprep.mubr.bf16.mxu0 %v9950
        %10157 = vmatmul.mubr.bf16.gmra.mrb[0].mxu0 %v9949
        %v10158 = vpop.f32.mrb[0].mxu0
        %v10159 = vadd.f32 %v9632, %v10158
        %v10160 = vpop.f32.mrb[0].mxu0
        %v10161 = vpop.f32.mrb[0].mxu0
        %v10162 = vadd.f32 %v9637, %v10161
        %v10163 = vpop.f32.mrb[0].mxu0
        %10164 = vmatprep.mubr.bf16.mxu0 %v9960
        %10165 = vmatmul.mubr.bf16.gmra.mrb[0].mxu0 %v9959
        %v10166 = vpop.f32.mrb[0].mxu0
        %v10167 = vadd.f32 %v9642, %v10166
        %v10168 = vpop.f32.mrb[0].mxu0
        %v10169 = vpop.f32.mrb[0].mxu0
        %v10170 = vadd.f32 %v9647, %v10169
        %v10171 = vpop.f32.mrb[0].mxu0
        %10172 = vmatprep.mubr.bf16.mxu0 %v9970
        %10173 = vmatmul.mubr.bf16.gmra.mrb[0].mxu0 %v9969
        %v10174 = vpop.f32.mrb[0].mxu0
        %v10175 = vadd.f32 %v9652, %v10174
        %v10176 = vpop.f32.mrb[0].mxu0
        %v10177 = vpop.f32.mrb[0].mxu0
        %v10178 = vadd.f32 %v9657, %v10177
        %v10179 = vpop.f32.mrb[0].mxu0
        %10180 = vmatprep.mubr.bf16.mxu0 %v9980
        %10181 = vmatmul.mubr.bf16.gmra.mrb[0].mxu0 %v9979
        %v10182 = vpop.f32.mrb[0].mxu0
        %v10183 = vadd.f32 %v9662, %v10182
        %v10184 = vpop.f32.mrb[0].mxu0
        %v10185 = vpop.f32.mrb[0].mxu0
        %v10186 = vadd.f32 %v9667, %v10185
        %v10187 = vpop.f32.mrb[0].mxu0
        %10188 = vmatprep.mubr.bf16.mxu0 %v9990
        %10189 = vmatmul.mubr.bf16.gmra.mrb[0].mxu0 %v9989
        %v10190 = vpop.f32.mrb[0].mxu0
        %v10191 = vadd.f32 %v9672, %v10190
        %v10192 = vpop.f32.mrb[0].mxu0
        %v10193 = vpop.f32.mrb[0].mxu0
        %v10194 = vadd.f32 %v9677, %v10193
        %v10195 = vpop.f32.mrb[0].mxu0
        %10196 = vmatprep.mubr.bf16.mxu0 %v10000
        %10197 = vmatmul.mubr.bf16.gmra.mrb[0].mxu0 %v9999
        %v10198 = vpop.f32.mrb[0].mxu0
        %v10199 = vadd.f32 %v9682, %v10198
        %v10200 = vpop.f32.mrb[0].mxu0
        %v10201 = vpop.f32.mrb[0].mxu0
        %v10202 = vadd.f32 %v9687, %v10201
        %v10203 = vpop.f32.mrb[0].mxu0
        %10204 = vmatprep.mubr.bf16.mxu0 %v10010
        %10205 = vmatmul.mubr.bf16.gmra.mrb[0].mxu0 %v10009
        %v10206 = vpop.f32.mrb[0].mxu0
        %v10207 = vadd.f32 %v9692, %v10206
        %v10208 = vpop.f32.mrb[0].mxu0
        %v10209 = vpop.f32.mrb[0].mxu0
        %v10210 = vadd.f32 %v9697, %v10209
        %v10211 = vpop.f32.mrb[0].mxu0
        %10212 = vdwg.mxu0
        %10213 = vmatprep.subr.bf16.mxu0 0
        %10214 = vmatpush1.bf16.msra.mxu0 %v9544
        %10215 = vmatprep.subr.bf16.mxu0 0
        %10216 = vmatpush1.bf16.msra.mxu0 %v9545
        %10217 = vmatprep.subr.bf16.mxu0 0
        %10218 = vmatpush1.bf16.msra.mxu0 %v9546
        %10219 = vmatprep.subr.bf16.mxu0 0
        %10220 = vmatpush1.bf16.msra.mxu0 %v9547
        %10221 = vmatprep.subr.bf16.mxu0 0
        %10222 = vmatpush1.bf16.msra.mxu0 %v9548
        %10223 = vmatprep.subr.bf16.mxu0 0
        %10224 = vmatpush1.bf16.msra.mxu0 %v9549
        %10225 = vmatprep.subr.bf16.mxu0 0
        %10226 = vmatpush1.bf16.msra.mxu0 %v9550
        %10227 = vmatprep.subr.bf16.mxu0 0
        %10228 = vmatpush1.bf16.msra.mxu0 %v9551
        %10229 = vmatprep.subr.bf16.mxu0 0
        %10230 = vmatpush1.bf16.msra.mxu0 %v9552
        %10231 = vmatprep.subr.bf16.mxu0 0
        %10232 = vmatpush1.bf16.msra.mxu0 %v9553
        %10233 = vmatprep.subr.bf16.mxu0 0
        %10234 = vmatpush1.bf16.msra.mxu0 %v9554
        %10235 = vmatprep.subr.bf16.mxu0 0
        %10236 = vmatpush1.bf16.msra.mxu0 %v9555
        %10237 = vmatprep.subr.bf16.mxu0 0
        %10238 = vmatpush1.bf16.msra.mxu0 %v9556
        %10239 = vmatprep.subr.bf16.mxu0 0
        %10240 = vmatpush1.bf16.msra.mxu0 %v9557
        %10241 = vmatprep.subr.bf16.mxu0 0
        %10242 = vmatpush1.bf16.msra.mxu0 %v9558
        %10243 = vmatprep.subr.bf16.mxu0 0
        %10244 = vmatpush1.bf16.msra.mxu0 %v9559
        %10245 = vmatprep.mubr.bf16.mxu0 %v9942
        %10246 = vmatmul.mubr.bf16.gmra.mrb[0].mxu0 %v9941
        %v10247 = vpop.f32.mrb[0].mxu0
        %v10248 = vadd.f32 %v10151, %v10247
        %v10249 = vpop.f32.mrb[0].mxu0
        %v10250 = vpop.f32.mrb[0].mxu0
        %v10251 = vadd.f32 %v10154, %v10250
        %v10252 = vpop.f32.mrb[0].mxu0
        %10253 = vmatprep.mubr.bf16.mxu0 %v9952
        %10254 = vmatmul.mubr.bf16.gmra.mrb[0].mxu0 %v9951
        %v10255 = vpop.f32.mrb[0].mxu0
        %v10256 = vadd.f32 %v10159, %v10255
        %v10257 = vpop.f32.mrb[0].mxu0
        %v10258 = vpop.f32.mrb[0].mxu0
        %v10259 = vadd.f32 %v10162, %v10258
        %v10260 = vpop.f32.mrb[0].mxu0
        %10261 = vmatprep.mubr.bf16.mxu0 %v9962
        %10262 = vmatmul.mubr.bf16.gmra.mrb[0].mxu0 %v9961
        %v10263 = vpop.f32.mrb[0].mxu0
        %v10264 = vadd.f32 %v10167, %v10263
        %v10265 = vpop.f32.mrb[0].mxu0
        %v10266 = vpop.f32.mrb[0].mxu0
        %v10267 = vadd.f32 %v10170, %v10266
        %v10268 = vpop.f32.mrb[0].mxu0
        %10269 = vmatprep.mubr.bf16.mxu0 %v9972
        %10270 = vmatmul.mubr.bf16.gmra.mrb[0].mxu0 %v9971
        %v10271 = vpop.f32.mrb[0].mxu0
        %v10272 = vadd.f32 %v10175, %v10271
        %v10273 = vpop.f32.mrb[0].mxu0
        %v10274 = vpop.f32.mrb[0].mxu0
        %v10275 = vadd.f32 %v10178, %v10274
        %v10276 = vpop.f32.mrb[0].mxu0
        %10277 = vmatprep.mubr.bf16.mxu0 %v9982
        %10278 = vmatmul.mubr.bf16.gmra.mrb[0].mxu0 %v9981
        %v10279 = vpop.f32.mrb[0].mxu0
        %v10280 = vadd.f32 %v10183, %v10279
        %v10281 = vpop.f32.mrb[0].mxu0
        %v10282 = vpop.f32.mrb[0].mxu0
        %v10283 = vadd.f32 %v10186, %v10282
        %v10284 = vpop.f32.mrb[0].mxu0
        %10285 = vmatprep.mubr.bf16.mxu0 %v9992
        %10286 = vmatmul.mubr.bf16.gmra.mrb[0].mxu0 %v9991
        %v10287 = vpop.f32.mrb[0].mxu0
        %v10288 = vadd.f32 %v10191, %v10287
        %v10289 = vpop.f32.mrb[0].mxu0
        %v10290 = vpop.f32.mrb[0].mxu0
        %v10291 = vadd.f32 %v10194, %v10290
        %v10292 = vpop.f32.mrb[0].mxu0
        %10293 = vmatprep.mubr.bf16.mxu0 %v10002
        %10294 = vmatmul.mubr.bf16.gmra.mrb[0].mxu0 %v10001
        %v10295 = vpop.f32.mrb[0].mxu0
        %v10296 = vadd.f32 %v10199, %v10295
        %v10297 = vpop.f32.mrb[0].mxu0
        %v10298 = vpop.f32.mrb[0].mxu0
        %v10299 = vadd.f32 %v10202, %v10298
        %v10300 = vpop.f32.mrb[0].mxu0
        %10301 = vmatprep.mubr.bf16.mxu0 %v10012
        %10302 = vmatmul.mubr.bf16.gmra.mrb[0].mxu0 %v10011
        %v10303 = vpop.f32.mrb[0].mxu0
        %v10304 = vadd.f32 %v10207, %v10303
        %v10305 = vpop.f32.mrb[0].mxu0
        %v10306 = vpop.f32.mrb[0].mxu0
        %v10307 = vadd.f32 %v10210, %v10306
        %v10308 = vpop.f32.mrb[0].mxu0
        %10309 = vdwg.mxu0
        %10310 = vmatprep.subr.bf16.mxu0 0
        %10311 = vmatpush1.bf16.msra.mxu0 %v9560
        %10312 = vmatprep.subr.bf16.mxu0 0
        %10313 = vmatpush1.bf16.msra.mxu0 %v9561
        %10314 = vmatprep.subr.bf16.mxu0 0
        %10315 = vmatpush1.bf16.msra.mxu0 %v9562
        %10316 = vmatprep.subr.bf16.mxu0 0
        %10317 = vmatpush1.bf16.msra.mxu0 %v9563
        %10318 = vmatprep.subr.bf16.mxu0 0
        %10319 = vmatpush1.bf16.msra.mxu0 %v9564
        %10320 = vmatprep.subr.bf16.mxu0 0
        %10321 = vmatpush1.bf16.msra.mxu0 %v9565
        %10322 = vmatprep.subr.bf16.mxu0 0
        %10323 = vmatpush1.bf16.msra.mxu0 %v9566
        %10324 = vmatprep.subr.bf16.mxu0 0
        %10325 = vmatpush1.bf16.msra.mxu0 %v9567
        %10326 = vmatprep.subr.bf16.mxu0 0
        %10327 = vmatpush1.bf16.msra.mxu0 %v9568
        %10328 = vmatprep.subr.bf16.mxu0 0
        %10329 = vmatpush1.bf16.msra.mxu0 %v9569
        %10330 = vmatprep.subr.bf16.mxu0 0
        %10331 = vmatpush1.bf16.msra.mxu0 %v9570
        %10332 = vmatprep.subr.bf16.mxu0 0
        %10333 = vmatpush1.bf16.msra.mxu0 %v9571
        %10334 = vmatprep.subr.bf16.mxu0 0
        %10335 = vmatpush1.bf16.msra.mxu0 %v9572
        %10336 = vmatprep.subr.bf16.mxu0 0
        %10337 = vmatpush1.bf16.msra.mxu0 %v9573
        %10338 = vmatprep.subr.bf16.mxu0 0
        %10339 = vmatpush1.bf16.msra.mxu0 %v9574
        %10340 = vmatprep.subr.bf16.mxu0 0
        %10341 = vmatpush1.bf16.msra.mxu0 %v9575
        %10342 = vmatprep.mubr.bf16.mxu0 %v9944
        %10343 = vmatmul.mubr.bf16.gmra.mrb[0].mxu0 %v9943
        %v10344 = vpop.f32.mrb[0].mxu0
        %v10345 = vadd.f32 %v10248, %v10344
        %v10346 = vpop.f32.mrb[0].mxu0
        %v10347 = vpop.f32.mrb[0].mxu0
        %v10348 = vadd.f32 %v10251, %v10347
        %v10349 = vpop.f32.mrb[0].mxu0
        %10350 = vmatprep.mubr.bf16.mxu0 %v9954
        %10351 = vmatmul.mubr.bf16.gmra.mrb[0].mxu0 %v9953
        %v10352 = vpop.f32.mrb[0].mxu0
        %v10353 = vadd.f32 %v10256, %v10352
        %v10354 = vpop.f32.mrb[0].mxu0
        %v10355 = vpop.f32.mrb[0].mxu0
        %v10356 = vadd.f32 %v10259, %v10355
        %v10357 = vpop.f32.mrb[0].mxu0
        %10358 = vmatprep.mubr.bf16.mxu0 %v9964
        %10359 = vmatmul.mubr.bf16.gmra.mrb[0].mxu0 %v9963
        %v10360 = vpop.f32.mrb[0].mxu0
        %v10361 = vadd.f32 %v10264, %v10360
        %v10362 = vpop.f32.mrb[0].mxu0
        %v10363 = vpop.f32.mrb[0].mxu0
        %v10364 = vadd.f32 %v10267, %v10363
        %v10365 = vpop.f32.mrb[0].mxu0
        %10366 = vmatprep.mubr.bf16.mxu0 %v9974
        %10367 = vmatmul.mubr.bf16.gmra.mrb[0].mxu0 %v9973
        %v10368 = vpop.f32.mrb[0].mxu0
        %v10369 = vadd.f32 %v10272, %v10368
        %v10370 = vpop.f32.mrb[0].mxu0
        %v10371 = vpop.f32.mrb[0].mxu0
        %v10372 = vadd.f32 %v10275, %v10371
        %v10373 = vpop.f32.mrb[0].mxu0
        %10374 = vmatprep.mubr.bf16.mxu0 %v9984
        %10375 = vmatmul.mubr.bf16.gmra.mrb[0].mxu0 %v9983
        %v10376 = vpop.f32.mrb[0].mxu0
        %v10377 = vadd.f32 %v10280, %v10376
        %v10378 = vpop.f32.mrb[0].mxu0
        %v10379 = vpop.f32.mrb[0].mxu0
        %v10380 = vadd.f32 %v10283, %v10379
        %v10381 = vpop.f32.mrb[0].mxu0
        %10382 = vmatprep.mubr.bf16.mxu0 %v9994
        %10383 = vmatmul.mubr.bf16.gmra.mrb[0].mxu0 %v9993
        %v10384 = vpop.f32.mrb[0].mxu0
        %v10385 = vadd.f32 %v10288, %v10384
        %v10386 = vpop.f32.mrb[0].mxu0
        %v10387 = vpop.f32.mrb[0].mxu0
        %v10388 = vadd.f32 %v10291, %v10387
        %v10389 = vpop.f32.mrb[0].mxu0
        %10390 = vmatprep.mubr.bf16.mxu0 %v10004
        %10391 = vmatmul.mubr.bf16.gmra.mrb[0].mxu0 %v10003
        %v10392 = vpop.f32.mrb[0].mxu0
        %v10393 = vadd.f32 %v10296, %v10392
        %v10394 = vpop.f32.mrb[0].mxu0
        %v10395 = vpop.f32.mrb[0].mxu0
        %v10396 = vadd.f32 %v10299, %v10395
        %v10397 = vpop.f32.mrb[0].mxu0
        %10398 = vmatprep.mubr.bf16.mxu0 %v10014
        %10399 = vmatmul.mubr.bf16.gmra.mrb[0].mxu0 %v10013
        %v10400 = vpop.f32.mrb[0].mxu0
        %v10401 = vadd.f32 %v10304, %v10400
        %v10402 = vpop.f32.mrb[0].mxu0
        %v10403 = vpop.f32.mrb[0].mxu0
        %v10404 = vadd.f32 %v10307, %v10403
        %v10405 = vpop.f32.mrb[0].mxu0
        %10406 = vdwg.mxu0
        %10407 = vmatprep.subr.bf16.mxu0 0
        %10408 = vmatpush1.bf16.msra.mxu0 %v9576
        %10409 = vmatprep.subr.bf16.mxu0 0
        %10410 = vmatpush1.bf16.msra.mxu0 %v9577
        %10411 = vmatprep.subr.bf16.mxu0 0
        %10412 = vmatpush1.bf16.msra.mxu0 %v9578
        %10413 = vmatprep.subr.bf16.mxu0 0
        %10414 = vmatpush1.bf16.msra.mxu0 %v9579
        %10415 = vmatprep.subr.bf16.mxu0 0
        %10416 = vmatpush1.bf16.msra.mxu0 %v9580
        %10417 = vmatprep.subr.bf16.mxu0 0
        %10418 = vmatpush1.bf16.msra.mxu0 %v9581
        %10419 = vmatprep.subr.bf16.mxu0 0
        %10420 = vmatpush1.bf16.msra.mxu0 %v9582
        %10421 = vmatprep.subr.bf16.mxu0 0
        %10422 = vmatpush1.bf16.msra.mxu0 %v9583
        %10423 = vmatprep.subr.bf16.mxu0 0
        %10424 = vmatpush1.bf16.msra.mxu0 %v9584
        %10425 = vmatprep.subr.bf16.mxu0 0
        %10426 = vmatpush1.bf16.msra.mxu0 %v9585
        %10427 = vmatprep.subr.bf16.mxu0 0
        %10428 = vmatpush1.bf16.msra.mxu0 %v9586
        %10429 = vmatprep.subr.bf16.mxu0 0
        %10430 = vmatpush1.bf16.msra.mxu0 %v9587
        %10431 = vmatprep.subr.bf16.mxu0 0
        %10432 = vmatpush1.bf16.msra.mxu0 %v9588
        %10433 = vmatprep.subr.bf16.mxu0 0
        %10434 = vmatpush1.bf16.msra.mxu0 %v9589
        %10435 = vmatprep.subr.bf16.mxu0 0
        %10436 = vmatpush1.bf16.msra.mxu0 %v9590
        %10437 = vmatprep.subr.bf16.mxu0 0
        %10438 = vmatpush1.bf16.msra.mxu0 %v9591
        %10439 = vmatprep.mubr.bf16.mxu0 %v9946
        %10440 = vmatmul.mubr.bf16.gmra.mrb[0].mxu0 %v9945
        %v10441 = vpop.f32.mrb[0].mxu0
        %v10442 = vadd.f32 %v10345, %v10441
        %v10443 = vpop.f32.mrb[0].mxu0
        %v10444 = vpop.f32.mrb[0].mxu0
        %v10445 = vadd.f32 %v10348, %v10444
        %v10446 = vpop.f32.mrb[0].mxu0
        %10447 = vmatprep.mubr.bf16.mxu0 %v9956
        %10448 = vmatmul.mubr.bf16.gmra.mrb[0].mxu0 %v9955
        %v10449 = vpop.f32.mrb[0].mxu0
        %v10450 = vadd.f32 %v10353, %v10449
        %v10451 = vpop.f32.mrb[0].mxu0
        %v10452 = vpop.f32.mrb[0].mxu0
        %v10453 = vadd.f32 %v10356, %v10452
        %v10454 = vpop.f32.mrb[0].mxu0
        %10455 = vmatprep.mubr.bf16.mxu0 %v9966
        %10456 = vmatmul.mubr.bf16.gmra.mrb[0].mxu0 %v9965
        %v10457 = vpop.f32.mrb[0].mxu0
        %v10458 = vadd.f32 %v10361, %v10457
        %v10459 = vpop.f32.mrb[0].mxu0
        %v10460 = vpop.f32.mrb[0].mxu0
        %v10461 = vadd.f32 %v10364, %v10460
        %v10462 = vpop.f32.mrb[0].mxu0
        %10463 = vmatprep.mubr.bf16.mxu0 %v9976
        %10464 = vmatmul.mubr.bf16.gmra.mrb[0].mxu0 %v9975
        %v10465 = vpop.f32.mrb[0].mxu0
        %v10466 = vadd.f32 %v10369, %v10465
        %v10467 = vpop.f32.mrb[0].mxu0
        %v10468 = vpop.f32.mrb[0].mxu0
        %v10469 = vadd.f32 %v10372, %v10468
        %v10470 = vpop.f32.mrb[0].mxu0
        %10471 = vmatprep.mubr.bf16.mxu0 %v9986
        %10472 = vmatmul.mubr.bf16.gmra.mrb[0].mxu0 %v9985
        %v10473 = vpop.f32.mrb[0].mxu0
        %v10474 = vadd.f32 %v10377, %v10473
        %v10475 = vpop.f32.mrb[0].mxu0
        %v10476 = vpop.f32.mrb[0].mxu0
        %v10477 = vadd.f32 %v10380, %v10476
        %v10478 = vpop.f32.mrb[0].mxu0
        %10479 = vmatprep.mubr.bf16.mxu0 %v9996
        %10480 = vmatmul.mubr.bf16.gmra.mrb[0].mxu0 %v9995
        %v10481 = vpop.f32.mrb[0].mxu0
        %v10482 = vadd.f32 %v10385, %v10481
        %v10483 = vpop.f32.mrb[0].mxu0
        %v10484 = vpop.f32.mrb[0].mxu0
        %v10485 = vadd.f32 %v10388, %v10484
        %v10486 = vpop.f32.mrb[0].mxu0
        %10487 = vmatprep.mubr.bf16.mxu0 %v10006
        %10488 = vmatmul.mubr.bf16.gmra.mrb[0].mxu0 %v10005
        %v10489 = vpop.f32.mrb[0].mxu0
        %v10490 = vadd.f32 %v10393, %v10489
        %v10491 = vpop.f32.mrb[0].mxu0
        %v10492 = vpop.f32.mrb[0].mxu0
        %v10493 = vadd.f32 %v10396, %v10492
        %v10494 = vpop.f32.mrb[0].mxu0
        %10495 = vmatprep.mubr.bf16.mxu0 %v10016
        %10496 = vmatmul.mubr.bf16.gmra.mrb[0].mxu0 %v10015
        %v10497 = vpop.f32.mrb[0].mxu0
        %v10498 = vadd.f32 %v10401, %v10497
        %v10499 = vpop.f32.mrb[0].mxu0
        %v10500 = vpop.f32.mrb[0].mxu0
        %v10501 = vadd.f32 %v10404, %v10500
        %v10502 = vpop.f32.mrb[0].mxu0
        %10503 = vdwg.mxu0
        %10504 = vmatprep.subr.bf16.mxu0 0
        %10505 = vmatpush1.bf16.msra.mxu0 %v9592
        %10506 = vmatprep.subr.bf16.mxu0 0
        %10507 = vmatpush1.bf16.msra.mxu0 %v9593
        %10508 = vmatprep.subr.bf16.mxu0 0
        %10509 = vmatpush1.bf16.msra.mxu0 %v9594
        %10510 = vmatprep.subr.bf16.mxu0 0
        %10511 = vmatpush1.bf16.msra.mxu0 %v9595
        %10512 = vmatprep.subr.bf16.mxu0 0
        %10513 = vmatpush1.bf16.msra.mxu0 %v9596
        %10514 = vmatprep.subr.bf16.mxu0 0
        %10515 = vmatpush1.bf16.msra.mxu0 %v9597
        %10516 = vmatprep.subr.bf16.mxu0 0
        %10517 = vmatpush1.bf16.msra.mxu0 %v9598
        %10518 = vmatprep.subr.bf16.mxu0 0
        %10519 = vmatpush1.bf16.msra.mxu0 %v9599
        %10520 = vmatprep.subr.bf16.mxu0 0
        %10521 = vmatpush1.bf16.msra.mxu0 %v9600
        %10522 = vmatprep.subr.bf16.mxu0 0
        %10523 = vmatpush1.bf16.msra.mxu0 %v9601
        %10524 = vmatprep.subr.bf16.mxu0 0
        %10525 = vmatpush1.bf16.msra.mxu0 %v9602
        %10526 = vmatprep.subr.bf16.mxu0 0
        %10527 = vmatpush1.bf16.msra.mxu0 0
        %10528 = vmatprep.subr.bf16.mxu0 0
        %10529 = vmatpush1.bf16.msra.mxu0 0
        %10530 = vmatprep.subr.bf16.mxu0 0
        %10531 = vmatpush1.bf16.msra.mxu0 0
        %10532 = vmatprep.subr.bf16.mxu0 0
        %10533 = vmatpush1.bf16.msra.mxu0 0
        %10534 = vmatprep.subr.bf16.mxu0 0
        %10535 = vmatpush1.bf16.msra.mxu0 0
        %10536 = vmatprep.mubr.bf16.mxu0 %v10093
        %10537 = vmatmul.mubr.bf16.gmra.mrb[0].mxu0 %v9947
        %v10538 = vpop.f32.mrb[0].mxu0
        %v10539 = vadd.f32 %v10442, %v10538
        %v10540 = vpop.f32.mrb[0].mxu0
        %v10541 = vpop.f32.mrb[0].mxu0
        %v10542 = vadd.f32 %v10445, %v10541
        %v10543 = vpop.f32.mrb[0].mxu0
        %10544 = vmatprep.mubr.bf16.mxu0 %v10096
        %10545 = vmatmul.mubr.bf16.gmra.mrb[0].mxu0 %v9957
        %v10546 = vpop.f32.mrb[0].mxu0
        %v10547 = vadd.f32 %v10450, %v10546
        %v10548 = vpop.f32.mrb[0].mxu0
        %v10549 = vpop.f32.mrb[0].mxu0
        %v10550 = vadd.f32 %v10453, %v10549
        %v10551 = vpop.f32.mrb[0].mxu0
        %10552 = vmatprep.mubr.bf16.mxu0 %v10099
        %10553 = vmatmul.mubr.bf16.gmra.mrb[0].mxu0 %v9967
        %v10554 = vpop.f32.mrb[0].mxu0
        %v10555 = vadd.f32 %v10458, %v10554
        %v10556 = vpop.f32.mrb[0].mxu0
        %v10557 = vpop.f32.mrb[0].mxu0
        %v10558 = vadd.f32 %v10461, %v10557
        %v10559 = vpop.f32.mrb[0].mxu0
        %10560 = vmatprep.mubr.bf16.mxu0 %v10102
        %10561 = vmatmul.mubr.bf16.gmra.mrb[0].mxu0 %v9977
        %v10562 = vpop.f32.mrb[0].mxu0
        %v10563 = vadd.f32 %v10466, %v10562
        %v10564 = vpop.f32.mrb[0].mxu0
        %v10565 = vpop.f32.mrb[0].mxu0
        %v10566 = vadd.f32 %v10469, %v10565
        %v10567 = vpop.f32.mrb[0].mxu0
        %10568 = vmatprep.mubr.bf16.mxu0 %v10105
        %10569 = vmatmul.mubr.bf16.gmra.mrb[0].mxu0 %v9987
        %v10570 = vpop.f32.mrb[0].mxu0
        %v10571 = vadd.f32 %v10474, %v10570
        %v10572 = vpop.f32.mrb[0].mxu0
        %v10573 = vpop.f32.mrb[0].mxu0
        %v10574 = vadd.f32 %v10477, %v10573
        %v10575 = vpop.f32.mrb[0].mxu0
        %10576 = vmatprep.mubr.bf16.mxu0 %v10108
        %10577 = vmatmul.mubr.bf16.gmra.mrb[0].mxu0 %v9997
        %v10578 = vpop.f32.mrb[0].mxu0
        %v10579 = vadd.f32 %v10482, %v10578
        %v10580 = vpop.f32.mrb[0].mxu0
        %v10581 = vpop.f32.mrb[0].mxu0
        %v10582 = vadd.f32 %v10485, %v10581
        %v10583 = vpop.f32.mrb[0].mxu0
        %10584 = vmatprep.mubr.bf16.mxu0 %v10111
        %10585 = vmatmul.mubr.bf16.gmra.mrb[0].mxu0 %v10007
        %v10586 = vpop.f32.mrb[0].mxu0
        %v10587 = vadd.f32 %v10490, %v10586
        %v10588 = vpop.f32.mrb[0].mxu0
        %v10589 = vpop.f32.mrb[0].mxu0
        %v10590 = vadd.f32 %v10493, %v10589
        %v10591 = vpop.f32.mrb[0].mxu0
        %10592 = vmatprep.mubr.bf16.mxu0 %v10114
        %10593 = vmatmul.mubr.bf16.gmra.mrb[0].mxu0 %v10017
        %v10594 = vpop.f32.mrb[0].mxu0
        %v10595 = vadd.f32 %v10498, %v10594
        %v10596 = vpop.f32.mrb[0].mxu0
        %v10597 = vpop.f32.mrb[0].mxu0
        %v10598 = vadd.f32 %v10501, %v10597
        %v10599 = vpop.f32.mrb[0].mxu0
        %10600 = vdwg.mxu0
        %v10601 = vmax.f32 %v10539, 0.0
        %v10602 = vmax.f32 %v10542, 0.0
        %v10603 = vmax.f32 %v10547, 0.0
        %v10604 = vmax.f32 %v10550, 0.0
        %v10605 = vmax.f32 %v10555, 0.0
        %v10606 = vmax.f32 %v10558, 0.0
        %v10607 = vmax.f32 %v10563, 0.0
        %v10608 = vmax.f32 %v10566, 0.0
        %v10609 = vmax.f32 %v10571, 0.0
        %v10610 = vmax.f32 %v10574, 0.0
        %v10611 = vmax.f32 %v10579, 0.0
        %v10612 = vmax.f32 %v10582, 0.0
        %v10613 = vmax.f32 %v10587, 0.0
        %v10614 = vmax.f32 %v10590, 0.0
        %v10615 = vmax.f32 %v10595, 0.0
        %v10616 = vmax.f32 %v10598, 0.0
        %v10617 = vpack.c.bf16 %v10602, %v10601
        %v10618 = vpack.c.bf16 %v10604, %v10603
        %v10619 = vpack.c.bf16 %v10606, %v10605
        %v10620 = vpack.c.bf16 %v10608, %v10607
        %v10621 = vpack.c.bf16 %v10610, %v10609
        %v10622 = vpack.c.bf16 %v10612, %v10611
        %v10623 = vpack.c.bf16 %v10614, %v10613
        %v10624 = vpack.c.bf16 %v10616, %v10615
        %v10625 = vld [vmem:[%s7] sm:$0xf]
        %v10626 = vld [vmem:[%s7 + $0x4] sm:$0xf]
        %v10627 = vld [vmem:[%s7 + $0x8] sm:$0xf]
        %v10628 = vld [vmem:[%s7 + $0xc] sm:$0xf]
        %v10629 = vld [vmem:[%s7 + $0x10] sm:$0xf]
        %v10630 = vld [vmem:[%s7 + $0x14] sm:$0xf]
        %v10631 = vld [vmem:[%s7 + $0x18] sm:$0xf]
        %v10632 = vld [vmem:[%s7 + $0x1c] sm:$0xf]
        %v10633 = vld [vmem:[%s7 + $0x20] sm:$0xf]
        %v10634 = vld [vmem:[%s7 + $0x24] sm:$0xf]
        %v10635 = vld [vmem:[%s7 + $0x28] sm:$0xf]
        %v10636 = vld [vmem:[%s7 + $0x2c] sm:$0xf]
        %v10637 = vld [vmem:[%s7 + $0x30] sm:$0xf]
        %v10638 = vld [vmem:[%s7 + $0x34] sm:$0xf]
        %v10639 = vld [vmem:[%s7 + $0x38] sm:$0xf]
        %v10640 = vld [vmem:[%s7 + $0x3c] sm:$0xf]
        %v10657 = vunpack.c.l.b16 %v10625
        %v10658 = vunpack.c.l.b16 %v10626
        %v10659 = vunpack.c.l.b16 %v10627
        %v10660 = vunpack.c.l.b16 %v10628
        %v10661 = vunpack.c.l.b16 %v10629
        %v10662 = vunpack.c.l.b16 %v10630
        %v10663 = vunpack.c.l.b16 %v10631
        %v10664 = vunpack.c.l.b16 %v10632
        %v10665 = vunpack.c.l.b16 %v10633
        %v10666 = vunpack.c.l.b16 %v10634
        %v10667 = vunpack.c.l.b16 %v10635
        %v10668 = vunpack.c.l.b16 %v10636
        %v10669 = vunpack.c.l.b16 %v10637
        %v10670 = vunpack.c.l.b16 %v10638
        %v10671 = vunpack.c.l.b16 %v10639
        %v10672 = vunpack.c.l.b16 %v10640
        %v10673 = vpack.c.b16 %v10658, %v10657
        %v10674 = vpack.c.b16 %v10660, %v10659
        %v10675 = vpack.c.b16 %v10662, %v10661
        %v10676 = vpack.c.b16 %v10664, %v10663
        %v10677 = vpack.c.b16 %v10666, %v10665
        %v10678 = vpack.c.b16 %v10668, %v10667
        %v10679 = vpack.c.b16 %v10670, %v10669
        %v10680 = vpack.c.b16 %v10672, %v10671
        %10689 = vmatprep.subr.bf16.mxu0 0
        %10690 = vmatpush1.bf16.msra.mxu0 %v10673
        %10691 = vmatprep.subr.bf16.mxu0 0
        %10692 = vmatpush1.bf16.msra.mxu0 %v10674
        %10693 = vmatprep.subr.bf16.mxu0 0
        %10694 = vmatpush1.bf16.msra.mxu0 %v10675
        %10695 = vmatprep.subr.bf16.mxu0 0
        %10696 = vmatpush1.bf16.msra.mxu0 %v10676
        %10697 = vmatprep.subr.bf16.mxu0 0
        %10698 = vmatpush1.bf16.msra.mxu0 %v10677
        %10699 = vmatprep.subr.bf16.mxu0 0
        %10700 = vmatpush1.bf16.msra.mxu0 %v10678
        %10701 = vmatprep.subr.bf16.mxu0 0
        %10702 = vmatpush1.bf16.msra.mxu0 %v10679
        %10703 = vmatprep.subr.bf16.mxu0 0
        %10704 = vmatpush1.bf16.msra.mxu0 %v10680
        %10705 = vmatprep.subr.bf16.mxu0 0
        %10706 = vmatpush1.bf16.msra.mxu0 0
        %10707 = vmatprep.subr.bf16.mxu0 0
        %10708 = vmatpush1.bf16.msra.mxu0 0
        %10709 = vmatprep.subr.bf16.mxu0 0
        %10710 = vmatpush1.bf16.msra.mxu0 0
        %10711 = vmatprep.subr.bf16.mxu0 0
        %10712 = vmatpush1.bf16.msra.mxu0 0
        %10713 = vmatprep.subr.bf16.mxu0 0
        %10714 = vmatpush1.bf16.msra.mxu0 0
        %10715 = vmatprep.subr.bf16.mxu0 0
        %10716 = vmatpush1.bf16.msra.mxu0 0
        %10717 = vmatprep.subr.bf16.mxu0 0
        %10718 = vmatpush1.bf16.msra.mxu0 0
        %10719 = vmatprep.subr.bf16.mxu0 0
        %10720 = vmatpush1.bf16.msra.mxu0 0
        %10721 = vmatprep.mubr.bf16.mxu0 0
        %10722 = vmatmul.mubr.bf16.gmra.mrb[0].mxu0 %v10617
        %v10723 = vpop.f32.mrb[0].mxu0
        %v10724 = vadd.f32 0.0, %v10723
        %v10725 = vpop.f32.mrb[0].mxu0
        %v10726 = vpop.f32.mrb[0].mxu0
        %v10727 = vadd.f32 0.0, %v10726
        %v10728 = vpop.f32.mrb[0].mxu0
        %10729 = vmatprep.mubr.bf16.mxu0 0
        %10730 = vmatmul.mubr.bf16.gmra.mrb[0].mxu0 %v10618
        %v10731 = vpop.f32.mrb[0].mxu0
        %v10732 = vadd.f32 0.0, %v10731
        %v10733 = vpop.f32.mrb[0].mxu0
        %v10734 = vpop.f32.mrb[0].mxu0
        %v10735 = vadd.f32 0.0, %v10734
        %v10736 = vpop.f32.mrb[0].mxu0
        %10737 = vmatprep.mubr.bf16.mxu0 0
        %10738 = vmatmul.mubr.bf16.gmra.mrb[0].mxu0 %v10619
        %v10739 = vpop.f32.mrb[0].mxu0
        %v10740 = vadd.f32 0.0, %v10739
        %v10741 = vpop.f32.mrb[0].mxu0
        %v10742 = vpop.f32.mrb[0].mxu0
        %v10743 = vadd.f32 0.0, %v10742
        %v10744 = vpop.f32.mrb[0].mxu0
        %10745 = vmatprep.mubr.bf16.mxu0 0
        %10746 = vmatmul.mubr.bf16.gmra.mrb[0].mxu0 %v10620
        %v10747 = vpop.f32.mrb[0].mxu0
        %v10748 = vadd.f32 0.0, %v10747
        %v10749 = vpop.f32.mrb[0].mxu0
        %v10750 = vpop.f32.mrb[0].mxu0
        %v10751 = vadd.f32 0.0, %v10750
        %v10752 = vpop.f32.mrb[0].mxu0
        %10753 = vmatprep.mubr.bf16.mxu0 0
        %10754 = vmatmul.mubr.bf16.gmra.mrb[0].mxu0 %v10621
        %v10755 = vpop.f32.mrb[0].mxu0
        %v10756 = vadd.f32 0.0, %v10755
        %v10757 = vpop.f32.mrb[0].mxu0
        %v10758 = vpop.f32.mrb[0].mxu0
        %v10759 = vadd.f32 0.0, %v10758
        %v10760 = vpop.f32.mrb[0].mxu0
        %10761 = vmatprep.mubr.bf16.mxu0 0
        %10762 = vmatmul.mubr.bf16.gmra.mrb[0].mxu0 %v10622
        %v10763 = vpop.f32.mrb[0].mxu0
        %v10764 = vadd.f32 0.0, %v10763
        %v10765 = vpop.f32.mrb[0].mxu0
        %v10766 = vpop.f32.mrb[0].mxu0
        %v10767 = vadd.f32 0.0, %v10766
        %v10768 = vpop.f32.mrb[0].mxu0
        %10769 = vmatprep.mubr.bf16.mxu0 0
        %10770 = vmatmul.mubr.bf16.gmra.mrb[0].mxu0 %v10623
        %v10771 = vpop.f32.mrb[0].mxu0
        %v10772 = vadd.f32 0.0, %v10771
        %v10773 = vpop.f32.mrb[0].mxu0
        %v10774 = vpop.f32.mrb[0].mxu0
        %v10775 = vadd.f32 0.0, %v10774
        %v10776 = vpop.f32.mrb[0].mxu0
        %10777 = vmatprep.mubr.bf16.mxu0 0
        %10778 = vmatmul.mubr.bf16.gmra.mrb[0].mxu0 %v10624
        %v10779 = vpop.f32.mrb[0].mxu0
        %v10780 = vadd.f32 0.0, %v10779
        %v10781 = vpop.f32.mrb[0].mxu0
        %v10782 = vpop.f32.mrb[0].mxu0
        %v10783 = vadd.f32 0.0, %v10782
        %v10784 = vpop.f32.mrb[0].mxu0
        %10785 = vdwg.mxu0
        %s10786 = scalar_lea.vmem %s7, 64
        %v10787 = vld [vmem:[%s10786] sm:$0xf]
        %v10788 = vld [vmem:[%s10786 + $0x4] sm:$0xf]
        %v10789 = vld [vmem:[%s10786 + $0x8] sm:$0xf]
        %v10790 = vld [vmem:[%s10786 + $0xc] sm:$0xf]
        %v10791 = vld [vmem:[%s10786 + $0x10] sm:$0xf]
        %v10792 = vld [vmem:[%s10786 + $0x14] sm:$0xf]
        %v10793 = vld [vmem:[%s10786 + $0x18] sm:$0xf]
        %v10794 = vld [vmem:[%s10786 + $0x1c] sm:$0xf]
        %v10795 = vld [vmem:[%s10786 + $0x20] sm:$0xf]
        %v10796 = vld [vmem:[%s10786 + $0x24] sm:$0xf]
        %v10797 = vld [vmem:[%s10786 + $0x28] sm:$0xf]
        %v10798 = vld [vmem:[%s10786 + $0x2c] sm:$0xf]
        %v10799 = vld [vmem:[%s10786 + $0x30] sm:$0xf]
        %v10800 = vld [vmem:[%s10786 + $0x34] sm:$0xf]
        %v10801 = vld [vmem:[%s10786 + $0x38] sm:$0xf]
        %v10802 = vld [vmem:[%s10786 + $0x3c] sm:$0xf]
        %v10819 = vunpack.c.l.b16 %v10787
        %v10820 = vunpack.c.l.b16 %v10788
        %v10821 = vunpack.c.l.b16 %v10789
        %v10822 = vunpack.c.l.b16 %v10790
        %v10823 = vunpack.c.l.b16 %v10791
        %v10824 = vunpack.c.l.b16 %v10792
        %v10825 = vunpack.c.l.b16 %v10793
        %v10826 = vunpack.c.l.b16 %v10794
        %v10827 = vunpack.c.l.b16 %v10795
        %v10828 = vunpack.c.l.b16 %v10796
        %v10829 = vunpack.c.l.b16 %v10797
        %v10830 = vunpack.c.l.b16 %v10798
        %v10831 = vunpack.c.l.b16 %v10799
        %v10832 = vunpack.c.l.b16 %v10800
        %v10833 = vunpack.c.l.b16 %v10801
        %v10834 = vunpack.c.l.b16 %v10802
        %v10835 = vpack.c.b16 %v10820, %v10819
        %v10836 = vpack.c.b16 %v10822, %v10821
        %v10837 = vpack.c.b16 %v10824, %v10823
        %v10838 = vpack.c.b16 %v10826, %v10825
        %v10839 = vpack.c.b16 %v10828, %v10827
        %v10840 = vpack.c.b16 %v10830, %v10829
        %v10841 = vpack.c.b16 %v10832, %v10831
        %v10842 = vpack.c.b16 %v10834, %v10833
        %10851 = vmatprep.subr.bf16.mxu0 0
        %10852 = vmatpush1.bf16.msra.mxu0 %v10835
        %10853 = vmatprep.subr.bf16.mxu0 0
        %10854 = vmatpush1.bf16.msra.mxu0 %v10836
        %10855 = vmatprep.subr.bf16.mxu0 0
        %10856 = vmatpush1.bf16.msra.mxu0 %v10837
        %10857 = vmatprep.subr.bf16.mxu0 0
        %10858 = vmatpush1.bf16.msra.mxu0 %v10838
        %10859 = vmatprep.subr.bf16.mxu0 0
        %10860 = vmatpush1.bf16.msra.mxu0 %v10839
        %10861 = vmatprep.subr.bf16.mxu0 0
        %10862 = vmatpush1.bf16.msra.mxu0 %v10840
        %10863 = vmatprep.subr.bf16.mxu0 0
        %10864 = vmatpush1.bf16.msra.mxu0 %v10841
        %10865 = vmatprep.subr.bf16.mxu0 0
        %10866 = vmatpush1.bf16.msra.mxu0 %v10842
        %10867 = vmatprep.subr.bf16.mxu0 0
        %10868 = vmatpush1.bf16.msra.mxu0 0
        %10869 = vmatprep.subr.bf16.mxu0 0
        %10870 = vmatpush1.bf16.msra.mxu0 0
        %10871 = vmatprep.subr.bf16.mxu0 0
        %10872 = vmatpush1.bf16.msra.mxu0 0
        %10873 = vmatprep.subr.bf16.mxu0 0
        %10874 = vmatpush1.bf16.msra.mxu0 0
        %10875 = vmatprep.subr.bf16.mxu0 0
        %10876 = vmatpush1.bf16.msra.mxu0 0
        %10877 = vmatprep.subr.bf16.mxu0 0
        %10878 = vmatpush1.bf16.msra.mxu0 0
        %10879 = vmatprep.subr.bf16.mxu0 0
        %10880 = vmatpush1.bf16.msra.mxu0 0
        %10881 = vmatprep.subr.bf16.mxu0 0
        %10882 = vmatpush1.bf16.msra.mxu0 0
        %10883 = vmatprep.mubr.bf16.mxu0 0
        %10884 = vmatmul.mubr.bf16.gmra.mrb[0].mxu0 %v10617
        %v10885 = vpop.f32.mrb[0].mxu0
        %v10886 = vadd.f32 0.0, %v10885
        %v10887 = vpop.f32.mrb[0].mxu0
        %v10888 = vpop.f32.mrb[0].mxu0
        %v10889 = vadd.f32 0.0, %v10888
        %v10890 = vpop.f32.mrb[0].mxu0
        %10891 = vmatprep.mubr.bf16.mxu0 0
        %10892 = vmatmul.mubr.bf16.gmra.mrb[0].mxu0 %v10618
        %v10893 = vpop.f32.mrb[0].mxu0
        %v10894 = vadd.f32 0.0, %v10893
        %v10895 = vpop.f32.mrb[0].mxu0
        %v10896 = vpop.f32.mrb[0].mxu0
        %v10897 = vadd.f32 0.0, %v10896
        %v10898 = vpop.f32.mrb[0].mxu0
        %10899 = vmatprep.mubr.bf16.mxu0 0
        %10900 = vmatmul.mubr.bf16.gmra.mrb[0].mxu0 %v10619
        %v10901 = vpop.f32.mrb[0].mxu0
        %v10902 = vadd.f32 0.0, %v10901
        %v10903 = vpop.f32.mrb[0].mxu0
        %v10904 = vpop.f32.mrb[0].mxu0
        %v10905 = vadd.f32 0.0, %v10904
        %v10906 = vpop.f32.mrb[0].mxu0
        %10907 = vmatprep.mubr.bf16.mxu0 0
        %10908 = vmatmul.mubr.bf16.gmra.mrb[0].mxu0 %v10620
        %v10909 = vpop.f32.mrb[0].mxu0
        %v10910 = vadd.f32 0.0, %v10909
        %v10911 = vpop.f32.mrb[0].mxu0
        %v10912 = vpop.f32.mrb[0].mxu0
        %v10913 = vadd.f32 0.0, %v10912
        %v10914 = vpop.f32.mrb[0].mxu0
        %10915 = vmatprep.mubr.bf16.mxu0 0
        %10916 = vmatmul.mubr.bf16.gmra.mrb[0].mxu0 %v10621
        %v10917 = vpop.f32.mrb[0].mxu0
        %v10918 = vadd.f32 0.0, %v10917
        %v10919 = vpop.f32.mrb[0].mxu0
        %v10920 = vpop.f32.mrb[0].mxu0
        %v10921 = vadd.f32 0.0, %v10920
        %v10922 = vpop.f32.mrb[0].mxu0
        %10923 = vmatprep.mubr.bf16.mxu0 0
        %10924 = vmatmul.mubr.bf16.gmra.mrb[0].mxu0 %v10622
        %v10925 = vpop.f32.mrb[0].mxu0
        %v10926 = vadd.f32 0.0, %v10925
        %v10927 = vpop.f32.mrb[0].mxu0
        %v10928 = vpop.f32.mrb[0].mxu0
        %v10929 = vadd.f32 0.0, %v10928
        %v10930 = vpop.f32.mrb[0].mxu0
        %10931 = vmatprep.mubr.bf16.mxu0 0
        %10932 = vmatmul.mubr.bf16.gmra.mrb[0].mxu0 %v10623
        %v10933 = vpop.f32.mrb[0].mxu0
        %v10934 = vadd.f32 0.0, %v10933
        %v10935 = vpop.f32.mrb[0].mxu0
        %v10936 = vpop.f32.mrb[0].mxu0
        %v10937 = vadd.f32 0.0, %v10936
        %v10938 = vpop.f32.mrb[0].mxu0
        %10939 = vmatprep.mubr.bf16.mxu0 0
        %10940 = vmatmul.mubr.bf16.gmra.mrb[0].mxu0 %v10624
        %v10941 = vpop.f32.mrb[0].mxu0
        %v10942 = vadd.f32 0.0, %v10941
        %v10943 = vpop.f32.mrb[0].mxu0
        %v10944 = vpop.f32.mrb[0].mxu0
        %v10945 = vadd.f32 0.0, %v10944
        %v10946 = vpop.f32.mrb[0].mxu0
        %10947 = vdwg.mxu0
        %v10948 = vmax.f32 %v10724, %v10886
        %v10949 = vmax.f32 %v10727, %v10889
        %v10950 = vmax.f32 %v10732, %v10894
        %v10951 = vmax.f32 %v10735, %v10897
        %v10952 = vmax.f32 %v10740, %v10902
        %v10953 = vmax.f32 %v10743, %v10905
        %v10954 = vmax.f32 %v10748, %v10910
        %v10955 = vmax.f32 %v10751, %v10913
        %v10956 = vmax.f32 %v10756, %v10918
        %v10957 = vmax.f32 %v10759, %v10921
        %v10958 = vmax.f32 %v10764, %v10926
        %v10959 = vmax.f32 %v10767, %v10929
        %v10960 = vmax.f32 %v10772, %v10934
        %v10961 = vmax.f32 %v10775, %v10937
        %v10962 = vmax.f32 %v10780, %v10942
        %v10963 = vmax.f32 %v10783, %v10945
        %s10964 = scalar_lea.vmem %s7, 128
        %v10965 = vld [vmem:[%s10964] sm:$0xf]
        %v10966 = vld [vmem:[%s10964 + $0x4] sm:$0xf]
        %v10967 = vld [vmem:[%s10964 + $0x8] sm:$0xf]
        %v10968 = vld [vmem:[%s10964 + $0xc] sm:$0xf]
        %v10969 = vld [vmem:[%s10964 + $0x10] sm:$0xf]
        %v10970 = vld [vmem:[%s10964 + $0x14] sm:$0xf]
        %v10971 = vld [vmem:[%s10964 + $0x18] sm:$0xf]
        %v10972 = vld [vmem:[%s10964 + $0x1c] sm:$0xf]
        %v10973 = vld [vmem:[%s10964 + $0x20] sm:$0xf]
        %v10974 = vld [vmem:[%s10964 + $0x24] sm:$0xf]
        %v10975 = vld [vmem:[%s10964 + $0x28] sm:$0xf]
        %v10976 = vld [vmem:[%s10964 + $0x2c] sm:$0xf]
        %v10977 = vld [vmem:[%s10964 + $0x30] sm:$0xf]
        %v10978 = vld [vmem:[%s10964 + $0x34] sm:$0xf]
        %v10979 = vld [vmem:[%s10964 + $0x38] sm:$0xf]
        %v10980 = vld [vmem:[%s10964 + $0x3c] sm:$0xf]
        %v10997 = vunpack.c.l.b16 %v10965
        %v10998 = vunpack.c.l.b16 %v10966
        %v10999 = vunpack.c.l.b16 %v10967
        %v11000 = vunpack.c.l.b16 %v10968
        %v11001 = vunpack.c.l.b16 %v10969
        %v11002 = vunpack.c.l.b16 %v10970
        %v11003 = vunpack.c.l.b16 %v10971
        %v11004 = vunpack.c.l.b16 %v10972
        %v11005 = vunpack.c.l.b16 %v10973
        %v11006 = vunpack.c.l.b16 %v10974
        %v11007 = vunpack.c.l.b16 %v10975
        %v11008 = vunpack.c.l.b16 %v10976
        %v11009 = vunpack.c.l.b16 %v10977
        %v11010 = vunpack.c.l.b16 %v10978
        %v11011 = vunpack.c.l.b16 %v10979
        %v11012 = vunpack.c.l.b16 %v10980
        %v11013 = vpack.c.b16 %v10998, %v10997
        %v11014 = vpack.c.b16 %v11000, %v10999
        %v11015 = vpack.c.b16 %v11002, %v11001
        %v11016 = vpack.c.b16 %v11004, %v11003
        %v11017 = vpack.c.b16 %v11006, %v11005
        %v11018 = vpack.c.b16 %v11008, %v11007
        %v11019 = vpack.c.b16 %v11010, %v11009
        %v11020 = vpack.c.b16 %v11012, %v11011
        %11029 = vmatprep.subr.bf16.mxu0 0
        %11030 = vmatpush1.bf16.msra.mxu0 %v11013
        %11031 = vmatprep.subr.bf16.mxu0 0
        %11032 = vmatpush1.bf16.msra.mxu0 %v11014
        %11033 = vmatprep.subr.bf16.mxu0 0
        %11034 = vmatpush1.bf16.msra.mxu0 %v11015
        %11035 = vmatprep.subr.bf16.mxu0 0
        %11036 = vmatpush1.bf16.msra.mxu0 %v11016
        %11037 = vmatprep.subr.bf16.mxu0 0
        %11038 = vmatpush1.bf16.msra.mxu0 %v11017
        %11039 = vmatprep.subr.bf16.mxu0 0
        %11040 = vmatpush1.bf16.msra.mxu0 %v11018
        %11041 = vmatprep.subr.bf16.mxu0 0
        %11042 = vmatpush1.bf16.msra.mxu0 %v11019
        %11043 = vmatprep.subr.bf16.mxu0 0
        %11044 = vmatpush1.bf16.msra.mxu0 %v11020
        %11045 = vmatprep.subr.bf16.mxu0 0
        %11046 = vmatpush1.bf16.msra.mxu0 0
        %11047 = vmatprep.subr.bf16.mxu0 0
        %11048 = vmatpush1.bf16.msra.mxu0 0
        %11049 = vmatprep.subr.bf16.mxu0 0
        %11050 = vmatpush1.bf16.msra.mxu0 0
        %11051 = vmatprep.subr.bf16.mxu0 0
        %11052 = vmatpush1.bf16.msra.mxu0 0
        %11053 = vmatprep.subr.bf16.mxu0 0
        %11054 = vmatpush1.bf16.msra.mxu0 0
        %11055 = vmatprep.subr.bf16.mxu0 0
        %11056 = vmatpush1.bf16.msra.mxu0 0
        %11057 = vmatprep.subr.bf16.mxu0 0
        %11058 = vmatpush1.bf16.msra.mxu0 0
        %11059 = vmatprep.subr.bf16.mxu0 0
        %11060 = vmatpush1.bf16.msra.mxu0 0
        %11061 = vmatprep.mubr.bf16.mxu0 0
        %11062 = vmatmul.mubr.bf16.gmra.mrb[0].mxu0 %v10617
        %v11063 = vpop.f32.mrb[0].mxu0
        %v11064 = vadd.f32 0.0, %v11063
        %v11065 = vpop.f32.mrb[0].mxu0
        %v11066 = vpop.f32.mrb[0].mxu0
        %v11067 = vadd.f32 0.0, %v11066
        %v11068 = vpop.f32.mrb[0].mxu0
        %11069 = vmatprep.mubr.bf16.mxu0 0
        %11070 = vmatmul.mubr.bf16.gmra.mrb[0].mxu0 %v10618
        %v11071 = vpop.f32.mrb[0].mxu0
        %v11072 = vadd.f32 0.0, %v11071
        %v11073 = vpop.f32.mrb[0].mxu0
        %v11074 = vpop.f32.mrb[0].mxu0
        %v11075 = vadd.f32 0.0, %v11074
        %v11076 = vpop.f32.mrb[0].mxu0
        %11077 = vmatprep.mubr.bf16.mxu0 0
        %11078 = vmatmul.mubr.bf16.gmra.mrb[0].mxu0 %v10619
        %v11079 = vpop.f32.mrb[0].mxu0
        %v11080 = vadd.f32 0.0, %v11079
        %v11081 = vpop.f32.mrb[0].mxu0
        %v11082 = vpop.f32.mrb[0].mxu0
        %v11083 = vadd.f32 0.0, %v11082
        %v11084 = vpop.f32.mrb[0].mxu0
        %11085 = vmatprep.mubr.bf16.mxu0 0
        %11086 = vmatmul.mubr.bf16.gmra.mrb[0].mxu0 %v10620
        %v11087 = vpop.f32.mrb[0].mxu0
        %v11088 = vadd.f32 0.0, %v11087
        %v11089 = vpop.f32.mrb[0].mxu0
        %v11090 = vpop.f32.mrb[0].mxu0
        %v11091 = vadd.f32 0.0, %v11090
        %v11092 = vpop.f32.mrb[0].mxu0
        %11093 = vmatprep.mubr.bf16.mxu0 0
        %11094 = vmatmul.mubr.bf16.gmra.mrb[0].mxu0 %v10621
        %v11095 = vpop.f32.mrb[0].mxu0
        %v11096 = vadd.f32 0.0, %v11095
        %v11097 = vpop.f32.mrb[0].mxu0
        %v11098 = vpop.f32.mrb[0].mxu0
        %v11099 = vadd.f32 0.0, %v11098
        %v11100 = vpop.f32.mrb[0].mxu0
        %11101 = vmatprep.mubr.bf16.mxu0 0
        %11102 = vmatmul.mubr.bf16.gmra.mrb[0].mxu0 %v10622
        %v11103 = vpop.f32.mrb[0].mxu0
        %v11104 = vadd.f32 0.0, %v11103
        %v11105 = vpop.f32.mrb[0].mxu0
        %v11106 = vpop.f32.mrb[0].mxu0
        %v11107 = vadd.f32 0.0, %v11106
        %v11108 = vpop.f32.mrb[0].mxu0
        %11109 = vmatprep.mubr.bf16.mxu0 0
        %11110 = vmatmul.mubr.bf16.gmra.mrb[0].mxu0 %v10623
        %v11111 = vpop.f32.mrb[0].mxu0
        %v11112 = vadd.f32 0.0, %v11111
        %v11113 = vpop.f32.mrb[0].mxu0
        %v11114 = vpop.f32.mrb[0].mxu0
        %v11115 = vadd.f32 0.0, %v11114
        %v11116 = vpop.f32.mrb[0].mxu0
        %11117 = vmatprep.mubr.bf16.mxu0 0
        %11118 = vmatmul.mubr.bf16.gmra.mrb[0].mxu0 %v10624
        %v11119 = vpop.f32.mrb[0].mxu0
        %v11120 = vadd.f32 0.0, %v11119
        %v11121 = vpop.f32.mrb[0].mxu0
        %v11122 = vpop.f32.mrb[0].mxu0
        %v11123 = vadd.f32 0.0, %v11122
        %v11124 = vpop.f32.mrb[0].mxu0
        %11125 = vdwg.mxu0
        %v11126 = vmax.f32 %v10948, %v11064
        %v11127 = vmax.f32 %v10949, %v11067
        %v11128 = vmax.f32 %v10950, %v11072
        %v11129 = vmax.f32 %v10951, %v11075
        %v11130 = vmax.f32 %v10952, %v11080
        %v11131 = vmax.f32 %v10953, %v11083
        %v11132 = vmax.f32 %v10954, %v11088
        %v11133 = vmax.f32 %v10955, %v11091
        %v11134 = vmax.f32 %v10956, %v11096
        %v11135 = vmax.f32 %v10957, %v11099
        %v11136 = vmax.f32 %v10958, %v11104
        %v11137 = vmax.f32 %v10959, %v11107
        %v11138 = vmax.f32 %v10960, %v11112
        %v11139 = vmax.f32 %v10961, %v11115
        %v11140 = vmax.f32 %v10962, %v11120
        %v11141 = vmax.f32 %v10963, %v11123
        %s11142 = scalar_lea.vmem %s7, 192
        %v11143 = vld [vmem:[%s11142] sm:$0xf]
        %v11144 = vld [vmem:[%s11142 + $0x4] sm:$0xf]
        %v11145 = vld [vmem:[%s11142 + $0x8] sm:$0xf]
        %v11146 = vld [vmem:[%s11142 + $0xc] sm:$0xf]
        %v11147 = vld [vmem:[%s11142 + $0x10] sm:$0xf]
        %v11148 = vld [vmem:[%s11142 + $0x14] sm:$0xf]
        %v11149 = vld [vmem:[%s11142 + $0x18] sm:$0xf]
        %v11150 = vld [vmem:[%s11142 + $0x1c] sm:$0xf]
        %v11151 = vld [vmem:[%s11142 + $0x20] sm:$0xf]
        %v11152 = vld [vmem:[%s11142 + $0x24] sm:$0xf]
        %v11153 = vld [vmem:[%s11142 + $0x28] sm:$0xf]
        %v11154 = vld [vmem:[%s11142 + $0x2c] sm:$0xf]
        %v11155 = vld [vmem:[%s11142 + $0x30] sm:$0xf]
        %v11156 = vld [vmem:[%s11142 + $0x34] sm:$0xf]
        %v11157 = vld [vmem:[%s11142 + $0x38] sm:$0xf]
        %v11158 = vld [vmem:[%s11142 + $0x3c] sm:$0xf]
        %v11175 = vunpack.c.l.b16 %v11143
        %v11176 = vunpack.c.l.b16 %v11144
        %v11177 = vunpack.c.l.b16 %v11145
        %v11178 = vunpack.c.l.b16 %v11146
        %v11179 = vunpack.c.l.b16 %v11147
        %v11180 = vunpack.c.l.b16 %v11148
        %v11181 = vunpack.c.l.b16 %v11149
        %v11182 = vunpack.c.l.b16 %v11150
        %v11183 = vunpack.c.l.b16 %v11151
        %v11184 = vunpack.c.l.b16 %v11152
        %v11185 = vunpack.c.l.b16 %v11153
        %v11186 = vunpack.c.l.b16 %v11154
        %v11187 = vunpack.c.l.b16 %v11155
        %v11188 = vunpack.c.l.b16 %v11156
        %v11189 = vunpack.c.l.b16 %v11157
        %v11190 = vunpack.c.l.b16 %v11158
        %v11191 = vpack.c.b16 %v11176, %v11175
        %v11192 = vpack.c.b16 %v11178, %v11177
        %v11193 = vpack.c.b16 %v11180, %v11179
        %v11194 = vpack.c.b16 %v11182, %v11181
        %v11195 = vpack.c.b16 %v11184, %v11183
        %v11196 = vpack.c.b16 %v11186, %v11185
        %v11197 = vpack.c.b16 %v11188, %v11187
        %v11198 = vpack.c.b16 %v11190, %v11189
        %11207 = vmatprep.subr.bf16.mxu0 0
        %11208 = vmatpush1.bf16.msra.mxu0 %v11191
        %11209 = vmatprep.subr.bf16.mxu0 0
        %11210 = vmatpush1.bf16.msra.mxu0 %v11192
        %11211 = vmatprep.subr.bf16.mxu0 0
        %11212 = vmatpush1.bf16.msra.mxu0 %v11193
        %11213 = vmatprep.subr.bf16.mxu0 0
        %11214 = vmatpush1.bf16.msra.mxu0 %v11194
        %11215 = vmatprep.subr.bf16.mxu0 0
        %11216 = vmatpush1.bf16.msra.mxu0 %v11195
        %11217 = vmatprep.subr.bf16.mxu0 0
        %11218 = vmatpush1.bf16.msra.mxu0 %v11196
        %11219 = vmatprep.subr.bf16.mxu0 0
        %11220 = vmatpush1.bf16.msra.mxu0 %v11197
        %11221 = vmatprep.subr.bf16.mxu0 0
        %11222 = vmatpush1.bf16.msra.mxu0 %v11198
        %11223 = vmatprep.subr.bf16.mxu0 0
        %11224 = vmatpush1.bf16.msra.mxu0 0
        %11225 = vmatprep.subr.bf16.mxu0 0
        %11226 = vmatpush1.bf16.msra.mxu0 0
        %11227 = vmatprep.subr.bf16.mxu0 0
        %11228 = vmatpush1.bf16.msra.mxu0 0
        %11229 = vmatprep.subr.bf16.mxu0 0
        %11230 = vmatpush1.bf16.msra.mxu0 0
        %11231 = vmatprep.subr.bf16.mxu0 0
        %11232 = vmatpush1.bf16.msra.mxu0 0
        %11233 = vmatprep.subr.bf16.mxu0 0
        %11234 = vmatpush1.bf16.msra.mxu0 0
        %11235 = vmatprep.subr.bf16.mxu0 0
        %11236 = vmatpush1.bf16.msra.mxu0 0
        %11237 = vmatprep.subr.bf16.mxu0 0
        %11238 = vmatpush1.bf16.msra.mxu0 0
        %11239 = vmatprep.mubr.bf16.mxu0 0
        %11240 = vmatmul.mubr.bf16.gmra.mrb[0].mxu0 %v10617
        %v11241 = vpop.f32.mrb[0].mxu0
        %v11242 = vadd.f32 0.0, %v11241
        %v11243 = vpop.f32.mrb[0].mxu0
        %v11244 = vpop.f32.mrb[0].mxu0
        %v11245 = vadd.f32 0.0, %v11244
        %v11246 = vpop.f32.mrb[0].mxu0
        %11247 = vmatprep.mubr.bf16.mxu0 0
        %11248 = vmatmul.mubr.bf16.gmra.mrb[0].mxu0 %v10618
        %v11249 = vpop.f32.mrb[0].mxu0
        %v11250 = vadd.f32 0.0, %v11249
        %v11251 = vpop.f32.mrb[0].mxu0
        %v11252 = vpop.f32.mrb[0].mxu0
        %v11253 = vadd.f32 0.0, %v11252
        %v11254 = vpop.f32.mrb[0].mxu0
        %11255 = vmatprep.mubr.bf16.mxu0 0
        %11256 = vmatmul.mubr.bf16.gmra.mrb[0].mxu0 %v10619
        %v11257 = vpop.f32.mrb[0].mxu0
        %v11258 = vadd.f32 0.0, %v11257
        %v11259 = vpop.f32.mrb[0].mxu0
        %v11260 = vpop.f32.mrb[0].mxu0
        %v11261 = vadd.f32 0.0, %v11260
        %v11262 = vpop.f32.mrb[0].mxu0
        %11263 = vmatprep.mubr.bf16.mxu0 0
        %11264 = vmatmul.mubr.bf16.gmra.mrb[0].mxu0 %v10620
        %v11265 = vpop.f32.mrb[0].mxu0
        %v11266 = vadd.f32 0.0, %v11265
        %v11267 = vpop.f32.mrb[0].mxu0
        %v11268 = vpop.f32.mrb[0].mxu0
        %v11269 = vadd.f32 0.0, %v11268
        %v11270 = vpop.f32.mrb[0].mxu0
        %11271 = vmatprep.mubr.bf16.mxu0 0
        %11272 = vmatmul.mubr.bf16.gmra.mrb[0].mxu0 %v10621
        %v11273 = vpop.f32.mrb[0].mxu0
        %v11274 = vadd.f32 0.0, %v11273
        %v11275 = vpop.f32.mrb[0].mxu0
        %v11276 = vpop.f32.mrb[0].mxu0
        %v11277 = vadd.f32 0.0, %v11276
        %v11278 = vpop.f32.mrb[0].mxu0
        %11279 = vmatprep.mubr.bf16.mxu0 0
        %11280 = vmatmul.mubr.bf16.gmra.mrb[0].mxu0 %v10622
        %v11281 = vpop.f32.mrb[0].mxu0
        %v11282 = vadd.f32 0.0, %v11281
        %v11283 = vpop.f32.mrb[0].mxu0
        %v11284 = vpop.f32.mrb[0].mxu0
        %v11285 = vadd.f32 0.0, %v11284
        %v11286 = vpop.f32.mrb[0].mxu0
        %11287 = vmatprep.mubr.bf16.mxu0 0
        %11288 = vmatmul.mubr.bf16.gmra.mrb[0].mxu0 %v10623
        %v11289 = vpop.f32.mrb[0].mxu0
        %v11290 = vadd.f32 0.0, %v11289
        %v11291 = vpop.f32.mrb[0].mxu0
        %v11292 = vpop.f32.mrb[0].mxu0
        %v11293 = vadd.f32 0.0, %v11292
        %v11294 = vpop.f32.mrb[0].mxu0
        %11295 = vmatprep.mubr.bf16.mxu0 0
        %11296 = vmatmul.mubr.bf16.gmra.mrb[0].mxu0 %v10624
        %v11297 = vpop.f32.mrb[0].mxu0
        %v11298 = vadd.f32 0.0, %v11297
        %v11299 = vpop.f32.mrb[0].mxu0
        %v11300 = vpop.f32.mrb[0].mxu0
        %v11301 = vadd.f32 0.0, %v11300
        %v11302 = vpop.f32.mrb[0].mxu0
        %11303 = vdwg.mxu0
        %v11304 = vmax.f32 %v11126, %v11242
        %v11305 = vmax.f32 %v11127, %v11245
        %v11306 = vmax.f32 %v11128, %v11250
        %v11307 = vmax.f32 %v11129, %v11253
        %v11308 = vmax.f32 %v11130, %v11258
        %v11309 = vmax.f32 %v11131, %v11261
        %v11310 = vmax.f32 %v11132, %v11266
        %v11311 = vmax.f32 %v11133, %v11269
        %v11312 = vmax.f32 %v11134, %v11274
        %v11313 = vmax.f32 %v11135, %v11277
        %v11314 = vmax.f32 %v11136, %v11282
        %v11315 = vmax.f32 %v11137, %v11285
        %v11316 = vmax.f32 %v11138, %v11290
        %v11317 = vmax.f32 %v11139, %v11293
        %v11318 = vmax.f32 %v11140, %v11298
        %v11319 = vmax.f32 %v11141, %v11301
        %v11320 = vpack.c.bf16 %v11305, %v11304
        %v11321 = vpack.c.bf16 %v11307, %v11306
        %v11322 = vpack.c.bf16 %v11309, %v11308
        %v11323 = vpack.c.bf16 %v11311, %v11310
        %v11324 = vpack.c.bf16 %v11313, %v11312
        %v11325 = vpack.c.bf16 %v11315, %v11314
        %v11326 = vpack.c.bf16 %v11317, %v11316
        %v11327 = vpack.c.bf16 %v11319, %v11318
        %v11328 = vld [vmem:[%s8] sm:$0xff]
        %v11329 = vld [vmem:[%s8 + $0x8] sm:$0xff]
        %v11330 = vld [vmem:[%s8 + $0x10] sm:$0xff]
        %v11331 = vld [vmem:[%s8 + $0x18] sm:$0xff]
        %v11332 = vld [vmem:[%s8 + $0x20] sm:$0xff]
        %v11333 = vld [vmem:[%s8 + $0x28] sm:$0xff]
        %v11334 = vld [vmem:[%s8 + $0x30] sm:$0xff]
        %v11335 = vld [vmem:[%s8 + $0x38] sm:$0xff]
        %v11336 = vld [vmem:[%s8 + $0x40] sm:$0xff]
        %v11337 = vld [vmem:[%s8 + $0x48] sm:$0xff]
        %v11338 = vld [vmem:[%s8 + $0x50] sm:$0xff]
        %v11339 = vld [vmem:[%s8 + $0x58] sm:$0xff]
        %v11340 = vld [vmem:[%s8 + $0x60] sm:$0xff]
        %v11341 = vld [vmem:[%s8 + $0x68] sm:$0xff]
        %v11342 = vld [vmem:[%s8 + $0x70] sm:$0xff]
        %v11343 = vld [vmem:[%s8 + $0x78] sm:$0xff]
        %v11344 = vld [vmem:[%s8 + $0x80] sm:$0xff]
        %v11345 = vld [vmem:[%s8 + $0x88] sm:$0xff]
        %v11346 = vld [vmem:[%s8 + $0x90] sm:$0xff]
        %v11347 = vld [vmem:[%s8 + $0x98] sm:$0xff]
        %v11348 = vld [vmem:[%s8 + $0xa0] sm:$0xff]
        %v11349 = vld [vmem:[%s8 + $0xa8] sm:$0xff]
        %v11350 = vld [vmem:[%s8 + $0xb0] sm:$0xff]
        %v11351 = vld [vmem:[%s8 + $0xb8] sm:$0xff]
        %v11352 = vld [vmem:[%s8 + $0xc0] sm:$0x11]
        %v11353 = vld [vmem:[%s8 + $0xc8] sm:$0x11]
        %v11354 = vld [vmem:[%s8 + $0xd0] sm:$0x11]
        %v11355 = vld [vmem:[%s8 + $0xd8] sm:$0x11]
        %v11356 = vld [vmem:[%s8 + $0xe0] sm:$0x11]
        %v11357 = vld [vmem:[%s8 + $0xe8] sm:$0x11]
        %v11358 = vld [vmem:[%s8 + $0xf0] sm:$0x11]
        %v11359 = vld [vmem:[%s8 + $0xf8] sm:$0x11]
        %v11392 = vunpack.c.l.b16 %v11328
        %v11393 = vunpack.c.h.b16 %v11328
        %v11394 = vunpack.c.l.b16 %v11329
        %v11395 = vunpack.c.h.b16 %v11329
        %v11396 = vunpack.c.l.b16 %v11330
        %v11397 = vunpack.c.h.b16 %v11330
        %v11398 = vunpack.c.l.b16 %v11331
        %v11399 = vunpack.c.h.b16 %v11331
        %v11400 = vunpack.c.l.b16 %v11332
        %v11401 = vunpack.c.h.b16 %v11332
        %v11402 = vunpack.c.l.b16 %v11333
        %v11403 = vunpack.c.h.b16 %v11333
        %v11404 = vunpack.c.l.b16 %v11334
        %v11405 = vunpack.c.h.b16 %v11334
        %v11406 = vunpack.c.l.b16 %v11335
        %v11407 = vunpack.c.h.b16 %v11335
        %v11408 = vunpack.c.l.b16 %v11336
        %v11409 = vunpack.c.h.b16 %v11336
        %v11410 = vunpack.c.l.b16 %v11337
        %v11411 = vunpack.c.h.b16 %v11337
        %v11412 = vunpack.c.l.b16 %v11338
        %v11413 = vunpack.c.h.b16 %v11338
        %v11414 = vunpack.c.l.b16 %v11339
        %v11415 = vunpack.c.h.b16 %v11339
        %v11416 = vunpack.c.l.b16 %v11340
        %v11417 = vunpack.c.h.b16 %v11340
        %v11418 = vunpack.c.l.b16 %v11341
        %v11419 = vunpack.c.h.b16 %v11341
        %v11420 = vunpack.c.l.b16 %v11342
        %v11421 = vunpack.c.h.b16 %v11342
        %v11422 = vunpack.c.l.b16 %v11343
        %v11423 = vunpack.c.h.b16 %v11343
        %v11424 = vunpack.c.l.b16 %v11344
        %v11425 = vunpack.c.h.b16 %v11344
        %v11426 = vunpack.c.l.b16 %v11345
        %v11427 = vunpack.c.h.b16 %v11345
        %v11428 = vunpack.c.l.b16 %v11346
        %v11429 = vunpack.c.h.b16 %v11346
        %v11430 = vunpack.c.l.b16 %v11347
        %v11431 = vunpack.c.h.b16 %v11347
        %v11432 = vunpack.c.l.b16 %v11348
        %v11433 = vunpack.c.h.b16 %v11348
        %v11434 = vunpack.c.l.b16 %v11349
        %v11435 = vunpack.c.h.b16 %v11349
        %v11436 = vunpack.c.l.b16 %v11350
        %v11437 = vunpack.c.h.b16 %v11350
        %v11438 = vunpack.c.l.b16 %v11351
        %v11439 = vunpack.c.h.b16 %v11351
        %v11440 = vunpack.c.l.b16 %v11352
        %v11441 = vunpack.c.h.b16 %v11352
        %v11442 = vunpack.c.l.b16 %v11353
        %v11443 = vunpack.c.h.b16 %v11353
        %v11444 = vunpack.c.l.b16 %v11354
        %v11445 = vunpack.c.h.b16 %v11354
        %v11446 = vunpack.c.l.b16 %v11355
        %v11447 = vunpack.c.h.b16 %v11355
        %v11448 = vunpack.c.l.b16 %v11356
        %v11449 = vunpack.c.h.b16 %v11356
        %v11450 = vunpack.c.l.b16 %v11357
        %v11451 = vunpack.c.h.b16 %v11357
        %v11452 = vunpack.c.l.b16 %v11358
        %v11453 = vunpack.c.h.b16 %v11358
        %v11454 = vunpack.c.l.b16 %v11359
        %v11455 = vunpack.c.h.b16 %v11359
        %v11456 = vpack.c.b16 %v11408, %v11392
        %v11457 = vpack.c.b16 %v11409, %v11393
        %v11458 = vpack.c.b16 %v11410, %v11394
        %v11459 = vpack.c.b16 %v11411, %v11395
        %v11460 = vpack.c.b16 %v11412, %v11396
        %v11461 = vpack.c.b16 %v11413, %v11397
        %v11462 = vpack.c.b16 %v11414, %v11398
        %v11463 = vpack.c.b16 %v11415, %v11399
        %v11464 = vpack.c.b16 %v11416, %v11400
        %v11465 = vpack.c.b16 %v11417, %v11401
        %v11466 = vpack.c.b16 %v11418, %v11402
        %v11467 = vpack.c.b16 %v11419, %v11403
        %v11468 = vpack.c.b16 %v11420, %v11404
        %v11469 = vpack.c.b16 %v11421, %v11405
        %v11470 = vpack.c.b16 %v11422, %v11406
        %v11471 = vpack.c.b16 %v11423, %v11407
        %v11472 = vpack.c.b16 %v11440, %v11424
        %v11473 = vpack.c.b16 %v11441, %v11425
        %v11474 = vpack.c.b16 %v11442, %v11426
        %v11475 = vpack.c.b16 %v11443, %v11427
        %v11476 = vpack.c.b16 %v11444, %v11428
        %v11477 = vpack.c.b16 %v11445, %v11429
        %v11478 = vpack.c.b16 %v11446, %v11430
        %v11479 = vpack.c.b16 %v11447, %v11431
        %v11480 = vpack.c.b16 %v11448, %v11432
        %v11481 = vpack.c.b16 %v11449, %v11433
        %v11482 = vpack.c.b16 %v11450, %v11434
        %v11483 = vpack.c.b16 %v11451, %v11435
        %v11484 = vpack.c.b16 %v11452, %v11436
        %v11485 = vpack.c.b16 %v11453, %v11437
        %v11486 = vpack.c.b16 %v11454, %v11438
        %v11487 = vpack.c.b16 %v11455, %v11439
        %vm11504 = vcmask 203776
        %v11506 = vsel %vm11504, %v11320, 0
        %v11509 = vsel %vm11504, %v11321, 0
        %v11512 = vsel %vm11504, %v11322, 0
        %v11515 = vsel %vm11504, %v11323, 0
        %v11518 = vsel %vm11504, %v11324, 0
        %v11521 = vsel %vm11504, %v11325, 0
        %v11524 = vsel %vm11504, %v11326, 0
        %v11527 = vsel %vm11504, %v11327, 0
        %vm11529 = vcmask 1044480
        %v11530 = vsel %vm2261, 4294967295, 65535
        %v11531 = vsel %vm11529, %v11530, 0
        %v11533 = vand.u32 %v11472, %v11531
        %v11536 = vand.u32 %v11473, %v11531
        %v11539 = vand.u32 %v11474, %v11531
        %v11542 = vand.u32 %v11475, %v11531
        %v11545 = vand.u32 %v11476, %v11531
        %v11548 = vand.u32 %v11477, %v11531
        %v11551 = vand.u32 %v11478, %v11531
        %v11554 = vand.u32 %v11479, %v11531
        %v11557 = vand.u32 %v11480, %v11531
        %v11560 = vand.u32 %v11481, %v11531
        %v11563 = vand.u32 %v11482, %v11531
        %v11566 = vand.u32 %v11483, %v11531
        %v11569 = vand.u32 %v11484, %v11531
        %v11572 = vand.u32 %v11485, %v11531
        %v11575 = vand.u32 %v11486, %v11531
        %v11578 = vand.u32 %v11487, %v11531
        %11580 = vmatprep.subr.bf16.mxu0 %v11457
        %11581 = vmatpush1.bf16.msra.mxu0 %v11456
        %11582 = vmatprep.subr.bf16.mxu0 %v11536
        %11583 = vmatpush1.bf16.msra.mxu0 %v11533
        %11584 = vmatprep.subr.bf16.mxu0 0
        %11585 = vmatpush1.bf16.msra.mxu0 0
        %11586 = vmatprep.subr.bf16.mxu0 0
        %11587 = vmatpush1.bf16.msra.mxu0 0
        %11588 = vmatprep.subr.bf16.mxu0 0
        %11589 = vmatpush1.bf16.msra.mxu0 0
        %11590 = vmatprep.subr.bf16.mxu0 0
        %11591 = vmatpush1.bf16.msra.mxu0 0
        %11592 = vmatprep.subr.bf16.mxu0 0
        %11593 = vmatpush1.bf16.msra.mxu0 0
        %11594 = vmatprep.subr.bf16.mxu0 0
        %11595 = vmatpush1.bf16.msra.mxu0 0
        %11596 = vmatprep.subr.bf16.mxu0 0
        %11597 = vmatpush1.bf16.msra.mxu0 0
        %11598 = vmatprep.subr.bf16.mxu0 0
        %11599 = vmatpush1.bf16.msra.mxu0 0
        %11600 = vmatprep.subr.bf16.mxu0 0
        %11601 = vmatpush1.bf16.msra.mxu0 0
        %11602 = vmatprep.subr.bf16.mxu0 0
        %11603 = vmatpush1.bf16.msra.mxu0 0
        %11604 = vmatprep.subr.bf16.mxu0 0
        %11605 = vmatpush1.bf16.msra.mxu0 0
        %11606 = vmatprep.subr.bf16.mxu0 0
        %11607 = vmatpush1.bf16.msra.mxu0 0
        %11608 = vmatprep.subr.bf16.mxu0 0
        %11609 = vmatpush1.bf16.msra.mxu0 0
        %11610 = vmatprep.subr.bf16.mxu0 0
        %11611 = vmatpush1.bf16.msra.mxu0 0
        %11612 = vmatprep.mubr.bf16.mxu0 0
        %11613 = vmatmul.mubr.bf16.gmra.mrb[0].mxu0 %v11506
        %v11614 = vpop.f32.mrb[0].mxu0
        %v11615 = vadd.f32 0.0, %v11614
        %v11616 = vpop.f32.mrb[0].mxu0
        %v11617 = vpop.f32.mrb[0].mxu0
        %v11618 = vpop.f32.mrb[0].mxu0
        %v11619 = vadd.f32 0.0, %v11618
        %11620 = vmatprep.mubr.bf16.mxu0 0
        %11621 = vmatmul.mubr.bf16.gmra.mrb[0].mxu0 %v11509
        %v11622 = vpop.f32.mrb[0].mxu0
        %v11623 = vpop.f32.mrb[0].mxu0
        %v11624 = vpop.f32.mrb[0].mxu0
        %v11625 = vpop.f32.mrb[0].mxu0
        %11626 = vmatprep.mubr.bf16.mxu0 0
        %11627 = vmatmul.mubr.bf16.gmra.mrb[0].mxu0 %v11512
        %v11628 = vpop.f32.mrb[0].mxu0
        %v11629 = vpop.f32.mrb[0].mxu0
        %v11630 = vpop.f32.mrb[0].mxu0
        %v11631 = vpop.f32.mrb[0].mxu0
        %11632 = vmatprep.mubr.bf16.mxu0 0
        %11633 = vmatmul.mubr.bf16.gmra.mrb[0].mxu0 %v11515
        %v11634 = vpop.f32.mrb[0].mxu0
        %v11635 = vpop.f32.mrb[0].mxu0
        %v11636 = vpop.f32.mrb[0].mxu0
        %v11637 = vpop.f32.mrb[0].mxu0
        %11638 = vmatprep.mubr.bf16.mxu0 0
        %11639 = vmatmul.mubr.bf16.gmra.mrb[0].mxu0 %v11518
        %v11640 = vpop.f32.mrb[0].mxu0
        %v11641 = vpop.f32.mrb[0].mxu0
        %v11642 = vpop.f32.mrb[0].mxu0
        %v11643 = vpop.f32.mrb[0].mxu0
        %11644 = vmatprep.mubr.bf16.mxu0 0
        %11645 = vmatmul.mubr.bf16.gmra.mrb[0].mxu0 %v11521
        %v11646 = vpop.f32.mrb[0].mxu0
        %v11647 = vpop.f32.mrb[0].mxu0
        %v11648 = vpop.f32.mrb[0].mxu0
        %v11649 = vpop.f32.mrb[0].mxu0
        %11650 = vmatprep.mubr.bf16.mxu0 0
        %11651 = vmatmul.mubr.bf16.gmra.mrb[0].mxu0 %v11524
        %v11652 = vpop.f32.mrb[0].mxu0
        %v11653 = vpop.f32.mrb[0].mxu0
        %v11654 = vpop.f32.mrb[0].mxu0
        %v11655 = vpop.f32.mrb[0].mxu0
        %11656 = vmatprep.mubr.bf16.mxu0 0
        %11657 = vmatmul.mubr.bf16.gmra.mrb[0].mxu0 %v11527
        %v11658 = vpop.f32.mrb[0].mxu0
        %v11659 = vpop.f32.mrb[0].mxu0
        %v11660 = vpop.f32.mrb[0].mxu0
        %v11661 = vpop.f32.mrb[0].mxu0
        %11662 = vdwg.mxu0
        %11663 = vmatprep.subr.bf16.mxu0 %v11459
        %11664 = vmatpush1.bf16.msra.mxu0 %v11458
        %11665 = vmatprep.subr.bf16.mxu0 %v11542
        %11666 = vmatpush1.bf16.msra.mxu0 %v11539
        %11667 = vmatprep.subr.bf16.mxu0 0
        %11668 = vmatpush1.bf16.msra.mxu0 0
        %11669 = vmatprep.subr.bf16.mxu0 0
        %11670 = vmatpush1.bf16.msra.mxu0 0
        %11671 = vmatprep.subr.bf16.mxu0 0
        %11672 = vmatpush1.bf16.msra.mxu0 0
        %11673 = vmatprep.subr.bf16.mxu0 0
        %11674 = vmatpush1.bf16.msra.mxu0 0
        %11675 = vmatprep.subr.bf16.mxu0 0
        %11676 = vmatpush1.bf16.msra.mxu0 0
        %11677 = vmatprep.subr.bf16.mxu0 0
        %11678 = vmatpush1.bf16.msra.mxu0 0
        %11679 = vmatprep.subr.bf16.mxu0 0
        %11680 = vmatpush1.bf16.msra.mxu0 0
        %11681 = vmatprep.subr.bf16.mxu0 0
        %11682 = vmatpush1.bf16.msra.mxu0 0
        %11683 = vmatprep.subr.bf16.mxu0 0
        %11684 = vmatpush1.bf16.msra.mxu0 0
        %11685 = vmatprep.subr.bf16.mxu0 0
        %11686 = vmatpush1.bf16.msra.mxu0 0
        %11687 = vmatprep.subr.bf16.mxu0 0
        %11688 = vmatpush1.bf16.msra.mxu0 0
        %11689 = vmatprep.subr.bf16.mxu0 0
        %11690 = vmatpush1.bf16.msra.mxu0 0
        %11691 = vmatprep.subr.bf16.mxu0 0
        %11692 = vmatpush1.bf16.msra.mxu0 0
        %11693 = vmatprep.subr.bf16.mxu0 0
        %11694 = vmatpush1.bf16.msra.mxu0 0
        %11695 = vmatprep.mubr.bf16.mxu0 0
        %11696 = vmatmul.mubr.bf16.gmra.mrb[0].mxu0 %v11506
        %v11697 = vpop.f32.mrb[0].mxu0
        %v11698 = vpop.f32.mrb[0].mxu0
        %v11699 = vpop.f32.mrb[0].mxu0
        %v11700 = vpop.f32.mrb[0].mxu0
        %11701 = vmatprep.mubr.bf16.mxu0 0
        %11702 = vmatmul.mubr.bf16.gmra.mrb[0].mxu0 %v11509
        %v11703 = vpop.f32.mrb[0].mxu0
        %v11704 = vadd.f32 0.0, %v11703
        %v11705 = vpop.f32.mrb[0].mxu0
        %v11706 = vpop.f32.mrb[0].mxu0
        %v11707 = vpop.f32.mrb[0].mxu0
        %v11708 = vadd.f32 0.0, %v11707
        %11709 = vmatprep.mubr.bf16.mxu0 0
        %11710 = vmatmul.mubr.bf16.gmra.mrb[0].mxu0 %v11512
        %v11711 = vpop.f32.mrb[0].mxu0
        %v11712 = vpop.f32.mrb[0].mxu0
        %v11713 = vpop.f32.mrb[0].mxu0
        %v11714 = vpop.f32.mrb[0].mxu0
        %11715 = vmatprep.mubr.bf16.mxu0 0
        %11716 = vmatmul.mubr.bf16.gmra.mrb[0].mxu0 %v11515
        %v11717 = vpop.f32.mrb[0].mxu0
        %v11718 = vpop.f32.mrb[0].mxu0
        %v11719 = vpop.f32.mrb[0].mxu0
        %v11720 = vpop.f32.mrb[0].mxu0
        %11721 = vmatprep.mubr.bf16.mxu0 0
        %11722 = vmatmul.mubr.bf16.gmra.mrb[0].mxu0 %v11518
        %v11723 = vpop.f32.mrb[0].mxu0
        %v11724 = vpop.f32.mrb[0].mxu0
        %v11725 = vpop.f32.mrb[0].mxu0
        %v11726 = vpop.f32.mrb[0].mxu0
        %11727 = vmatprep.mubr.bf16.mxu0 0
        %11728 = vmatmul.mubr.bf16.gmra.mrb[0].mxu0 %v11521
        %v11729 = vpop.f32.mrb[0].mxu0
        %v11730 = vpop.f32.mrb[0].mxu0
        %v11731 = vpop.f32.mrb[0].mxu0
        %v11732 = vpop.f32.mrb[0].mxu0
        %11733 = vmatprep.mubr.bf16.mxu0 0
        %11734 = vmatmul.mubr.bf16.gmra.mrb[0].mxu0 %v11524
        %v11735 = vpop.f32.mrb[0].mxu0
        %v11736 = vpop.f32.mrb[0].mxu0
        %v11737 = vpop.f32.mrb[0].mxu0
        %v11738 = vpop.f32.mrb[0].mxu0
        %11739 = vmatprep.mubr.bf16.mxu0 0
        %11740 = vmatmul.mubr.bf16.gmra.mrb[0].mxu0 %v11527
        %v11741 = vpop.f32.mrb[0].mxu0
        %v11742 = vpop.f32.mrb[0].mxu0
        %v11743 = vpop.f32.mrb[0].mxu0
        %v11744 = vpop.f32.mrb[0].mxu0
        %11745 = vdwg.mxu0
        %11746 = vmatprep.subr.bf16.mxu0 %v11461
        %11747 = vmatpush1.bf16.msra.mxu0 %v11460
        %11748 = vmatprep.subr.bf16.mxu0 %v11548
        %11749 = vmatpush1.bf16.msra.mxu0 %v11545
        %11750 = vmatprep.subr.bf16.mxu0 0
        %11751 = vmatpush1.bf16.msra.mxu0 0
        %11752 = vmatprep.subr.bf16.mxu0 0
        %11753 = vmatpush1.bf16.msra.mxu0 0
        %11754 = vmatprep.subr.bf16.mxu0 0
        %11755 = vmatpush1.bf16.msra.mxu0 0
        %11756 = vmatprep.subr.bf16.mxu0 0
        %11757 = vmatpush1.bf16.msra.mxu0 0
        %11758 = vmatprep.subr.bf16.mxu0 0
        %11759 = vmatpush1.bf16.msra.mxu0 0
        %11760 = vmatprep.subr.bf16.mxu0 0
        %11761 = vmatpush1.bf16.msra.mxu0 0
        %11762 = vmatprep.subr.bf16.mxu0 0
        %11763 = vmatpush1.bf16.msra.mxu0 0
        %11764 = vmatprep.subr.bf16.mxu0 0
        %11765 = vmatpush1.bf16.msra.mxu0 0
        %11766 = vmatprep.subr.bf16.mxu0 0
        %11767 = vmatpush1.bf16.msra.mxu0 0
        %11768 = vmatprep.subr.bf16.mxu0 0
        %11769 = vmatpush1.bf16.msra.mxu0 0
        %11770 = vmatprep.subr.bf16.mxu0 0
        %11771 = vmatpush1.bf16.msra.mxu0 0
        %11772 = vmatprep.subr.bf16.mxu0 0
        %11773 = vmatpush1.bf16.msra.mxu0 0
        %11774 = vmatprep.subr.bf16.mxu0 0
        %11775 = vmatpush1.bf16.msra.mxu0 0
        %11776 = vmatprep.subr.bf16.mxu0 0
        %11777 = vmatpush1.bf16.msra.mxu0 0
        %11778 = vmatprep.mubr.bf16.mxu0 0
        %11779 = vmatmul.mubr.bf16.gmra.mrb[0].mxu0 %v11506
        %v11780 = vpop.f32.mrb[0].mxu0
        %v11781 = vpop.f32.mrb[0].mxu0
        %v11782 = vpop.f32.mrb[0].mxu0
        %v11783 = vpop.f32.mrb[0].mxu0
        %11784 = vmatprep.mubr.bf16.mxu0 0
        %11785 = vmatmul.mubr.bf16.gmra.mrb[0].mxu0 %v11509
        %v11786 = vpop.f32.mrb[0].mxu0
        %v11787 = vpop.f32.mrb[0].mxu0
        %v11788 = vpop.f32.mrb[0].mxu0
        %v11789 = vpop.f32.mrb[0].mxu0
        %11790 = vmatprep.mubr.bf16.mxu0 0
        %11791 = vmatmul.mubr.bf16.gmra.mrb[0].mxu0 %v11512
        %v11792 = vpop.f32.mrb[0].mxu0
        %v11793 = vadd.f32 0.0, %v11792
        %v11794 = vpop.f32.mrb[0].mxu0
        %v11795 = vpop.f32.mrb[0].mxu0
        %v11796 = vpop.f32.mrb[0].mxu0
        %v11797 = vadd.f32 0.0, %v11796
        %11798 = vmatprep.mubr.bf16.mxu0 0
        %11799 = vmatmul.mubr.bf16.gmra.mrb[0].mxu0 %v11515
        %v11800 = vpop.f32.mrb[0].mxu0
        %v11801 = vpop.f32.mrb[0].mxu0
        %v11802 = vpop.f32.mrb[0].mxu0
        %v11803 = vpop.f32.mrb[0].mxu0
        %11804 = vmatprep.mubr.bf16.mxu0 0
        %11805 = vmatmul.mubr.bf16.gmra.mrb[0].mxu0 %v11518
        %v11806 = vpop.f32.mrb[0].mxu0
        %v11807 = vpop.f32.mrb[0].mxu0
        %v11808 = vpop.f32.mrb[0].mxu0
        %v11809 = vpop.f32.mrb[0].mxu0
        %11810 = vmatprep.mubr.bf16.mxu0 0
        %11811 = vmatmul.mubr.bf16.gmra.mrb[0].mxu0 %v11521
        %v11812 = vpop.f32.mrb[0].mxu0
        %v11813 = vpop.f32.mrb[0].mxu0
        %v11814 = vpop.f32.mrb[0].mxu0
        %v11815 = vpop.f32.mrb[0].mxu0
        %11816 = vmatprep.mubr.bf16.mxu0 0
        %11817 = vmatmul.mubr.bf16.gmra.mrb[0].mxu0 %v11524
        %v11818 = vpop.f32.mrb[0].mxu0
        %v11819 = vpop.f32.mrb[0].mxu0
        %v11820 = vpop.f32.mrb[0].mxu0
        %v11821 = vpop.f32.mrb[0].mxu0
        %11822 = vmatprep.mubr.bf16.mxu0 0
        %11823 = vmatmul.mubr.bf16.gmra.mrb[0].mxu0 %v11527
        %v11824 = vpop.f32.mrb[0].mxu0
        %v11825 = vpop.f32.mrb[0].mxu0
        %v11826 = vpop.f32.mrb[0].mxu0
        %v11827 = vpop.f32.mrb[0].mxu0
        %11828 = vdwg.mxu0
        %11829 = vmatprep.subr.bf16.mxu0 %v11463
        %11830 = vmatpush1.bf16.msra.mxu0 %v11462
        %11831 = vmatprep.subr.bf16.mxu0 %v11554
        %11832 = vmatpush1.bf16.msra.mxu0 %v11551
        %11833 = vmatprep.subr.bf16.mxu0 0
        %11834 = vmatpush1.bf16.msra.mxu0 0
        %11835 = vmatprep.subr.bf16.mxu0 0
        %11836 = vmatpush1.bf16.msra.mxu0 0
        %11837 = vmatprep.subr.bf16.mxu0 0
        %11838 = vmatpush1.bf16.msra.mxu0 0
        %11839 = vmatprep.subr.bf16.mxu0 0
        %11840 = vmatpush1.bf16.msra.mxu0 0
        %11841 = vmatprep.subr.bf16.mxu0 0
        %11842 = vmatpush1.bf16.msra.mxu0 0
        %11843 = vmatprep.subr.bf16.mxu0 0
        %11844 = vmatpush1.bf16.msra.mxu0 0
        %11845 = vmatprep.subr.bf16.mxu0 0
        %11846 = vmatpush1.bf16.msra.mxu0 0
        %11847 = vmatprep.subr.bf16.mxu0 0
        %11848 = vmatpush1.bf16.msra.mxu0 0
        %11849 = vmatprep.subr.bf16.mxu0 0
        %11850 = vmatpush1.bf16.msra.mxu0 0
        %11851 = vmatprep.subr.bf16.mxu0 0
        %11852 = vmatpush1.bf16.msra.mxu0 0
        %11853 = vmatprep.subr.bf16.mxu0 0
        %11854 = vmatpush1.bf16.msra.mxu0 0
        %11855 = vmatprep.subr.bf16.mxu0 0
        %11856 = vmatpush1.bf16.msra.mxu0 0
        %11857 = vmatprep.subr.bf16.mxu0 0
        %11858 = vmatpush1.bf16.msra.mxu0 0
        %11859 = vmatprep.subr.bf16.mxu0 0
        %11860 = vmatpush1.bf16.msra.mxu0 0
        %11861 = vmatprep.mubr.bf16.mxu0 0
        %11862 = vmatmul.mubr.bf16.gmra.mrb[0].mxu0 %v11506
        %v11863 = vpop.f32.mrb[0].mxu0
        %v11864 = vpop.f32.mrb[0].mxu0
        %v11865 = vpop.f32.mrb[0].mxu0
        %v11866 = vpop.f32.mrb[0].mxu0
        %11867 = vmatprep.mubr.bf16.mxu0 0
        %11868 = vmatmul.mubr.bf16.gmra.mrb[0].mxu0 %v11509
        %v11869 = vpop.f32.mrb[0].mxu0
        %v11870 = vpop.f32.mrb[0].mxu0
        %v11871 = vpop.f32.mrb[0].mxu0
        %v11872 = vpop.f32.mrb[0].mxu0
        %11873 = vmatprep.mubr.bf16.mxu0 0
        %11874 = vmatmul.mubr.bf16.gmra.mrb[0].mxu0 %v11512
        %v11875 = vpop.f32.mrb[0].mxu0
        %v11876 = vpop.f32.mrb[0].mxu0
        %v11877 = vpop.f32.mrb[0].mxu0
        %v11878 = vpop.f32.mrb[0].mxu0
        %11879 = vmatprep.mubr.bf16.mxu0 0
        %11880 = vmatmul.mubr.bf16.gmra.mrb[0].mxu0 %v11515
        %v11881 = vpop.f32.mrb[0].mxu0
        %v11882 = vadd.f32 0.0, %v11881
        %v11883 = vpop.f32.mrb[0].mxu0
        %v11884 = vpop.f32.mrb[0].mxu0
        %v11885 = vpop.f32.mrb[0].mxu0
        %v11886 = vadd.f32 0.0, %v11885
        %11887 = vmatprep.mubr.bf16.mxu0 0
        %11888 = vmatmul.mubr.bf16.gmra.mrb[0].mxu0 %v11518
        %v11889 = vpop.f32.mrb[0].mxu0
        %v11890 = vpop.f32.mrb[0].mxu0
        %v11891 = vpop.f32.mrb[0].mxu0
        %v11892 = vpop.f32.mrb[0].mxu0
        %11893 = vmatprep.mubr.bf16.mxu0 0
        %11894 = vmatmul.mubr.bf16.gmra.mrb[0].mxu0 %v11521
        %v11895 = vpop.f32.mrb[0].mxu0
        %v11896 = vpop.f32.mrb[0].mxu0
        %v11897 = vpop.f32.mrb[0].mxu0
        %v11898 = vpop.f32.mrb[0].mxu0
        %11899 = vmatprep.mubr.bf16.mxu0 0
        %11900 = vmatmul.mubr.bf16.gmra.mrb[0].mxu0 %v11524
        %v11901 = vpop.f32.mrb[0].mxu0
        %v11902 = vpop.f32.mrb[0].mxu0
        %v11903 = vpop.f32.mrb[0].mxu0
        %v11904 = vpop.f32.mrb[0].mxu0
        %11905 = vmatprep.mubr.bf16.mxu0 0
        %11906 = vmatmul.mubr.bf16.gmra.mrb[0].mxu0 %v11527
        %v11907 = vpop.f32.mrb[0].mxu0
        %v11908 = vpop.f32.mrb[0].mxu0
        %v11909 = vpop.f32.mrb[0].mxu0
        %v11910 = vpop.f32.mrb[0].mxu0
        %11911 = vdwg.mxu0
        %11912 = vmatprep.subr.bf16.mxu0 %v11465
        %11913 = vmatpush1.bf16.msra.mxu0 %v11464
        %11914 = vmatprep.subr.bf16.mxu0 %v11560
        %11915 = vmatpush1.bf16.msra.mxu0 %v11557
        %11916 = vmatprep.subr.bf16.mxu0 0
        %11917 = vmatpush1.bf16.msra.mxu0 0
        %11918 = vmatprep.subr.bf16.mxu0 0
        %11919 = vmatpush1.bf16.msra.mxu0 0
        %11920 = vmatprep.subr.bf16.mxu0 0
        %11921 = vmatpush1.bf16.msra.mxu0 0
        %11922 = vmatprep.subr.bf16.mxu0 0
        %11923 = vmatpush1.bf16.msra.mxu0 0
        %11924 = vmatprep.subr.bf16.mxu0 0
        %11925 = vmatpush1.bf16.msra.mxu0 0
        %11926 = vmatprep.subr.bf16.mxu0 0
        %11927 = vmatpush1.bf16.msra.mxu0 0
        %11928 = vmatprep.subr.bf16.mxu0 0
        %11929 = vmatpush1.bf16.msra.mxu0 0
        %11930 = vmatprep.subr.bf16.mxu0 0
        %11931 = vmatpush1.bf16.msra.mxu0 0
        %11932 = vmatprep.subr.bf16.mxu0 0
        %11933 = vmatpush1.bf16.msra.mxu0 0
        %11934 = vmatprep.subr.bf16.mxu0 0
        %11935 = vmatpush1.bf16.msra.mxu0 0
        %11936 = vmatprep.subr.bf16.mxu0 0
        %11937 = vmatpush1.bf16.msra.mxu0 0
        %11938 = vmatprep.subr.bf16.mxu0 0
        %11939 = vmatpush1.bf16.msra.mxu0 0
        %11940 = vmatprep.subr.bf16.mxu0 0
        %11941 = vmatpush1.bf16.msra.mxu0 0
        %11942 = vmatprep.subr.bf16.mxu0 0
        %11943 = vmatpush1.bf16.msra.mxu0 0
        %11944 = vmatprep.mubr.bf16.mxu0 0
        %11945 = vmatmul.mubr.bf16.gmra.mrb[0].mxu0 %v11506
        %v11946 = vpop.f32.mrb[0].mxu0
        %v11947 = vpop.f32.mrb[0].mxu0
        %v11948 = vpop.f32.mrb[0].mxu0
        %v11949 = vpop.f32.mrb[0].mxu0
        %11950 = vmatprep.mubr.bf16.mxu0 0
        %11951 = vmatmul.mubr.bf16.gmra.mrb[0].mxu0 %v11509
        %v11952 = vpop.f32.mrb[0].mxu0
        %v11953 = vpop.f32.mrb[0].mxu0
        %v11954 = vpop.f32.mrb[0].mxu0
        %v11955 = vpop.f32.mrb[0].mxu0
        %11956 = vmatprep.mubr.bf16.mxu0 0
        %11957 = vmatmul.mubr.bf16.gmra.mrb[0].mxu0 %v11512
        %v11958 = vpop.f32.mrb[0].mxu0
        %v11959 = vpop.f32.mrb[0].mxu0
        %v11960 = vpop.f32.mrb[0].mxu0
        %v11961 = vpop.f32.mrb[0].mxu0
        %11962 = vmatprep.mubr.bf16.mxu0 0
        %11963 = vmatmul.mubr.bf16.gmra.mrb[0].mxu0 %v11515
        %v11964 = vpop.f32.mrb[0].mxu0
        %v11965 = vpop.f32.mrb[0].mxu0
        %v11966 = vpop.f32.mrb[0].mxu0
        %v11967 = vpop.f32.mrb[0].mxu0
        %11968 = vmatprep.mubr.bf16.mxu0 0
        %11969 = vmatmul.mubr.bf16.gmra.mrb[0].mxu0 %v11518
        %v11970 = vpop.f32.mrb[0].mxu0
        %v11971 = vadd.f32 0.0, %v11970
        %v11972 = vpop.f32.mrb[0].mxu0
        %v11973 = vpop.f32.mrb[0].mxu0
        %v11974 = vpop.f32.mrb[0].mxu0
        %v11975 = vadd.f32 0.0, %v11974
        %11976 = vmatprep.mubr.bf16.mxu0 0
        %11977 = vmatmul.mubr.bf16.gmra.mrb[0].mxu0 %v11521
        %v11978 = vpop.f32.mrb[0].mxu0
        %v11979 = vpop.f32.mrb[0].mxu0
        %v11980 = vpop.f32.mrb[0].mxu0
        %v11981 = vpop.f32.mrb[0].mxu0
        %11982 = vmatprep.mubr.bf16.mxu0 0
        %11983 = vmatmul.mubr.bf16.gmra.mrb[0].mxu0 %v11524
        %v11984 = vpop.f32.mrb[0].mxu0
        %v11985 = vpop.f32.mrb[0].mxu0
        %v11986 = vpop.f32.mrb[0].mxu0
        %v11987 = vpop.f32.mrb[0].mxu0
        %11988 = vmatprep.mubr.bf16.mxu0 0
        %11989 = vmatmul.mubr.bf16.gmra.mrb[0].mxu0 %v11527
        %v11990 = vpop.f32.mrb[0].mxu0
        %v11991 = vpop.f32.mrb[0].mxu0
        %v11992 = vpop.f32.mrb[0].mxu0
        %v11993 = vpop.f32.mrb[0].mxu0
        %11994 = vdwg.mxu0
        %11995 = vmatprep.subr.bf16.mxu0 %v11467
        %11996 = vmatpush1.bf16.msra.mxu0 %v11466
        %11997 = vmatprep.subr.bf16.mxu0 %v11566
        %11998 = vmatpush1.bf16.msra.mxu0 %v11563
        %11999 = vmatprep.subr.bf16.mxu0 0
        %12000 = vmatpush1.bf16.msra.mxu0 0
        %12001 = vmatprep.subr.bf16.mxu0 0
        %12002 = vmatpush1.bf16.msra.mxu0 0
        %12003 = vmatprep.subr.bf16.mxu0 0
        %12004 = vmatpush1.bf16.msra.mxu0 0
        %12005 = vmatprep.subr.bf16.mxu0 0
        %12006 = vmatpush1.bf16.msra.mxu0 0
        %12007 = vmatprep.subr.bf16.mxu0 0
        %12008 = vmatpush1.bf16.msra.mxu0 0
        %12009 = vmatprep.subr.bf16.mxu0 0
        %12010 = vmatpush1.bf16.msra.mxu0 0
        %12011 = vmatprep.subr.bf16.mxu0 0
        %12012 = vmatpush1.bf16.msra.mxu0 0
        %12013 = vmatprep.subr.bf16.mxu0 0
        %12014 = vmatpush1.bf16.msra.mxu0 0
        %12015 = vmatprep.subr.bf16.mxu0 0
        %12016 = vmatpush1.bf16.msra.mxu0 0
        %12017 = vmatprep.subr.bf16.mxu0 0
        %12018 = vmatpush1.bf16.msra.mxu0 0
        %12019 = vmatprep.subr.bf16.mxu0 0
        %12020 = vmatpush1.bf16.msra.mxu0 0
        %12021 = vmatprep.subr.bf16.mxu0 0
        %12022 = vmatpush1.bf16.msra.mxu0 0
        %12023 = vmatprep.subr.bf16.mxu0 0
        %12024 = vmatpush1.bf16.msra.mxu0 0
        %12025 = vmatprep.subr.bf16.mxu0 0
        %12026 = vmatpush1.bf16.msra.mxu0 0
        %12027 = vmatprep.mubr.bf16.mxu0 0
        %12028 = vmatmul.mubr.bf16.gmra.mrb[0].mxu0 %v11506
        %v12029 = vpop.f32.mrb[0].mxu0
        %v12030 = vpop.f32.mrb[0].mxu0
        %v12031 = vpop.f32.mrb[0].mxu0
        %v12032 = vpop.f32.mrb[0].mxu0
        %12033 = vmatprep.mubr.bf16.mxu0 0
        %12034 = vmatmul.mubr.bf16.gmra.mrb[0].mxu0 %v11509
        %v12035 = vpop.f32.mrb[0].mxu0
        %v12036 = vpop.f32.mrb[0].mxu0
        %v12037 = vpop.f32.mrb[0].mxu0
        %v12038 = vpop.f32.mrb[0].mxu0
        %12039 = vmatprep.mubr.bf16.mxu0 0
        %12040 = vmatmul.mubr.bf16.gmra.mrb[0].mxu0 %v11512
        %v12041 = vpop.f32.mrb[0].mxu0
        %v12042 = vpop.f32.mrb[0].mxu0
        %v12043 = vpop.f32.mrb[0].mxu0
        %v12044 = vpop.f32.mrb[0].mxu0
        %12045 = vmatprep.mubr.bf16.mxu0 0
        %12046 = vmatmul.mubr.bf16.gmra.mrb[0].mxu0 %v11515
        %v12047 = vpop.f32.mrb[0].mxu0
        %v12048 = vpop.f32.mrb[0].mxu0
        %v12049 = vpop.f32.mrb[0].mxu0
        %v12050 = vpop.f32.mrb[0].mxu0
        %12051 = vmatprep.mubr.bf16.mxu0 0
        %12052 = vmatmul.mubr.bf16.gmra.mrb[0].mxu0 %v11518
        %v12053 = vpop.f32.mrb[0].mxu0
        %v12054 = vpop.f32.mrb[0].mxu0
        %v12055 = vpop.f32.mrb[0].mxu0
        %v12056 = vpop.f32.mrb[0].mxu0
        %12057 = vmatprep.mubr.bf16.mxu0 0
        %12058 = vmatmul.mubr.bf16.gmra.mrb[0].mxu0 %v11521
        %v12059 = vpop.f32.mrb[0].mxu0
        %v12060 = vadd.f32 0.0, %v12059
        %v12061 = vpop.f32.mrb[0].mxu0
        %v12062 = vpop.f32.mrb[0].mxu0
        %v12063 = vpop.f32.mrb[0].mxu0
        %v12064 = vadd.f32 0.0, %v12063
        %12065 = vmatprep.mubr.bf16.mxu0 0
        %12066 = vmatmul.mubr.bf16.gmra.mrb[0].mxu0 %v11524
        %v12067 = vpop.f32.mrb[0].mxu0
        %v12068 = vpop.f32.mrb[0].mxu0
        %v12069 = vpop.f32.mrb[0].mxu0
        %v12070 = vpop.f32.mrb[0].mxu0
        %12071 = vmatprep.mubr.bf16.mxu0 0
        %12072 = vmatmul.mubr.bf16.gmra.mrb[0].mxu0 %v11527
        %v12073 = vpop.f32.mrb[0].mxu0
        %v12074 = vpop.f32.mrb[0].mxu0
        %v12075 = vpop.f32.mrb[0].mxu0
        %v12076 = vpop.f32.mrb[0].mxu0
        %12077 = vdwg.mxu0
        %12078 = vmatprep.subr.bf16.mxu0 %v11469
        %12079 = vmatpush1.bf16.msra.mxu0 %v11468
        %12080 = vmatprep.subr.bf16.mxu0 %v11572
        %12081 = vmatpush1.bf16.msra.mxu0 %v11569
        %12082 = vmatprep.subr.bf16.mxu0 0
        %12083 = vmatpush1.bf16.msra.mxu0 0
        %12084 = vmatprep.subr.bf16.mxu0 0
        %12085 = vmatpush1.bf16.msra.mxu0 0
        %12086 = vmatprep.subr.bf16.mxu0 0
        %12087 = vmatpush1.bf16.msra.mxu0 0
        %12088 = vmatprep.subr.bf16.mxu0 0
        %12089 = vmatpush1.bf16.msra.mxu0 0
        %12090 = vmatprep.subr.bf16.mxu0 0
        %12091 = vmatpush1.bf16.msra.mxu0 0
        %12092 = vmatprep.subr.bf16.mxu0 0
        %12093 = vmatpush1.bf16.msra.mxu0 0
        %12094 = vmatprep.subr.bf16.mxu0 0
        %12095 = vmatpush1.bf16.msra.mxu0 0
        %12096 = vmatprep.subr.bf16.mxu0 0
        %12097 = vmatpush1.bf16.msra.mxu0 0
        %12098 = vmatprep.subr.bf16.mxu0 0
        %12099 = vmatpush1.bf16.msra.mxu0 0
        %12100 = vmatprep.subr.bf16.mxu0 0
        %12101 = vmatpush1.bf16.msra.mxu0 0
        %12102 = vmatprep.subr.bf16.mxu0 0
        %12103 = vmatpush1.bf16.msra.mxu0 0
        %12104 = vmatprep.subr.bf16.mxu0 0
        %12105 = vmatpush1.bf16.msra.mxu0 0
        %12106 = vmatprep.subr.bf16.mxu0 0
        %12107 = vmatpush1.bf16.msra.mxu0 0
        %12108 = vmatprep.subr.bf16.mxu0 0
        %12109 = vmatpush1.bf16.msra.mxu0 0
        %12110 = vmatprep.mubr.bf16.mxu0 0
        %12111 = vmatmul.mubr.bf16.gmra.mrb[0].mxu0 %v11506
        %v12112 = vpop.f32.mrb[0].mxu0
        %v12113 = vpop.f32.mrb[0].mxu0
        %v12114 = vpop.f32.mrb[0].mxu0
        %v12115 = vpop.f32.mrb[0].mxu0
        %12116 = vmatprep.mubr.bf16.mxu0 0
        %12117 = vmatmul.mubr.bf16.gmra.mrb[0].mxu0 %v11509
        %v12118 = vpop.f32.mrb[0].mxu0
        %v12119 = vpop.f32.mrb[0].mxu0
        %v12120 = vpop.f32.mrb[0].mxu0
        %v12121 = vpop.f32.mrb[0].mxu0
        %12122 = vmatprep.mubr.bf16.mxu0 0
        %12123 = vmatmul.mubr.bf16.gmra.mrb[0].mxu0 %v11512
        %v12124 = vpop.f32.mrb[0].mxu0
        %v12125 = vpop.f32.mrb[0].mxu0
        %v12126 = vpop.f32.mrb[0].mxu0
        %v12127 = vpop.f32.mrb[0].mxu0
        %12128 = vmatprep.mubr.bf16.mxu0 0
        %12129 = vmatmul.mubr.bf16.gmra.mrb[0].mxu0 %v11515
        %v12130 = vpop.f32.mrb[0].mxu0
        %v12131 = vpop.f32.mrb[0].mxu0
        %v12132 = vpop.f32.mrb[0].mxu0
        %v12133 = vpop.f32.mrb[0].mxu0
        %12134 = vmatprep.mubr.bf16.mxu0 0
        %12135 = vmatmul.mubr.bf16.gmra.mrb[0].mxu0 %v11518
        %v12136 = vpop.f32.mrb[0].mxu0
        %v12137 = vpop.f32.mrb[0].mxu0
        %v12138 = vpop.f32.mrb[0].mxu0
        %v12139 = vpop.f32.mrb[0].mxu0
        %12140 = vmatprep.mubr.bf16.mxu0 0
        %12141 = vmatmul.mubr.bf16.gmra.mrb[0].mxu0 %v11521
        %v12142 = vpop.f32.mrb[0].mxu0
        %v12143 = vpop.f32.mrb[0].mxu0
        %v12144 = vpop.f32.mrb[0].mxu0
        %v12145 = vpop.f32.mrb[0].mxu0
        %12146 = vmatprep.mubr.bf16.mxu0 0
        %12147 = vmatmul.mubr.bf16.gmra.mrb[0].mxu0 %v11524
        %v12148 = vpop.f32.mrb[0].mxu0
        %v12149 = vadd.f32 0.0, %v12148
        %v12150 = vpop.f32.mrb[0].mxu0
        %v12151 = vpop.f32.mrb[0].mxu0
        %v12152 = vpop.f32.mrb[0].mxu0
        %v12153 = vadd.f32 0.0, %v12152
        %12154 = vmatprep.mubr.bf16.mxu0 0
        %12155 = vmatmul.mubr.bf16.gmra.mrb[0].mxu0 %v11527
        %v12156 = vpop.f32.mrb[0].mxu0
        %v12157 = vpop.f32.mrb[0].mxu0
        %v12158 = vpop.f32.mrb[0].mxu0
        %v12159 = vpop.f32.mrb[0].mxu0
        %12160 = vdwg.mxu0
        %12161 = vmatprep.subr.bf16.mxu0 %v11471
        %12162 = vmatpush1.bf16.msra.mxu0 %v11470
        %12163 = vmatprep.subr.bf16.mxu0 %v11578
        %12164 = vmatpush1.bf16.msra.mxu0 %v11575
        %12165 = vmatprep.subr.bf16.mxu0 0
        %12166 = vmatpush1.bf16.msra.mxu0 0
        %12167 = vmatprep.subr.bf16.mxu0 0
        %12168 = vmatpush1.bf16.msra.mxu0 0
        %12169 = vmatprep.subr.bf16.mxu0 0
        %12170 = vmatpush1.bf16.msra.mxu0 0
        %12171 = vmatprep.subr.bf16.mxu0 0
        %12172 = vmatpush1.bf16.msra.mxu0 0
        %12173 = vmatprep.subr.bf16.mxu0 0
        %12174 = vmatpush1.bf16.msra.mxu0 0
        %12175 = vmatprep.subr.bf16.mxu0 0
        %12176 = vmatpush1.bf16.msra.mxu0 0
        %12177 = vmatprep.subr.bf16.mxu0 0
        %12178 = vmatpush1.bf16.msra.mxu0 0
        %12179 = vmatprep.subr.bf16.mxu0 0
        %12180 = vmatpush1.bf16.msra.mxu0 0
        %12181 = vmatprep.subr.bf16.mxu0 0
        %12182 = vmatpush1.bf16.msra.mxu0 0
        %12183 = vmatprep.subr.bf16.mxu0 0
        %12184 = vmatpush1.bf16.msra.mxu0 0
        %12185 = vmatprep.subr.bf16.mxu0 0
        %12186 = vmatpush1.bf16.msra.mxu0 0
        %12187 = vmatprep.subr.bf16.mxu0 0
        %12188 = vmatpush1.bf16.msra.mxu0 0
        %12189 = vmatprep.subr.bf16.mxu0 0
        %12190 = vmatpush1.bf16.msra.mxu0 0
        %12191 = vmatprep.subr.bf16.mxu0 0
        %12192 = vmatpush1.bf16.msra.mxu0 0
        %12193 = vmatprep.mubr.bf16.mxu0 0
        %12194 = vmatmul.mubr.bf16.gmra.mrb[0].mxu0 %v11506
        %v12195 = vpop.f32.mrb[0].mxu0
        %v12196 = vpop.f32.mrb[0].mxu0
        %v12197 = vpop.f32.mrb[0].mxu0
        %v12198 = vpop.f32.mrb[0].mxu0
        %12199 = vmatprep.mubr.bf16.mxu0 0
        %12200 = vmatmul.mubr.bf16.gmra.mrb[0].mxu0 %v11509
        %v12201 = vpop.f32.mrb[0].mxu0
        %v12202 = vpop.f32.mrb[0].mxu0
        %v12203 = vpop.f32.mrb[0].mxu0
        %v12204 = vpop.f32.mrb[0].mxu0
        %12205 = vmatprep.mubr.bf16.mxu0 0
        %12206 = vmatmul.mubr.bf16.gmra.mrb[0].mxu0 %v11512
        %v12207 = vpop.f32.mrb[0].mxu0
        %v12208 = vpop.f32.mrb[0].mxu0
        %v12209 = vpop.f32.mrb[0].mxu0
        %v12210 = vpop.f32.mrb[0].mxu0
        %12211 = vmatprep.mubr.bf16.mxu0 0
        %12212 = vmatmul.mubr.bf16.gmra.mrb[0].mxu0 %v11515
        %v12213 = vpop.f32.mrb[0].mxu0
        %v12214 = vpop.f32.mrb[0].mxu0
        %v12215 = vpop.f32.mrb[0].mxu0
        %v12216 = vpop.f32.mrb[0].mxu0
        %12217 = vmatprep.mubr.bf16.mxu0 0
        %12218 = vmatmul.mubr.bf16.gmra.mrb[0].mxu0 %v11518
        %v12219 = vpop.f32.mrb[0].mxu0
        %v12220 = vpop.f32.mrb[0].mxu0
        %v12221 = vpop.f32.mrb[0].mxu0
        %v12222 = vpop.f32.mrb[0].mxu0
        %12223 = vmatprep.mubr.bf16.mxu0 0
        %12224 = vmatmul.mubr.bf16.gmra.mrb[0].mxu0 %v11521
        %v12225 = vpop.f32.mrb[0].mxu0
        %v12226 = vpop.f32.mrb[0].mxu0
        %v12227 = vpop.f32.mrb[0].mxu0
        %v12228 = vpop.f32.mrb[0].mxu0
        %12229 = vmatprep.mubr.bf16.mxu0 0
        %12230 = vmatmul.mubr.bf16.gmra.mrb[0].mxu0 %v11524
        %v12231 = vpop.f32.mrb[0].mxu0
        %v12232 = vpop.f32.mrb[0].mxu0
        %v12233 = vpop.f32.mrb[0].mxu0
        %v12234 = vpop.f32.mrb[0].mxu0
        %12235 = vmatprep.mubr.bf16.mxu0 0
        %12236 = vmatmul.mubr.bf16.gmra.mrb[0].mxu0 %v11527
        %v12237 = vpop.f32.mrb[0].mxu0
        %v12238 = vadd.f32 0.0, %v12237
        %v12239 = vpop.f32.mrb[0].mxu0
        %v12240 = vpop.f32.mrb[0].mxu0
        %v12241 = vpop.f32.mrb[0].mxu0
        %v12242 = vadd.f32 0.0, %v12241
        %12243 = vdwg.mxu0
        %v12244 = vadd.f32 %v11615, %v11619
        %v12245 = vadd.f32 %v12244, %v11704
        %v12246 = vadd.f32 %v12245, %v11708
        %v12247 = vadd.f32 %v12246, %v11793
        %v12248 = vadd.f32 %v12247, %v11797
        %v12249 = vadd.f32 %v12248, %v11882
        %v12250 = vadd.f32 %v12249, %v11886
        %v12251 = vadd.f32 %v12250, %v11971
        %v12252 = vadd.f32 %v12251, %v11975
        %v12253 = vadd.f32 %v12252, %v12060
        %v12254 = vadd.f32 %v12253, %v12064
        %v12255 = vadd.f32 %v12254, %v12149
        %v12256 = vadd.f32 %v12255, %v12153
        %v12257 = vadd.f32 %v12256, %v12238
        %v12258 = vadd.f32 %v12257, %v12242
        %v12259 = vld [vmem:[%s9] sm:$0x1]
        %v12261 = vlaneseq
        %v12262 = vshrl.u32 %v12261, 7
        %v12263 = vsub.s32 0, %v12262
        %v12264 = vrot.slane %v12259, %v12263
        %v12266 = vadd.f32 %v12258, %v12264
        %v12267 = vmax.f32 %v12266, 0.0
        %v12268 = vpack.c.bf16 %v12267, %v12267
        %v12269 = vld [vmem:[%s10] sm:$0xf]
        %v12270 = vld [vmem:[%s10 + $0x4] sm:$0xf]
        %v12271 = vld [vmem:[%s10 + $0x8] sm:$0xf]
        %v12272 = vld [vmem:[%s10 + $0xc] sm:$0xf]
        %v12273 = vld [vmem:[%s10 + $0x10] sm:$0xf]
        %v12274 = vld [vmem:[%s10 + $0x14] sm:$0xf]
        %v12275 = vld [vmem:[%s10 + $0x18] sm:$0xf]
        %v12276 = vld [vmem:[%s10 + $0x1c] sm:$0xf]
        %v12277 = vld [vmem:[%s10 + $0x20] sm:$0xf]
        %v12278 = vld [vmem:[%s10 + $0x24] sm:$0xf]
        %v12279 = vld [vmem:[%s10 + $0x28] sm:$0xf]
        %v12280 = vld [vmem:[%s10 + $0x2c] sm:$0xf]
        %v12281 = vld [vmem:[%s10 + $0x30] sm:$0xf]
        %v12282 = vld [vmem:[%s10 + $0x34] sm:$0xf]
        %v12283 = vld [vmem:[%s10 + $0x38] sm:$0xf]
        %v12284 = vld [vmem:[%s10 + $0x3c] sm:$0xf]
        %v12285 = vld [vmem:[%s11] sm:$0x1]
        %v12287 = vlaneseq
        %v12288 = vshrl.u32 %v12287, 7
        %v12289 = vsub.s32 0, %v12288
        %v12290 = vrot.slane %v12285, %v12289
        %v12308 = vunpack.c.l.b16 %v12269
        %v12309 = vunpack.c.l.b16 %v12270
        %v12310 = vunpack.c.l.b16 %v12271
        %v12311 = vunpack.c.l.b16 %v12272
        %v12312 = vunpack.c.l.b16 %v12273
        %v12313 = vunpack.c.l.b16 %v12274
        %v12314 = vunpack.c.l.b16 %v12275
        %v12315 = vunpack.c.l.b16 %v12276
        %v12316 = vunpack.c.l.b16 %v12277
        %v12317 = vunpack.c.l.b16 %v12278
        %v12318 = vunpack.c.l.b16 %v12279
        %v12319 = vunpack.c.l.b16 %v12280
        %v12320 = vunpack.c.l.b16 %v12281
        %v12321 = vunpack.c.l.b16 %v12282
        %v12322 = vunpack.c.l.b16 %v12283
        %v12323 = vunpack.c.l.b16 %v12284
        %v12324 = vpack.c.b16 %v12309, %v12308
        %v12325 = vpack.c.b16 %v12311, %v12310
        %v12326 = vpack.c.b16 %v12313, %v12312
        %v12327 = vpack.c.b16 %v12315, %v12314
        %v12328 = vpack.c.b16 %v12317, %v12316
        %v12329 = vpack.c.b16 %v12319, %v12318
        %v12330 = vpack.c.b16 %v12321, %v12320
        %v12331 = vpack.c.b16 %v12323, %v12322
        %12340 = vmatprep.subr.bf16.mxu0 0
        %12341 = vmatpush1.bf16.msra.mxu0 %v12324
        %12342 = vmatprep.subr.bf16.mxu0 0
        %12343 = vmatpush1.bf16.msra.mxu0 %v12325
        %12344 = vmatprep.subr.bf16.mxu0 0
        %12345 = vmatpush1.bf16.msra.mxu0 %v12326
        %12346 = vmatprep.subr.bf16.mxu0 0
        %12347 = vmatpush1.bf16.msra.mxu0 %v12327
        %12348 = vmatprep.subr.bf16.mxu0 0
        %12349 = vmatpush1.bf16.msra.mxu0 %v12328
        %12350 = vmatprep.subr.bf16.mxu0 0
        %12351 = vmatpush1.bf16.msra.mxu0 %v12329
        %12352 = vmatprep.subr.bf16.mxu0 0
        %12353 = vmatpush1.bf16.msra.mxu0 %v12330
        %12354 = vmatprep.subr.bf16.mxu0 0
        %12355 = vmatpush1.bf16.msra.mxu0 %v12331
        %12356 = vmatprep.subr.bf16.mxu0 0
        %12357 = vmatpush1.bf16.msra.mxu0 0
        %12358 = vmatprep.subr.bf16.mxu0 0
        %12359 = vmatpush1.bf16.msra.mxu0 0
        %12360 = vmatprep.subr.bf16.mxu0 0
        %12361 = vmatpush1.bf16.msra.mxu0 0
        %12362 = vmatprep.subr.bf16.mxu0 0
        %12363 = vmatpush1.bf16.msra.mxu0 0
        %12364 = vmatprep.subr.bf16.mxu0 0
        %12365 = vmatpush1.bf16.msra.mxu0 0
        %12366 = vmatprep.subr.bf16.mxu0 0
        %12367 = vmatpush1.bf16.msra.mxu0 0
        %12368 = vmatprep.subr.bf16.mxu0 0
        %12369 = vmatpush1.bf16.msra.mxu0 0
        %12370 = vmatprep.subr.bf16.mxu0 0
        %12371 = vmatpush1.bf16.msra.mxu0 0
        %12372 = vmatprep.mubr.bf16.mxu0 0
        %12373 = vmatmul.mubr.bf16.gmra.mrb[0].mxu0 %v12268
        %v12374 = vpop.f32.mrb[0].mxu0
        %v12375 = vadd.f32 %v12290, %v12374
        %v12376 = vpop.f32.mrb[0].mxu0
        %v12377 = vpop.f32.mrb[0].mxu0
        %v12378 = vpop.f32.mrb[0].mxu0
        %12379 = vdwg.mxu0
        %v12380 = vmax.f32 %v12375, 0.0
        %v12381 = vpack.c.bf16 %v12380, %v12380
        %v12382 = vld [vmem:[%s12] sm:$0xf]
        %v12383 = vld [vmem:[%s12 + $0x4] sm:$0xf]
        %v12384 = vld [vmem:[%s12 + $0x8] sm:$0xf]
        %v12385 = vld [vmem:[%s12 + $0xc] sm:$0xf]
        %v12386 = vld [vmem:[%s12 + $0x10] sm:$0xf]
        %v12387 = vld [vmem:[%s12 + $0x14] sm:$0xf]
        %v12388 = vld [vmem:[%s12 + $0x18] sm:$0xf]
        %v12389 = vld [vmem:[%s12 + $0x1c] sm:$0xf]
        %v12390 = vld [vmem:[%s12 + $0x20] sm:$0xf]
        %v12391 = vld [vmem:[%s12 + $0x24] sm:$0xf]
        %v12392 = vld [vmem:[%s12 + $0x28] sm:$0x3]
        %v12393 = vld [vmem:[%s13] sm:$0x1]
        %v12395 = vlaneseq
        %v12396 = vshrl.u32 %v12395, 7
        %v12397 = vsub.s32 0, %v12396
        %v12398 = vrot.slane %v12393, %v12397
        %v12411 = vunpack.c.l.b16 %v12382
        %v12412 = vunpack.c.l.b16 %v12383
        %v12413 = vunpack.c.l.b16 %v12384
        %v12414 = vunpack.c.l.b16 %v12385
        %v12415 = vunpack.c.l.b16 %v12386
        %v12416 = vunpack.c.l.b16 %v12387
        %v12417 = vunpack.c.l.b16 %v12388
        %v12418 = vunpack.c.l.b16 %v12389
        %v12419 = vunpack.c.l.b16 %v12390
        %v12420 = vunpack.c.l.b16 %v12391
        %v12421 = vunpack.c.l.b16 %v12392
        %v12422 = vpack.c.b16 %v12412, %v12411
        %v12423 = vpack.c.b16 %v12414, %v12413
        %v12424 = vpack.c.b16 %v12416, %v12415
        %v12425 = vpack.c.b16 %v12418, %v12417
        %v12426 = vpack.c.b16 %v12420, %v12419
        %v12427 = vpack.c.b16 %v12421, %v12421
        %vm12433 = vcmask 687104
        %v12435 = vsel %vm12433, %v12381, 0
        %v12438 = vsel %vm8409, %v12427, 0
        %12440 = vmatprep.subr.bf16.mxu0 0
        %12441 = vmatpush1.bf16.msra.mxu0 %v12422
        %12442 = vmatprep.subr.bf16.mxu0 0
        %12443 = vmatpush1.bf16.msra.mxu0 %v12423
        %12444 = vmatprep.subr.bf16.mxu0 0
        %12445 = vmatpush1.bf16.msra.mxu0 %v12424
        %12446 = vmatprep.subr.bf16.mxu0 0
        %12447 = vmatpush1.bf16.msra.mxu0 %v12425
        %12448 = vmatprep.subr.bf16.mxu0 0
        %12449 = vmatpush1.bf16.msra.mxu0 %v12426
        %12450 = vmatprep.subr.bf16.mxu0 0
        %12451 = vmatpush1.bf16.msra.mxu0 %v12438
        %12452 = vmatprep.subr.bf16.mxu0 0
        %12453 = vmatpush1.bf16.msra.mxu0 0
        %12454 = vmatprep.subr.bf16.mxu0 0
        %12455 = vmatpush1.bf16.msra.mxu0 0
        %12456 = vmatprep.subr.bf16.mxu0 0
        %12457 = vmatpush1.bf16.msra.mxu0 0
        %12458 = vmatprep.subr.bf16.mxu0 0
        %12459 = vmatpush1.bf16.msra.mxu0 0
        %12460 = vmatprep.subr.bf16.mxu0 0
        %12461 = vmatpush1.bf16.msra.mxu0 0
        %12462 = vmatprep.subr.bf16.mxu0 0
        %12463 = vmatpush1.bf16.msra.mxu0 0
        %12464 = vmatprep.subr.bf16.mxu0 0
        %12465 = vmatpush1.bf16.msra.mxu0 0
        %12466 = vmatprep.subr.bf16.mxu0 0
        %12467 = vmatpush1.bf16.msra.mxu0 0
        %12468 = vmatprep.subr.bf16.mxu0 0
        %12469 = vmatpush1.bf16.msra.mxu0 0
        %12470 = vmatprep.subr.bf16.mxu0 0
        %12471 = vmatpush1.bf16.msra.mxu0 0
        %12472 = vmatprep.mubr.bf16.mxu0 0
        %12473 = vmatmul.mubr.bf16.gmra.mrb[0].mxu0 %v12435
        %v12474 = vpop.f32.mrb[0].mxu0
        %v12475 = vadd.f32 %v12398, %v12474
        %v12476 = vpop.f32.mrb[0].mxu0
        %v12477 = vpop.f32.mrb[0].mxu0
        %v12478 = vpop.f32.mrb[0].mxu0
        %12479 = vdwg.mxu0
        %12480 = vst [vmem:[%s463] sm:$0xff] %v12475
        %s12481 = sand.u32 %s335, 1
        %s12482 = scalar_lea.sflag [#allocation4], %s12481
        %s12483 = sand.u32 %s335, 1
        %s12484 = smul.addr %s12483, 8
        %s12485 = scalar_lea.vmem [#allocation3], %s12484
        // Predicated region
        $region77: #{tpu_custom_call.1} parent=75 // pred_check
          %p12486 = pneg %p345
        $region78: #{tpu_custom_call.1} parent=75 // pred_check_branch
          %12488 = sbr.rel (%p12486) target = $region80
        $region79: #{tpu_custom_call.1} parent=75 // pred_region
          %s12490 = ssub.s32 128, 128
          %12491 = vsyncadd %s12482, %s12490
          %s12492 = smul.addr %s28, 128
          %s12493 = scalar_lea.hbm %s14, %s12492
          %s12495 = sshll.u32 %s12485, 4
          %s12496 = int_to_ptr.vmem [resolvable:$true] %s12495
          %12498 = dma.vmem_to_hbm [thread:$0]  %s12496, 128, %s12493, %s12482
        $region80: #{tpu_custom_call.1} parent=75 // pred_fallthru
          _
      $region76: #{tpu_custom_call.1} parent=5 // pred_fallthru
        _
      %p12499 = scmp.le.s32.totalorder 2, %s23
      // Predicated region
      $region81: #{tpu_custom_call.1} parent=5 // pred_check
        %p12500 = pneg %p12499
      $region82: #{tpu_custom_call.1} parent=5 // pred_check_branch
        %12502 = sbr.rel (%p12500) target = $region84
      $region83: #{tpu_custom_call.1} parent=5 // pred_region
        %s12503 = ssub.s32 %s23, 2
        // Predicated region
        $region85: #{tpu_custom_call.1} parent=83 // pred_check
          %p12504 = pneg %p351
        $region86: #{tpu_custom_call.1} parent=83 // pred_check_branch
          %12506 = sbr.rel (%p12504) target = $region88
        $region87: #{tpu_custom_call.1} parent=83 // pred_region
          %s12507 = sand.u32 %s336, 1
          %s12508 = scalar_lea.sflag [#allocation4], %s12507
          %s12509 = sand.u32 %s336, 1
          %s12510 = smul.addr %s12509, 8
          %s12511 = scalar_lea.vmem [#allocation3], %s12510
          %12512 = dma.done %s12508, 128
        $region88: #{tpu_custom_call.1} parent=83 // pred_fallthru
          _
      $region84: #{tpu_custom_call.1} parent=5 // pred_fallthru
        _
    $region6: #{tpu_custom_call.1} parent=1 // loop_footer
      %s27 = sadd.s32 1, %s23
    $region7: #{tpu_custom_call.1} parent=1 // loop_footer_branch
      %22 = sbr.rel target = $region3
    $region8: #{tpu_custom_call.1} parent=1 // loop_exit
      _
    %12513 = vsyncpa [#allocation4], 1
    %s12514 = scalar_lea.sflag [#allocation4], 1
    %12515 = vsyncpa %s12514, 1

</llo_original>
